<compile_context>
chip_gen: v6e
topology: v6e:2x2x1
jax: 0.10.0
libtpu: 0.0.40
codegen_flags: <defaults>
</compile_context>

<pallas_src>
import math
import functools

import jax
import jax.numpy as jnp
from jax.experimental import pallas as pl
from jax.experimental.pallas import tpu as pltpu

N_MASKS = 4          # number of regions / masks (graph like Renderer_N4)
N_PARAMS = 16        # filter parameters per region
MAX_DOWN_SIZE = 32

_VMEM_LIMIT = 32 * 1024 * 1024   # safe on v5e/v6e/v7x


# ----------------------------------------------------------------------------
# Pallas kernel 1: spatial-last conv matmul + bias + ReLU  (backbone stages)
#   a: (K, TS) bf16 im2col columns, w: (Cout, K) bf16, bias: (Cout, 1) f32
#   out: (Cout, TS)  -- lane dim = spatial tile => unmasked lane-dense stores.
# ----------------------------------------------------------------------------
def _conv_mm_kernel(a_ref, w_ref, b_ref, o_ref):
    acc = jnp.dot(w_ref[...], a_ref[...], preferred_element_type=jnp.float32)
    o_ref[...] = jnp.maximum(acc + b_ref[...], 0.0).astype(o_ref.dtype)


def _im2col_3x3_s2(x):
    """x: (B, C, H, W) -> (B, C*9, Ho*Wo), Ho, Wo  (zero pad=1, stride=2).

    Spatial stays LAST -> no transposes before/after the matmul kernel and the
    kernel output is directly NCHW-flattened.
    """
    B, C, H, W = x.shape
    Ho = (H + 2 - 3) // 2 + 1
    Wo = (W + 2 - 3) // 2 + 1
    xp = jnp.pad(x, ((0, 0), (0, 0), (1, 1), (1, 1)))
    taps = []
    for kh in range(3):
        for kw in range(3):
            taps.append(xp[:, :, kh:kh + 2 * Ho - 1:2, kw:kw + 2 * Wo - 1:2])
    p = jnp.stack(taps, axis=2)                       # (B, C, 9, Ho, Wo)
    return p.reshape(B, C * 9, Ho * Wo), Ho, Wo       # column order = (c, kh, kw)


def conv3x3_s2_relu(x, w, b, *, out_dtype=jnp.bfloat16, ts=8192):
    """PyTorch-semantics Conv2d(k=3, s=2, p=1) + ReLU, spatial-last Pallas matmul."""
    B, Cin, _, _ = x.shape
    Cout = w.shape[0]
    x = x.astype(jnp.bfloat16)                        # halve im2col HBM traffic
    a, Ho, Wo = _im2col_3x3_s2(x)                     # (B, K, S) bf16
    K = Cin * 9
    S = Ho * Wo
    ts = S if S <= ts else ts                         # ts is a multiple of 128 when tiling
    wm = w.reshape(Cout, K).astype(jnp.bfloat16)      # matches (c, kh, kw) flattening
    out = pl.pallas_call(
        _conv_mm_kernel,
        out_shape=jax.ShapeDtypeStruct((B, Cout, S), out_dtype),
        grid=(B, pl.cdiv(S, ts)),                     # ragged last tile: OOB cols dropped
        in_specs=[
            pl.BlockSpec((None, K, ts), lambda bi, si: (bi, 0, si)),
            pl.BlockSpec((Cout, K), lambda bi, si: (0, 0)),
            pl.BlockSpec((Cout, 1), lambda bi, si: (0, 0)),
        ],
        out_specs=pl.BlockSpec((None, Cout, ts), lambda bi, si: (bi, 0, si)),
        compiler_params=pltpu.CompilerParams(
            dimension_semantics=("parallel", "parallel"),
            vmem_limit_bytes=_VMEM_LIMIT),
    )(a, wm, b.reshape(Cout, 1).astype(jnp.float32))
    return out.reshape(B, Cout, Ho, Wo)


# ----------------------------------------------------------------------------
# Pallas kernel 2: region renderer (graph) -- the per-pixel hot path.
#   Params are pre-folded in XLA:  W'_{m,i,j} = exp(p15)*gain_i*M_{m,i,j},
#   b'_{m,i} = exp(p15)*gain_i*bias_{m,i}; per pixel only 3x3 matvec + blend.
#   result = img + sum_m mask_m * (F_m(img) - img);  cache_m = img + delta_m.
# ----------------------------------------------------------------------------
def _fold_params(params):
    """params: (B, N, 16) -> wf (B, 3N, 3), bf (B, 3N, 1), both f32."""
    B, N, _ = params.shape
    scale = jnp.exp(params[..., 15:16]) * params[..., 12:15]          # (B,N,3)
    mat = params[..., :9].reshape(B, N, 3, 3) * scale[..., None]      # (B,N,3,3)
    bias = params[..., 9:12] * scale                                  # (B,N,3)
    return (mat.reshape(B, N * 3, 3).astype(jnp.float32),
            bias.reshape(B, N * 3, 1).astype(jnp.float32))


def _renderer_body(wf_ref, bf_ref, img_ref, msk_ref, out_ref, cache_ref, n_masks):
    img = img_ref[...]                                # (B, 3, TS) f32
    wf = wf_ref[...]                                  # (B, 3N, 3)
    bfv = bf_ref[...]                                 # (B, 3N, 1)
    msk = msk_ref[...]                                # (B, N, TS)
    acc = img
    for m in range(n_masks):
        w_m = wf[:, 3 * m:3 * m + 3, :]               # (B, 3, 3)
        b_m = bfv[:, 3 * m:3 * m + 3, :]              # (B, 3, 1)
        filt = (w_m[:, :, 0:1] * img[:, 0:1, :]
                + w_m[:, :, 1:2] * img[:, 1:2, :]
                + w_m[:, :, 2:3] * img[:, 2:3, :]
                + b_m)                                # (B, 3, TS)
        delta = msk[:, m:m + 1, :] * (filt - img)     # (B, 3, TS)
        if cache_ref is not None:
            cache_ref[:, 3 * m:3 * m + 3, :] = (img + delta).astype(cache_ref.dtype)
        acc = acc + delta
    out_ref[...] = acc


def _renderer_kernel_cache(wf_ref, bf_ref, img_ref, msk_ref, out_ref, cache_ref,
                           *, n_masks):
    _renderer_body(wf_ref, bf_ref, img_ref, msk_ref, out_ref, cache_ref, n_masks)


def _renderer_kernel_nocache(wf_ref, bf_ref, img_ref, msk_ref, out_ref, *, n_masks):
    _renderer_body(wf_ref, bf_ref, img_ref, msk_ref, out_ref, None, n_masks)


def renderer_pallas(img, masks, params, *, cache=True,
                    cache_dtype=jnp.bfloat16, ts=16384):
    B, C, H, W = img.shape
    N = masks.shape[1]
    S = H * W
    ts = S if S <= ts else ts                         # 16384 is a multiple of 128
    wf, bf = _fold_params(params)
    img_f = img.reshape(B, C, S).astype(jnp.float32)  # renderer math stays f32 (v5e VPU)
    msk_f = masks.reshape(B, N, S).astype(jnp.float32)

    in_specs = [
        pl.BlockSpec((B, N * C, C), lambda s: (0, 0, 0)),
        pl.BlockSpec((B, N * C, 1), lambda s: (0, 0, 0)),
        pl.BlockSpec((B, C, ts), lambda s: (0, 0, s)),
        pl.BlockSpec((B, N, ts), lambda s: (0, 0, s)),
    ]
    cparams = pltpu.CompilerParams(dimension_semantics=("parallel",),
                                   vmem_limit_bytes=_VMEM_LIMIT)
    grid = (pl.cdiv(S, ts),)

    if cache:
        out, cache_out = pl.pallas_call(
            functools.partial(_renderer_kernel_cache, n_masks=N),
            out_shape=(jax.ShapeDtypeStruct((B, C, S), jnp.float32),
                       jax.ShapeDtypeStruct((B, N * C, S), cache_dtype)),
            grid=grid,
            in_specs=in_specs,
            out_specs=(pl.BlockSpec((B, C, ts), lambda s: (0, 0, s)),
                       pl.BlockSpec((B, N * C, ts), lambda s: (0, 0, s))),
            compiler_params=cparams,
        )(wf, bf, img_f, msk_f)
        return out.reshape(B, C, H, W), cache_out.reshape(B, N, C, H, W)

    out = pl.pallas_call(
        functools.partial(_renderer_kernel_nocache, n_masks=N),
        out_shape=jax.ShapeDtypeStruct((B, C, S), jnp.float32),
        grid=grid,
        in_specs=in_specs,
        out_specs=pl.BlockSpec((B, C, ts), lambda s: (0, 0, s)),
        compiler_params=cparams,
    )(wf, bf, img_f, msk_f)
    return out.reshape(B, C, H, W), None


# ----------------------------------------------------------------------------
# Full forward (RSFNet_MaskIn.forward)
# ----------------------------------------------------------------------------
@functools.partial(jax.jit, static_argnames=("cache",))
def rsfnet_maskin_forward(img, masks, weights, cache=True):
    B, _, h, w = img.shape
    hh = math.ceil(h / MAX_DOWN_SIZE) * MAX_DOWN_SIZE
    ww = math.ceil(w / MAX_DOWN_SIZE) * MAX_DOWN_SIZE
    pad_h, pad_w = hh - h, ww - w

    # input_tensor = cat([img, masks], dim=1); reflect pad to multiple of 32
    x = jnp.concatenate([img, masks], axis=1)
    x = jnp.pad(
        x,
        ((0, 0), (0, 0),
         (pad_h // 2, pad_h - pad_h // 2),
         (pad_w // 2, pad_w - pad_w // 2)),
        mode="reflect",
    )

    # F.interpolate(scale_factor=360/max(hh,ww), bilinear) ~ jax.image.resize (glue)
    # TODO(synk): torch bilinear (align_corners=False) vs jax.image.resize may
    #             differ slightly at borders.
    s_ratio = 360.0 / max(hh, ww)
    out_h, out_w = int(hh * s_ratio), int(ww * s_ratio)
    x = jax.image.resize(x, (x.shape[0], x.shape[1], out_h, out_w), method="bilinear")

    # backbone (extract_feat): two stride-2 conv+ReLU stages (Pallas, bf16 MXU)
    f1 = conv3x3_s2_relu(x, weights["w1"], weights["b1"], out_dtype=jnp.bfloat16)
    f2 = conv3x3_s2_relu(f1, weights["w2"], weights["b2"], out_dtype=jnp.float32)

    # head: global average pool + linear in plain XLA (tiny; Pallas buys nothing)
    Bf, C2 = f2.shape[:2]
    pooled = jnp.mean(f2.reshape(Bf, C2, -1).astype(jnp.float32), axis=-1)
    params = pooled @ weights["w_head"] + weights["b_head"]
    params = params.reshape(B, N_MASKS, N_PARAMS)

    # assert masks.size(1) == params.size(1)
    assert masks.shape[1] == params.shape[1]

    # graph renderer (Pallas, spatially tiled hot path)
    result, cache_imgs = renderer_pallas(img, masks, params, cache=cache)

    out = {"result": result, "params": params}
    if cache:
        out["cache"] = cache_imgs
    return out


def init_weights():
    key = jax.random.PRNGKey(0)
    k1, k2, k3 = jax.random.split(key, 3)
    cin = 3 + N_MASKS
    w = {
        "w1": jax.random.normal(k1, (16, cin, 3, 3), jnp.float32) * 0.1,
        "b1": jnp.zeros((16,), jnp.float32),
        "w2": jax.random.normal(k2, (32, 16, 3, 3), jnp.float32) * 0.1,
        "b2": jnp.zeros((32,), jnp.float32),
        "w_head": jax.random.normal(k3, (32, N_MASKS * N_PARAMS), jnp.float32) * 0.01,
    }
    # bias so each region's filter starts near identity (3x3=I, bias=0, gain=1, exposure=0)
    ident = jnp.array([1, 0, 0, 0, 1, 0, 0, 0, 1, 0, 0, 0, 1, 1, 1, 0], jnp.float32)
    w["b_head"] = jnp.tile(ident, (N_MASKS,))
    return w


# pure-JAX reference for the renderer (numerical check of the hot-path kernel)
def renderer_reference(img, masks, params):
    B, C, H, W = img.shape
    N = masks.shape[1]
    rgb = img.reshape(B, C, H * W)
    scale = jnp.exp(params[..., 15:16]) * params[..., 12:15]          # (B,N,3)
    mat = params[..., :9].reshape(B, N, 3, 3) * scale[..., None]
    bias = params[..., 9:12] * scale                                  # (B,N,3)
    filt = jnp.einsum("bnij,bjs->bnis", mat, rgb) + bias[..., None]   # (B,N,3,S)
    delta = masks.reshape(B, N, 1, H * W) * (filt - rgb[:, None])
    res = (rgb + delta.sum(axis=1)).reshape(B, C, H, W)
    cache = (rgb[:, None] + delta).reshape(B, N, C, H, W)
    return res, cache


if __name__ == "__main__":
    key = jax.random.PRNGKey(0)
    k_img, k_msk = jax.random.split(key, 2)
    img = jax.random.uniform(k_img, (2, 3, 16, 16), jnp.float32)          # NCHW
    masks = jax.random.uniform(k_msk, (2, N_MASKS, 16, 16), jnp.float32)

    weights = init_weights()

    out = rsfnet_maskin_forward(img, masks, weights, cache=True)
    jax.block_until_ready(out["result"])
    jax.block_until_ready(out["params"])
    jax.block_until_ready(out["cache"])

    assert out["result"].shape == (2, 3, 16, 16)
    assert out["params"].shape == (2, N_MASKS, N_PARAMS)
    assert out["cache"].shape == (2, N_MASKS, 3, 16, 16)

    # check the renderer kernel against a pure-JAX reference
    ref_res, ref_cache = renderer_reference(img, masks, out["params"])
    assert jnp.allclose(out["result"], ref_res, atol=1e-4, rtol=1e-4)
    assert jnp.allclose(out["cache"].astype(jnp.float32), ref_cache,
                        atol=5e-2, rtol=5e-2)   # cache is stored as bf16

    # cache=False path: no cache computed/written, result unchanged
    out_nc = rsfnet_maskin_forward(img, masks, weights, cache=False)
    jax.block_until_ready(out_nc["result"])
    assert "cache" not in out_nc
    assert jnp.allclose(out_nc["result"], out["result"], atol=1e-5, rtol=1e-5)

    print("KERNEL_OK")
</pallas_src>

<mosaic_0001>
module attributes {stable_mosaic.version = 11 : i64} {
  func.func @_conv_mm_kernel(%arg0: i32, %arg1: i32, %arg2: memref<1x63x8192xbf16, #tpu.memory_space<vmem>>, %arg3: memref<16x63xbf16, #tpu.memory_space<vmem>>, %arg4: memref<16x1xf32, #tpu.memory_space<vmem>>, %arg5: memref<1x16x8192xbf16, #tpu.memory_space<vmem>>) attributes {dimension_semantics = [#tpu.dimension_semantics<parallel>, #tpu.dimension_semantics<parallel>], iteration_bounds = array<i64: 2, 4>, scalar_prefetch = 0 : i64, scratch_operands = 0 : i64, tpu.core_type = #tpu.core_type<tc>, window_params = [{transform_indices = @transform_0, window_bounds = array<i64: 1, 63, 8192>}, {pipeline_mode = #tpu.pipeline_mode<synchronous>, transform_indices = @transform_1, window_bounds = array<i64: 16, 63>}, {pipeline_mode = #tpu.pipeline_mode<synchronous>, transform_indices = @transform_2, window_bounds = array<i64: 16, 1>}, {transform_indices = @transform_3, window_bounds = array<i64: 1, 16, 8192>}]} {
    %c0 = arith.constant 0 : index
    %c0_0 = arith.constant 0 : index
    %0 = vector.load %arg3[%c0, %c0_0] : memref<16x63xbf16, #tpu.memory_space<vmem>>, vector<16x63xbf16>
    %c0_1 = arith.constant 0 : index
    %c0_2 = arith.constant 0 : index
    %c0_3 = arith.constant 0 : index
    %1 = vector.load %arg2[%c0_1, %c0_2, %c0_3] : memref<1x63x8192xbf16, #tpu.memory_space<vmem>>, vector<1x63x8192xbf16>
    %2 = vector.shape_cast %1 : vector<1x63x8192xbf16> to vector<63x8192xbf16>
    %cst = arith.constant dense<0.000000e+00> : vector<16x8192xf32>
    %3 = tpu.matmul %0, %2, %cst {dimension_numbers = #tpu.dot_dimension_numbers<[1], [0], [0], [1], [0, 0, 1, 1], [], []>} : vector<16x63xbf16>, vector<63x8192xbf16>, vector<16x8192xf32> -> vector<16x8192xf32>
    %c0_4 = arith.constant 0 : index
    %c0_5 = arith.constant 0 : index
    %4 = vector.load %arg4[%c0_4, %c0_5] : memref<16x1xf32, #tpu.memory_space<vmem>>, vector<16x1xf32>
    %5 = vector.broadcast %4 : vector<16x1xf32> to vector<16x8192xf32>
    %6 = arith.addf %3, %5 : vector<16x8192xf32>
    %cst_6 = arith.constant 0.000000e+00 : f32
    %7 = vector.broadcast %cst_6 : f32 to vector<16x8192xf32>
    %8 = arith.maximumf %6, %7 : vector<16x8192xf32>
    %9 = arith.truncf %8 : vector<16x8192xf32> to vector<16x8192xbf16>
    %c0_7 = arith.constant 0 : index
    %c0_8 = arith.constant 0 : index
    %c0_9 = arith.constant 0 : index
    %10 = vector.load %arg5[%c0_7, %c0_8, %c0_9] : memref<1x16x8192xbf16, #tpu.memory_space<vmem>>, vector<1x16x8192xbf16>
    %11 = vector.shape_cast %10 : vector<1x16x8192xbf16> to vector<16x8192xbf16>
    %12 = vector.shape_cast %9 : vector<16x8192xbf16> to vector<1x16x8192xbf16>
    tpu.vector_store %arg5[%c0_7, %c0_8, %c0_9], %12 {strides = array<i32>} : memref<1x16x8192xbf16, #tpu.memory_space<vmem>>, vector<1x16x8192xbf16>,
    return
  }
  func.func @transform_0(%arg0: i32, %arg1: i32) -> (i32, i32, i32) {
    %c0_i32 = arith.constant 0 : i32
    %c0_i32_0 = arith.constant 0 : i32
    return %arg0, %c0_i32, %arg1 : i32, i32, i32
  }
  func.func @transform_1(%arg0: i32, %arg1: i32) -> (i32, i32) {
    %c0_i32 = arith.constant 0 : i32
    %c0_i32_0 = arith.constant 0 : i32
    %c0_i32_1 = arith.constant 0 : i32
    return %c0_i32, %c0_i32_0 : i32, i32
  }
  func.func @transform_2(%arg0: i32, %arg1: i32) -> (i32, i32) {
    %c0_i32 = arith.constant 0 : i32
    %c0_i32_0 = arith.constant 0 : i32
    %c0_i32_1 = arith.constant 0 : i32
    return %c0_i32, %c0_i32_0 : i32, i32
  }
  func.func @transform_3(%arg0: i32, %arg1: i32) -> (i32, i32, i32) {
    %c0_i32 = arith.constant 0 : i32
    %c0_i32_0 = arith.constant 0 : i32
    return %arg0, %c0_i32, %arg1 : i32, i32, i32
  }
}

module attributes {stable_mosaic.version = 11 : i64} {
  func.func @_conv_mm_kernel(%arg0: i32, %arg1: i32, %arg2: memref<1x144x8100xbf16, #tpu.memory_space<vmem>>, %arg3: memref<32x144xbf16, #tpu.memory_space<vmem>>, %arg4: memref<32x1xf32, #tpu.memory_space<vmem>>, %arg5: memref<1x32x8100xf32, #tpu.memory_space<vmem>>) attributes {dimension_semantics = [#tpu.dimension_semantics<parallel>, #tpu.dimension_semantics<parallel>], iteration_bounds = array<i64: 2, 1>, scalar_prefetch = 0 : i64, scratch_operands = 0 : i64, tpu.core_type = #tpu.core_type<tc>, window_params = [{transform_indices = @transform_0, window_bounds = array<i64: 1, 144, 8100>}, {pipeline_mode = #tpu.pipeline_mode<synchronous>, transform_indices = @transform_1, window_bounds = array<i64: 32, 144>}, {pipeline_mode = #tpu.pipeline_mode<synchronous>, transform_indices = @transform_2, window_bounds = array<i64: 32, 1>}, {transform_indices = @transform_3, window_bounds = array<i64: 1, 32, 8100>}]} {
    %c0 = arith.constant 0 : index
    %c0_0 = arith.constant 0 : index
    %0 = vector.load %arg3[%c0, %c0_0] : memref<32x144xbf16, #tpu.memory_space<vmem>>, vector<32x144xbf16>
    %c0_1 = arith.constant 0 : index
    %c0_2 = arith.constant 0 : index
    %c0_3 = arith.constant 0 : index
    %1 = vector.load %arg2[%c0_1, %c0_2, %c0_3] : memref<1x144x8100xbf16, #tpu.memory_space<vmem>>, vector<1x144x8100xbf16>
    %2 = vector.shape_cast %1 : vector<1x144x8100xbf16> to vector<144x8100xbf16>
    %cst = arith.constant dense<0.000000e+00> : vector<32x8100xf32>
    %3 = tpu.matmul %0, %2, %cst {dimension_numbers = #tpu.dot_dimension_numbers<[1], [0], [0], [1], [0, 0, 1, 1], [], []>} : vector<32x144xbf16>, vector<144x8100xbf16>, vector<32x8100xf32> -> vector<32x8100xf32>
    %c0_4 = arith.constant 0 : index
    %c0_5 = arith.constant 0 : index
    %4 = vector.load %arg4[%c0_4, %c0_5] : memref<32x1xf32, #tpu.memory_space<vmem>>, vector<32x1xf32>
    %5 = vector.broadcast %4 : vector<32x1xf32> to vector<32x8100xf32>
    %6 = arith.addf %3, %5 : vector<32x8100xf32>
    %cst_6 = arith.constant 0.000000e+00 : f32
    %7 = vector.broadcast %cst_6 : f32 to vector<32x8100xf32>
    %8 = arith.maximumf %6, %7 : vector<32x8100xf32>
    %c0_7 = arith.constant 0 : index
    %c0_8 = arith.constant 0 : index
    %c0_9 = arith.constant 0 : index
    %9 = vector.load %arg5[%c0_7, %c0_8, %c0_9] : memref<1x32x8100xf32, #tpu.memory_space<vmem>>, vector<1x32x8100xf32>
    %10 = vector.shape_cast %9 : vector<1x32x8100xf32> to vector<32x8100xf32>
    %11 = vector.shape_cast %8 : vector<32x8100xf32> to vector<1x32x8100xf32>
    tpu.vector_store %arg5[%c0_7, %c0_8, %c0_9], %11 {strides = array<i32>} : memref<1x32x8100xf32, #tpu.memory_space<vmem>>, vector<1x32x8100xf32>,
    return
  }
  func.func @transform_0(%arg0: i32, %arg1: i32) -> (i32, i32, i32) {
    %c0_i32 = arith.constant 0 : i32
    %c0_i32_0 = arith.constant 0 : i32
    return %arg0, %c0_i32, %arg1 : i32, i32, i32
  }
  func.func @transform_1(%arg0: i32, %arg1: i32) -> (i32, i32) {
    %c0_i32 = arith.constant 0 : i32
    %c0_i32_0 = arith.constant 0 : i32
    %c0_i32_1 = arith.constant 0 : i32
    return %c0_i32, %c0_i32_0 : i32, i32
  }
  func.func @transform_2(%arg0: i32, %arg1: i32) -> (i32, i32) {
    %c0_i32 = arith.constant 0 : i32
    %c0_i32_0 = arith.constant 0 : i32
    %c0_i32_1 = arith.constant 0 : i32
    return %c0_i32, %c0_i32_0 : i32, i32
  }
  func.func @transform_3(%arg0: i32, %arg1: i32) -> (i32, i32, i32) {
    %c0_i32 = arith.constant 0 : i32
    %c0_i32_0 = arith.constant 0 : i32
    return %arg0, %c0_i32, %arg1 : i32, i32, i32
  }
}

module attributes {stable_mosaic.version = 11 : i64} {
  func.func @_renderer_kernel_cache(%arg0: i32, %arg1: memref<2x12x3xf32, #tpu.memory_space<vmem>>, %arg2: memref<2x12x1xf32, #tpu.memory_space<vmem>>, %arg3: memref<2x3x256xf32, #tpu.memory_space<vmem>>, %arg4: memref<2x4x256xf32, #tpu.memory_space<vmem>>, %arg5: memref<2x3x256xf32, #tpu.memory_space<vmem>>, %arg6: memref<2x12x256xbf16, #tpu.memory_space<vmem>>) attributes {dimension_semantics = [#tpu.dimension_semantics<parallel>], iteration_bounds = array<i64: 1>, scalar_prefetch = 0 : i64, scratch_operands = 0 : i64, tpu.core_type = #tpu.core_type<tc>, window_params = [{pipeline_mode = #tpu.pipeline_mode<synchronous>, transform_indices = @transform_0, window_bounds = array<i64: 2, 12, 3>}, {pipeline_mode = #tpu.pipeline_mode<synchronous>, transform_indices = @transform_1, window_bounds = array<i64: 2, 12, 1>}, {transform_indices = @transform_2, window_bounds = array<i64: 2, 3, 256>}, {transform_indices = @transform_3, window_bounds = array<i64: 2, 4, 256>}, {transform_indices = @transform_4, window_bounds = array<i64: 2, 3, 256>}, {transform_indices = @transform_5, window_bounds = array<i64: 2, 12, 256>}]} {
    %c0 = arith.constant 0 : index
    %c0_0 = arith.constant 0 : index
    %c0_1 = arith.constant 0 : index
    %0 = vector.load %arg3[%c0, %c0_0, %c0_1] : memref<2x3x256xf32, #tpu.memory_space<vmem>>, vector<2x3x256xf32>
    %c0_2 = arith.constant 0 : index
    %c0_3 = arith.constant 0 : index
    %c0_4 = arith.constant 0 : index
    %1 = vector.load %arg1[%c0_2, %c0_3, %c0_4] : memref<2x12x3xf32, #tpu.memory_space<vmem>>, vector<2x12x3xf32>
    %c0_5 = arith.constant 0 : index
    %c0_6 = arith.constant 0 : index
    %c0_7 = arith.constant 0 : index
    %2 = vector.load %arg2[%c0_5, %c0_6, %c0_7] : memref<2x12x1xf32, #tpu.memory_space<vmem>>, vector<2x12x1xf32>
    %c0_8 = arith.constant 0 : index
    %c0_9 = arith.constant 0 : index
    %c0_10 = arith.constant 0 : index
    %3 = vector.load %arg4[%c0_8, %c0_9, %c0_10] : memref<2x4x256xf32, #tpu.memory_space<vmem>>, vector<2x4x256xf32>
    %4 = vector.extract_strided_slice %1 {offsets = [0, 0, 0], sizes = [2, 3, 3], strides = [1, 1, 1]} : vector<2x12x3xf32> to vector<2x3x3xf32>
    %5 = vector.extract_strided_slice %2 {offsets = [0, 0, 0], sizes = [2, 3, 1], strides = [1, 1, 1]} : vector<2x12x1xf32> to vector<2x3x1xf32>
    %6 = vector.extract_strided_slice %4 {offsets = [0, 0, 0], sizes = [2, 3, 1], strides = [1, 1, 1]} : vector<2x3x3xf32> to vector<2x3x1xf32>
    %7 = vector.extract_strided_slice %0 {offsets = [0, 0, 0], sizes = [2, 1, 256], strides = [1, 1, 1]} : vector<2x3x256xf32> to vector<2x1x256xf32>
    %8 = vector.broadcast %6 : vector<2x3x1xf32> to vector<2x3x256xf32>
    %9 = vector.broadcast %7 : vector<2x1x256xf32> to vector<2x3x256xf32>
    %10 = arith.mulf %8, %9 : vector<2x3x256xf32>
    %11 = vector.extract_strided_slice %4 {offsets = [0, 0, 1], sizes = [2, 3, 1], strides = [1, 1, 1]} : vector<2x3x3xf32> to vector<2x3x1xf32>
    %12 = vector.extract_strided_slice %0 {offsets = [0, 1, 0], sizes = [2, 1, 256], strides = [1, 1, 1]} : vector<2x3x256xf32> to vector<2x1x256xf32>
    %13 = vector.broadcast %11 : vector<2x3x1xf32> to vector<2x3x256xf32>
    %14 = vector.broadcast %12 : vector<2x1x256xf32> to vector<2x3x256xf32>
    %15 = arith.mulf %13, %14 : vector<2x3x256xf32>
    %16 = arith.addf %10, %15 : vector<2x3x256xf32>
    %17 = vector.extract_strided_slice %4 {offsets = [0, 0, 2], sizes = [2, 3, 1], strides = [1, 1, 1]} : vector<2x3x3xf32> to vector<2x3x1xf32>
    %18 = vector.extract_strided_slice %0 {offsets = [0, 2, 0], sizes = [2, 1, 256], strides = [1, 1, 1]} : vector<2x3x256xf32> to vector<2x1x256xf32>
    %19 = vector.broadcast %17 : vector<2x3x1xf32> to vector<2x3x256xf32>
    %20 = vector.broadcast %18 : vector<2x1x256xf32> to vector<2x3x256xf32>
    %21 = arith.mulf %19, %20 : vector<2x3x256xf32>
    %22 = arith.addf %16, %21 : vector<2x3x256xf32>
    %23 = vector.broadcast %5 : vector<2x3x1xf32> to vector<2x3x256xf32>
    %24 = arith.addf %22, %23 : vector<2x3x256xf32>
    %25 = vector.extract_strided_slice %3 {offsets = [0, 0, 0], sizes = [2, 1, 256], strides = [1, 1, 1]} : vector<2x4x256xf32> to vector<2x1x256xf32>
    %26 = arith.subf %24, %0 : vector<2x3x256xf32>
    %27 = vector.broadcast %25 : vector<2x1x256xf32> to vector<2x3x256xf32>
    %28 = arith.mulf %27, %26 : vector<2x3x256xf32>
    %29 = arith.addf %0, %28 : vector<2x3x256xf32>
    %30 = arith.truncf %29 : vector<2x3x256xf32> to vector<2x3x256xbf16>
    %c0_11 = arith.constant 0 : index
    %c0_12 = arith.constant 0 : index
    %c0_13 = arith.constant 0 : index
    %31 = vector.load %arg6[%c0_11, %c0_12, %c0_13] : memref<2x12x256xbf16, #tpu.memory_space<vmem>>, vector<2x3x256xbf16>
    tpu.vector_store %arg6[%c0_11, %c0_12, %c0_13], %30 {strides = array<i32>} : memref<2x12x256xbf16, #tpu.memory_space<vmem>>, vector<2x3x256xbf16>,
    %32 = arith.addf %0, %28 : vector<2x3x256xf32>
    %33 = vector.extract_strided_slice %1 {offsets = [0, 3, 0], sizes = [2, 3, 3], strides = [1, 1, 1]} : vector<2x12x3xf32> to vector<2x3x3xf32>
    %34 = vector.extract_strided_slice %2 {offsets = [0, 3, 0], sizes = [2, 3, 1], strides = [1, 1, 1]} : vector<2x12x1xf32> to vector<2x3x1xf32>
    %35 = vector.extract_strided_slice %33 {offsets = [0, 0, 0], sizes = [2, 3, 1], strides = [1, 1, 1]} : vector<2x3x3xf32> to vector<2x3x1xf32>
    %36 = vector.extract_strided_slice %0 {offsets = [0, 0, 0], sizes = [2, 1, 256], strides = [1, 1, 1]} : vector<2x3x256xf32> to vector<2x1x256xf32>
    %37 = vector.broadcast %35 : vector<2x3x1xf32> to vector<2x3x256xf32>
    %38 = vector.broadcast %36 : vector<2x1x256xf32> to vector<2x3x256xf32>
    %39 = arith.mulf %37, %38 : vector<2x3x256xf32>
    %40 = vector.extract_strided_slice %33 {offsets = [0, 0, 1], sizes = [2, 3, 1], strides = [1, 1, 1]} : vector<2x3x3xf32> to vector<2x3x1xf32>
    %41 = vector.extract_strided_slice %0 {offsets = [0, 1, 0], sizes = [2, 1, 256], strides = [1, 1, 1]} : vector<2x3x256xf32> to vector<2x1x256xf32>
    %42 = vector.broadcast %40 : vector<2x3x1xf32> to vector<2x3x256xf32>
    %43 = vector.broadcast %41 : vector<2x1x256xf32> to vector<2x3x256xf32>
    %44 = arith.mulf %42, %43 : vector<2x3x256xf32>
    %45 = arith.addf %39, %44 : vector<2x3x256xf32>
    %46 = vector.extract_strided_slice %33 {offsets = [0, 0, 2], sizes = [2, 3, 1], strides = [1, 1, 1]} : vector<2x3x3xf32> to vector<2x3x1xf32>
    %47 = vector.extract_strided_slice %0 {offsets = [0, 2, 0], sizes = [2, 1, 256], strides = [1, 1, 1]} : vector<2x3x256xf32> to vector<2x1x256xf32>
    %48 = vector.broadcast %46 : vector<2x3x1xf32> to vector<2x3x256xf32>
    %49 = vector.broadcast %47 : vector<2x1x256xf32> to vector<2x3x256xf32>
    %50 = arith.mulf %48, %49 : vector<2x3x256xf32>
    %51 = arith.addf %45, %50 : vector<2x3x256xf32>
    %52 = vector.broadcast %34 : vector<2x3x1xf32> to vector<2x3x256xf32>
    %53 = arith.addf %51, %52 : vector<2x3x256xf32>
    %54 = vector.extract_strided_slice %3 {offsets = [0, 1, 0], sizes = [2, 1, 256], strides = [1, 1, 1]} : vector<2x4x256xf32> to vector<2x1x256xf32>
    %55 = arith.subf %53, %0 : vector<2x3x256xf32>
    %56 = vector.broadcast %54 : vector<2x1x256xf32> to vector<2x3x256xf32>
    %57 = arith.mulf %56, %55 : vector<2x3x256xf32>
    %58 = arith.addf %0, %57 : vector<2x3x256xf32>
    %59 = arith.truncf %58 : vector<2x3x256xf32> to vector<2x3x256xbf16>
    %c0_14 = arith.constant 0 : index
    %c3 = arith.constant 3 : index
    %c0_15 = arith.constant 0 : index
    %60 = vector.load %arg6[%c0_14, %c3, %c0_15] : memref<2x12x256xbf16, #tpu.memory_space<vmem>>, vector<2x3x256xbf16>
    tpu.vector_store %arg6[%c0_14, %c3, %c0_15], %59 {strides = array<i32>} : memref<2x12x256xbf16, #tpu.memory_space<vmem>>, vector<2x3x256xbf16>,
    %61 = arith.addf %32, %57 : vector<2x3x256xf32>
    %62 = vector.extract_strided_slice %1 {offsets = [0, 6, 0], sizes = [2, 3, 3], strides = [1, 1, 1]} : vector<2x12x3xf32> to vector<2x3x3xf32>
    %63 = vector.extract_strided_slice %2 {offsets = [0, 6, 0], sizes = [2, 3, 1], strides = [1, 1, 1]} : vector<2x12x1xf32> to vector<2x3x1xf32>
    %64 = vector.extract_strided_slice %62 {offsets = [0, 0, 0], sizes = [2, 3, 1], strides = [1, 1, 1]} : vector<2x3x3xf32> to vector<2x3x1xf32>
    %65 = vector.extract_strided_slice %0 {offsets = [0, 0, 0], sizes = [2, 1, 256], strides = [1, 1, 1]} : vector<2x3x256xf32> to vector<2x1x256xf32>
    %66 = vector.broadcast %64 : vector<2x3x1xf32> to vector<2x3x256xf32>
    %67 = vector.broadcast %65 : vector<2x1x256xf32> to vector<2x3x256xf32>
    %68 = arith.mulf %66, %67 : vector<2x3x256xf32>
    %69 = vector.extract_strided_slice %62 {offsets = [0, 0, 1], sizes = [2, 3, 1], strides = [1, 1, 1]} : vector<2x3x3xf32> to vector<2x3x1xf32>
    %70 = vector.extract_strided_slice %0 {offsets = [0, 1, 0], sizes = [2, 1, 256], strides = [1, 1, 1]} : vector<2x3x256xf32> to vector<2x1x256xf32>
    %71 = vector.broadcast %69 : vector<2x3x1xf32> to vector<2x3x256xf32>
    %72 = vector.broadcast %70 : vector<2x1x256xf32> to vector<2x3x256xf32>
    %73 = arith.mulf %71, %72 : vector<2x3x256xf32>
    %74 = arith.addf %68, %73 : vector<2x3x256xf32>
    %75 = vector.extract_strided_slice %62 {offsets = [0, 0, 2], sizes = [2, 3, 1], strides = [1, 1, 1]} : vector<2x3x3xf32> to vector<2x3x1xf32>
    %76 = vector.extract_strided_slice %0 {offsets = [0, 2, 0], sizes = [2, 1, 256], strides = [1, 1, 1]} : vector<2x3x256xf32> to vector<2x1x256xf32>
    %77 = vector.broadcast %75 : vector<2x3x1xf32> to vector<2x3x256xf32>
    %78 = vector.broadcast %76 : vector<2x1x256xf32> to vector<2x3x256xf32>
    %79 = arith.mulf %77, %78 : vector<2x3x256xf32>
    %80 = arith.addf %74, %79 : vector<2x3x256xf32>
    %81 = vector.broadcast %63 : vector<2x3x1xf32> to vector<2x3x256xf32>
    %82 = arith.addf %80, %81 : vector<2x3x256xf32>
    %83 = vector.extract_strided_slice %3 {offsets = [0, 2, 0], sizes = [2, 1, 256], strides = [1, 1, 1]} : vector<2x4x256xf32> to vector<2x1x256xf32>
    %84 = arith.subf %82, %0 : vector<2x3x256xf32>
    %85 = vector.broadcast %83 : vector<2x1x256xf32> to vector<2x3x256xf32>
    %86 = arith.mulf %85, %84 : vector<2x3x256xf32>
    %87 = arith.addf %0, %86 : vector<2x3x256xf32>
    %88 = arith.truncf %87 : vector<2x3x256xf32> to vector<2x3x256xbf16>
    %c0_16 = arith.constant 0 : index
    %c6 = arith.constant 6 : index
    %c0_17 = arith.constant 0 : index
    %89 = vector.load %arg6[%c0_16, %c6, %c0_17] : memref<2x12x256xbf16, #tpu.memory_space<vmem>>, vector<2x3x256xbf16>
    tpu.vector_store %arg6[%c0_16, %c6, %c0_17], %88 {strides = array<i32>} : memref<2x12x256xbf16, #tpu.memory_space<vmem>>, vector<2x3x256xbf16>,
    %90 = arith.addf %61, %86 : vector<2x3x256xf32>
    %91 = vector.extract_strided_slice %1 {offsets = [0, 9, 0], sizes = [2, 3, 3], strides = [1, 1, 1]} : vector<2x12x3xf32> to vector<2x3x3xf32>
    %92 = vector.extract_strided_slice %2 {offsets = [0, 9, 0], sizes = [2, 3, 1], strides = [1, 1, 1]} : vector<2x12x1xf32> to vector<2x3x1xf32>
    %93 = vector.extract_strided_slice %91 {offsets = [0, 0, 0], sizes = [2, 3, 1], strides = [1, 1, 1]} : vector<2x3x3xf32> to vector<2x3x1xf32>
    %94 = vector.extract_strided_slice %0 {offsets = [0, 0, 0], sizes = [2, 1, 256], strides = [1, 1, 1]} : vector<2x3x256xf32> to vector<2x1x256xf32>
    %95 = vector.broadcast %93 : vector<2x3x1xf32> to vector<2x3x256xf32>
    %96 = vector.broadcast %94 : vector<2x1x256xf32> to vector<2x3x256xf32>
    %97 = arith.mulf %95, %96 : vector<2x3x256xf32>
    %98 = vector.extract_strided_slice %91 {offsets = [0, 0, 1], sizes = [2, 3, 1], strides = [1, 1, 1]} : vector<2x3x3xf32> to vector<2x3x1xf32>
    %99 = vector.extract_strided_slice %0 {offsets = [0, 1, 0], sizes = [2, 1, 256], strides = [1, 1, 1]} : vector<2x3x256xf32> to vector<2x1x256xf32>
    %100 = vector.broadcast %98 : vector<2x3x1xf32> to vector<2x3x256xf32>
    %101 = vector.broadcast %99 : vector<2x1x256xf32> to vector<2x3x256xf32>
    %102 = arith.mulf %100, %101 : vector<2x3x256xf32>
    %103 = arith.addf %97, %102 : vector<2x3x256xf32>
    %104 = vector.extract_strided_slice %91 {offsets = [0, 0, 2], sizes = [2, 3, 1], strides = [1, 1, 1]} : vector<2x3x3xf32> to vector<2x3x1xf32>
    %105 = vector.extract_strided_slice %0 {offsets = [0, 2, 0], sizes = [2, 1, 256], strides = [1, 1, 1]} : vector<2x3x256xf32> to vector<2x1x256xf32>
    %106 = vector.broadcast %104 : vector<2x3x1xf32> to vector<2x3x256xf32>
    %107 = vector.broadcast %105 : vector<2x1x256xf32> to vector<2x3x256xf32>
    %108 = arith.mulf %106, %107 : vector<2x3x256xf32>
    %109 = arith.addf %103, %108 : vector<2x3x256xf32>
    %110 = vector.broadcast %92 : vector<2x3x1xf32> to vector<2x3x256xf32>
    %111 = arith.addf %109, %110 : vector<2x3x256xf32>
    %112 = vector.extract_strided_slice %3 {offsets = [0, 3, 0], sizes = [2, 1, 256], strides = [1, 1, 1]} : vector<2x4x256xf32> to vector<2x1x256xf32>
    %113 = arith.subf %111, %0 : vector<2x3x256xf32>
    %114 = vector.broadcast %112 : vector<2x1x256xf32> to vector<2x3x256xf32>
    %115 = arith.mulf %114, %113 : vector<2x3x256xf32>
    %116 = arith.addf %0, %115 : vector<2x3x256xf32>
    %117 = arith.truncf %116 : vector<2x3x256xf32> to vector<2x3x256xbf16>
    %c0_18 = arith.constant 0 : index
    %c9 = arith.constant 9 : index
    %c0_19 = arith.constant 0 : index
    %118 = vector.load %arg6[%c0_18, %c9, %c0_19] : memref<2x12x256xbf16, #tpu.memory_space<vmem>>, vector<2x3x256xbf16>
    tpu.vector_store %arg6[%c0_18, %c9, %c0_19], %117 {strides = array<i32>} : memref<2x12x256xbf16, #tpu.memory_space<vmem>>, vector<2x3x256xbf16>,
    %119 = arith.addf %90, %115 : vector<2x3x256xf32>
    %c0_20 = arith.constant 0 : index
    %c0_21 = arith.constant 0 : index
    %c0_22 = arith.constant 0 : index
    %120 = vector.load %arg5[%c0_20, %c0_21, %c0_22] : memref<2x3x256xf32, #tpu.memory_space<vmem>>, vector<2x3x256xf32>
    tpu.vector_store %arg5[%c0_20, %c0_21, %c0_22], %119 {strides = array<i32>} : memref<2x3x256xf32, #tpu.memory_space<vmem>>, vector<2x3x256xf32>,
    return
  }
  func.func @transform_0(%arg0: i32) -> (i32, i32, i32) {
    %c0_i32 = arith.constant 0 : i32
    %c0_i32_0 = arith.constant 0 : i32
    %c0_i32_1 = arith.constant 0 : i32
    %c0_i32_2 = arith.constant 0 : i32
    return %c0_i32, %c0_i32_0, %c0_i32_1 : i32, i32, i32
  }
  func.func @transform_1(%arg0: i32) -> (i32, i32, i32) {
    %c0_i32 = arith.constant 0 : i32
    %c0_i32_0 = arith.constant 0 : i32
    %c0_i32_1 = arith.constant 0 : i32
    %c0_i32_2 = arith.constant 0 : i32
    return %c0_i32, %c0_i32_0, %c0_i32_1 : i32, i32, i32
  }
  func.func @transform_2(%arg0: i32) -> (i32, i32, i32) {
    %c0_i32 = arith.constant 0 : i32
    %c0_i32_0 = arith.constant 0 : i32
    %c0_i32_1 = arith.constant 0 : i32
    return %c0_i32, %c0_i32_0, %arg0 : i32, i32, i32
  }
  func.func @transform_3(%arg0: i32) -> (i32, i32, i32) {
    %c0_i32 = arith.constant 0 : i32
    %c0_i32_0 = arith.constant 0 : i32
    %c0_i32_1 = arith.constant 0 : i32
    return %c0_i32, %c0_i32_0, %arg0 : i32, i32, i32
  }
  func.func @transform_4(%arg0: i32) -> (i32, i32, i32) {
    %c0_i32 = arith.constant 0 : i32
    %c0_i32_0 = arith.constant 0 : i32
    %c0_i32_1 = arith.constant 0 : i32
    return %c0_i32, %c0_i32_0, %arg0 : i32, i32, i32
  }
  func.func @transform_5(%arg0: i32) -> (i32, i32, i32) {
    %c0_i32 = arith.constant 0 : i32
    %c0_i32_0 = arith.constant 0 : i32
    %c0_i32_1 = arith.constant 0 : i32
    return %c0_i32, %c0_i32_0, %arg0 : i32, i32, i32
  }
}

</mosaic_0001>

<llo_original>
// kernel: rsfnet_maskin_forward.3
$region0: #{rsfnet_maskin_forward.3}
  #allocation0 [shape = 'u32[]', space=smem, size = 0x4, offset = 0x4, fixed_abs, tag = 'smem constant byte address 0x4 - core index']
  #allocation1 [shape = 'u32[144,128]{1,0:T(1,128)}', space=vmem, size = 0x12000, scoped, tag = 'internal scratch']
  %s0 = inlined_call_operand.vmem [shape: bf16[2,63,32400], index: 0, kind: input, shape index: {}]
  %s1 = inlined_call_operand.vmem [shape: bf16[16,63], index: 1, kind: input, shape index: {}]
  %s2 = inlined_call_operand.vmem [shape: f32[16,1], index: 2, kind: input, shape index: {}]
  %s3 = inlined_call_operand.vmem [shape: bf16[2,16,32400], index: 3, kind: output, shape index: {}]
  %s4 = sld [smem:[#allocation0]]
  $region173: #{rsfnet_maskin_forward.3} parent=0
    _
  %s6 = ssub.s32 1, %s4
  %s7 = scalar_select 0, %s6, %s4
  $region1: #{rsfnet_maskin_forward.3} parent=0
    #allocation2 [shape = 'u8[2097152]{0}', space=vmem, size = 0x200000, scoped, tag = 'input window, operand 0']
    #allocation3 [shape = 'u8[524288]{0}', space=vmem, size = 0x80000, scoped, tag = 'output window, operand 0']
    loop: start=0, step=1, limit=10
    $region2: #{rsfnet_maskin_forward.3} parent=1 // loop_pre_header
      _
    $region3: #{rsfnet_maskin_forward.3} parent=1 // loop_header
      %s9 = sphi 0, %s13
      %p10 = scmp.ge.s32.totalorder %s9, 10
      %s16 = sphi 0, %s28
      %s17 = sphi 0, %s24
      %s18 = sphi 0, %s16
      %s19 = sphi 0, %s17
      %s20 = sphi 0, %s18
      %s21 = sphi 0, %s19
      %s33 = sphi 0, %s35
      %s36 = sphi 0, %s33
      %s37 = sphi 0, %s36
      %s53 = sphi 0, %s37
      %s57 = sphi 0, %s57
      %s59 = sphi 0, %s57
      %s60 = sphi 0, %s59
      %s74 = sphi 0, %s60
      %s78 = sphi 0, %s78
      %s80 = sphi 0, %s78
      %s81 = sphi 0, %s80
      %s95 = sphi 0, %s81
      %s103 = sphi 0, %s105
      %s106 = sphi 0, %s103
      %s107 = sphi 0, %s106
      %s123 = sphi 0, %s107
    $region4: #{rsfnet_maskin_forward.3} parent=1 // loop_header_branch
      %12 = sbr.rel (%p10) target = $region8
    $region5: #{rsfnet_maskin_forward.3} parent=1 // loop_body
      %s14 = ssub.s32 %s9, 1
      %s15 = ssub.s32 %s9, 2
      %s22 = sadd.s32 1, %s17
      %p23 = scmp.ge.s32.totalorder %s22, 4
      %s24 = scalar_select %p23, 0, %s22
      %s25 = sadd.s32 1, %s16
      %s26 = scalar_select %p23, %s25, %s16
      %p27 = scmp.ge.s32.totalorder %s26, 2
      %s28 = scalar_select %p27, 0, %s26
      %s29 = ssub.s32 %s16, %s28
      %s30 = ssub.s32 %s17, %s24
      %s31 = sor.u32 %s29, %s30
      %p32 = scmp.eq.s32.totalorder %s31, 0
      %s34 = sadd.s32 %s33, 1
      %s35 = scalar_select %p32, %s33, %s34
      %p38 = pneg %p32
      %p39 = scmp.eq.s32.totalorder %s9, 7
      %p40 = por %p38, %p39
      %p41 = scmp.ne.s32.totalorder %s33, %s36
      %p42 = scmp.eq.s32.totalorder %s9, 0
      %p43 = por %p41, %p42
      %p44 = scmp.ne.s32.totalorder %s33, %s36
      %p45 = scmp.eq.s32.totalorder %s14, 7
      %p46 = por %p44, %p45
      %p47 = scmp.ne.s32.totalorder %s36, %s37
      %p48 = scmp.eq.s32.totalorder %s14, 0
      %p49 = por %p47, %p48
      %p50 = scmp.ne.s32.totalorder %s36, %s37
      %p51 = scmp.eq.s32.totalorder %s15, 7
      %p52 = por %p50, %p51
      %p54 = scmp.ne.s32.totalorder %s37, %s53
      %p55 = scmp.eq.s32.totalorder %s15, 0
      %p56 = por %p54, %p55
      %s58 = sadd.s32 %s57, 1
      %p61 = scmp.eq.s32.totalorder %s9, 7
      %p62 = scmp.ne.s32.totalorder %s57, %s59
      %p63 = scmp.eq.s32.totalorder %s9, 0
      %p64 = por %p62, %p63
      %p65 = scmp.ne.s32.totalorder %s57, %s59
      %p66 = scmp.eq.s32.totalorder %s14, 7
      %p67 = por %p65, %p66
      %p68 = scmp.ne.s32.totalorder %s59, %s60
      %p69 = scmp.eq.s32.totalorder %s14, 0
      %p70 = por %p68, %p69
      %p71 = scmp.ne.s32.totalorder %s59, %s60
      %p72 = scmp.eq.s32.totalorder %s15, 7
      %p73 = por %p71, %p72
      %p75 = scmp.ne.s32.totalorder %s60, %s74
      %p76 = scmp.eq.s32.totalorder %s15, 0
      %p77 = por %p75, %p76
      %s79 = sadd.s32 %s78, 1
      %p82 = scmp.eq.s32.totalorder %s9, 7
      %p83 = scmp.ne.s32.totalorder %s78, %s80
      %p84 = scmp.eq.s32.totalorder %s9, 0
      %p85 = por %p83, %p84
      %p86 = scmp.ne.s32.totalorder %s78, %s80
      %p87 = scmp.eq.s32.totalorder %s14, 7
      %p88 = por %p86, %p87
      %p89 = scmp.ne.s32.totalorder %s80, %s81
      %p90 = scmp.eq.s32.totalorder %s14, 0
      %p91 = por %p89, %p90
      %p92 = scmp.ne.s32.totalorder %s80, %s81
      %p93 = scmp.eq.s32.totalorder %s15, 7
      %p94 = por %p92, %p93
      %p96 = scmp.ne.s32.totalorder %s81, %s95
      %p97 = scmp.eq.s32.totalorder %s15, 0
      %p98 = por %p96, %p97
      %s99 = ssub.s32 %s16, %s28
      %s100 = ssub.s32 %s17, %s24
      %s101 = sor.u32 %s99, %s100
      %p102 = scmp.eq.s32.totalorder %s101, 0
      %s104 = sadd.s32 %s103, 1
      %s105 = scalar_select %p102, %s103, %s104
      %p108 = pneg %p102
      %p109 = scmp.eq.s32.totalorder %s9, 7
      %p110 = por %p108, %p109
      %p111 = scmp.ne.s32.totalorder %s103, %s106
      %p112 = scmp.eq.s32.totalorder %s9, 0
      %p113 = por %p111, %p112
      %p114 = scmp.ne.s32.totalorder %s103, %s106
      %p115 = scmp.eq.s32.totalorder %s14, 7
      %p116 = por %p114, %p115
      %p117 = scmp.ne.s32.totalorder %s106, %s107
      %p118 = scmp.eq.s32.totalorder %s14, 0
      %p119 = por %p117, %p118
      %p120 = scmp.ne.s32.totalorder %s106, %s107
      %p121 = scmp.eq.s32.totalorder %s15, 7
      %p122 = por %p120, %p121
      %p124 = scmp.ne.s32.totalorder %s107, %s123
      %p125 = scmp.eq.s32.totalorder %s15, 0
      %p126 = por %p124, %p125
      %p127 = scmp.le.s32.totalorder 1, %s9
      %p128 = scmp.lt.s32.totalorder %s9, 9
      %p129 = pnand %p127, %p128
      %p130 = pneg %p129
      // Predicated region
      $region9: #{rsfnet_maskin_forward.3} parent=5 // pred_check
        _
      $region10: #{rsfnet_maskin_forward.3} parent=5 // pred_check_branch
        %132 = sbr.rel (%p129) target = $region12
      $region11: #{rsfnet_maskin_forward.3} parent=5 // pred_region
        %s133 = ssub.s32 %s9, 1
        // Predicated region
        $region13: #{rsfnet_maskin_forward.3} parent=11 // pred_check
          %p134 = pneg %p70
        $region14: #{rsfnet_maskin_forward.3} parent=11 // pred_check_branch
          %136 = sbr.rel (%p134) target = $region16
        $region15: #{rsfnet_maskin_forward.3} parent=11 // pred_region
          _
        $region16: #{rsfnet_maskin_forward.3} parent=11 // pred_fallthru
          _
        // Predicated region
        $region17: #{rsfnet_maskin_forward.3} parent=11 // pred_check
          %p137 = pneg %p91
        $region18: #{rsfnet_maskin_forward.3} parent=11 // pred_check_branch
          %139 = sbr.rel (%p137) target = $region20
        $region19: #{rsfnet_maskin_forward.3} parent=11 // pred_region
          _
        $region20: #{rsfnet_maskin_forward.3} parent=11 // pred_fallthru
          _
      $region12: #{rsfnet_maskin_forward.3} parent=5 // pred_fallthru
        _
      %p140 = scmp.lt.s32.totalorder %s9, 8
      // Predicated region
      $region21: #{rsfnet_maskin_forward.3} parent=5 // pred_check
        %p141 = pneg %p140
      $region22: #{rsfnet_maskin_forward.3} parent=5 // pred_check_branch
        %143 = sbr.rel (%p141) target = $region24
      $region23: #{rsfnet_maskin_forward.3} parent=5 // pred_region
        // Predicated region
        $region25: #{rsfnet_maskin_forward.3} parent=23 // pred_check
          %p144 = pneg %p43
        $region26: #{rsfnet_maskin_forward.3} parent=23 // pred_check_branch
          %146 = sbr.rel (%p144) target = $region28
        $region27: #{rsfnet_maskin_forward.3} parent=23 // pred_region
          %s147 = sand.u32 %s33, 1
          %s148 = sand.u32 %s33, 1
          %s149 = smul.addr %s148, 2048
          %s150 = scalar_lea.vmem [#allocation2], %s149
          %s151 = smul.u32 64, %s17
          %s152 = ssub.s32 254, %s151
          %p153 = scmp.lt.s32.totalorder %s152, 64
          %s154 = scalar_select %p153, %s152, 64
          %s155 = smul.u32 512, %s154
          %p156 = scmp.ne.s32.totalorder 0, %s155
          %s157 = smul.addr %s16, 2032
          %s158 = sadd.s32 %s151, %s157
          %s159 = smul.addr %s158, 4
          %s160 = scalar_lea.vmem %s0, %s159
          %s161 = smul.u32 %s154, 4
          // Predicated region
          $region29: #{rsfnet_maskin_forward.3} parent=27 // pred_check
            %p162 = pneg %p156
          $region30: #{rsfnet_maskin_forward.3} parent=27 // pred_check_branch
            %164 = sbr.rel (%p162) target = $region32
          $region31: #{rsfnet_maskin_forward.3} parent=27 // pred_region
            %p165 = scmp.lt.u32.totalorder %s161, 8
            %p166 = pneg %p165
            // Predicated region
            $region33: #{rsfnet_maskin_forward.3} parent=31 // pred_check
              _
            $region34: #{rsfnet_maskin_forward.3} parent=31 // pred_check_branch
              %168 = sbr.rel (%p165) target = $region36
            $region35: #{rsfnet_maskin_forward.3} parent=31 // pred_region
              %s198 = sand.u32 %s161, 7
              %p199 = scmp.eq.s32.totalorder %s198, 0
              // Predicated region
              $region48: #{rsfnet_maskin_forward.3} parent=35 // pred_check
                %p200 = pneg %p199
              $region49: #{rsfnet_maskin_forward.3} parent=35 // pred_check_branch
                %202 = sbr.rel (%p200) target = $region51
              $region50: #{rsfnet_maskin_forward.3} parent=35 // pred_region
                %s203 = sshrl.u32 %s161, 3
                %s204 = sshrl.u32 %s203, 3
                // While loop
                $region52: #{rsfnet_maskin_forward.3} parent=50 // loop_pre_header
                  _
                $region53: #{rsfnet_maskin_forward.3} parent=50 // loop_header
                  %s208 = sphi 0, %s210
                  %p209 = scmp.ge.s32.totalorder %s208, %s204
                  %s213 = sphi 0, %s346
                  %s214 = sphi %s160, %s349
                  %s215 = sphi %s150, %s350
                $region54: #{rsfnet_maskin_forward.3} parent=50 // loop_header_branch
                  %212 = sbr.rel (%p209) target = $region58
                $region55: #{rsfnet_maskin_forward.3} parent=50 // loop_body
                  %v216 = vld [vmem:[%s214] sm:$0xff]
                  %217 = vst [vmem:[%s215] sm:$0xff] %v216
                  %v218 = vld [vmem:[%s214 + $0x8] sm:$0xff]
                  %219 = vst [vmem:[%s215 + $0x8] sm:$0xff] %v218
                  %v220 = vld [vmem:[%s214 + $0x10] sm:$0xff]
                  %221 = vst [vmem:[%s215 + $0x10] sm:$0xff] %v220
                  %v222 = vld [vmem:[%s214 + $0x18] sm:$0xff]
                  %223 = vst [vmem:[%s215 + $0x18] sm:$0xff] %v222
                  %v224 = vld [vmem:[%s214 + $0x20] sm:$0xff]
                  %225 = vst [vmem:[%s215 + $0x20] sm:$0xff] %v224
                  %v226 = vld [vmem:[%s214 + $0x28] sm:$0xff]
                  %227 = vst [vmem:[%s215 + $0x28] sm:$0xff] %v226
                  %v228 = vld [vmem:[%s214 + $0x30] sm:$0xff]
                  %229 = vst [vmem:[%s215 + $0x30] sm:$0xff] %v228
                  %v230 = vld [vmem:[%s214 + $0x38] sm:$0xff]
                  %231 = vst [vmem:[%s215 + $0x38] sm:$0xff] %v230
                  %v232 = vld [vmem:[%s214 + $0x3f8] sm:$0xff]
                  %233 = vst [vmem:[%s215 + $0x100] sm:$0xff] %v232
                  %v234 = vld [vmem:[%s214 + $0x400] sm:$0xff]
                  %235 = vst [vmem:[%s215 + $0x108] sm:$0xff] %v234
                  %v236 = vld [vmem:[%s214 + $0x408] sm:$0xff]
                  %237 = vst [vmem:[%s215 + $0x110] sm:$0xff] %v236
                  %v238 = vld [vmem:[%s214 + $0x410] sm:$0xff]
                  %239 = vst [vmem:[%s215 + $0x118] sm:$0xff] %v238
                  %v240 = vld [vmem:[%s214 + $0x418] sm:$0xff]
                  %241 = vst [vmem:[%s215 + $0x120] sm:$0xff] %v240
                  %v242 = vld [vmem:[%s214 + $0x420] sm:$0xff]
                  %243 = vst [vmem:[%s215 + $0x128] sm:$0xff] %v242
                  %v244 = vld [vmem:[%s214 + $0x428] sm:$0xff]
                  %245 = vst [vmem:[%s215 + $0x130] sm:$0xff] %v244
                  %v246 = vld [vmem:[%s214 + $0x430] sm:$0xff]
                  %247 = vst [vmem:[%s215 + $0x138] sm:$0xff] %v246
                  %v248 = vld [vmem:[%s214 + $0x7f0] sm:$0xff]
                  %249 = vst [vmem:[%s215 + $0x200] sm:$0xff] %v248
                  %v250 = vld [vmem:[%s214 + $0x7f8] sm:$0xff]
                  %251 = vst [vmem:[%s215 + $0x208] sm:$0xff] %v250
                  %v252 = vld [vmem:[%s214 + $0x800] sm:$0xff]
                  %253 = vst [vmem:[%s215 + $0x210] sm:$0xff] %v252
                  %v254 = vld [vmem:[%s214 + $0x808] sm:$0xff]
                  %255 = vst [vmem:[%s215 + $0x218] sm:$0xff] %v254
                  %v256 = vld [vmem:[%s214 + $0x810] sm:$0xff]
                  %257 = vst [vmem:[%s215 + $0x220] sm:$0xff] %v256
                  %v258 = vld [vmem:[%s214 + $0x818] sm:$0xff]
                  %259 = vst [vmem:[%s215 + $0x228] sm:$0xff] %v258
                  %v260 = vld [vmem:[%s214 + $0x820] sm:$0xff]
                  %261 = vst [vmem:[%s215 + $0x230] sm:$0xff] %v260
                  %v262 = vld [vmem:[%s214 + $0x828] sm:$0xff]
                  %263 = vst [vmem:[%s215 + $0x238] sm:$0xff] %v262
                  %v264 = vld [vmem:[%s214 + $0xbe8] sm:$0xff]
                  %265 = vst [vmem:[%s215 + $0x300] sm:$0xff] %v264
                  %v266 = vld [vmem:[%s214 + $0xbf0] sm:$0xff]
                  %267 = vst [vmem:[%s215 + $0x308] sm:$0xff] %v266
                  %v268 = vld [vmem:[%s214 + $0xbf8] sm:$0xff]
                  %269 = vst [vmem:[%s215 + $0x310] sm:$0xff] %v268
                  %v270 = vld [vmem:[%s214 + $0xc00] sm:$0xff]
                  %271 = vst [vmem:[%s215 + $0x318] sm:$0xff] %v270
                  %v272 = vld [vmem:[%s214 + $0xc08] sm:$0xff]
                  %273 = vst [vmem:[%s215 + $0x320] sm:$0xff] %v272
                  %v274 = vld [vmem:[%s214 + $0xc10] sm:$0xff]
                  %275 = vst [vmem:[%s215 + $0x328] sm:$0xff] %v274
                  %v276 = vld [vmem:[%s214 + $0xc18] sm:$0xff]
                  %277 = vst [vmem:[%s215 + $0x330] sm:$0xff] %v276
                  %v278 = vld [vmem:[%s214 + $0xc20] sm:$0xff]
                  %279 = vst [vmem:[%s215 + $0x338] sm:$0xff] %v278
                  %v280 = vld [vmem:[%s214 + $0xfe0] sm:$0xff]
                  %281 = vst [vmem:[%s215 + $0x400] sm:$0xff] %v280
                  %v282 = vld [vmem:[%s214 + $0xfe8] sm:$0xff]
                  %283 = vst [vmem:[%s215 + $0x408] sm:$0xff] %v282
                  %v284 = vld [vmem:[%s214 + $0xff0] sm:$0xff]
                  %285 = vst [vmem:[%s215 + $0x410] sm:$0xff] %v284
                  %v286 = vld [vmem:[%s214 + $0xff8] sm:$0xff]
                  %287 = vst [vmem:[%s215 + $0x418] sm:$0xff] %v286
                  %v288 = vld [vmem:[%s214 + $0x1000] sm:$0xff]
                  %289 = vst [vmem:[%s215 + $0x420] sm:$0xff] %v288
                  %v290 = vld [vmem:[%s214 + $0x1008] sm:$0xff]
                  %291 = vst [vmem:[%s215 + $0x428] sm:$0xff] %v290
                  %v292 = vld [vmem:[%s214 + $0x1010] sm:$0xff]
                  %293 = vst [vmem:[%s215 + $0x430] sm:$0xff] %v292
                  %v294 = vld [vmem:[%s214 + $0x1018] sm:$0xff]
                  %295 = vst [vmem:[%s215 + $0x438] sm:$0xff] %v294
                  %v296 = vld [vmem:[%s214 + $0x13d8] sm:$0xff]
                  %297 = vst [vmem:[%s215 + $0x500] sm:$0xff] %v296
                  %v298 = vld [vmem:[%s214 + $0x13e0] sm:$0xff]
                  %299 = vst [vmem:[%s215 + $0x508] sm:$0xff] %v298
                  %v300 = vld [vmem:[%s214 + $0x13e8] sm:$0xff]
                  %301 = vst [vmem:[%s215 + $0x510] sm:$0xff] %v300
                  %v302 = vld [vmem:[%s214 + $0x13f0] sm:$0xff]
                  %303 = vst [vmem:[%s215 + $0x518] sm:$0xff] %v302
                  %v304 = vld [vmem:[%s214 + $0x13f8] sm:$0xff]
                  %305 = vst [vmem:[%s215 + $0x520] sm:$0xff] %v304
                  %v306 = vld [vmem:[%s214 + $0x1400] sm:$0xff]
                  %307 = vst [vmem:[%s215 + $0x528] sm:$0xff] %v306
                  %v308 = vld [vmem:[%s214 + $0x1408] sm:$0xff]
                  %309 = vst [vmem:[%s215 + $0x530] sm:$0xff] %v308
                  %v310 = vld [vmem:[%s214 + $0x1410] sm:$0xff]
                  %311 = vst [vmem:[%s215 + $0x538] sm:$0xff] %v310
                  %v312 = vld [vmem:[%s214 + $0x17d0] sm:$0xff]
                  %313 = vst [vmem:[%s215 + $0x600] sm:$0xff] %v312
                  %v314 = vld [vmem:[%s214 + $0x17d8] sm:$0xff]
                  %315 = vst [vmem:[%s215 + $0x608] sm:$0xff] %v314
                  %v316 = vld [vmem:[%s214 + $0x17e0] sm:$0xff]
                  %317 = vst [vmem:[%s215 + $0x610] sm:$0xff] %v316
                  %v318 = vld [vmem:[%s214 + $0x17e8] sm:$0xff]
                  %319 = vst [vmem:[%s215 + $0x618] sm:$0xff] %v318
                  %v320 = vld [vmem:[%s214 + $0x17f0] sm:$0xff]
                  %321 = vst [vmem:[%s215 + $0x620] sm:$0xff] %v320
                  %v322 = vld [vmem:[%s214 + $0x17f8] sm:$0xff]
                  %323 = vst [vmem:[%s215 + $0x628] sm:$0xff] %v322
                  %v324 = vld [vmem:[%s214 + $0x1800] sm:$0xff]
                  %325 = vst [vmem:[%s215 + $0x630] sm:$0xff] %v324
                  %v326 = vld [vmem:[%s214 + $0x1808] sm:$0xff]
                  %327 = vst [vmem:[%s215 + $0x638] sm:$0xff] %v326
                  %v328 = vld [vmem:[%s214 + $0x1bc8] sm:$0xff]
                  %329 = vst [vmem:[%s215 + $0x700] sm:$0xff] %v328
                  %v330 = vld [vmem:[%s214 + $0x1bd0] sm:$0xff]
                  %331 = vst [vmem:[%s215 + $0x708] sm:$0xff] %v330
                  %v332 = vld [vmem:[%s214 + $0x1bd8] sm:$0xff]
                  %333 = vst [vmem:[%s215 + $0x710] sm:$0xff] %v332
                  %v334 = vld [vmem:[%s214 + $0x1be0] sm:$0xff]
                  %335 = vst [vmem:[%s215 + $0x718] sm:$0xff] %v334
                  %v336 = vld [vmem:[%s214 + $0x1be8] sm:$0xff]
                  %337 = vst [vmem:[%s215 + $0x720] sm:$0xff] %v336
                  %v338 = vld [vmem:[%s214 + $0x1bf0] sm:$0xff]
                  %339 = vst [vmem:[%s215 + $0x728] sm:$0xff] %v338
                  %v340 = vld [vmem:[%s214 + $0x1bf8] sm:$0xff]
                  %341 = vst [vmem:[%s215 + $0x730] sm:$0xff] %v340
                  %v342 = vld [vmem:[%s214 + $0x1c00] sm:$0xff]
                  %343 = vst [vmem:[%s215 + $0x738] sm:$0xff] %v342
                  %s344 = sadd.s32 1, %s213
                  %p345 = scmp.ge.s32.totalorder %s344, %s204
                  %s346 = scalar_select %p345, 0, %s344
                  %s347 = smul.u32 %s346, 64
                  %s348 = smul.u32 %s346, 64
                  %s349 = scalar_lea.vmem %s160, %s347
                  %s350 = scalar_lea.vmem %s150, %s348 [#allocation2]
                $region56: #{rsfnet_maskin_forward.3} parent=50 // loop_footer
                  %s210 = sadd.s32 %s208, 1
                $region57: #{rsfnet_maskin_forward.3} parent=50 // loop_footer_branch
                  %207 = sbr.rel target = $region53
                $region58: #{rsfnet_maskin_forward.3} parent=50 // loop_exit
                  _
                %s351 = sshrl.u32 %s203, 3
                %s352 = sand.u32 %s203, 7
                %s353 = smul.u32 %s351, 8
                %s354 = smul.u32 128, %s353
                %s355 = sshra.s32 %s354, 4
                %s356 = scalar_lea.vmem %s160, %s355
                %s357 = smul.u32 128, %s353
                %s358 = sshra.s32 %s357, 4
                %s359 = scalar_lea.vmem %s150, %s358 [#allocation2]
                // While loop
                $region59: #{rsfnet_maskin_forward.3} parent=50 // loop_pre_header
                  _
                $region60: #{rsfnet_maskin_forward.3} parent=50 // loop_header
                  %s363 = sphi 0, %s365
                  %p364 = scmp.ge.s32.totalorder %s363, %s352
                  %s368 = sphi 0, %s389
                  %s369 = sphi %s356, %s392
                  %s370 = sphi %s359, %s393
                $region61: #{rsfnet_maskin_forward.3} parent=50 // loop_header_branch
                  %367 = sbr.rel (%p364) target = $region65
                $region62: #{rsfnet_maskin_forward.3} parent=50 // loop_body
                  %v371 = vld [vmem:[%s369] sm:$0xff]
                  %372 = vst [vmem:[%s370] sm:$0xff] %v371
                  %v373 = vld [vmem:[%s369 + $0x3f8] sm:$0xff]
                  %374 = vst [vmem:[%s370 + $0x100] sm:$0xff] %v373
                  %v375 = vld [vmem:[%s369 + $0x7f0] sm:$0xff]
                  %376 = vst [vmem:[%s370 + $0x200] sm:$0xff] %v375
                  %v377 = vld [vmem:[%s369 + $0xbe8] sm:$0xff]
                  %378 = vst [vmem:[%s370 + $0x300] sm:$0xff] %v377
                  %v379 = vld [vmem:[%s369 + $0xfe0] sm:$0xff]
                  %380 = vst [vmem:[%s370 + $0x400] sm:$0xff] %v379
                  %v381 = vld [vmem:[%s369 + $0x13d8] sm:$0xff]
                  %382 = vst [vmem:[%s370 + $0x500] sm:$0xff] %v381
                  %v383 = vld [vmem:[%s369 + $0x17d0] sm:$0xff]
                  %384 = vst [vmem:[%s370 + $0x600] sm:$0xff] %v383
                  %v385 = vld [vmem:[%s369 + $0x1bc8] sm:$0xff]
                  %386 = vst [vmem:[%s370 + $0x700] sm:$0xff] %v385
                  %s387 = sadd.s32 1, %s368
                  %p388 = scmp.ge.s32.totalorder %s387, %s352
                  %s389 = scalar_select %p388, 0, %s387
                  %s390 = smul.u32 %s389, 8
                  %s391 = smul.u32 %s389, 8
                  %s392 = scalar_lea.vmem %s356, %s390
                  %s393 = scalar_lea.vmem %s359, %s391 [#allocation2]
                $region63: #{rsfnet_maskin_forward.3} parent=50 // loop_footer
                  %s365 = sadd.s32 %s363, 1
                $region64: #{rsfnet_maskin_forward.3} parent=50 // loop_footer_branch
                  %362 = sbr.rel target = $region60
                $region65: #{rsfnet_maskin_forward.3} parent=50 // loop_exit
                  _
              $region51: #{rsfnet_maskin_forward.3} parent=35 // pred_fallthru
                _
              %p394 = pneg %p199
              // Predicated region
              $region66: #{rsfnet_maskin_forward.3} parent=35 // pred_check
                _
              $region67: #{rsfnet_maskin_forward.3} parent=35 // pred_check_branch
                %396 = sbr.rel (%p199) target = $region69
              $region68: #{rsfnet_maskin_forward.3} parent=35 // pred_region
                %s397 = sand.u32 %s161, 7
                %s398 = ssub.s32 %s161, %s397
                %s399 = scalar_lea.vmem %s160, %s398
                %s400 = ssub.s32 %s161, %s397
                %s401 = scalar_lea.vmem %s150, %s400 [#allocation2]
                %s402 = sshrl.u32 %s161, 3
                %s403 = sshrl.u32 %s402, 3
                // While loop
                $region70: #{rsfnet_maskin_forward.3} parent=68 // loop_pre_header
                  _
                $region71: #{rsfnet_maskin_forward.3} parent=68 // loop_header
                  %s407 = sphi 0, %s409
                  %p408 = scmp.ge.s32.totalorder %s407, %s403
                  %s412 = sphi 0, %s545
                  %s413 = sphi %s160, %s548
                  %s414 = sphi %s150, %s549
                $region72: #{rsfnet_maskin_forward.3} parent=68 // loop_header_branch
                  %411 = sbr.rel (%p408) target = $region76
                $region73: #{rsfnet_maskin_forward.3} parent=68 // loop_body
                  %v415 = vld [vmem:[%s413] sm:$0xff]
                  %416 = vst [vmem:[%s414] sm:$0xff] %v415
                  %v417 = vld [vmem:[%s413 + $0x8] sm:$0xff]
                  %418 = vst [vmem:[%s414 + $0x8] sm:$0xff] %v417
                  %v419 = vld [vmem:[%s413 + $0x10] sm:$0xff]
                  %420 = vst [vmem:[%s414 + $0x10] sm:$0xff] %v419
                  %v421 = vld [vmem:[%s413 + $0x18] sm:$0xff]
                  %422 = vst [vmem:[%s414 + $0x18] sm:$0xff] %v421
                  %v423 = vld [vmem:[%s413 + $0x20] sm:$0xff]
                  %424 = vst [vmem:[%s414 + $0x20] sm:$0xff] %v423
                  %v425 = vld [vmem:[%s413 + $0x28] sm:$0xff]
                  %426 = vst [vmem:[%s414 + $0x28] sm:$0xff] %v425
                  %v427 = vld [vmem:[%s413 + $0x30] sm:$0xff]
                  %428 = vst [vmem:[%s414 + $0x30] sm:$0xff] %v427
                  %v429 = vld [vmem:[%s413 + $0x38] sm:$0xff]
                  %430 = vst [vmem:[%s414 + $0x38] sm:$0xff] %v429
                  %v431 = vld [vmem:[%s413 + $0x3f8] sm:$0xff]
                  %432 = vst [vmem:[%s414 + $0x100] sm:$0xff] %v431
                  %v433 = vld [vmem:[%s413 + $0x400] sm:$0xff]
                  %434 = vst [vmem:[%s414 + $0x108] sm:$0xff] %v433
                  %v435 = vld [vmem:[%s413 + $0x408] sm:$0xff]
                  %436 = vst [vmem:[%s414 + $0x110] sm:$0xff] %v435
                  %v437 = vld [vmem:[%s413 + $0x410] sm:$0xff]
                  %438 = vst [vmem:[%s414 + $0x118] sm:$0xff] %v437
                  %v439 = vld [vmem:[%s413 + $0x418] sm:$0xff]
                  %440 = vst [vmem:[%s414 + $0x120] sm:$0xff] %v439
                  %v441 = vld [vmem:[%s413 + $0x420] sm:$0xff]
                  %442 = vst [vmem:[%s414 + $0x128] sm:$0xff] %v441
                  %v443 = vld [vmem:[%s413 + $0x428] sm:$0xff]
                  %444 = vst [vmem:[%s414 + $0x130] sm:$0xff] %v443
                  %v445 = vld [vmem:[%s413 + $0x430] sm:$0xff]
                  %446 = vst [vmem:[%s414 + $0x138] sm:$0xff] %v445
                  %v447 = vld [vmem:[%s413 + $0x7f0] sm:$0xff]
                  %448 = vst [vmem:[%s414 + $0x200] sm:$0xff] %v447
                  %v449 = vld [vmem:[%s413 + $0x7f8] sm:$0xff]
                  %450 = vst [vmem:[%s414 + $0x208] sm:$0xff] %v449
                  %v451 = vld [vmem:[%s413 + $0x800] sm:$0xff]
                  %452 = vst [vmem:[%s414 + $0x210] sm:$0xff] %v451
                  %v453 = vld [vmem:[%s413 + $0x808] sm:$0xff]
                  %454 = vst [vmem:[%s414 + $0x218] sm:$0xff] %v453
                  %v455 = vld [vmem:[%s413 + $0x810] sm:$0xff]
                  %456 = vst [vmem:[%s414 + $0x220] sm:$0xff] %v455
                  %v457 = vld [vmem:[%s413 + $0x818] sm:$0xff]
                  %458 = vst [vmem:[%s414 + $0x228] sm:$0xff] %v457
                  %v459 = vld [vmem:[%s413 + $0x820] sm:$0xff]
                  %460 = vst [vmem:[%s414 + $0x230] sm:$0xff] %v459
                  %v461 = vld [vmem:[%s413 + $0x828] sm:$0xff]
                  %462 = vst [vmem:[%s414 + $0x238] sm:$0xff] %v461
                  %v463 = vld [vmem:[%s413 + $0xbe8] sm:$0xff]
                  %464 = vst [vmem:[%s414 + $0x300] sm:$0xff] %v463
                  %v465 = vld [vmem:[%s413 + $0xbf0] sm:$0xff]
                  %466 = vst [vmem:[%s414 + $0x308] sm:$0xff] %v465
                  %v467 = vld [vmem:[%s413 + $0xbf8] sm:$0xff]
                  %468 = vst [vmem:[%s414 + $0x310] sm:$0xff] %v467
                  %v469 = vld [vmem:[%s413 + $0xc00] sm:$0xff]
                  %470 = vst [vmem:[%s414 + $0x318] sm:$0xff] %v469
                  %v471 = vld [vmem:[%s413 + $0xc08] sm:$0xff]
                  %472 = vst [vmem:[%s414 + $0x320] sm:$0xff] %v471
                  %v473 = vld [vmem:[%s413 + $0xc10] sm:$0xff]
                  %474 = vst [vmem:[%s414 + $0x328] sm:$0xff] %v473
                  %v475 = vld [vmem:[%s413 + $0xc18] sm:$0xff]
                  %476 = vst [vmem:[%s414 + $0x330] sm:$0xff] %v475
                  %v477 = vld [vmem:[%s413 + $0xc20] sm:$0xff]
                  %478 = vst [vmem:[%s414 + $0x338] sm:$0xff] %v477
                  %v479 = vld [vmem:[%s413 + $0xfe0] sm:$0xff]
                  %480 = vst [vmem:[%s414 + $0x400] sm:$0xff] %v479
                  %v481 = vld [vmem:[%s413 + $0xfe8] sm:$0xff]
                  %482 = vst [vmem:[%s414 + $0x408] sm:$0xff] %v481
                  %v483 = vld [vmem:[%s413 + $0xff0] sm:$0xff]
                  %484 = vst [vmem:[%s414 + $0x410] sm:$0xff] %v483
                  %v485 = vld [vmem:[%s413 + $0xff8] sm:$0xff]
                  %486 = vst [vmem:[%s414 + $0x418] sm:$0xff] %v485
                  %v487 = vld [vmem:[%s413 + $0x1000] sm:$0xff]
                  %488 = vst [vmem:[%s414 + $0x420] sm:$0xff] %v487
                  %v489 = vld [vmem:[%s413 + $0x1008] sm:$0xff]
                  %490 = vst [vmem:[%s414 + $0x428] sm:$0xff] %v489
                  %v491 = vld [vmem:[%s413 + $0x1010] sm:$0xff]
                  %492 = vst [vmem:[%s414 + $0x430] sm:$0xff] %v491
                  %v493 = vld [vmem:[%s413 + $0x1018] sm:$0xff]
                  %494 = vst [vmem:[%s414 + $0x438] sm:$0xff] %v493
                  %v495 = vld [vmem:[%s413 + $0x13d8] sm:$0xff]
                  %496 = vst [vmem:[%s414 + $0x500] sm:$0xff] %v495
                  %v497 = vld [vmem:[%s413 + $0x13e0] sm:$0xff]
                  %498 = vst [vmem:[%s414 + $0x508] sm:$0xff] %v497
                  %v499 = vld [vmem:[%s413 + $0x13e8] sm:$0xff]
                  %500 = vst [vmem:[%s414 + $0x510] sm:$0xff] %v499
                  %v501 = vld [vmem:[%s413 + $0x13f0] sm:$0xff]
                  %502 = vst [vmem:[%s414 + $0x518] sm:$0xff] %v501
                  %v503 = vld [vmem:[%s413 + $0x13f8] sm:$0xff]
                  %504 = vst [vmem:[%s414 + $0x520] sm:$0xff] %v503
                  %v505 = vld [vmem:[%s413 + $0x1400] sm:$0xff]
                  %506 = vst [vmem:[%s414 + $0x528] sm:$0xff] %v505
                  %v507 = vld [vmem:[%s413 + $0x1408] sm:$0xff]
                  %508 = vst [vmem:[%s414 + $0x530] sm:$0xff] %v507
                  %v509 = vld [vmem:[%s413 + $0x1410] sm:$0xff]
                  %510 = vst [vmem:[%s414 + $0x538] sm:$0xff] %v509
                  %v511 = vld [vmem:[%s413 + $0x17d0] sm:$0xff]
                  %512 = vst [vmem:[%s414 + $0x600] sm:$0xff] %v511
                  %v513 = vld [vmem:[%s413 + $0x17d8] sm:$0xff]
                  %514 = vst [vmem:[%s414 + $0x608] sm:$0xff] %v513
                  %v515 = vld [vmem:[%s413 + $0x17e0] sm:$0xff]
                  %516 = vst [vmem:[%s414 + $0x610] sm:$0xff] %v515
                  %v517 = vld [vmem:[%s413 + $0x17e8] sm:$0xff]
                  %518 = vst [vmem:[%s414 + $0x618] sm:$0xff] %v517
                  %v519 = vld [vmem:[%s413 + $0x17f0] sm:$0xff]
                  %520 = vst [vmem:[%s414 + $0x620] sm:$0xff] %v519
                  %v521 = vld [vmem:[%s413 + $0x17f8] sm:$0xff]
                  %522 = vst [vmem:[%s414 + $0x628] sm:$0xff] %v521
                  %v523 = vld [vmem:[%s413 + $0x1800] sm:$0xff]
                  %524 = vst [vmem:[%s414 + $0x630] sm:$0xff] %v523
                  %v525 = vld [vmem:[%s413 + $0x1808] sm:$0xff]
                  %526 = vst [vmem:[%s414 + $0x638] sm:$0xff] %v525
                  %v527 = vld [vmem:[%s413 + $0x1bc8] sm:$0xff]
                  %528 = vst [vmem:[%s414 + $0x700] sm:$0xff] %v527
                  %v529 = vld [vmem:[%s413 + $0x1bd0] sm:$0xff]
                  %530 = vst [vmem:[%s414 + $0x708] sm:$0xff] %v529
                  %v531 = vld [vmem:[%s413 + $0x1bd8] sm:$0xff]
                  %532 = vst [vmem:[%s414 + $0x710] sm:$0xff] %v531
                  %v533 = vld [vmem:[%s413 + $0x1be0] sm:$0xff]
                  %534 = vst [vmem:[%s414 + $0x718] sm:$0xff] %v533
                  %v535 = vld [vmem:[%s413 + $0x1be8] sm:$0xff]
                  %536 = vst [vmem:[%s414 + $0x720] sm:$0xff] %v535
                  %v537 = vld [vmem:[%s413 + $0x1bf0] sm:$0xff]
                  %538 = vst [vmem:[%s414 + $0x728] sm:$0xff] %v537
                  %v539 = vld [vmem:[%s413 + $0x1bf8] sm:$0xff]
                  %540 = vst [vmem:[%s414 + $0x730] sm:$0xff] %v539
                  %v541 = vld [vmem:[%s413 + $0x1c00] sm:$0xff]
                  %542 = vst [vmem:[%s414 + $0x738] sm:$0xff] %v541
                  %s543 = sadd.s32 1, %s412
                  %p544 = scmp.ge.s32.totalorder %s543, %s403
                  %s545 = scalar_select %p544, 0, %s543
                  %s546 = smul.u32 %s545, 64
                  %s547 = smul.u32 %s545, 64
                  %s548 = scalar_lea.vmem %s160, %s546
                  %s549 = scalar_lea.vmem %s150, %s547 [#allocation2]
                $region74: #{rsfnet_maskin_forward.3} parent=68 // loop_footer
                  %s409 = sadd.s32 %s407, 1
                $region75: #{rsfnet_maskin_forward.3} parent=68 // loop_footer_branch
                  %406 = sbr.rel target = $region71
                $region76: #{rsfnet_maskin_forward.3} parent=68 // loop_exit
                  _
                %s550 = sshrl.u32 %s402, 3
                %s551 = sand.u32 %s402, 7
                %s552 = smul.u32 %s550, 8
                %s553 = smul.u32 128, %s552
                %s554 = sshra.s32 %s553, 4
                %s555 = scalar_lea.vmem %s160, %s554
                %s556 = smul.u32 128, %s552
                %s557 = sshra.s32 %s556, 4
                %s558 = scalar_lea.vmem %s150, %s557 [#allocation2]
                // While loop
                $region77: #{rsfnet_maskin_forward.3} parent=68 // loop_pre_header
                  _
                $region78: #{rsfnet_maskin_forward.3} parent=68 // loop_header
                  %s562 = sphi 0, %s564
                  %p563 = scmp.ge.s32.totalorder %s562, %s551
                  %s567 = sphi 0, %s588
                  %s568 = sphi %s555, %s591
                  %s569 = sphi %s558, %s592
                $region79: #{rsfnet_maskin_forward.3} parent=68 // loop_header_branch
                  %566 = sbr.rel (%p563) target = $region83
                $region80: #{rsfnet_maskin_forward.3} parent=68 // loop_body
                  %v570 = vld [vmem:[%s568] sm:$0xff]
                  %571 = vst [vmem:[%s569] sm:$0xff] %v570
                  %v572 = vld [vmem:[%s568 + $0x3f8] sm:$0xff]
                  %573 = vst [vmem:[%s569 + $0x100] sm:$0xff] %v572
                  %v574 = vld [vmem:[%s568 + $0x7f0] sm:$0xff]
                  %575 = vst [vmem:[%s569 + $0x200] sm:$0xff] %v574
                  %v576 = vld [vmem:[%s568 + $0xbe8] sm:$0xff]
                  %577 = vst [vmem:[%s569 + $0x300] sm:$0xff] %v576
                  %v578 = vld [vmem:[%s568 + $0xfe0] sm:$0xff]
                  %579 = vst [vmem:[%s569 + $0x400] sm:$0xff] %v578
                  %v580 = vld [vmem:[%s568 + $0x13d8] sm:$0xff]
                  %581 = vst [vmem:[%s569 + $0x500] sm:$0xff] %v580
                  %v582 = vld [vmem:[%s568 + $0x17d0] sm:$0xff]
                  %583 = vst [vmem:[%s569 + $0x600] sm:$0xff] %v582
                  %v584 = vld [vmem:[%s568 + $0x1bc8] sm:$0xff]
                  %585 = vst [vmem:[%s569 + $0x700] sm:$0xff] %v584
                  %s586 = sadd.s32 1, %s567
                  %p587 = scmp.ge.s32.totalorder %s586, %s551
                  %s588 = scalar_select %p587, 0, %s586
                  %s589 = smul.u32 %s588, 8
                  %s590 = smul.u32 %s588, 8
                  %s591 = scalar_lea.vmem %s555, %s589
                  %s592 = scalar_lea.vmem %s558, %s590 [#allocation2]
                $region81: #{rsfnet_maskin_forward.3} parent=68 // loop_footer
                  %s564 = sadd.s32 %s562, 1
                $region82: #{rsfnet_maskin_forward.3} parent=68 // loop_footer_branch
                  %561 = sbr.rel target = $region78
                $region83: #{rsfnet_maskin_forward.3} parent=68 // loop_exit
                  _
                %s593 = sshll.u32 1, %s397
                %s594 = ssub.s32 %s593, 1
                loop: start=0, step=1, limit=1
                $region84: #{rsfnet_maskin_forward.3} parent=68 // loop_pre_header
                  _
                $region85: #{rsfnet_maskin_forward.3} parent=68 // loop_header
                  %s596 = sphi 0, %s600
                  %p597 = scmp.ge.s32.totalorder %s596, 1
                  %s601 = sphi %s399, %s399
                  %s602 = sphi %s401, %s401
                $region86: #{rsfnet_maskin_forward.3} parent=68 // loop_header_branch
                  %599 = sbr.rel (%p597) target = $region90
                $region87: #{rsfnet_maskin_forward.3} parent=68 // loop_body
                  %v603 = vld [vmem:[%s601] sm:%s594]
                  %604 = vst [vmem:[%s602] sm:%s594] %v603
                  %v605 = vld [vmem:[%s601 + $0x3f8] sm:%s594]
                  %606 = vst [vmem:[%s602 + $0x100] sm:%s594] %v605
                  %v607 = vld [vmem:[%s601 + $0x7f0] sm:%s594]
                  %608 = vst [vmem:[%s602 + $0x200] sm:%s594] %v607
                  %v609 = vld [vmem:[%s601 + $0xbe8] sm:%s594]
                  %610 = vst [vmem:[%s602 + $0x300] sm:%s594] %v609
                  %v611 = vld [vmem:[%s601 + $0xfe0] sm:%s594]
                  %612 = vst [vmem:[%s602 + $0x400] sm:%s594] %v611
                  %v613 = vld [vmem:[%s601 + $0x13d8] sm:%s594]
                  %614 = vst [vmem:[%s602 + $0x500] sm:%s594] %v613
                  %v615 = vld [vmem:[%s601 + $0x17d0] sm:%s594]
                  %616 = vst [vmem:[%s602 + $0x600] sm:%s594] %v615
                  %v617 = vld [vmem:[%s601 + $0x1bc8] sm:%s594]
                  %618 = vst [vmem:[%s602 + $0x700] sm:%s594] %v617
                $region88: #{rsfnet_maskin_forward.3} parent=68 // loop_footer
                  %s600 = sadd.s32 1, %s596
                $region89: #{rsfnet_maskin_forward.3} parent=68 // loop_footer_branch
                  %595 = sbr.rel target = $region85
                $region90: #{rsfnet_maskin_forward.3} parent=68 // loop_exit
                  _
              $region69: #{rsfnet_maskin_forward.3} parent=35 // pred_fallthru
                _
            $region36: #{rsfnet_maskin_forward.3} parent=31 // pred_fallthru
              _
            // Predicated region
            $region37: #{rsfnet_maskin_forward.3} parent=31 // pred_check
              %p169 = pneg %p165
            $region38: #{rsfnet_maskin_forward.3} parent=31 // pred_check_branch
              %171 = sbr.rel (%p169) target = $region40
            $region39: #{rsfnet_maskin_forward.3} parent=31 // pred_region
              %s172 = sshll.u32 1, %s161
              %s173 = ssub.s32 %s172, 1
              loop: start=0, step=1, limit=1
              $region41: #{rsfnet_maskin_forward.3} parent=39 // loop_pre_header
                _
              $region42: #{rsfnet_maskin_forward.3} parent=39 // loop_header
                %s175 = sphi 0, %s179
                %p176 = scmp.ge.s32.totalorder %s175, 1
                %s180 = sphi %s160, %s160
                %s181 = sphi %s150, %s150
              $region43: #{rsfnet_maskin_forward.3} parent=39 // loop_header_branch
                %178 = sbr.rel (%p176) target = $region47
              $region44: #{rsfnet_maskin_forward.3} parent=39 // loop_body
                %v182 = vld [vmem:[%s180] sm:%s173]
                %183 = vst [vmem:[%s181] sm:%s173] %v182
                %v184 = vld [vmem:[%s180 + $0x3f8] sm:%s173]
                %185 = vst [vmem:[%s181 + $0x100] sm:%s173] %v184
                %v186 = vld [vmem:[%s180 + $0x7f0] sm:%s173]
                %187 = vst [vmem:[%s181 + $0x200] sm:%s173] %v186
                %v188 = vld [vmem:[%s180 + $0xbe8] sm:%s173]
                %189 = vst [vmem:[%s181 + $0x300] sm:%s173] %v188
                %v190 = vld [vmem:[%s180 + $0xfe0] sm:%s173]
                %191 = vst [vmem:[%s181 + $0x400] sm:%s173] %v190
                %v192 = vld [vmem:[%s180 + $0x13d8] sm:%s173]
                %193 = vst [vmem:[%s181 + $0x500] sm:%s173] %v192
                %v194 = vld [vmem:[%s180 + $0x17d0] sm:%s173]
                %195 = vst [vmem:[%s181 + $0x600] sm:%s173] %v194
                %v196 = vld [vmem:[%s180 + $0x1bc8] sm:%s173]
                %197 = vst [vmem:[%s181 + $0x700] sm:%s173] %v196
              $region45: #{rsfnet_maskin_forward.3} parent=39 // loop_footer
                %s179 = sadd.s32 1, %s175
              $region46: #{rsfnet_maskin_forward.3} parent=39 // loop_footer_branch
                %174 = sbr.rel target = $region42
              $region47: #{rsfnet_maskin_forward.3} parent=39 // loop_exit
                _
            $region40: #{rsfnet_maskin_forward.3} parent=31 // pred_fallthru
              _
          $region32: #{rsfnet_maskin_forward.3} parent=27 // pred_fallthru
            _
          %619 = vnop
        $region28: #{rsfnet_maskin_forward.3} parent=23 // pred_fallthru
          _
      $region24: #{rsfnet_maskin_forward.3} parent=5 // pred_fallthru
        _
      %p620 = scmp.le.s32.totalorder 1, %s9
      %p621 = scmp.lt.s32.totalorder %s9, 9
      %p622 = pnand %p620, %p621
      %p623 = pneg %p622
      // Predicated region
      $region91: #{rsfnet_maskin_forward.3} parent=5 // pred_check
        _
      $region92: #{rsfnet_maskin_forward.3} parent=5 // pred_check_branch
        %625 = sbr.rel (%p622) target = $region94
      $region93: #{rsfnet_maskin_forward.3} parent=5 // pred_region
        %s626 = ssub.s32 %s9, 1
        %s627 = sand.u32 %s36, 1
        %s628 = sand.u32 %s36, 1
        %s629 = smul.addr %s628, 2048
        %s630 = scalar_lea.vmem [#allocation2], %s629
        // Predicated region
        $region95: #{rsfnet_maskin_forward.3} parent=93 // pred_check
          %p631 = pneg %p49
        $region96: #{rsfnet_maskin_forward.3} parent=93 // pred_check_branch
          %633 = sbr.rel (%p631) target = $region98
        $region97: #{rsfnet_maskin_forward.3} parent=93 // pred_region
          _
        $region98: #{rsfnet_maskin_forward.3} parent=93 // pred_fallthru
          _
        %s634 = sand.u32 %s36, 1
        %s635 = sand.u32 %s36, 1
        %s636 = smul.addr %s635, 2048
        %s637 = scalar_lea.vmem [#allocation2], %s636
        %p638 = pneg %p49
        %p639 = pneg %p46
        %p640 = pneg %p70
        %p641 = pneg %p67
        %p642 = pneg %p91
        %p643 = pneg %p88
        %p644 = pneg %p119
        %p645 = pneg %p116
        %s646 = sand.u32 %s106, 1
        %s647 = sand.u32 %s106, 1
        %s648 = smul.addr %s647, 512
        %s649 = scalar_lea.vmem [#allocation3], %s648
        %s650 = smul.u32 64, %s19
        %s651 = ssub.s32 254, %s650
        %p652 = scmp.lt.s32.totalorder %s651, 64
        %s653 = scalar_select %p652, %s651, 64
        %s654 = smul.u32 512, %s653
        %s655 = smul.u32 64, %s19
        %s656 = ssub.s32 254, %s655
        %p657 = scmp.lt.s32.totalorder %s656, 64
        %s658 = scalar_select %p657, %s656, 64
        %s659 = smul.u32 128, %s658
        %v661 = vld [vmem:[%s1] sm:$0xf]
        %v662 = vld [vmem:[%s1 + $0x4] sm:$0xf]
        %v663 = vld [vmem:[%s630] sm:$0xff]
        %v664 = vld [vmem:[%s630 + $0x8] sm:$0xff]
        %v665 = vld [vmem:[%s630 + $0x10] sm:$0xff]
        %v666 = vld [vmem:[%s630 + $0x18] sm:$0xff]
        %v667 = vld [vmem:[%s630 + $0x20] sm:$0xff]
        %v668 = vld [vmem:[%s630 + $0x28] sm:$0xff]
        %v669 = vld [vmem:[%s630 + $0x30] sm:$0xff]
        %v670 = vld [vmem:[%s630 + $0x38] sm:$0xff]
        %v671 = vld [vmem:[%s630 + $0x40] sm:$0xff]
        %v672 = vld [vmem:[%s630 + $0x48] sm:$0xff]
        %v673 = vld [vmem:[%s630 + $0x50] sm:$0xff]
        %v674 = vld [vmem:[%s630 + $0x58] sm:$0xff]
        %v675 = vld [vmem:[%s630 + $0x60] sm:$0xff]
        %v676 = vld [vmem:[%s630 + $0x68] sm:$0xff]
        %v677 = vld [vmem:[%s630 + $0x70] sm:$0xff]
        %v678 = vld [vmem:[%s630 + $0x78] sm:$0xff]
        %v679 = vld [vmem:[%s630 + $0x80] sm:$0xff]
        %v680 = vld [vmem:[%s630 + $0x88] sm:$0xff]
        %v681 = vld [vmem:[%s630 + $0x90] sm:$0xff]
        %v682 = vld [vmem:[%s630 + $0x98] sm:$0xff]
        %v683 = vld [vmem:[%s630 + $0xa0] sm:$0xff]
        %v684 = vld [vmem:[%s630 + $0xa8] sm:$0xff]
        %v685 = vld [vmem:[%s630 + $0xb0] sm:$0xff]
        %v686 = vld [vmem:[%s630 + $0xb8] sm:$0xff]
        %v687 = vld [vmem:[%s630 + $0xc0] sm:$0xff]
        %v688 = vld [vmem:[%s630 + $0xc8] sm:$0xff]
        %v689 = vld [vmem:[%s630 + $0xd0] sm:$0xff]
        %v690 = vld [vmem:[%s630 + $0xd8] sm:$0xff]
        %v691 = vld [vmem:[%s630 + $0xe0] sm:$0xff]
        %v692 = vld [vmem:[%s630 + $0xe8] sm:$0xff]
        %v693 = vld [vmem:[%s630 + $0xf0] sm:$0xff]
        %v694 = vld [vmem:[%s630 + $0xf8] sm:$0xff]
        %v695 = vld [vmem:[%s630 + $0x100] sm:$0xff]
        %v696 = vld [vmem:[%s630 + $0x108] sm:$0xff]
        %v697 = vld [vmem:[%s630 + $0x110] sm:$0xff]
        %v698 = vld [vmem:[%s630 + $0x118] sm:$0xff]
        %v699 = vld [vmem:[%s630 + $0x120] sm:$0xff]
        %v700 = vld [vmem:[%s630 + $0x128] sm:$0xff]
        %v701 = vld [vmem:[%s630 + $0x130] sm:$0xff]
        %v702 = vld [vmem:[%s630 + $0x138] sm:$0xff]
        %v703 = vld [vmem:[%s630 + $0x140] sm:$0xff]
        %v704 = vld [vmem:[%s630 + $0x148] sm:$0xff]
        %v705 = vld [vmem:[%s630 + $0x150] sm:$0xff]
        %v706 = vld [vmem:[%s630 + $0x158] sm:$0xff]
        %v707 = vld [vmem:[%s630 + $0x160] sm:$0xff]
        %v708 = vld [vmem:[%s630 + $0x168] sm:$0xff]
        %v709 = vld [vmem:[%s630 + $0x170] sm:$0xff]
        %v710 = vld [vmem:[%s630 + $0x178] sm:$0xff]
        %v711 = vld [vmem:[%s630 + $0x180] sm:$0xff]
        %v712 = vld [vmem:[%s630 + $0x188] sm:$0xff]
        %v713 = vld [vmem:[%s630 + $0x190] sm:$0xff]
        %v714 = vld [vmem:[%s630 + $0x198] sm:$0xff]
        %v715 = vld [vmem:[%s630 + $0x1a0] sm:$0xff]
        %v716 = vld [vmem:[%s630 + $0x1a8] sm:$0xff]
        %v717 = vld [vmem:[%s630 + $0x1b0] sm:$0xff]
        %v718 = vld [vmem:[%s630 + $0x1b8] sm:$0xff]
        %v719 = vld [vmem:[%s630 + $0x1c0] sm:$0xff]
        %v720 = vld [vmem:[%s630 + $0x1c8] sm:$0xff]
        %v721 = vld [vmem:[%s630 + $0x1d0] sm:$0xff]
        %v722 = vld [vmem:[%s630 + $0x1d8] sm:$0xff]
        %v723 = vld [vmem:[%s630 + $0x1e0] sm:$0xff]
        %v724 = vld [vmem:[%s630 + $0x1e8] sm:$0xff]
        %v725 = vld [vmem:[%s630 + $0x1f0] sm:$0xff]
        %v726 = vld [vmem:[%s630 + $0x1f8] sm:$0xff]
        %v727 = vld [vmem:[%s630 + $0x200] sm:$0xff]
        %v728 = vld [vmem:[%s630 + $0x208] sm:$0xff]
        %v729 = vld [vmem:[%s630 + $0x210] sm:$0xff]
        %v730 = vld [vmem:[%s630 + $0x218] sm:$0xff]
        %v731 = vld [vmem:[%s630 + $0x220] sm:$0xff]
        %v732 = vld [vmem:[%s630 + $0x228] sm:$0xff]
        %v733 = vld [vmem:[%s630 + $0x230] sm:$0xff]
        %v734 = vld [vmem:[%s630 + $0x238] sm:$0xff]
        %v735 = vld [vmem:[%s630 + $0x240] sm:$0xff]
        %v736 = vld [vmem:[%s630 + $0x248] sm:$0xff]
        %v737 = vld [vmem:[%s630 + $0x250] sm:$0xff]
        %v738 = vld [vmem:[%s630 + $0x258] sm:$0xff]
        %v739 = vld [vmem:[%s630 + $0x260] sm:$0xff]
        %v740 = vld [vmem:[%s630 + $0x268] sm:$0xff]
        %v741 = vld [vmem:[%s630 + $0x270] sm:$0xff]
        %v742 = vld [vmem:[%s630 + $0x278] sm:$0xff]
        %v743 = vld [vmem:[%s630 + $0x280] sm:$0xff]
        %v744 = vld [vmem:[%s630 + $0x288] sm:$0xff]
        %v745 = vld [vmem:[%s630 + $0x290] sm:$0xff]
        %v746 = vld [vmem:[%s630 + $0x298] sm:$0xff]
        %v747 = vld [vmem:[%s630 + $0x2a0] sm:$0xff]
        %v748 = vld [vmem:[%s630 + $0x2a8] sm:$0xff]
        %v749 = vld [vmem:[%s630 + $0x2b0] sm:$0xff]
        %v750 = vld [vmem:[%s630 + $0x2b8] sm:$0xff]
        %v751 = vld [vmem:[%s630 + $0x2c0] sm:$0xff]
        %v752 = vld [vmem:[%s630 + $0x2c8] sm:$0xff]
        %v753 = vld [vmem:[%s630 + $0x2d0] sm:$0xff]
        %v754 = vld [vmem:[%s630 + $0x2d8] sm:$0xff]
        %v755 = vld [vmem:[%s630 + $0x2e0] sm:$0xff]
        %v756 = vld [vmem:[%s630 + $0x2e8] sm:$0xff]
        %v757 = vld [vmem:[%s630 + $0x2f0] sm:$0xff]
        %v758 = vld [vmem:[%s630 + $0x2f8] sm:$0xff]
        %v759 = vld [vmem:[%s630 + $0x300] sm:$0xff]
        %v760 = vld [vmem:[%s630 + $0x308] sm:$0xff]
        %v761 = vld [vmem:[%s630 + $0x310] sm:$0xff]
        %v762 = vld [vmem:[%s630 + $0x318] sm:$0xff]
        %v763 = vld [vmem:[%s630 + $0x320] sm:$0xff]
        %v764 = vld [vmem:[%s630 + $0x328] sm:$0xff]
        %v765 = vld [vmem:[%s630 + $0x330] sm:$0xff]
        %v766 = vld [vmem:[%s630 + $0x338] sm:$0xff]
        %v767 = vld [vmem:[%s630 + $0x340] sm:$0xff]
        %v768 = vld [vmem:[%s630 + $0x348] sm:$0xff]
        %v769 = vld [vmem:[%s630 + $0x350] sm:$0xff]
        %v770 = vld [vmem:[%s630 + $0x358] sm:$0xff]
        %v771 = vld [vmem:[%s630 + $0x360] sm:$0xff]
        %v772 = vld [vmem:[%s630 + $0x368] sm:$0xff]
        %v773 = vld [vmem:[%s630 + $0x370] sm:$0xff]
        %v774 = vld [vmem:[%s630 + $0x378] sm:$0xff]
        %v775 = vld [vmem:[%s630 + $0x380] sm:$0xff]
        %v776 = vld [vmem:[%s630 + $0x388] sm:$0xff]
        %v777 = vld [vmem:[%s630 + $0x390] sm:$0xff]
        %v778 = vld [vmem:[%s630 + $0x398] sm:$0xff]
        %v779 = vld [vmem:[%s630 + $0x3a0] sm:$0xff]
        %v780 = vld [vmem:[%s630 + $0x3a8] sm:$0xff]
        %v781 = vld [vmem:[%s630 + $0x3b0] sm:$0xff]
        %v782 = vld [vmem:[%s630 + $0x3b8] sm:$0xff]
        %v783 = vld [vmem:[%s630 + $0x3c0] sm:$0xff]
        %v784 = vld [vmem:[%s630 + $0x3c8] sm:$0xff]
        %v785 = vld [vmem:[%s630 + $0x3d0] sm:$0xff]
        %v786 = vld [vmem:[%s630 + $0x3d8] sm:$0xff]
        %v787 = vld [vmem:[%s630 + $0x3e0] sm:$0xff]
        %v788 = vld [vmem:[%s630 + $0x3e8] sm:$0xff]
        %v789 = vld [vmem:[%s630 + $0x3f0] sm:$0xff]
        %v790 = vld [vmem:[%s630 + $0x3f8] sm:$0xff]
        %v791 = vld [vmem:[%s630 + $0x400] sm:$0xff]
        %v792 = vld [vmem:[%s630 + $0x408] sm:$0xff]
        %v793 = vld [vmem:[%s630 + $0x410] sm:$0xff]
        %v794 = vld [vmem:[%s630 + $0x418] sm:$0xff]
        %v795 = vld [vmem:[%s630 + $0x420] sm:$0xff]
        %v796 = vld [vmem:[%s630 + $0x428] sm:$0xff]
        %v797 = vld [vmem:[%s630 + $0x430] sm:$0xff]
        %v798 = vld [vmem:[%s630 + $0x438] sm:$0xff]
        %v799 = vld [vmem:[%s630 + $0x440] sm:$0xff]
        %v800 = vld [vmem:[%s630 + $0x448] sm:$0xff]
        %v801 = vld [vmem:[%s630 + $0x450] sm:$0xff]
        %v802 = vld [vmem:[%s630 + $0x458] sm:$0xff]
        %v803 = vld [vmem:[%s630 + $0x460] sm:$0xff]
        %v804 = vld [vmem:[%s630 + $0x468] sm:$0xff]
        %v805 = vld [vmem:[%s630 + $0x470] sm:$0xff]
        %v806 = vld [vmem:[%s630 + $0x478] sm:$0xff]
        %v807 = vld [vmem:[%s630 + $0x480] sm:$0xff]
        %v808 = vld [vmem:[%s630 + $0x488] sm:$0xff]
        %v809 = vld [vmem:[%s630 + $0x490] sm:$0xff]
        %v810 = vld [vmem:[%s630 + $0x498] sm:$0xff]
        %v811 = vld [vmem:[%s630 + $0x4a0] sm:$0xff]
        %v812 = vld [vmem:[%s630 + $0x4a8] sm:$0xff]
        %v813 = vld [vmem:[%s630 + $0x4b0] sm:$0xff]
        %v814 = vld [vmem:[%s630 + $0x4b8] sm:$0xff]
        %v815 = vld [vmem:[%s630 + $0x4c0] sm:$0xff]
        %v816 = vld [vmem:[%s630 + $0x4c8] sm:$0xff]
        %v817 = vld [vmem:[%s630 + $0x4d0] sm:$0xff]
        %v818 = vld [vmem:[%s630 + $0x4d8] sm:$0xff]
        %v819 = vld [vmem:[%s630 + $0x4e0] sm:$0xff]
        %v820 = vld [vmem:[%s630 + $0x4e8] sm:$0xff]
        %v821 = vld [vmem:[%s630 + $0x4f0] sm:$0xff]
        %v822 = vld [vmem:[%s630 + $0x4f8] sm:$0xff]
        %v823 = vld [vmem:[%s630 + $0x500] sm:$0xff]
        %v824 = vld [vmem:[%s630 + $0x508] sm:$0xff]
        %v825 = vld [vmem:[%s630 + $0x510] sm:$0xff]
        %v826 = vld [vmem:[%s630 + $0x518] sm:$0xff]
        %v827 = vld [vmem:[%s630 + $0x520] sm:$0xff]
        %v828 = vld [vmem:[%s630 + $0x528] sm:$0xff]
        %v829 = vld [vmem:[%s630 + $0x530] sm:$0xff]
        %v830 = vld [vmem:[%s630 + $0x538] sm:$0xff]
        %v831 = vld [vmem:[%s630 + $0x540] sm:$0xff]
        %v832 = vld [vmem:[%s630 + $0x548] sm:$0xff]
        %v833 = vld [vmem:[%s630 + $0x550] sm:$0xff]
        %v834 = vld [vmem:[%s630 + $0x558] sm:$0xff]
        %v835 = vld [vmem:[%s630 + $0x560] sm:$0xff]
        %v836 = vld [vmem:[%s630 + $0x568] sm:$0xff]
        %v837 = vld [vmem:[%s630 + $0x570] sm:$0xff]
        %v838 = vld [vmem:[%s630 + $0x578] sm:$0xff]
        %v839 = vld [vmem:[%s630 + $0x580] sm:$0xff]
        %v840 = vld [vmem:[%s630 + $0x588] sm:$0xff]
        %v841 = vld [vmem:[%s630 + $0x590] sm:$0xff]
        %v842 = vld [vmem:[%s630 + $0x598] sm:$0xff]
        %v843 = vld [vmem:[%s630 + $0x5a0] sm:$0xff]
        %v844 = vld [vmem:[%s630 + $0x5a8] sm:$0xff]
        %v845 = vld [vmem:[%s630 + $0x5b0] sm:$0xff]
        %v846 = vld [vmem:[%s630 + $0x5b8] sm:$0xff]
        %v847 = vld [vmem:[%s630 + $0x5c0] sm:$0xff]
        %v848 = vld [vmem:[%s630 + $0x5c8] sm:$0xff]
        %v849 = vld [vmem:[%s630 + $0x5d0] sm:$0xff]
        %v850 = vld [vmem:[%s630 + $0x5d8] sm:$0xff]
        %v851 = vld [vmem:[%s630 + $0x5e0] sm:$0xff]
        %v852 = vld [vmem:[%s630 + $0x5e8] sm:$0xff]
        %v853 = vld [vmem:[%s630 + $0x5f0] sm:$0xff]
        %v854 = vld [vmem:[%s630 + $0x5f8] sm:$0xff]
        %v855 = vld [vmem:[%s630 + $0x600] sm:$0xff]
        %v856 = vld [vmem:[%s630 + $0x608] sm:$0xff]
        %v857 = vld [vmem:[%s630 + $0x610] sm:$0xff]
        %v858 = vld [vmem:[%s630 + $0x618] sm:$0xff]
        %v859 = vld [vmem:[%s630 + $0x620] sm:$0xff]
        %v860 = vld [vmem:[%s630 + $0x628] sm:$0xff]
        %v861 = vld [vmem:[%s630 + $0x630] sm:$0xff]
        %v862 = vld [vmem:[%s630 + $0x638] sm:$0xff]
        %v863 = vld [vmem:[%s630 + $0x640] sm:$0xff]
        %v864 = vld [vmem:[%s630 + $0x648] sm:$0xff]
        %v865 = vld [vmem:[%s630 + $0x650] sm:$0xff]
        %v866 = vld [vmem:[%s630 + $0x658] sm:$0xff]
        %v867 = vld [vmem:[%s630 + $0x660] sm:$0xff]
        %v868 = vld [vmem:[%s630 + $0x668] sm:$0xff]
        %v869 = vld [vmem:[%s630 + $0x670] sm:$0xff]
        %v870 = vld [vmem:[%s630 + $0x678] sm:$0xff]
        %v871 = vld [vmem:[%s630 + $0x680] sm:$0xff]
        %v872 = vld [vmem:[%s630 + $0x688] sm:$0xff]
        %v873 = vld [vmem:[%s630 + $0x690] sm:$0xff]
        %v874 = vld [vmem:[%s630 + $0x698] sm:$0xff]
        %v875 = vld [vmem:[%s630 + $0x6a0] sm:$0xff]
        %v876 = vld [vmem:[%s630 + $0x6a8] sm:$0xff]
        %v877 = vld [vmem:[%s630 + $0x6b0] sm:$0xff]
        %v878 = vld [vmem:[%s630 + $0x6b8] sm:$0xff]
        %v879 = vld [vmem:[%s630 + $0x6c0] sm:$0xff]
        %v880 = vld [vmem:[%s630 + $0x6c8] sm:$0xff]
        %v881 = vld [vmem:[%s630 + $0x6d0] sm:$0xff]
        %v882 = vld [vmem:[%s630 + $0x6d8] sm:$0xff]
        %v883 = vld [vmem:[%s630 + $0x6e0] sm:$0xff]
        %v884 = vld [vmem:[%s630 + $0x6e8] sm:$0xff]
        %v885 = vld [vmem:[%s630 + $0x6f0] sm:$0xff]
        %v886 = vld [vmem:[%s630 + $0x6f8] sm:$0xff]
        %v887 = vld [vmem:[%s630 + $0x700] sm:$0xff]
        %v888 = vld [vmem:[%s630 + $0x708] sm:$0xff]
        %v889 = vld [vmem:[%s630 + $0x710] sm:$0xff]
        %v890 = vld [vmem:[%s630 + $0x718] sm:$0xff]
        %v891 = vld [vmem:[%s630 + $0x720] sm:$0xff]
        %v892 = vld [vmem:[%s630 + $0x728] sm:$0xff]
        %v893 = vld [vmem:[%s630 + $0x730] sm:$0xff]
        %v894 = vld [vmem:[%s630 + $0x738] sm:$0xff]
        %v895 = vld [vmem:[%s630 + $0x740] sm:$0xff]
        %v896 = vld [vmem:[%s630 + $0x748] sm:$0xff]
        %v897 = vld [vmem:[%s630 + $0x750] sm:$0xff]
        %v898 = vld [vmem:[%s630 + $0x758] sm:$0xff]
        %v899 = vld [vmem:[%s630 + $0x760] sm:$0xff]
        %v900 = vld [vmem:[%s630 + $0x768] sm:$0xff]
        %v901 = vld [vmem:[%s630 + $0x770] sm:$0xff]
        %v902 = vld [vmem:[%s630 + $0x778] sm:$0xff]
        %v903 = vld [vmem:[%s630 + $0x780] sm:$0xff]
        %v904 = vld [vmem:[%s630 + $0x788] sm:$0xff]
        %v905 = vld [vmem:[%s630 + $0x790] sm:$0xff]
        %v906 = vld [vmem:[%s630 + $0x798] sm:$0xff]
        %v907 = vld [vmem:[%s630 + $0x7a0] sm:$0xff]
        %v908 = vld [vmem:[%s630 + $0x7a8] sm:$0xff]
        %v909 = vld [vmem:[%s630 + $0x7b0] sm:$0xff]
        %v910 = vld [vmem:[%s630 + $0x7b8] sm:$0xff]
        %v911 = vld [vmem:[%s630 + $0x7c0] sm:$0xff]
        %v912 = vld [vmem:[%s630 + $0x7c8] sm:$0xff]
        %v913 = vld [vmem:[%s630 + $0x7d0] sm:$0xff]
        %v914 = vld [vmem:[%s630 + $0x7d8] sm:$0xff]
        %v915 = vld [vmem:[%s630 + $0x7e0] sm:$0xff]
        %v916 = vld [vmem:[%s630 + $0x7e8] sm:$0xff]
        %v917 = vld [vmem:[%s630 + $0x7f0] sm:$0xff]
        %v918 = vld [vmem:[%s630 + $0x7f8] sm:$0xff]
        %v919 = vld [vmem:[%s2] sm:$0xff]
        %v920 = vld [vmem:[%s2 + $0x8] sm:$0xff]
        %922 = vset.pattern.permute.xlu0 0
        %923 = vperm.xlu0 %922, %v919
        %v924 = vpop.permute.xlu0 %923
        %927 = vset.pattern.permute.xlu0 0
        %928 = vperm.xlu0 %927, %v920
        %v929 = vpop.permute.xlu0 %928
        %v933 = vunpack.c.l.b16 %v661
        %v934 = vunpack.c.l.b16 %v662
        %v935 = vpack.c.b16 %v934, %v933
        %v1192 = vunpack.c.l.b16 %v663
        %v1193 = vunpack.c.h.b16 %v663
        %v1194 = vunpack.c.l.b16 %v664
        %v1195 = vunpack.c.h.b16 %v664
        %v1196 = vunpack.c.l.b16 %v665
        %v1197 = vunpack.c.h.b16 %v665
        %v1198 = vunpack.c.l.b16 %v666
        %v1199 = vunpack.c.h.b16 %v666
        %v1200 = vunpack.c.l.b16 %v667
        %v1201 = vunpack.c.h.b16 %v667
        %v1202 = vunpack.c.l.b16 %v668
        %v1203 = vunpack.c.h.b16 %v668
        %v1204 = vunpack.c.l.b16 %v669
        %v1205 = vunpack.c.h.b16 %v669
        %v1206 = vunpack.c.l.b16 %v670
        %v1207 = vunpack.c.h.b16 %v670
        %v1208 = vunpack.c.l.b16 %v671
        %v1209 = vunpack.c.h.b16 %v671
        %v1210 = vunpack.c.l.b16 %v672
        %v1211 = vunpack.c.h.b16 %v672
        %v1212 = vunpack.c.l.b16 %v673
        %v1213 = vunpack.c.h.b16 %v673
        %v1214 = vunpack.c.l.b16 %v674
        %v1215 = vunpack.c.h.b16 %v674
        %v1216 = vunpack.c.l.b16 %v675
        %v1217 = vunpack.c.h.b16 %v675
        %v1218 = vunpack.c.l.b16 %v676
        %v1219 = vunpack.c.h.b16 %v676
        %v1220 = vunpack.c.l.b16 %v677
        %v1221 = vunpack.c.h.b16 %v677
        %v1222 = vunpack.c.l.b16 %v678
        %v1223 = vunpack.c.h.b16 %v678
        %v1224 = vunpack.c.l.b16 %v679
        %v1225 = vunpack.c.h.b16 %v679
        %v1226 = vunpack.c.l.b16 %v680
        %v1227 = vunpack.c.h.b16 %v680
        %v1228 = vunpack.c.l.b16 %v681
        %v1229 = vunpack.c.h.b16 %v681
        %v1230 = vunpack.c.l.b16 %v682
        %v1231 = vunpack.c.h.b16 %v682
        %v1232 = vunpack.c.l.b16 %v683
        %v1233 = vunpack.c.h.b16 %v683
        %v1234 = vunpack.c.l.b16 %v684
        %v1235 = vunpack.c.h.b16 %v684
        %v1236 = vunpack.c.l.b16 %v685
        %v1237 = vunpack.c.h.b16 %v685
        %v1238 = vunpack.c.l.b16 %v686
        %v1239 = vunpack.c.h.b16 %v686
        %v1240 = vunpack.c.l.b16 %v687
        %v1241 = vunpack.c.h.b16 %v687
        %v1242 = vunpack.c.l.b16 %v688
        %v1243 = vunpack.c.h.b16 %v688
        %v1244 = vunpack.c.l.b16 %v689
        %v1245 = vunpack.c.h.b16 %v689
        %v1246 = vunpack.c.l.b16 %v690
        %v1247 = vunpack.c.h.b16 %v690
        %v1248 = vunpack.c.l.b16 %v691
        %v1249 = vunpack.c.h.b16 %v691
        %v1250 = vunpack.c.l.b16 %v692
        %v1251 = vunpack.c.h.b16 %v692
        %v1252 = vunpack.c.l.b16 %v693
        %v1253 = vunpack.c.h.b16 %v693
        %v1254 = vunpack.c.l.b16 %v694
        %v1255 = vunpack.c.h.b16 %v694
        %v1256 = vunpack.c.l.b16 %v695
        %v1257 = vunpack.c.h.b16 %v695
        %v1258 = vunpack.c.l.b16 %v696
        %v1259 = vunpack.c.h.b16 %v696
        %v1260 = vunpack.c.l.b16 %v697
        %v1261 = vunpack.c.h.b16 %v697
        %v1262 = vunpack.c.l.b16 %v698
        %v1263 = vunpack.c.h.b16 %v698
        %v1264 = vunpack.c.l.b16 %v699
        %v1265 = vunpack.c.h.b16 %v699
        %v1266 = vunpack.c.l.b16 %v700
        %v1267 = vunpack.c.h.b16 %v700
        %v1268 = vunpack.c.l.b16 %v701
        %v1269 = vunpack.c.h.b16 %v701
        %v1270 = vunpack.c.l.b16 %v702
        %v1271 = vunpack.c.h.b16 %v702
        %v1272 = vunpack.c.l.b16 %v703
        %v1273 = vunpack.c.h.b16 %v703
        %v1274 = vunpack.c.l.b16 %v704
        %v1275 = vunpack.c.h.b16 %v704
        %v1276 = vunpack.c.l.b16 %v705
        %v1277 = vunpack.c.h.b16 %v705
        %v1278 = vunpack.c.l.b16 %v706
        %v1279 = vunpack.c.h.b16 %v706
        %v1280 = vunpack.c.l.b16 %v707
        %v1281 = vunpack.c.h.b16 %v707
        %v1282 = vunpack.c.l.b16 %v708
        %v1283 = vunpack.c.h.b16 %v708
        %v1284 = vunpack.c.l.b16 %v709
        %v1285 = vunpack.c.h.b16 %v709
        %v1286 = vunpack.c.l.b16 %v710
        %v1287 = vunpack.c.h.b16 %v710
        %v1288 = vunpack.c.l.b16 %v711
        %v1289 = vunpack.c.h.b16 %v711
        %v1290 = vunpack.c.l.b16 %v712
        %v1291 = vunpack.c.h.b16 %v712
        %v1292 = vunpack.c.l.b16 %v713
        %v1293 = vunpack.c.h.b16 %v713
        %v1294 = vunpack.c.l.b16 %v714
        %v1295 = vunpack.c.h.b16 %v714
        %v1296 = vunpack.c.l.b16 %v715
        %v1297 = vunpack.c.h.b16 %v715
        %v1298 = vunpack.c.l.b16 %v716
        %v1299 = vunpack.c.h.b16 %v716
        %v1300 = vunpack.c.l.b16 %v717
        %v1301 = vunpack.c.h.b16 %v717
        %v1302 = vunpack.c.l.b16 %v718
        %v1303 = vunpack.c.h.b16 %v718
        %v1304 = vunpack.c.l.b16 %v719
        %v1305 = vunpack.c.h.b16 %v719
        %v1306 = vunpack.c.l.b16 %v720
        %v1307 = vunpack.c.h.b16 %v720
        %v1308 = vunpack.c.l.b16 %v721
        %v1309 = vunpack.c.h.b16 %v721
        %v1310 = vunpack.c.l.b16 %v722
        %v1311 = vunpack.c.h.b16 %v722
        %v1312 = vunpack.c.l.b16 %v723
        %v1313 = vunpack.c.h.b16 %v723
        %v1314 = vunpack.c.l.b16 %v724
        %v1315 = vunpack.c.h.b16 %v724
        %v1316 = vunpack.c.l.b16 %v725
        %v1317 = vunpack.c.h.b16 %v725
        %v1318 = vunpack.c.l.b16 %v726
        %v1319 = vunpack.c.h.b16 %v726
        %v1320 = vunpack.c.l.b16 %v727
        %v1321 = vunpack.c.h.b16 %v727
        %v1322 = vunpack.c.l.b16 %v728
        %v1323 = vunpack.c.h.b16 %v728
        %v1324 = vunpack.c.l.b16 %v729
        %v1325 = vunpack.c.h.b16 %v729
        %v1326 = vunpack.c.l.b16 %v730
        %v1327 = vunpack.c.h.b16 %v730
        %v1328 = vunpack.c.l.b16 %v731
        %v1329 = vunpack.c.h.b16 %v731
        %v1330 = vunpack.c.l.b16 %v732
        %v1331 = vunpack.c.h.b16 %v732
        %v1332 = vunpack.c.l.b16 %v733
        %v1333 = vunpack.c.h.b16 %v733
        %v1334 = vunpack.c.l.b16 %v734
        %v1335 = vunpack.c.h.b16 %v734
        %v1336 = vunpack.c.l.b16 %v735
        %v1337 = vunpack.c.h.b16 %v735
        %v1338 = vunpack.c.l.b16 %v736
        %v1339 = vunpack.c.h.b16 %v736
        %v1340 = vunpack.c.l.b16 %v737
        %v1341 = vunpack.c.h.b16 %v737
        %v1342 = vunpack.c.l.b16 %v738
        %v1343 = vunpack.c.h.b16 %v738
        %v1344 = vunpack.c.l.b16 %v739
        %v1345 = vunpack.c.h.b16 %v739
        %v1346 = vunpack.c.l.b16 %v740
        %v1347 = vunpack.c.h.b16 %v740
        %v1348 = vunpack.c.l.b16 %v741
        %v1349 = vunpack.c.h.b16 %v741
        %v1350 = vunpack.c.l.b16 %v742
        %v1351 = vunpack.c.h.b16 %v742
        %v1352 = vunpack.c.l.b16 %v743
        %v1353 = vunpack.c.h.b16 %v743
        %v1354 = vunpack.c.l.b16 %v744
        %v1355 = vunpack.c.h.b16 %v744
        %v1356 = vunpack.c.l.b16 %v745
        %v1357 = vunpack.c.h.b16 %v745
        %v1358 = vunpack.c.l.b16 %v746
        %v1359 = vunpack.c.h.b16 %v746
        %v1360 = vunpack.c.l.b16 %v747
        %v1361 = vunpack.c.h.b16 %v747
        %v1362 = vunpack.c.l.b16 %v748
        %v1363 = vunpack.c.h.b16 %v748
        %v1364 = vunpack.c.l.b16 %v749
        %v1365 = vunpack.c.h.b16 %v749
        %v1366 = vunpack.c.l.b16 %v750
        %v1367 = vunpack.c.h.b16 %v750
        %v1368 = vunpack.c.l.b16 %v751
        %v1369 = vunpack.c.h.b16 %v751
        %v1370 = vunpack.c.l.b16 %v752
        %v1371 = vunpack.c.h.b16 %v752
        %v1372 = vunpack.c.l.b16 %v753
        %v1373 = vunpack.c.h.b16 %v753
        %v1374 = vunpack.c.l.b16 %v754
        %v1375 = vunpack.c.h.b16 %v754
        %v1376 = vunpack.c.l.b16 %v755
        %v1377 = vunpack.c.h.b16 %v755
        %v1378 = vunpack.c.l.b16 %v756
        %v1379 = vunpack.c.h.b16 %v756
        %v1380 = vunpack.c.l.b16 %v757
        %v1381 = vunpack.c.h.b16 %v757
        %v1382 = vunpack.c.l.b16 %v758
        %v1383 = vunpack.c.h.b16 %v758
        %v1384 = vunpack.c.l.b16 %v759
        %v1385 = vunpack.c.h.b16 %v759
        %v1386 = vunpack.c.l.b16 %v760
        %v1387 = vunpack.c.h.b16 %v760
        %v1388 = vunpack.c.l.b16 %v761
        %v1389 = vunpack.c.h.b16 %v761
        %v1390 = vunpack.c.l.b16 %v762
        %v1391 = vunpack.c.h.b16 %v762
        %v1392 = vunpack.c.l.b16 %v763
        %v1393 = vunpack.c.h.b16 %v763
        %v1394 = vunpack.c.l.b16 %v764
        %v1395 = vunpack.c.h.b16 %v764
        %v1396 = vunpack.c.l.b16 %v765
        %v1397 = vunpack.c.h.b16 %v765
        %v1398 = vunpack.c.l.b16 %v766
        %v1399 = vunpack.c.h.b16 %v766
        %v1400 = vunpack.c.l.b16 %v767
        %v1401 = vunpack.c.h.b16 %v767
        %v1402 = vunpack.c.l.b16 %v768
        %v1403 = vunpack.c.h.b16 %v768
        %v1404 = vunpack.c.l.b16 %v769
        %v1405 = vunpack.c.h.b16 %v769
        %v1406 = vunpack.c.l.b16 %v770
        %v1407 = vunpack.c.h.b16 %v770
        %v1408 = vunpack.c.l.b16 %v771
        %v1409 = vunpack.c.h.b16 %v771
        %v1410 = vunpack.c.l.b16 %v772
        %v1411 = vunpack.c.h.b16 %v772
        %v1412 = vunpack.c.l.b16 %v773
        %v1413 = vunpack.c.h.b16 %v773
        %v1414 = vunpack.c.l.b16 %v774
        %v1415 = vunpack.c.h.b16 %v774
        %v1416 = vunpack.c.l.b16 %v775
        %v1417 = vunpack.c.h.b16 %v775
        %v1418 = vunpack.c.l.b16 %v776
        %v1419 = vunpack.c.h.b16 %v776
        %v1420 = vunpack.c.l.b16 %v777
        %v1421 = vunpack.c.h.b16 %v777
        %v1422 = vunpack.c.l.b16 %v778
        %v1423 = vunpack.c.h.b16 %v778
        %v1424 = vunpack.c.l.b16 %v779
        %v1425 = vunpack.c.h.b16 %v779
        %v1426 = vunpack.c.l.b16 %v780
        %v1427 = vunpack.c.h.b16 %v780
        %v1428 = vunpack.c.l.b16 %v781
        %v1429 = vunpack.c.h.b16 %v781
        %v1430 = vunpack.c.l.b16 %v782
        %v1431 = vunpack.c.h.b16 %v782
        %v1432 = vunpack.c.l.b16 %v783
        %v1433 = vunpack.c.h.b16 %v783
        %v1434 = vunpack.c.l.b16 %v784
        %v1435 = vunpack.c.h.b16 %v784
        %v1436 = vunpack.c.l.b16 %v785
        %v1437 = vunpack.c.h.b16 %v785
        %v1438 = vunpack.c.l.b16 %v786
        %v1439 = vunpack.c.h.b16 %v786
        %v1440 = vunpack.c.l.b16 %v787
        %v1441 = vunpack.c.h.b16 %v787
        %v1442 = vunpack.c.l.b16 %v788
        %v1443 = vunpack.c.h.b16 %v788
        %v1444 = vunpack.c.l.b16 %v789
        %v1445 = vunpack.c.h.b16 %v789
        %v1446 = vunpack.c.l.b16 %v790
        %v1447 = vunpack.c.h.b16 %v790
        %v1448 = vunpack.c.l.b16 %v791
        %v1449 = vunpack.c.h.b16 %v791
        %v1450 = vunpack.c.l.b16 %v792
        %v1451 = vunpack.c.h.b16 %v792
        %v1452 = vunpack.c.l.b16 %v793
        %v1453 = vunpack.c.h.b16 %v793
        %v1454 = vunpack.c.l.b16 %v794
        %v1455 = vunpack.c.h.b16 %v794
        %v1456 = vunpack.c.l.b16 %v795
        %v1457 = vunpack.c.h.b16 %v795
        %v1458 = vunpack.c.l.b16 %v796
        %v1459 = vunpack.c.h.b16 %v796
        %v1460 = vunpack.c.l.b16 %v797
        %v1461 = vunpack.c.h.b16 %v797
        %v1462 = vunpack.c.l.b16 %v798
        %v1463 = vunpack.c.h.b16 %v798
        %v1464 = vunpack.c.l.b16 %v799
        %v1465 = vunpack.c.h.b16 %v799
        %v1466 = vunpack.c.l.b16 %v800
        %v1467 = vunpack.c.h.b16 %v800
        %v1468 = vunpack.c.l.b16 %v801
        %v1469 = vunpack.c.h.b16 %v801
        %v1470 = vunpack.c.l.b16 %v802
        %v1471 = vunpack.c.h.b16 %v802
        %v1472 = vunpack.c.l.b16 %v803
        %v1473 = vunpack.c.h.b16 %v803
        %v1474 = vunpack.c.l.b16 %v804
        %v1475 = vunpack.c.h.b16 %v804
        %v1476 = vunpack.c.l.b16 %v805
        %v1477 = vunpack.c.h.b16 %v805
        %v1478 = vunpack.c.l.b16 %v806
        %v1479 = vunpack.c.h.b16 %v806
        %v1480 = vunpack.c.l.b16 %v807
        %v1481 = vunpack.c.h.b16 %v807
        %v1482 = vunpack.c.l.b16 %v808
        %v1483 = vunpack.c.h.b16 %v808
        %v1484 = vunpack.c.l.b16 %v809
        %v1485 = vunpack.c.h.b16 %v809
        %v1486 = vunpack.c.l.b16 %v810
        %v1487 = vunpack.c.h.b16 %v810
        %v1488 = vunpack.c.l.b16 %v811
        %v1489 = vunpack.c.h.b16 %v811
        %v1490 = vunpack.c.l.b16 %v812
        %v1491 = vunpack.c.h.b16 %v812
        %v1492 = vunpack.c.l.b16 %v813
        %v1493 = vunpack.c.h.b16 %v813
        %v1494 = vunpack.c.l.b16 %v814
        %v1495 = vunpack.c.h.b16 %v814
        %v1496 = vunpack.c.l.b16 %v815
        %v1497 = vunpack.c.h.b16 %v815
        %v1498 = vunpack.c.l.b16 %v816
        %v1499 = vunpack.c.h.b16 %v816
        %v1500 = vunpack.c.l.b16 %v817
        %v1501 = vunpack.c.h.b16 %v817
        %v1502 = vunpack.c.l.b16 %v818
        %v1503 = vunpack.c.h.b16 %v818
        %v1504 = vunpack.c.l.b16 %v819
        %v1505 = vunpack.c.h.b16 %v819
        %v1506 = vunpack.c.l.b16 %v820
        %v1507 = vunpack.c.h.b16 %v820
        %v1508 = vunpack.c.l.b16 %v821
        %v1509 = vunpack.c.h.b16 %v821
        %v1510 = vunpack.c.l.b16 %v822
        %v1511 = vunpack.c.h.b16 %v822
        %v1512 = vunpack.c.l.b16 %v823
        %v1513 = vunpack.c.h.b16 %v823
        %v1514 = vunpack.c.l.b16 %v824
        %v1515 = vunpack.c.h.b16 %v824
        %v1516 = vunpack.c.l.b16 %v825
        %v1517 = vunpack.c.h.b16 %v825
        %v1518 = vunpack.c.l.b16 %v826
        %v1519 = vunpack.c.h.b16 %v826
        %v1520 = vunpack.c.l.b16 %v827
        %v1521 = vunpack.c.h.b16 %v827
        %v1522 = vunpack.c.l.b16 %v828
        %v1523 = vunpack.c.h.b16 %v828
        %v1524 = vunpack.c.l.b16 %v829
        %v1525 = vunpack.c.h.b16 %v829
        %v1526 = vunpack.c.l.b16 %v830
        %v1527 = vunpack.c.h.b16 %v830
        %v1528 = vunpack.c.l.b16 %v831
        %v1529 = vunpack.c.h.b16 %v831
        %v1530 = vunpack.c.l.b16 %v832
        %v1531 = vunpack.c.h.b16 %v832
        %v1532 = vunpack.c.l.b16 %v833
        %v1533 = vunpack.c.h.b16 %v833
        %v1534 = vunpack.c.l.b16 %v834
        %v1535 = vunpack.c.h.b16 %v834
        %v1536 = vunpack.c.l.b16 %v835
        %v1537 = vunpack.c.h.b16 %v835
        %v1538 = vunpack.c.l.b16 %v836
        %v1539 = vunpack.c.h.b16 %v836
        %v1540 = vunpack.c.l.b16 %v837
        %v1541 = vunpack.c.h.b16 %v837
        %v1542 = vunpack.c.l.b16 %v838
        %v1543 = vunpack.c.h.b16 %v838
        %v1544 = vunpack.c.l.b16 %v839
        %v1545 = vunpack.c.h.b16 %v839
        %v1546 = vunpack.c.l.b16 %v840
        %v1547 = vunpack.c.h.b16 %v840
        %v1548 = vunpack.c.l.b16 %v841
        %v1549 = vunpack.c.h.b16 %v841
        %v1550 = vunpack.c.l.b16 %v842
        %v1551 = vunpack.c.h.b16 %v842
        %v1552 = vunpack.c.l.b16 %v843
        %v1553 = vunpack.c.h.b16 %v843
        %v1554 = vunpack.c.l.b16 %v844
        %v1555 = vunpack.c.h.b16 %v844
        %v1556 = vunpack.c.l.b16 %v845
        %v1557 = vunpack.c.h.b16 %v845
        %v1558 = vunpack.c.l.b16 %v846
        %v1559 = vunpack.c.h.b16 %v846
        %v1560 = vunpack.c.l.b16 %v847
        %v1561 = vunpack.c.h.b16 %v847
        %v1562 = vunpack.c.l.b16 %v848
        %v1563 = vunpack.c.h.b16 %v848
        %v1564 = vunpack.c.l.b16 %v849
        %v1565 = vunpack.c.h.b16 %v849
        %v1566 = vunpack.c.l.b16 %v850
        %v1567 = vunpack.c.h.b16 %v850
        %v1568 = vunpack.c.l.b16 %v851
        %v1569 = vunpack.c.h.b16 %v851
        %v1570 = vunpack.c.l.b16 %v852
        %v1571 = vunpack.c.h.b16 %v852
        %v1572 = vunpack.c.l.b16 %v853
        %v1573 = vunpack.c.h.b16 %v853
        %v1574 = vunpack.c.l.b16 %v854
        %v1575 = vunpack.c.h.b16 %v854
        %v1576 = vunpack.c.l.b16 %v855
        %v1577 = vunpack.c.h.b16 %v855
        %v1578 = vunpack.c.l.b16 %v856
        %v1579 = vunpack.c.h.b16 %v856
        %v1580 = vunpack.c.l.b16 %v857
        %v1581 = vunpack.c.h.b16 %v857
        %v1582 = vunpack.c.l.b16 %v858
        %v1583 = vunpack.c.h.b16 %v858
        %v1584 = vunpack.c.l.b16 %v859
        %v1585 = vunpack.c.h.b16 %v859
        %v1586 = vunpack.c.l.b16 %v860
        %v1587 = vunpack.c.h.b16 %v860
        %v1588 = vunpack.c.l.b16 %v861
        %v1589 = vunpack.c.h.b16 %v861
        %v1590 = vunpack.c.l.b16 %v862
        %v1591 = vunpack.c.h.b16 %v862
        %v1592 = vunpack.c.l.b16 %v863
        %v1593 = vunpack.c.h.b16 %v863
        %v1594 = vunpack.c.l.b16 %v864
        %v1595 = vunpack.c.h.b16 %v864
        %v1596 = vunpack.c.l.b16 %v865
        %v1597 = vunpack.c.h.b16 %v865
        %v1598 = vunpack.c.l.b16 %v866
        %v1599 = vunpack.c.h.b16 %v866
        %v1600 = vunpack.c.l.b16 %v867
        %v1601 = vunpack.c.h.b16 %v867
        %v1602 = vunpack.c.l.b16 %v868
        %v1603 = vunpack.c.h.b16 %v868
        %v1604 = vunpack.c.l.b16 %v869
        %v1605 = vunpack.c.h.b16 %v869
        %v1606 = vunpack.c.l.b16 %v870
        %v1607 = vunpack.c.h.b16 %v870
        %v1608 = vunpack.c.l.b16 %v871
        %v1609 = vunpack.c.h.b16 %v871
        %v1610 = vunpack.c.l.b16 %v872
        %v1611 = vunpack.c.h.b16 %v872
        %v1612 = vunpack.c.l.b16 %v873
        %v1613 = vunpack.c.h.b16 %v873
        %v1614 = vunpack.c.l.b16 %v874
        %v1615 = vunpack.c.h.b16 %v874
        %v1616 = vunpack.c.l.b16 %v875
        %v1617 = vunpack.c.h.b16 %v875
        %v1618 = vunpack.c.l.b16 %v876
        %v1619 = vunpack.c.h.b16 %v876
        %v1620 = vunpack.c.l.b16 %v877
        %v1621 = vunpack.c.h.b16 %v877
        %v1622 = vunpack.c.l.b16 %v878
        %v1623 = vunpack.c.h.b16 %v878
        %v1624 = vunpack.c.l.b16 %v879
        %v1625 = vunpack.c.h.b16 %v879
        %v1626 = vunpack.c.l.b16 %v880
        %v1627 = vunpack.c.h.b16 %v880
        %v1628 = vunpack.c.l.b16 %v881
        %v1629 = vunpack.c.h.b16 %v881
        %v1630 = vunpack.c.l.b16 %v882
        %v1631 = vunpack.c.h.b16 %v882
        %v1632 = vunpack.c.l.b16 %v883
        %v1633 = vunpack.c.h.b16 %v883
        %v1634 = vunpack.c.l.b16 %v884
        %v1635 = vunpack.c.h.b16 %v884
        %v1636 = vunpack.c.l.b16 %v885
        %v1637 = vunpack.c.h.b16 %v885
        %v1638 = vunpack.c.l.b16 %v886
        %v1639 = vunpack.c.h.b16 %v886
        %v1640 = vunpack.c.l.b16 %v887
        %v1641 = vunpack.c.h.b16 %v887
        %v1642 = vunpack.c.l.b16 %v888
        %v1643 = vunpack.c.h.b16 %v888
        %v1644 = vunpack.c.l.b16 %v889
        %v1645 = vunpack.c.h.b16 %v889
        %v1646 = vunpack.c.l.b16 %v890
        %v1647 = vunpack.c.h.b16 %v890
        %v1648 = vunpack.c.l.b16 %v891
        %v1649 = vunpack.c.h.b16 %v891
        %v1650 = vunpack.c.l.b16 %v892
        %v1651 = vunpack.c.h.b16 %v892
        %v1652 = vunpack.c.l.b16 %v893
        %v1653 = vunpack.c.h.b16 %v893
        %v1654 = vunpack.c.l.b16 %v894
        %v1655 = vunpack.c.h.b16 %v894
        %v1656 = vunpack.c.l.b16 %v895
        %v1657 = vunpack.c.h.b16 %v895
        %v1658 = vunpack.c.l.b16 %v896
        %v1659 = vunpack.c.h.b16 %v896
        %v1660 = vunpack.c.l.b16 %v897
        %v1661 = vunpack.c.h.b16 %v897
        %v1662 = vunpack.c.l.b16 %v898
        %v1663 = vunpack.c.h.b16 %v898
        %v1664 = vunpack.c.l.b16 %v899
        %v1665 = vunpack.c.h.b16 %v899
        %v1666 = vunpack.c.l.b16 %v900
        %v1667 = vunpack.c.h.b16 %v900
        %v1668 = vunpack.c.l.b16 %v901
        %v1669 = vunpack.c.h.b16 %v901
        %v1670 = vunpack.c.l.b16 %v902
        %v1671 = vunpack.c.h.b16 %v902
        %v1672 = vunpack.c.l.b16 %v903
        %v1673 = vunpack.c.h.b16 %v903
        %v1674 = vunpack.c.l.b16 %v904
        %v1675 = vunpack.c.h.b16 %v904
        %v1676 = vunpack.c.l.b16 %v905
        %v1677 = vunpack.c.h.b16 %v905
        %v1678 = vunpack.c.l.b16 %v906
        %v1679 = vunpack.c.h.b16 %v906
        %v1680 = vunpack.c.l.b16 %v907
        %v1681 = vunpack.c.h.b16 %v907
        %v1682 = vunpack.c.l.b16 %v908
        %v1683 = vunpack.c.h.b16 %v908
        %v1684 = vunpack.c.l.b16 %v909
        %v1685 = vunpack.c.h.b16 %v909
        %v1686 = vunpack.c.l.b16 %v910
        %v1687 = vunpack.c.h.b16 %v910
        %v1688 = vunpack.c.l.b16 %v911
        %v1689 = vunpack.c.h.b16 %v911
        %v1690 = vunpack.c.l.b16 %v912
        %v1691 = vunpack.c.h.b16 %v912
        %v1692 = vunpack.c.l.b16 %v913
        %v1693 = vunpack.c.h.b16 %v913
        %v1694 = vunpack.c.l.b16 %v914
        %v1695 = vunpack.c.h.b16 %v914
        %v1696 = vunpack.c.l.b16 %v915
        %v1697 = vunpack.c.h.b16 %v915
        %v1698 = vunpack.c.l.b16 %v916
        %v1699 = vunpack.c.h.b16 %v916
        %v1700 = vunpack.c.l.b16 %v917
        %v1701 = vunpack.c.h.b16 %v917
        %v1702 = vunpack.c.l.b16 %v918
        %v1703 = vunpack.c.h.b16 %v918
        %v1704 = vpack.c.b16 %v1256, %v1192
        %v1705 = vpack.c.b16 %v1257, %v1193
        %v1706 = vpack.c.b16 %v1258, %v1194
        %v1707 = vpack.c.b16 %v1259, %v1195
        %v1708 = vpack.c.b16 %v1260, %v1196
        %v1709 = vpack.c.b16 %v1261, %v1197
        %v1710 = vpack.c.b16 %v1262, %v1198
        %v1711 = vpack.c.b16 %v1263, %v1199
        %v1712 = vpack.c.b16 %v1264, %v1200
        %v1713 = vpack.c.b16 %v1265, %v1201
        %v1714 = vpack.c.b16 %v1266, %v1202
        %v1715 = vpack.c.b16 %v1267, %v1203
        %v1716 = vpack.c.b16 %v1268, %v1204
        %v1717 = vpack.c.b16 %v1269, %v1205
        %v1718 = vpack.c.b16 %v1270, %v1206
        %v1719 = vpack.c.b16 %v1271, %v1207
        %v1720 = vpack.c.b16 %v1272, %v1208
        %v1721 = vpack.c.b16 %v1273, %v1209
        %v1722 = vpack.c.b16 %v1274, %v1210
        %v1723 = vpack.c.b16 %v1275, %v1211
        %v1724 = vpack.c.b16 %v1276, %v1212
        %v1725 = vpack.c.b16 %v1277, %v1213
        %v1726 = vpack.c.b16 %v1278, %v1214
        %v1727 = vpack.c.b16 %v1279, %v1215
        %v1728 = vpack.c.b16 %v1280, %v1216
        %v1729 = vpack.c.b16 %v1281, %v1217
        %v1730 = vpack.c.b16 %v1282, %v1218
        %v1731 = vpack.c.b16 %v1283, %v1219
        %v1732 = vpack.c.b16 %v1284, %v1220
        %v1733 = vpack.c.b16 %v1285, %v1221
        %v1734 = vpack.c.b16 %v1286, %v1222
        %v1735 = vpack.c.b16 %v1287, %v1223
        %v1736 = vpack.c.b16 %v1288, %v1224
        %v1737 = vpack.c.b16 %v1289, %v1225
        %v1738 = vpack.c.b16 %v1290, %v1226
        %v1739 = vpack.c.b16 %v1291, %v1227
        %v1740 = vpack.c.b16 %v1292, %v1228
        %v1741 = vpack.c.b16 %v1293, %v1229
        %v1742 = vpack.c.b16 %v1294, %v1230
        %v1743 = vpack.c.b16 %v1295, %v1231
        %v1744 = vpack.c.b16 %v1296, %v1232
        %v1745 = vpack.c.b16 %v1297, %v1233
        %v1746 = vpack.c.b16 %v1298, %v1234
        %v1747 = vpack.c.b16 %v1299, %v1235
        %v1748 = vpack.c.b16 %v1300, %v1236
        %v1749 = vpack.c.b16 %v1301, %v1237
        %v1750 = vpack.c.b16 %v1302, %v1238
        %v1751 = vpack.c.b16 %v1303, %v1239
        %v1752 = vpack.c.b16 %v1304, %v1240
        %v1753 = vpack.c.b16 %v1305, %v1241
        %v1754 = vpack.c.b16 %v1306, %v1242
        %v1755 = vpack.c.b16 %v1307, %v1243
        %v1756 = vpack.c.b16 %v1308, %v1244
        %v1757 = vpack.c.b16 %v1309, %v1245
        %v1758 = vpack.c.b16 %v1310, %v1246
        %v1759 = vpack.c.b16 %v1311, %v1247
        %v1760 = vpack.c.b16 %v1312, %v1248
        %v1761 = vpack.c.b16 %v1313, %v1249
        %v1762 = vpack.c.b16 %v1314, %v1250
        %v1763 = vpack.c.b16 %v1315, %v1251
        %v1764 = vpack.c.b16 %v1316, %v1252
        %v1765 = vpack.c.b16 %v1317, %v1253
        %v1766 = vpack.c.b16 %v1318, %v1254
        %v1767 = vpack.c.b16 %v1319, %v1255
        %v1768 = vpack.c.b16 %v1384, %v1320
        %v1769 = vpack.c.b16 %v1385, %v1321
        %v1770 = vpack.c.b16 %v1386, %v1322
        %v1771 = vpack.c.b16 %v1387, %v1323
        %v1772 = vpack.c.b16 %v1388, %v1324
        %v1773 = vpack.c.b16 %v1389, %v1325
        %v1774 = vpack.c.b16 %v1390, %v1326
        %v1775 = vpack.c.b16 %v1391, %v1327
        %v1776 = vpack.c.b16 %v1392, %v1328
        %v1777 = vpack.c.b16 %v1393, %v1329
        %v1778 = vpack.c.b16 %v1394, %v1330
        %v1779 = vpack.c.b16 %v1395, %v1331
        %v1780 = vpack.c.b16 %v1396, %v1332
        %v1781 = vpack.c.b16 %v1397, %v1333
        %v1782 = vpack.c.b16 %v1398, %v1334
        %v1783 = vpack.c.b16 %v1399, %v1335
        %v1784 = vpack.c.b16 %v1400, %v1336
        %v1785 = vpack.c.b16 %v1401, %v1337
        %v1786 = vpack.c.b16 %v1402, %v1338
        %v1787 = vpack.c.b16 %v1403, %v1339
        %v1788 = vpack.c.b16 %v1404, %v1340
        %v1789 = vpack.c.b16 %v1405, %v1341
        %v1790 = vpack.c.b16 %v1406, %v1342
        %v1791 = vpack.c.b16 %v1407, %v1343
        %v1792 = vpack.c.b16 %v1408, %v1344
        %v1793 = vpack.c.b16 %v1409, %v1345
        %v1794 = vpack.c.b16 %v1410, %v1346
        %v1795 = vpack.c.b16 %v1411, %v1347
        %v1796 = vpack.c.b16 %v1412, %v1348
        %v1797 = vpack.c.b16 %v1413, %v1349
        %v1798 = vpack.c.b16 %v1414, %v1350
        %v1799 = vpack.c.b16 %v1415, %v1351
        %v1800 = vpack.c.b16 %v1416, %v1352
        %v1801 = vpack.c.b16 %v1417, %v1353
        %v1802 = vpack.c.b16 %v1418, %v1354
        %v1803 = vpack.c.b16 %v1419, %v1355
        %v1804 = vpack.c.b16 %v1420, %v1356
        %v1805 = vpack.c.b16 %v1421, %v1357
        %v1806 = vpack.c.b16 %v1422, %v1358
        %v1807 = vpack.c.b16 %v1423, %v1359
        %v1808 = vpack.c.b16 %v1424, %v1360
        %v1809 = vpack.c.b16 %v1425, %v1361
        %v1810 = vpack.c.b16 %v1426, %v1362
        %v1811 = vpack.c.b16 %v1427, %v1363
        %v1812 = vpack.c.b16 %v1428, %v1364
        %v1813 = vpack.c.b16 %v1429, %v1365
        %v1814 = vpack.c.b16 %v1430, %v1366
        %v1815 = vpack.c.b16 %v1431, %v1367
        %v1816 = vpack.c.b16 %v1432, %v1368
        %v1817 = vpack.c.b16 %v1433, %v1369
        %v1818 = vpack.c.b16 %v1434, %v1370
        %v1819 = vpack.c.b16 %v1435, %v1371
        %v1820 = vpack.c.b16 %v1436, %v1372
        %v1821 = vpack.c.b16 %v1437, %v1373
        %v1822 = vpack.c.b16 %v1438, %v1374
        %v1823 = vpack.c.b16 %v1439, %v1375
        %v1824 = vpack.c.b16 %v1440, %v1376
        %v1825 = vpack.c.b16 %v1441, %v1377
        %v1826 = vpack.c.b16 %v1442, %v1378
        %v1827 = vpack.c.b16 %v1443, %v1379
        %v1828 = vpack.c.b16 %v1444, %v1380
        %v1829 = vpack.c.b16 %v1445, %v1381
        %v1830 = vpack.c.b16 %v1446, %v1382
        %v1831 = vpack.c.b16 %v1447, %v1383
        %v1832 = vpack.c.b16 %v1512, %v1448
        %v1833 = vpack.c.b16 %v1513, %v1449
        %v1834 = vpack.c.b16 %v1514, %v1450
        %v1835 = vpack.c.b16 %v1515, %v1451
        %v1836 = vpack.c.b16 %v1516, %v1452
        %v1837 = vpack.c.b16 %v1517, %v1453
        %v1838 = vpack.c.b16 %v1518, %v1454
        %v1839 = vpack.c.b16 %v1519, %v1455
        %v1840 = vpack.c.b16 %v1520, %v1456
        %v1841 = vpack.c.b16 %v1521, %v1457
        %v1842 = vpack.c.b16 %v1522, %v1458
        %v1843 = vpack.c.b16 %v1523, %v1459
        %v1844 = vpack.c.b16 %v1524, %v1460
        %v1845 = vpack.c.b16 %v1525, %v1461
        %v1846 = vpack.c.b16 %v1526, %v1462
        %v1847 = vpack.c.b16 %v1527, %v1463
        %v1848 = vpack.c.b16 %v1528, %v1464
        %v1849 = vpack.c.b16 %v1529, %v1465
        %v1850 = vpack.c.b16 %v1530, %v1466
        %v1851 = vpack.c.b16 %v1531, %v1467
        %v1852 = vpack.c.b16 %v1532, %v1468
        %v1853 = vpack.c.b16 %v1533, %v1469
        %v1854 = vpack.c.b16 %v1534, %v1470
        %v1855 = vpack.c.b16 %v1535, %v1471
        %v1856 = vpack.c.b16 %v1536, %v1472
        %v1857 = vpack.c.b16 %v1537, %v1473
        %v1858 = vpack.c.b16 %v1538, %v1474
        %v1859 = vpack.c.b16 %v1539, %v1475
        %v1860 = vpack.c.b16 %v1540, %v1476
        %v1861 = vpack.c.b16 %v1541, %v1477
        %v1862 = vpack.c.b16 %v1542, %v1478
        %v1863 = vpack.c.b16 %v1543, %v1479
        %v1864 = vpack.c.b16 %v1544, %v1480
        %v1865 = vpack.c.b16 %v1545, %v1481
        %v1866 = vpack.c.b16 %v1546, %v1482
        %v1867 = vpack.c.b16 %v1547, %v1483
        %v1868 = vpack.c.b16 %v1548, %v1484
        %v1869 = vpack.c.b16 %v1549, %v1485
        %v1870 = vpack.c.b16 %v1550, %v1486
        %v1871 = vpack.c.b16 %v1551, %v1487
        %v1872 = vpack.c.b16 %v1552, %v1488
        %v1873 = vpack.c.b16 %v1553, %v1489
        %v1874 = vpack.c.b16 %v1554, %v1490
        %v1875 = vpack.c.b16 %v1555, %v1491
        %v1876 = vpack.c.b16 %v1556, %v1492
        %v1877 = vpack.c.b16 %v1557, %v1493
        %v1878 = vpack.c.b16 %v1558, %v1494
        %v1879 = vpack.c.b16 %v1559, %v1495
        %v1880 = vpack.c.b16 %v1560, %v1496
        %v1881 = vpack.c.b16 %v1561, %v1497
        %v1882 = vpack.c.b16 %v1562, %v1498
        %v1883 = vpack.c.b16 %v1563, %v1499
        %v1884 = vpack.c.b16 %v1564, %v1500
        %v1885 = vpack.c.b16 %v1565, %v1501
        %v1886 = vpack.c.b16 %v1566, %v1502
        %v1887 = vpack.c.b16 %v1567, %v1503
        %v1888 = vpack.c.b16 %v1568, %v1504
        %v1889 = vpack.c.b16 %v1569, %v1505
        %v1890 = vpack.c.b16 %v1570, %v1506
        %v1891 = vpack.c.b16 %v1571, %v1507
        %v1892 = vpack.c.b16 %v1572, %v1508
        %v1893 = vpack.c.b16 %v1573, %v1509
        %v1894 = vpack.c.b16 %v1574, %v1510
        %v1895 = vpack.c.b16 %v1575, %v1511
        %v1896 = vpack.c.b16 %v1640, %v1576
        %v1897 = vpack.c.b16 %v1641, %v1577
        %v1898 = vpack.c.b16 %v1642, %v1578
        %v1899 = vpack.c.b16 %v1643, %v1579
        %v1900 = vpack.c.b16 %v1644, %v1580
        %v1901 = vpack.c.b16 %v1645, %v1581
        %v1902 = vpack.c.b16 %v1646, %v1582
        %v1903 = vpack.c.b16 %v1647, %v1583
        %v1904 = vpack.c.b16 %v1648, %v1584
        %v1905 = vpack.c.b16 %v1649, %v1585
        %v1906 = vpack.c.b16 %v1650, %v1586
        %v1907 = vpack.c.b16 %v1651, %v1587
        %v1908 = vpack.c.b16 %v1652, %v1588
        %v1909 = vpack.c.b16 %v1653, %v1589
        %v1910 = vpack.c.b16 %v1654, %v1590
        %v1911 = vpack.c.b16 %v1655, %v1591
        %v1912 = vpack.c.b16 %v1656, %v1592
        %v1913 = vpack.c.b16 %v1657, %v1593
        %v1914 = vpack.c.b16 %v1658, %v1594
        %v1915 = vpack.c.b16 %v1659, %v1595
        %v1916 = vpack.c.b16 %v1660, %v1596
        %v1917 = vpack.c.b16 %v1661, %v1597
        %v1918 = vpack.c.b16 %v1662, %v1598
        %v1919 = vpack.c.b16 %v1663, %v1599
        %v1920 = vpack.c.b16 %v1664, %v1600
        %v1921 = vpack.c.b16 %v1665, %v1601
        %v1922 = vpack.c.b16 %v1666, %v1602
        %v1923 = vpack.c.b16 %v1667, %v1603
        %v1924 = vpack.c.b16 %v1668, %v1604
        %v1925 = vpack.c.b16 %v1669, %v1605
        %v1926 = vpack.c.b16 %v1670, %v1606
        %v1927 = vpack.c.b16 %v1671, %v1607
        %v1928 = vpack.c.b16 %v1672, %v1608
        %v1929 = vpack.c.b16 %v1673, %v1609
        %v1930 = vpack.c.b16 %v1674, %v1610
        %v1931 = vpack.c.b16 %v1675, %v1611
        %v1932 = vpack.c.b16 %v1676, %v1612
        %v1933 = vpack.c.b16 %v1677, %v1613
        %v1934 = vpack.c.b16 %v1678, %v1614
        %v1935 = vpack.c.b16 %v1679, %v1615
        %v1936 = vpack.c.b16 %v1680, %v1616
        %v1937 = vpack.c.b16 %v1681, %v1617
        %v1938 = vpack.c.b16 %v1682, %v1618
        %v1939 = vpack.c.b16 %v1683, %v1619
        %v1940 = vpack.c.b16 %v1684, %v1620
        %v1941 = vpack.c.b16 %v1685, %v1621
        %v1942 = vpack.c.b16 %v1686, %v1622
        %v1943 = vpack.c.b16 %v1687, %v1623
        %v1944 = vpack.c.b16 %v1688, %v1624
        %v1945 = vpack.c.b16 %v1689, %v1625
        %v1946 = vpack.c.b16 %v1690, %v1626
        %v1947 = vpack.c.b16 %v1691, %v1627
        %v1948 = vpack.c.b16 %v1692, %v1628
        %v1949 = vpack.c.b16 %v1693, %v1629
        %v1950 = vpack.c.b16 %v1694, %v1630
        %v1951 = vpack.c.b16 %v1695, %v1631
        %v1952 = vpack.c.b16 %v1696, %v1632
        %v1953 = vpack.c.b16 %v1697, %v1633
        %v1954 = vpack.c.b16 %v1698, %v1634
        %v1955 = vpack.c.b16 %v1699, %v1635
        %v1956 = vpack.c.b16 %v1700, %v1636
        %v1957 = vpack.c.b16 %v1701, %v1637
        %v1958 = vpack.c.b16 %v1702, %v1638
        %v1959 = vpack.c.b16 %v1703, %v1639
        %vm2152 = vcmask 515072
        %v2154 = vsel %vm2152, %v935, 0
        %vm2156 = vcmask 1046528
        %vm2157 = vcmask 1047552
        %v2158 = vsel %vm2156, 4294967295, 65535
        %v2159 = vsel %vm2157, %v2158, 0
        %v2161 = vand.u32 %v1896, %v2159
        %v2164 = vand.u32 %v1897, %v2159
        %v2167 = vand.u32 %v1898, %v2159
        %v2170 = vand.u32 %v1899, %v2159
        %v2173 = vand.u32 %v1900, %v2159
        %v2176 = vand.u32 %v1901, %v2159
        %v2179 = vand.u32 %v1902, %v2159
        %v2182 = vand.u32 %v1903, %v2159
        %v2185 = vand.u32 %v1904, %v2159
        %v2188 = vand.u32 %v1905, %v2159
        %v2191 = vand.u32 %v1906, %v2159
        %v2194 = vand.u32 %v1907, %v2159
        %v2197 = vand.u32 %v1908, %v2159
        %v2200 = vand.u32 %v1909, %v2159
        %v2203 = vand.u32 %v1910, %v2159
        %v2206 = vand.u32 %v1911, %v2159
        %v2209 = vand.u32 %v1912, %v2159
        %v2212 = vand.u32 %v1913, %v2159
        %v2215 = vand.u32 %v1914, %v2159
        %v2218 = vand.u32 %v1915, %v2159
        %v2221 = vand.u32 %v1916, %v2159
        %v2224 = vand.u32 %v1917, %v2159
        %v2227 = vand.u32 %v1918, %v2159
        %v2230 = vand.u32 %v1919, %v2159
        %v2233 = vand.u32 %v1920, %v2159
        %v2236 = vand.u32 %v1921, %v2159
        %v2239 = vand.u32 %v1922, %v2159
        %v2242 = vand.u32 %v1923, %v2159
        %v2245 = vand.u32 %v1924, %v2159
        %v2248 = vand.u32 %v1925, %v2159
        %v2251 = vand.u32 %v1926, %v2159
        %v2254 = vand.u32 %v1927, %v2159
        %v2257 = vand.u32 %v1928, %v2159
        %v2260 = vand.u32 %v1929, %v2159
        %v2263 = vand.u32 %v1930, %v2159
        %v2266 = vand.u32 %v1931, %v2159
        %v2269 = vand.u32 %v1932, %v2159
        %v2272 = vand.u32 %v1933, %v2159
        %v2275 = vand.u32 %v1934, %v2159
        %v2278 = vand.u32 %v1935, %v2159
        %v2281 = vand.u32 %v1936, %v2159
        %v2284 = vand.u32 %v1937, %v2159
        %v2287 = vand.u32 %v1938, %v2159
        %v2290 = vand.u32 %v1939, %v2159
        %v2293 = vand.u32 %v1940, %v2159
        %v2296 = vand.u32 %v1941, %v2159
        %v2299 = vand.u32 %v1942, %v2159
        %v2302 = vand.u32 %v1943, %v2159
        %v2305 = vand.u32 %v1944, %v2159
        %v2308 = vand.u32 %v1945, %v2159
        %v2311 = vand.u32 %v1946, %v2159
        %v2314 = vand.u32 %v1947, %v2159
        %v2317 = vand.u32 %v1948, %v2159
        %v2320 = vand.u32 %v1949, %v2159
        %v2323 = vand.u32 %v1950, %v2159
        %v2326 = vand.u32 %v1951, %v2159
        %v2329 = vand.u32 %v1952, %v2159
        %v2332 = vand.u32 %v1953, %v2159
        %v2335 = vand.u32 %v1954, %v2159
        %v2338 = vand.u32 %v1955, %v2159
        %v2341 = vand.u32 %v1956, %v2159
        %v2344 = vand.u32 %v1957, %v2159
        %v2347 = vand.u32 %v1958, %v2159
        %v2350 = vand.u32 %v1959, %v2159
        %2352 = vmatprep.subr.bf16.mxu0 0
        %2353 = vmatpush1.bf16.msra.mxu0 0
        %2354 = vmatprep.subr.bf16.mxu0 0
        %2355 = vmatpush1.bf16.msra.mxu0 0
        %2356 = vmatprep.subr.bf16.mxu0 0
        %2357 = vmatpush1.bf16.msra.mxu0 0
        %2358 = vmatprep.subr.bf16.mxu0 0
        %2359 = vmatpush1.bf16.msra.mxu0 0
        %2360 = vmatprep.subr.bf16.mxu0 %v2164
        %2361 = vmatpush1.bf16.msra.mxu0 %v2161
        %2362 = vmatprep.subr.bf16.mxu0 %v1833
        %2363 = vmatpush1.bf16.msra.mxu0 %v1832
        %2364 = vmatprep.subr.bf16.mxu0 %v1769
        %2365 = vmatpush1.bf16.msra.mxu0 %v1768
        %2366 = vmatprep.subr.bf16.mxu0 %v1705
        %2367 = vmatpush1.bf16.msra.mxu0 %v1704
        %2368 = vmatprep.subr.bf16.mxu0 0
        %2369 = vmatpush2.bf16.msra.mxu0 0
        %2370 = vmatprep.subr.bf16.mxu0 0
        %2371 = vmatpush2.bf16.msra.mxu0 0
        %2372 = vmatprep.subr.bf16.mxu0 0
        %2373 = vmatpush2.bf16.msra.mxu0 0
        %2374 = vmatprep.subr.bf16.mxu0 0
        %2375 = vmatpush2.bf16.msra.mxu0 0
        %2376 = vmatprep.subr.bf16.mxu0 0
        %2377 = vmatpush2.bf16.msra.mxu0 0
        %2378 = vmatprep.subr.bf16.mxu0 0
        %2379 = vmatpush2.bf16.msra.mxu0 0
        %2380 = vmatprep.subr.bf16.mxu0 0
        %2381 = vmatpush2.bf16.msra.mxu0 0
        %2382 = vmatprep.subr.bf16.mxu0 0
        %2383 = vmatpush2.bf16.msra.mxu0 0
        %2384 = vmatprep.mubr.bf16.mxu0 0
        %2385 = vmatmul.mubr.bf16.gmra.mxu0 %v2154
        %v2386 = vpop.f32.mrf.mxu0
        %v2387 = vadd.f32 %v924, %v2386
        %v2388 = vpop.f32.mrf.mxu0
        %v2389 = vadd.f32 %v924, %v2388
        %v2390 = vpop.f32.mrf.mxu0
        %v2391 = vadd.f32 %v929, %v2390
        %v2392 = vpop.f32.mrf.mxu0
        %v2393 = vadd.f32 %v929, %v2392
        %2394 = vdwg.mxu0
        %2395 = vmatprep.subr.bf16.mxu0 0
        %2396 = vmatpush1.bf16.msra.mxu0 0
        %2397 = vmatprep.subr.bf16.mxu0 0
        %2398 = vmatpush1.bf16.msra.mxu0 0
        %2399 = vmatprep.subr.bf16.mxu0 0
        %2400 = vmatpush1.bf16.msra.mxu0 0
        %2401 = vmatprep.subr.bf16.mxu0 0
        %2402 = vmatpush1.bf16.msra.mxu0 0
        %2403 = vmatprep.subr.bf16.mxu0 %v2170
        %2404 = vmatpush1.bf16.msra.mxu0 %v2167
        %2405 = vmatprep.subr.bf16.mxu0 %v1835
        %2406 = vmatpush1.bf16.msra.mxu0 %v1834
        %2407 = vmatprep.subr.bf16.mxu0 %v1771
        %2408 = vmatpush1.bf16.msra.mxu0 %v1770
        %2409 = vmatprep.subr.bf16.mxu0 %v1707
        %2410 = vmatpush1.bf16.msra.mxu0 %v1706
        %2411 = vmatprep.subr.bf16.mxu0 0
        %2412 = vmatpush2.bf16.msra.mxu0 0
        %2413 = vmatprep.subr.bf16.mxu0 0
        %2414 = vmatpush2.bf16.msra.mxu0 0
        %2415 = vmatprep.subr.bf16.mxu0 0
        %2416 = vmatpush2.bf16.msra.mxu0 0
        %2417 = vmatprep.subr.bf16.mxu0 0
        %2418 = vmatpush2.bf16.msra.mxu0 0
        %2419 = vmatprep.subr.bf16.mxu0 0
        %2420 = vmatpush2.bf16.msra.mxu0 0
        %2421 = vmatprep.subr.bf16.mxu0 0
        %2422 = vmatpush2.bf16.msra.mxu0 0
        %2423 = vmatprep.subr.bf16.mxu0 0
        %2424 = vmatpush2.bf16.msra.mxu0 0
        %2425 = vmatprep.subr.bf16.mxu0 0
        %2426 = vmatpush2.bf16.msra.mxu0 0
        %2427 = vmatprep.mubr.bf16.mxu0 0
        %2428 = vmatmul.mubr.bf16.gmra.mxu0 %v2154
        %v2429 = vpop.f32.mrf.mxu0
        %v2430 = vadd.f32 %v924, %v2429
        %v2431 = vpop.f32.mrf.mxu0
        %v2432 = vadd.f32 %v924, %v2431
        %v2433 = vpop.f32.mrf.mxu0
        %v2434 = vadd.f32 %v929, %v2433
        %v2435 = vpop.f32.mrf.mxu0
        %v2436 = vadd.f32 %v929, %v2435
        %2437 = vdwg.mxu0
        %2438 = vmatprep.subr.bf16.mxu0 0
        %2439 = vmatpush1.bf16.msra.mxu0 0
        %2440 = vmatprep.subr.bf16.mxu0 0
        %2441 = vmatpush1.bf16.msra.mxu0 0
        %2442 = vmatprep.subr.bf16.mxu0 0
        %2443 = vmatpush1.bf16.msra.mxu0 0
        %2444 = vmatprep.subr.bf16.mxu0 0
        %2445 = vmatpush1.bf16.msra.mxu0 0
        %2446 = vmatprep.subr.bf16.mxu0 %v2176
        %2447 = vmatpush1.bf16.msra.mxu0 %v2173
        %2448 = vmatprep.subr.bf16.mxu0 %v1837
        %2449 = vmatpush1.bf16.msra.mxu0 %v1836
        %2450 = vmatprep.subr.bf16.mxu0 %v1773
        %2451 = vmatpush1.bf16.msra.mxu0 %v1772
        %2452 = vmatprep.subr.bf16.mxu0 %v1709
        %2453 = vmatpush1.bf16.msra.mxu0 %v1708
        %2454 = vmatprep.subr.bf16.mxu0 0
        %2455 = vmatpush2.bf16.msra.mxu0 0
        %2456 = vmatprep.subr.bf16.mxu0 0
        %2457 = vmatpush2.bf16.msra.mxu0 0
        %2458 = vmatprep.subr.bf16.mxu0 0
        %2459 = vmatpush2.bf16.msra.mxu0 0
        %2460 = vmatprep.subr.bf16.mxu0 0
        %2461 = vmatpush2.bf16.msra.mxu0 0
        %2462 = vmatprep.subr.bf16.mxu0 0
        %2463 = vmatpush2.bf16.msra.mxu0 0
        %2464 = vmatprep.subr.bf16.mxu0 0
        %2465 = vmatpush2.bf16.msra.mxu0 0
        %2466 = vmatprep.subr.bf16.mxu0 0
        %2467 = vmatpush2.bf16.msra.mxu0 0
        %2468 = vmatprep.subr.bf16.mxu0 0
        %2469 = vmatpush2.bf16.msra.mxu0 0
        %2470 = vmatprep.mubr.bf16.mxu0 0
        %2471 = vmatmul.mubr.bf16.gmra.mxu0 %v2154
        %v2472 = vpop.f32.mrf.mxu0
        %v2473 = vadd.f32 %v924, %v2472
        %v2474 = vpop.f32.mrf.mxu0
        %v2475 = vadd.f32 %v924, %v2474
        %v2476 = vpop.f32.mrf.mxu0
        %v2477 = vadd.f32 %v929, %v2476
        %v2478 = vpop.f32.mrf.mxu0
        %v2479 = vadd.f32 %v929, %v2478
        %2480 = vdwg.mxu0
        %2481 = vmatprep.subr.bf16.mxu0 0
        %2482 = vmatpush1.bf16.msra.mxu0 0
        %2483 = vmatprep.subr.bf16.mxu0 0
        %2484 = vmatpush1.bf16.msra.mxu0 0
        %2485 = vmatprep.subr.bf16.mxu0 0
        %2486 = vmatpush1.bf16.msra.mxu0 0
        %2487 = vmatprep.subr.bf16.mxu0 0
        %2488 = vmatpush1.bf16.msra.mxu0 0
        %2489 = vmatprep.subr.bf16.mxu0 %v2182
        %2490 = vmatpush1.bf16.msra.mxu0 %v2179
        %2491 = vmatprep.subr.bf16.mxu0 %v1839
        %2492 = vmatpush1.bf16.msra.mxu0 %v1838
        %2493 = vmatprep.subr.bf16.mxu0 %v1775
        %2494 = vmatpush1.bf16.msra.mxu0 %v1774
        %2495 = vmatprep.subr.bf16.mxu0 %v1711
        %2496 = vmatpush1.bf16.msra.mxu0 %v1710
        %2497 = vmatprep.subr.bf16.mxu0 0
        %2498 = vmatpush2.bf16.msra.mxu0 0
        %2499 = vmatprep.subr.bf16.mxu0 0
        %2500 = vmatpush2.bf16.msra.mxu0 0
        %2501 = vmatprep.subr.bf16.mxu0 0
        %2502 = vmatpush2.bf16.msra.mxu0 0
        %2503 = vmatprep.subr.bf16.mxu0 0
        %2504 = vmatpush2.bf16.msra.mxu0 0
        %2505 = vmatprep.subr.bf16.mxu0 0
        %2506 = vmatpush2.bf16.msra.mxu0 0
        %2507 = vmatprep.subr.bf16.mxu0 0
        %2508 = vmatpush2.bf16.msra.mxu0 0
        %2509 = vmatprep.subr.bf16.mxu0 0
        %2510 = vmatpush2.bf16.msra.mxu0 0
        %2511 = vmatprep.subr.bf16.mxu0 0
        %2512 = vmatpush2.bf16.msra.mxu0 0
        %2513 = vmatprep.mubr.bf16.mxu0 0
        %2514 = vmatmul.mubr.bf16.gmra.mxu0 %v2154
        %v2515 = vpop.f32.mrf.mxu0
        %v2516 = vadd.f32 %v924, %v2515
        %v2517 = vpop.f32.mrf.mxu0
        %v2518 = vadd.f32 %v924, %v2517
        %v2519 = vpop.f32.mrf.mxu0
        %v2520 = vadd.f32 %v929, %v2519
        %v2521 = vpop.f32.mrf.mxu0
        %v2522 = vadd.f32 %v929, %v2521
        %2523 = vdwg.mxu0
        %2524 = vmatprep.subr.bf16.mxu0 0
        %2525 = vmatpush1.bf16.msra.mxu0 0
        %2526 = vmatprep.subr.bf16.mxu0 0
        %2527 = vmatpush1.bf16.msra.mxu0 0
        %2528 = vmatprep.subr.bf16.mxu0 0
        %2529 = vmatpush1.bf16.msra.mxu0 0
        %2530 = vmatprep.subr.bf16.mxu0 0
        %2531 = vmatpush1.bf16.msra.mxu0 0
        %2532 = vmatprep.subr.bf16.mxu0 %v2188
        %2533 = vmatpush1.bf16.msra.mxu0 %v2185
        %2534 = vmatprep.subr.bf16.mxu0 %v1841
        %2535 = vmatpush1.bf16.msra.mxu0 %v1840
        %2536 = vmatprep.subr.bf16.mxu0 %v1777
        %2537 = vmatpush1.bf16.msra.mxu0 %v1776
        %2538 = vmatprep.subr.bf16.mxu0 %v1713
        %2539 = vmatpush1.bf16.msra.mxu0 %v1712
        %2540 = vmatprep.subr.bf16.mxu0 0
        %2541 = vmatpush2.bf16.msra.mxu0 0
        %2542 = vmatprep.subr.bf16.mxu0 0
        %2543 = vmatpush2.bf16.msra.mxu0 0
        %2544 = vmatprep.subr.bf16.mxu0 0
        %2545 = vmatpush2.bf16.msra.mxu0 0
        %2546 = vmatprep.subr.bf16.mxu0 0
        %2547 = vmatpush2.bf16.msra.mxu0 0
        %2548 = vmatprep.subr.bf16.mxu0 0
        %2549 = vmatpush2.bf16.msra.mxu0 0
        %2550 = vmatprep.subr.bf16.mxu0 0
        %2551 = vmatpush2.bf16.msra.mxu0 0
        %2552 = vmatprep.subr.bf16.mxu0 0
        %2553 = vmatpush2.bf16.msra.mxu0 0
        %2554 = vmatprep.subr.bf16.mxu0 0
        %2555 = vmatpush2.bf16.msra.mxu0 0
        %2556 = vmatprep.mubr.bf16.mxu0 0
        %2557 = vmatmul.mubr.bf16.gmra.mxu0 %v2154
        %v2558 = vpop.f32.mrf.mxu0
        %v2559 = vadd.f32 %v924, %v2558
        %v2560 = vpop.f32.mrf.mxu0
        %v2561 = vadd.f32 %v924, %v2560
        %v2562 = vpop.f32.mrf.mxu0
        %v2563 = vadd.f32 %v929, %v2562
        %v2564 = vpop.f32.mrf.mxu0
        %v2565 = vadd.f32 %v929, %v2564
        %2566 = vdwg.mxu0
        %2567 = vmatprep.subr.bf16.mxu0 0
        %2568 = vmatpush1.bf16.msra.mxu0 0
        %2569 = vmatprep.subr.bf16.mxu0 0
        %2570 = vmatpush1.bf16.msra.mxu0 0
        %2571 = vmatprep.subr.bf16.mxu0 0
        %2572 = vmatpush1.bf16.msra.mxu0 0
        %2573 = vmatprep.subr.bf16.mxu0 0
        %2574 = vmatpush1.bf16.msra.mxu0 0
        %2575 = vmatprep.subr.bf16.mxu0 %v2194
        %2576 = vmatpush1.bf16.msra.mxu0 %v2191
        %2577 = vmatprep.subr.bf16.mxu0 %v1843
        %2578 = vmatpush1.bf16.msra.mxu0 %v1842
        %2579 = vmatprep.subr.bf16.mxu0 %v1779
        %2580 = vmatpush1.bf16.msra.mxu0 %v1778
        %2581 = vmatprep.subr.bf16.mxu0 %v1715
        %2582 = vmatpush1.bf16.msra.mxu0 %v1714
        %2583 = vmatprep.subr.bf16.mxu0 0
        %2584 = vmatpush2.bf16.msra.mxu0 0
        %2585 = vmatprep.subr.bf16.mxu0 0
        %2586 = vmatpush2.bf16.msra.mxu0 0
        %2587 = vmatprep.subr.bf16.mxu0 0
        %2588 = vmatpush2.bf16.msra.mxu0 0
        %2589 = vmatprep.subr.bf16.mxu0 0
        %2590 = vmatpush2.bf16.msra.mxu0 0
        %2591 = vmatprep.subr.bf16.mxu0 0
        %2592 = vmatpush2.bf16.msra.mxu0 0
        %2593 = vmatprep.subr.bf16.mxu0 0
        %2594 = vmatpush2.bf16.msra.mxu0 0
        %2595 = vmatprep.subr.bf16.mxu0 0
        %2596 = vmatpush2.bf16.msra.mxu0 0
        %2597 = vmatprep.subr.bf16.mxu0 0
        %2598 = vmatpush2.bf16.msra.mxu0 0
        %2599 = vmatprep.mubr.bf16.mxu0 0
        %2600 = vmatmul.mubr.bf16.gmra.mxu0 %v2154
        %v2601 = vpop.f32.mrf.mxu0
        %v2602 = vadd.f32 %v924, %v2601
        %v2603 = vpop.f32.mrf.mxu0
        %v2604 = vadd.f32 %v924, %v2603
        %v2605 = vpop.f32.mrf.mxu0
        %v2606 = vadd.f32 %v929, %v2605
        %v2607 = vpop.f32.mrf.mxu0
        %v2608 = vadd.f32 %v929, %v2607
        %2609 = vdwg.mxu0
        %2610 = vmatprep.subr.bf16.mxu0 0
        %2611 = vmatpush1.bf16.msra.mxu0 0
        %2612 = vmatprep.subr.bf16.mxu0 0
        %2613 = vmatpush1.bf16.msra.mxu0 0
        %2614 = vmatprep.subr.bf16.mxu0 0
        %2615 = vmatpush1.bf16.msra.mxu0 0
        %2616 = vmatprep.subr.bf16.mxu0 0
        %2617 = vmatpush1.bf16.msra.mxu0 0
        %2618 = vmatprep.subr.bf16.mxu0 %v2200
        %2619 = vmatpush1.bf16.msra.mxu0 %v2197
        %2620 = vmatprep.subr.bf16.mxu0 %v1845
        %2621 = vmatpush1.bf16.msra.mxu0 %v1844
        %2622 = vmatprep.subr.bf16.mxu0 %v1781
        %2623 = vmatpush1.bf16.msra.mxu0 %v1780
        %2624 = vmatprep.subr.bf16.mxu0 %v1717
        %2625 = vmatpush1.bf16.msra.mxu0 %v1716
        %2626 = vmatprep.subr.bf16.mxu0 0
        %2627 = vmatpush2.bf16.msra.mxu0 0
        %2628 = vmatprep.subr.bf16.mxu0 0
        %2629 = vmatpush2.bf16.msra.mxu0 0
        %2630 = vmatprep.subr.bf16.mxu0 0
        %2631 = vmatpush2.bf16.msra.mxu0 0
        %2632 = vmatprep.subr.bf16.mxu0 0
        %2633 = vmatpush2.bf16.msra.mxu0 0
        %2634 = vmatprep.subr.bf16.mxu0 0
        %2635 = vmatpush2.bf16.msra.mxu0 0
        %2636 = vmatprep.subr.bf16.mxu0 0
        %2637 = vmatpush2.bf16.msra.mxu0 0
        %2638 = vmatprep.subr.bf16.mxu0 0
        %2639 = vmatpush2.bf16.msra.mxu0 0
        %2640 = vmatprep.subr.bf16.mxu0 0
        %2641 = vmatpush2.bf16.msra.mxu0 0
        %2642 = vmatprep.mubr.bf16.mxu0 0
        %2643 = vmatmul.mubr.bf16.gmra.mxu0 %v2154
        %v2644 = vpop.f32.mrf.mxu0
        %v2645 = vadd.f32 %v924, %v2644
        %v2646 = vpop.f32.mrf.mxu0
        %v2647 = vadd.f32 %v924, %v2646
        %v2648 = vpop.f32.mrf.mxu0
        %v2649 = vadd.f32 %v929, %v2648
        %v2650 = vpop.f32.mrf.mxu0
        %v2651 = vadd.f32 %v929, %v2650
        %2652 = vdwg.mxu0
        %2653 = vmatprep.subr.bf16.mxu0 0
        %2654 = vmatpush1.bf16.msra.mxu0 0
        %2655 = vmatprep.subr.bf16.mxu0 0
        %2656 = vmatpush1.bf16.msra.mxu0 0
        %2657 = vmatprep.subr.bf16.mxu0 0
        %2658 = vmatpush1.bf16.msra.mxu0 0
        %2659 = vmatprep.subr.bf16.mxu0 0
        %2660 = vmatpush1.bf16.msra.mxu0 0
        %2661 = vmatprep.subr.bf16.mxu0 %v2206
        %2662 = vmatpush1.bf16.msra.mxu0 %v2203
        %2663 = vmatprep.subr.bf16.mxu0 %v1847
        %2664 = vmatpush1.bf16.msra.mxu0 %v1846
        %2665 = vmatprep.subr.bf16.mxu0 %v1783
        %2666 = vmatpush1.bf16.msra.mxu0 %v1782
        %2667 = vmatprep.subr.bf16.mxu0 %v1719
        %2668 = vmatpush1.bf16.msra.mxu0 %v1718
        %2669 = vmatprep.subr.bf16.mxu0 0
        %2670 = vmatpush2.bf16.msra.mxu0 0
        %2671 = vmatprep.subr.bf16.mxu0 0
        %2672 = vmatpush2.bf16.msra.mxu0 0
        %2673 = vmatprep.subr.bf16.mxu0 0
        %2674 = vmatpush2.bf16.msra.mxu0 0
        %2675 = vmatprep.subr.bf16.mxu0 0
        %2676 = vmatpush2.bf16.msra.mxu0 0
        %2677 = vmatprep.subr.bf16.mxu0 0
        %2678 = vmatpush2.bf16.msra.mxu0 0
        %2679 = vmatprep.subr.bf16.mxu0 0
        %2680 = vmatpush2.bf16.msra.mxu0 0
        %2681 = vmatprep.subr.bf16.mxu0 0
        %2682 = vmatpush2.bf16.msra.mxu0 0
        %2683 = vmatprep.subr.bf16.mxu0 0
        %2684 = vmatpush2.bf16.msra.mxu0 0
        %2685 = vmatprep.mubr.bf16.mxu0 0
        %2686 = vmatmul.mubr.bf16.gmra.mxu0 %v2154
        %v2687 = vpop.f32.mrf.mxu0
        %v2688 = vadd.f32 %v924, %v2687
        %v2689 = vpop.f32.mrf.mxu0
        %v2690 = vadd.f32 %v924, %v2689
        %v2691 = vpop.f32.mrf.mxu0
        %v2692 = vadd.f32 %v929, %v2691
        %v2693 = vpop.f32.mrf.mxu0
        %v2694 = vadd.f32 %v929, %v2693
        %2695 = vdwg.mxu0
        %2696 = vmatprep.subr.bf16.mxu0 0
        %2697 = vmatpush1.bf16.msra.mxu0 0
        %2698 = vmatprep.subr.bf16.mxu0 0
        %2699 = vmatpush1.bf16.msra.mxu0 0
        %2700 = vmatprep.subr.bf16.mxu0 0
        %2701 = vmatpush1.bf16.msra.mxu0 0
        %2702 = vmatprep.subr.bf16.mxu0 0
        %2703 = vmatpush1.bf16.msra.mxu0 0
        %2704 = vmatprep.subr.bf16.mxu0 %v2212
        %2705 = vmatpush1.bf16.msra.mxu0 %v2209
        %2706 = vmatprep.subr.bf16.mxu0 %v1849
        %2707 = vmatpush1.bf16.msra.mxu0 %v1848
        %2708 = vmatprep.subr.bf16.mxu0 %v1785
        %2709 = vmatpush1.bf16.msra.mxu0 %v1784
        %2710 = vmatprep.subr.bf16.mxu0 %v1721
        %2711 = vmatpush1.bf16.msra.mxu0 %v1720
        %2712 = vmatprep.subr.bf16.mxu0 0
        %2713 = vmatpush2.bf16.msra.mxu0 0
        %2714 = vmatprep.subr.bf16.mxu0 0
        %2715 = vmatpush2.bf16.msra.mxu0 0
        %2716 = vmatprep.subr.bf16.mxu0 0
        %2717 = vmatpush2.bf16.msra.mxu0 0
        %2718 = vmatprep.subr.bf16.mxu0 0
        %2719 = vmatpush2.bf16.msra.mxu0 0
        %2720 = vmatprep.subr.bf16.mxu0 0
        %2721 = vmatpush2.bf16.msra.mxu0 0
        %2722 = vmatprep.subr.bf16.mxu0 0
        %2723 = vmatpush2.bf16.msra.mxu0 0
        %2724 = vmatprep.subr.bf16.mxu0 0
        %2725 = vmatpush2.bf16.msra.mxu0 0
        %2726 = vmatprep.subr.bf16.mxu0 0
        %2727 = vmatpush2.bf16.msra.mxu0 0
        %2728 = vmatprep.mubr.bf16.mxu0 0
        %2729 = vmatmul.mubr.bf16.gmra.mxu0 %v2154
        %v2730 = vpop.f32.mrf.mxu0
        %v2731 = vadd.f32 %v924, %v2730
        %v2732 = vpop.f32.mrf.mxu0
        %v2733 = vadd.f32 %v924, %v2732
        %v2734 = vpop.f32.mrf.mxu0
        %v2735 = vadd.f32 %v929, %v2734
        %v2736 = vpop.f32.mrf.mxu0
        %v2737 = vadd.f32 %v929, %v2736
        %2738 = vdwg.mxu0
        %2739 = vmatprep.subr.bf16.mxu0 0
        %2740 = vmatpush1.bf16.msra.mxu0 0
        %2741 = vmatprep.subr.bf16.mxu0 0
        %2742 = vmatpush1.bf16.msra.mxu0 0
        %2743 = vmatprep.subr.bf16.mxu0 0
        %2744 = vmatpush1.bf16.msra.mxu0 0
        %2745 = vmatprep.subr.bf16.mxu0 0
        %2746 = vmatpush1.bf16.msra.mxu0 0
        %2747 = vmatprep.subr.bf16.mxu0 %v2218
        %2748 = vmatpush1.bf16.msra.mxu0 %v2215
        %2749 = vmatprep.subr.bf16.mxu0 %v1851
        %2750 = vmatpush1.bf16.msra.mxu0 %v1850
        %2751 = vmatprep.subr.bf16.mxu0 %v1787
        %2752 = vmatpush1.bf16.msra.mxu0 %v1786
        %2753 = vmatprep.subr.bf16.mxu0 %v1723
        %2754 = vmatpush1.bf16.msra.mxu0 %v1722
        %2755 = vmatprep.subr.bf16.mxu0 0
        %2756 = vmatpush2.bf16.msra.mxu0 0
        %2757 = vmatprep.subr.bf16.mxu0 0
        %2758 = vmatpush2.bf16.msra.mxu0 0
        %2759 = vmatprep.subr.bf16.mxu0 0
        %2760 = vmatpush2.bf16.msra.mxu0 0
        %2761 = vmatprep.subr.bf16.mxu0 0
        %2762 = vmatpush2.bf16.msra.mxu0 0
        %2763 = vmatprep.subr.bf16.mxu0 0
        %2764 = vmatpush2.bf16.msra.mxu0 0
        %2765 = vmatprep.subr.bf16.mxu0 0
        %2766 = vmatpush2.bf16.msra.mxu0 0
        %2767 = vmatprep.subr.bf16.mxu0 0
        %2768 = vmatpush2.bf16.msra.mxu0 0
        %2769 = vmatprep.subr.bf16.mxu0 0
        %2770 = vmatpush2.bf16.msra.mxu0 0
        %2771 = vmatprep.mubr.bf16.mxu0 0
        %2772 = vmatmul.mubr.bf16.gmra.mxu0 %v2154
        %v2773 = vpop.f32.mrf.mxu0
        %v2774 = vadd.f32 %v924, %v2773
        %v2775 = vpop.f32.mrf.mxu0
        %v2776 = vadd.f32 %v924, %v2775
        %v2777 = vpop.f32.mrf.mxu0
        %v2778 = vadd.f32 %v929, %v2777
        %v2779 = vpop.f32.mrf.mxu0
        %v2780 = vadd.f32 %v929, %v2779
        %2781 = vdwg.mxu0
        %2782 = vmatprep.subr.bf16.mxu0 0
        %2783 = vmatpush1.bf16.msra.mxu0 0
        %2784 = vmatprep.subr.bf16.mxu0 0
        %2785 = vmatpush1.bf16.msra.mxu0 0
        %2786 = vmatprep.subr.bf16.mxu0 0
        %2787 = vmatpush1.bf16.msra.mxu0 0
        %2788 = vmatprep.subr.bf16.mxu0 0
        %2789 = vmatpush1.bf16.msra.mxu0 0
        %2790 = vmatprep.subr.bf16.mxu0 %v2224
        %2791 = vmatpush1.bf16.msra.mxu0 %v2221
        %2792 = vmatprep.subr.bf16.mxu0 %v1853
        %2793 = vmatpush1.bf16.msra.mxu0 %v1852
        %2794 = vmatprep.subr.bf16.mxu0 %v1789
        %2795 = vmatpush1.bf16.msra.mxu0 %v1788
        %2796 = vmatprep.subr.bf16.mxu0 %v1725
        %2797 = vmatpush1.bf16.msra.mxu0 %v1724
        %2798 = vmatprep.subr.bf16.mxu0 0
        %2799 = vmatpush2.bf16.msra.mxu0 0
        %2800 = vmatprep.subr.bf16.mxu0 0
        %2801 = vmatpush2.bf16.msra.mxu0 0
        %2802 = vmatprep.subr.bf16.mxu0 0
        %2803 = vmatpush2.bf16.msra.mxu0 0
        %2804 = vmatprep.subr.bf16.mxu0 0
        %2805 = vmatpush2.bf16.msra.mxu0 0
        %2806 = vmatprep.subr.bf16.mxu0 0
        %2807 = vmatpush2.bf16.msra.mxu0 0
        %2808 = vmatprep.subr.bf16.mxu0 0
        %2809 = vmatpush2.bf16.msra.mxu0 0
        %2810 = vmatprep.subr.bf16.mxu0 0
        %2811 = vmatpush2.bf16.msra.mxu0 0
        %2812 = vmatprep.subr.bf16.mxu0 0
        %2813 = vmatpush2.bf16.msra.mxu0 0
        %2814 = vmatprep.mubr.bf16.mxu0 0
        %2815 = vmatmul.mubr.bf16.gmra.mxu0 %v2154
        %v2816 = vpop.f32.mrf.mxu0
        %v2817 = vadd.f32 %v924, %v2816
        %v2818 = vpop.f32.mrf.mxu0
        %v2819 = vadd.f32 %v924, %v2818
        %v2820 = vpop.f32.mrf.mxu0
        %v2821 = vadd.f32 %v929, %v2820
        %v2822 = vpop.f32.mrf.mxu0
        %v2823 = vadd.f32 %v929, %v2822
        %2824 = vdwg.mxu0
        %2825 = vmatprep.subr.bf16.mxu0 0
        %2826 = vmatpush1.bf16.msra.mxu0 0
        %2827 = vmatprep.subr.bf16.mxu0 0
        %2828 = vmatpush1.bf16.msra.mxu0 0
        %2829 = vmatprep.subr.bf16.mxu0 0
        %2830 = vmatpush1.bf16.msra.mxu0 0
        %2831 = vmatprep.subr.bf16.mxu0 0
        %2832 = vmatpush1.bf16.msra.mxu0 0
        %2833 = vmatprep.subr.bf16.mxu0 %v2230
        %2834 = vmatpush1.bf16.msra.mxu0 %v2227
        %2835 = vmatprep.subr.bf16.mxu0 %v1855
        %2836 = vmatpush1.bf16.msra.mxu0 %v1854
        %2837 = vmatprep.subr.bf16.mxu0 %v1791
        %2838 = vmatpush1.bf16.msra.mxu0 %v1790
        %2839 = vmatprep.subr.bf16.mxu0 %v1727
        %2840 = vmatpush1.bf16.msra.mxu0 %v1726
        %2841 = vmatprep.subr.bf16.mxu0 0
        %2842 = vmatpush2.bf16.msra.mxu0 0
        %2843 = vmatprep.subr.bf16.mxu0 0
        %2844 = vmatpush2.bf16.msra.mxu0 0
        %2845 = vmatprep.subr.bf16.mxu0 0
        %2846 = vmatpush2.bf16.msra.mxu0 0
        %2847 = vmatprep.subr.bf16.mxu0 0
        %2848 = vmatpush2.bf16.msra.mxu0 0
        %2849 = vmatprep.subr.bf16.mxu0 0
        %2850 = vmatpush2.bf16.msra.mxu0 0
        %2851 = vmatprep.subr.bf16.mxu0 0
        %2852 = vmatpush2.bf16.msra.mxu0 0
        %2853 = vmatprep.subr.bf16.mxu0 0
        %2854 = vmatpush2.bf16.msra.mxu0 0
        %2855 = vmatprep.subr.bf16.mxu0 0
        %2856 = vmatpush2.bf16.msra.mxu0 0
        %2857 = vmatprep.mubr.bf16.mxu0 0
        %2858 = vmatmul.mubr.bf16.gmra.mxu0 %v2154
        %v2859 = vpop.f32.mrf.mxu0
        %v2860 = vadd.f32 %v924, %v2859
        %v2861 = vpop.f32.mrf.mxu0
        %v2862 = vadd.f32 %v924, %v2861
        %v2863 = vpop.f32.mrf.mxu0
        %v2864 = vadd.f32 %v929, %v2863
        %v2865 = vpop.f32.mrf.mxu0
        %v2866 = vadd.f32 %v929, %v2865
        %2867 = vdwg.mxu0
        %2868 = vmatprep.subr.bf16.mxu0 0
        %2869 = vmatpush1.bf16.msra.mxu0 0
        %2870 = vmatprep.subr.bf16.mxu0 0
        %2871 = vmatpush1.bf16.msra.mxu0 0
        %2872 = vmatprep.subr.bf16.mxu0 0
        %2873 = vmatpush1.bf16.msra.mxu0 0
        %2874 = vmatprep.subr.bf16.mxu0 0
        %2875 = vmatpush1.bf16.msra.mxu0 0
        %2876 = vmatprep.subr.bf16.mxu0 %v2236
        %2877 = vmatpush1.bf16.msra.mxu0 %v2233
        %2878 = vmatprep.subr.bf16.mxu0 %v1857
        %2879 = vmatpush1.bf16.msra.mxu0 %v1856
        %2880 = vmatprep.subr.bf16.mxu0 %v1793
        %2881 = vmatpush1.bf16.msra.mxu0 %v1792
        %2882 = vmatprep.subr.bf16.mxu0 %v1729
        %2883 = vmatpush1.bf16.msra.mxu0 %v1728
        %2884 = vmatprep.subr.bf16.mxu0 0
        %2885 = vmatpush2.bf16.msra.mxu0 0
        %2886 = vmatprep.subr.bf16.mxu0 0
        %2887 = vmatpush2.bf16.msra.mxu0 0
        %2888 = vmatprep.subr.bf16.mxu0 0
        %2889 = vmatpush2.bf16.msra.mxu0 0
        %2890 = vmatprep.subr.bf16.mxu0 0
        %2891 = vmatpush2.bf16.msra.mxu0 0
        %2892 = vmatprep.subr.bf16.mxu0 0
        %2893 = vmatpush2.bf16.msra.mxu0 0
        %2894 = vmatprep.subr.bf16.mxu0 0
        %2895 = vmatpush2.bf16.msra.mxu0 0
        %2896 = vmatprep.subr.bf16.mxu0 0
        %2897 = vmatpush2.bf16.msra.mxu0 0
        %2898 = vmatprep.subr.bf16.mxu0 0
        %2899 = vmatpush2.bf16.msra.mxu0 0
        %2900 = vmatprep.mubr.bf16.mxu0 0
        %2901 = vmatmul.mubr.bf16.gmra.mxu0 %v2154
        %v2902 = vpop.f32.mrf.mxu0
        %v2903 = vadd.f32 %v924, %v2902
        %v2904 = vpop.f32.mrf.mxu0
        %v2905 = vadd.f32 %v924, %v2904
        %v2906 = vpop.f32.mrf.mxu0
        %v2907 = vadd.f32 %v929, %v2906
        %v2908 = vpop.f32.mrf.mxu0
        %v2909 = vadd.f32 %v929, %v2908
        %2910 = vdwg.mxu0
        %2911 = vmatprep.subr.bf16.mxu0 0
        %2912 = vmatpush1.bf16.msra.mxu0 0
        %2913 = vmatprep.subr.bf16.mxu0 0
        %2914 = vmatpush1.bf16.msra.mxu0 0
        %2915 = vmatprep.subr.bf16.mxu0 0
        %2916 = vmatpush1.bf16.msra.mxu0 0
        %2917 = vmatprep.subr.bf16.mxu0 0
        %2918 = vmatpush1.bf16.msra.mxu0 0
        %2919 = vmatprep.subr.bf16.mxu0 %v2242
        %2920 = vmatpush1.bf16.msra.mxu0 %v2239
        %2921 = vmatprep.subr.bf16.mxu0 %v1859
        %2922 = vmatpush1.bf16.msra.mxu0 %v1858
        %2923 = vmatprep.subr.bf16.mxu0 %v1795
        %2924 = vmatpush1.bf16.msra.mxu0 %v1794
        %2925 = vmatprep.subr.bf16.mxu0 %v1731
        %2926 = vmatpush1.bf16.msra.mxu0 %v1730
        %2927 = vmatprep.subr.bf16.mxu0 0
        %2928 = vmatpush2.bf16.msra.mxu0 0
        %2929 = vmatprep.subr.bf16.mxu0 0
        %2930 = vmatpush2.bf16.msra.mxu0 0
        %2931 = vmatprep.subr.bf16.mxu0 0
        %2932 = vmatpush2.bf16.msra.mxu0 0
        %2933 = vmatprep.subr.bf16.mxu0 0
        %2934 = vmatpush2.bf16.msra.mxu0 0
        %2935 = vmatprep.subr.bf16.mxu0 0
        %2936 = vmatpush2.bf16.msra.mxu0 0
        %2937 = vmatprep.subr.bf16.mxu0 0
        %2938 = vmatpush2.bf16.msra.mxu0 0
        %2939 = vmatprep.subr.bf16.mxu0 0
        %2940 = vmatpush2.bf16.msra.mxu0 0
        %2941 = vmatprep.subr.bf16.mxu0 0
        %2942 = vmatpush2.bf16.msra.mxu0 0
        %2943 = vmatprep.mubr.bf16.mxu0 0
        %2944 = vmatmul.mubr.bf16.gmra.mxu0 %v2154
        %v2945 = vpop.f32.mrf.mxu0
        %v2946 = vadd.f32 %v924, %v2945
        %v2947 = vpop.f32.mrf.mxu0
        %v2948 = vadd.f32 %v924, %v2947
        %v2949 = vpop.f32.mrf.mxu0
        %v2950 = vadd.f32 %v929, %v2949
        %v2951 = vpop.f32.mrf.mxu0
        %v2952 = vadd.f32 %v929, %v2951
        %2953 = vdwg.mxu0
        %2954 = vmatprep.subr.bf16.mxu0 0
        %2955 = vmatpush1.bf16.msra.mxu0 0
        %2956 = vmatprep.subr.bf16.mxu0 0
        %2957 = vmatpush1.bf16.msra.mxu0 0
        %2958 = vmatprep.subr.bf16.mxu0 0
        %2959 = vmatpush1.bf16.msra.mxu0 0
        %2960 = vmatprep.subr.bf16.mxu0 0
        %2961 = vmatpush1.bf16.msra.mxu0 0
        %2962 = vmatprep.subr.bf16.mxu0 %v2248
        %2963 = vmatpush1.bf16.msra.mxu0 %v2245
        %2964 = vmatprep.subr.bf16.mxu0 %v1861
        %2965 = vmatpush1.bf16.msra.mxu0 %v1860
        %2966 = vmatprep.subr.bf16.mxu0 %v1797
        %2967 = vmatpush1.bf16.msra.mxu0 %v1796
        %2968 = vmatprep.subr.bf16.mxu0 %v1733
        %2969 = vmatpush1.bf16.msra.mxu0 %v1732
        %2970 = vmatprep.subr.bf16.mxu0 0
        %2971 = vmatpush2.bf16.msra.mxu0 0
        %2972 = vmatprep.subr.bf16.mxu0 0
        %2973 = vmatpush2.bf16.msra.mxu0 0
        %2974 = vmatprep.subr.bf16.mxu0 0
        %2975 = vmatpush2.bf16.msra.mxu0 0
        %2976 = vmatprep.subr.bf16.mxu0 0
        %2977 = vmatpush2.bf16.msra.mxu0 0
        %2978 = vmatprep.subr.bf16.mxu0 0
        %2979 = vmatpush2.bf16.msra.mxu0 0
        %2980 = vmatprep.subr.bf16.mxu0 0
        %2981 = vmatpush2.bf16.msra.mxu0 0
        %2982 = vmatprep.subr.bf16.mxu0 0
        %2983 = vmatpush2.bf16.msra.mxu0 0
        %2984 = vmatprep.subr.bf16.mxu0 0
        %2985 = vmatpush2.bf16.msra.mxu0 0
        %2986 = vmatprep.mubr.bf16.mxu0 0
        %2987 = vmatmul.mubr.bf16.gmra.mxu0 %v2154
        %v2988 = vpop.f32.mrf.mxu0
        %v2989 = vadd.f32 %v924, %v2988
        %v2990 = vpop.f32.mrf.mxu0
        %v2991 = vadd.f32 %v924, %v2990
        %v2992 = vpop.f32.mrf.mxu0
        %v2993 = vadd.f32 %v929, %v2992
        %v2994 = vpop.f32.mrf.mxu0
        %v2995 = vadd.f32 %v929, %v2994
        %2996 = vdwg.mxu0
        %2997 = vmatprep.subr.bf16.mxu0 0
        %2998 = vmatpush1.bf16.msra.mxu0 0
        %2999 = vmatprep.subr.bf16.mxu0 0
        %3000 = vmatpush1.bf16.msra.mxu0 0
        %3001 = vmatprep.subr.bf16.mxu0 0
        %3002 = vmatpush1.bf16.msra.mxu0 0
        %3003 = vmatprep.subr.bf16.mxu0 0
        %3004 = vmatpush1.bf16.msra.mxu0 0
        %3005 = vmatprep.subr.bf16.mxu0 %v2254
        %3006 = vmatpush1.bf16.msra.mxu0 %v2251
        %3007 = vmatprep.subr.bf16.mxu0 %v1863
        %3008 = vmatpush1.bf16.msra.mxu0 %v1862
        %3009 = vmatprep.subr.bf16.mxu0 %v1799
        %3010 = vmatpush1.bf16.msra.mxu0 %v1798
        %3011 = vmatprep.subr.bf16.mxu0 %v1735
        %3012 = vmatpush1.bf16.msra.mxu0 %v1734
        %3013 = vmatprep.subr.bf16.mxu0 0
        %3014 = vmatpush2.bf16.msra.mxu0 0
        %3015 = vmatprep.subr.bf16.mxu0 0
        %3016 = vmatpush2.bf16.msra.mxu0 0
        %3017 = vmatprep.subr.bf16.mxu0 0
        %3018 = vmatpush2.bf16.msra.mxu0 0
        %3019 = vmatprep.subr.bf16.mxu0 0
        %3020 = vmatpush2.bf16.msra.mxu0 0
        %3021 = vmatprep.subr.bf16.mxu0 0
        %3022 = vmatpush2.bf16.msra.mxu0 0
        %3023 = vmatprep.subr.bf16.mxu0 0
        %3024 = vmatpush2.bf16.msra.mxu0 0
        %3025 = vmatprep.subr.bf16.mxu0 0
        %3026 = vmatpush2.bf16.msra.mxu0 0
        %3027 = vmatprep.subr.bf16.mxu0 0
        %3028 = vmatpush2.bf16.msra.mxu0 0
        %3029 = vmatprep.mubr.bf16.mxu0 0
        %3030 = vmatmul.mubr.bf16.gmra.mxu0 %v2154
        %v3031 = vpop.f32.mrf.mxu0
        %v3032 = vadd.f32 %v924, %v3031
        %v3033 = vpop.f32.mrf.mxu0
        %v3034 = vadd.f32 %v924, %v3033
        %v3035 = vpop.f32.mrf.mxu0
        %v3036 = vadd.f32 %v929, %v3035
        %v3037 = vpop.f32.mrf.mxu0
        %v3038 = vadd.f32 %v929, %v3037
        %3039 = vdwg.mxu0
        %3040 = vmatprep.subr.bf16.mxu0 0
        %3041 = vmatpush1.bf16.msra.mxu0 0
        %3042 = vmatprep.subr.bf16.mxu0 0
        %3043 = vmatpush1.bf16.msra.mxu0 0
        %3044 = vmatprep.subr.bf16.mxu0 0
        %3045 = vmatpush1.bf16.msra.mxu0 0
        %3046 = vmatprep.subr.bf16.mxu0 0
        %3047 = vmatpush1.bf16.msra.mxu0 0
        %3048 = vmatprep.subr.bf16.mxu0 %v2260
        %3049 = vmatpush1.bf16.msra.mxu0 %v2257
        %3050 = vmatprep.subr.bf16.mxu0 %v1865
        %3051 = vmatpush1.bf16.msra.mxu0 %v1864
        %3052 = vmatprep.subr.bf16.mxu0 %v1801
        %3053 = vmatpush1.bf16.msra.mxu0 %v1800
        %3054 = vmatprep.subr.bf16.mxu0 %v1737
        %3055 = vmatpush1.bf16.msra.mxu0 %v1736
        %3056 = vmatprep.subr.bf16.mxu0 0
        %3057 = vmatpush2.bf16.msra.mxu0 0
        %3058 = vmatprep.subr.bf16.mxu0 0
        %3059 = vmatpush2.bf16.msra.mxu0 0
        %3060 = vmatprep.subr.bf16.mxu0 0
        %3061 = vmatpush2.bf16.msra.mxu0 0
        %3062 = vmatprep.subr.bf16.mxu0 0
        %3063 = vmatpush2.bf16.msra.mxu0 0
        %3064 = vmatprep.subr.bf16.mxu0 0
        %3065 = vmatpush2.bf16.msra.mxu0 0
        %3066 = vmatprep.subr.bf16.mxu0 0
        %3067 = vmatpush2.bf16.msra.mxu0 0
        %3068 = vmatprep.subr.bf16.mxu0 0
        %3069 = vmatpush2.bf16.msra.mxu0 0
        %3070 = vmatprep.subr.bf16.mxu0 0
        %3071 = vmatpush2.bf16.msra.mxu0 0
        %3072 = vmatprep.mubr.bf16.mxu0 0
        %3073 = vmatmul.mubr.bf16.gmra.mxu0 %v2154
        %v3074 = vpop.f32.mrf.mxu0
        %v3075 = vadd.f32 %v924, %v3074
        %v3076 = vpop.f32.mrf.mxu0
        %v3077 = vadd.f32 %v924, %v3076
        %v3078 = vpop.f32.mrf.mxu0
        %v3079 = vadd.f32 %v929, %v3078
        %v3080 = vpop.f32.mrf.mxu0
        %v3081 = vadd.f32 %v929, %v3080
        %3082 = vdwg.mxu0
        %3083 = vmatprep.subr.bf16.mxu0 0
        %3084 = vmatpush1.bf16.msra.mxu0 0
        %3085 = vmatprep.subr.bf16.mxu0 0
        %3086 = vmatpush1.bf16.msra.mxu0 0
        %3087 = vmatprep.subr.bf16.mxu0 0
        %3088 = vmatpush1.bf16.msra.mxu0 0
        %3089 = vmatprep.subr.bf16.mxu0 0
        %3090 = vmatpush1.bf16.msra.mxu0 0
        %3091 = vmatprep.subr.bf16.mxu0 %v2266
        %3092 = vmatpush1.bf16.msra.mxu0 %v2263
        %3093 = vmatprep.subr.bf16.mxu0 %v1867
        %3094 = vmatpush1.bf16.msra.mxu0 %v1866
        %3095 = vmatprep.subr.bf16.mxu0 %v1803
        %3096 = vmatpush1.bf16.msra.mxu0 %v1802
        %3097 = vmatprep.subr.bf16.mxu0 %v1739
        %3098 = vmatpush1.bf16.msra.mxu0 %v1738
        %3099 = vmatprep.subr.bf16.mxu0 0
        %3100 = vmatpush2.bf16.msra.mxu0 0
        %3101 = vmatprep.subr.bf16.mxu0 0
        %3102 = vmatpush2.bf16.msra.mxu0 0
        %3103 = vmatprep.subr.bf16.mxu0 0
        %3104 = vmatpush2.bf16.msra.mxu0 0
        %3105 = vmatprep.subr.bf16.mxu0 0
        %3106 = vmatpush2.bf16.msra.mxu0 0
        %3107 = vmatprep.subr.bf16.mxu0 0
        %3108 = vmatpush2.bf16.msra.mxu0 0
        %3109 = vmatprep.subr.bf16.mxu0 0
        %3110 = vmatpush2.bf16.msra.mxu0 0
        %3111 = vmatprep.subr.bf16.mxu0 0
        %3112 = vmatpush2.bf16.msra.mxu0 0
        %3113 = vmatprep.subr.bf16.mxu0 0
        %3114 = vmatpush2.bf16.msra.mxu0 0
        %3115 = vmatprep.mubr.bf16.mxu0 0
        %3116 = vmatmul.mubr.bf16.gmra.mxu0 %v2154
        %v3117 = vpop.f32.mrf.mxu0
        %v3118 = vadd.f32 %v924, %v3117
        %v3119 = vpop.f32.mrf.mxu0
        %v3120 = vadd.f32 %v924, %v3119
        %v3121 = vpop.f32.mrf.mxu0
        %v3122 = vadd.f32 %v929, %v3121
        %v3123 = vpop.f32.mrf.mxu0
        %v3124 = vadd.f32 %v929, %v3123
        %3125 = vdwg.mxu0
        %3126 = vmatprep.subr.bf16.mxu0 0
        %3127 = vmatpush1.bf16.msra.mxu0 0
        %3128 = vmatprep.subr.bf16.mxu0 0
        %3129 = vmatpush1.bf16.msra.mxu0 0
        %3130 = vmatprep.subr.bf16.mxu0 0
        %3131 = vmatpush1.bf16.msra.mxu0 0
        %3132 = vmatprep.subr.bf16.mxu0 0
        %3133 = vmatpush1.bf16.msra.mxu0 0
        %3134 = vmatprep.subr.bf16.mxu0 %v2272
        %3135 = vmatpush1.bf16.msra.mxu0 %v2269
        %3136 = vmatprep.subr.bf16.mxu0 %v1869
        %3137 = vmatpush1.bf16.msra.mxu0 %v1868
        %3138 = vmatprep.subr.bf16.mxu0 %v1805
        %3139 = vmatpush1.bf16.msra.mxu0 %v1804
        %3140 = vmatprep.subr.bf16.mxu0 %v1741
        %3141 = vmatpush1.bf16.msra.mxu0 %v1740
        %3142 = vmatprep.subr.bf16.mxu0 0
        %3143 = vmatpush2.bf16.msra.mxu0 0
        %3144 = vmatprep.subr.bf16.mxu0 0
        %3145 = vmatpush2.bf16.msra.mxu0 0
        %3146 = vmatprep.subr.bf16.mxu0 0
        %3147 = vmatpush2.bf16.msra.mxu0 0
        %3148 = vmatprep.subr.bf16.mxu0 0
        %3149 = vmatpush2.bf16.msra.mxu0 0
        %3150 = vmatprep.subr.bf16.mxu0 0
        %3151 = vmatpush2.bf16.msra.mxu0 0
        %3152 = vmatprep.subr.bf16.mxu0 0
        %3153 = vmatpush2.bf16.msra.mxu0 0
        %3154 = vmatprep.subr.bf16.mxu0 0
        %3155 = vmatpush2.bf16.msra.mxu0 0
        %3156 = vmatprep.subr.bf16.mxu0 0
        %3157 = vmatpush2.bf16.msra.mxu0 0
        %3158 = vmatprep.mubr.bf16.mxu0 0
        %3159 = vmatmul.mubr.bf16.gmra.mxu0 %v2154
        %v3160 = vpop.f32.mrf.mxu0
        %v3161 = vadd.f32 %v924, %v3160
        %v3162 = vpop.f32.mrf.mxu0
        %v3163 = vadd.f32 %v924, %v3162
        %v3164 = vpop.f32.mrf.mxu0
        %v3165 = vadd.f32 %v929, %v3164
        %v3166 = vpop.f32.mrf.mxu0
        %v3167 = vadd.f32 %v929, %v3166
        %3168 = vdwg.mxu0
        %3169 = vmatprep.subr.bf16.mxu0 0
        %3170 = vmatpush1.bf16.msra.mxu0 0
        %3171 = vmatprep.subr.bf16.mxu0 0
        %3172 = vmatpush1.bf16.msra.mxu0 0
        %3173 = vmatprep.subr.bf16.mxu0 0
        %3174 = vmatpush1.bf16.msra.mxu0 0
        %3175 = vmatprep.subr.bf16.mxu0 0
        %3176 = vmatpush1.bf16.msra.mxu0 0
        %3177 = vmatprep.subr.bf16.mxu0 %v2278
        %3178 = vmatpush1.bf16.msra.mxu0 %v2275
        %3179 = vmatprep.subr.bf16.mxu0 %v1871
        %3180 = vmatpush1.bf16.msra.mxu0 %v1870
        %3181 = vmatprep.subr.bf16.mxu0 %v1807
        %3182 = vmatpush1.bf16.msra.mxu0 %v1806
        %3183 = vmatprep.subr.bf16.mxu0 %v1743
        %3184 = vmatpush1.bf16.msra.mxu0 %v1742
        %3185 = vmatprep.subr.bf16.mxu0 0
        %3186 = vmatpush2.bf16.msra.mxu0 0
        %3187 = vmatprep.subr.bf16.mxu0 0
        %3188 = vmatpush2.bf16.msra.mxu0 0
        %3189 = vmatprep.subr.bf16.mxu0 0
        %3190 = vmatpush2.bf16.msra.mxu0 0
        %3191 = vmatprep.subr.bf16.mxu0 0
        %3192 = vmatpush2.bf16.msra.mxu0 0
        %3193 = vmatprep.subr.bf16.mxu0 0
        %3194 = vmatpush2.bf16.msra.mxu0 0
        %3195 = vmatprep.subr.bf16.mxu0 0
        %3196 = vmatpush2.bf16.msra.mxu0 0
        %3197 = vmatprep.subr.bf16.mxu0 0
        %3198 = vmatpush2.bf16.msra.mxu0 0
        %3199 = vmatprep.subr.bf16.mxu0 0
        %3200 = vmatpush2.bf16.msra.mxu0 0
        %3201 = vmatprep.mubr.bf16.mxu0 0
        %3202 = vmatmul.mubr.bf16.gmra.mxu0 %v2154
        %v3203 = vpop.f32.mrf.mxu0
        %v3204 = vadd.f32 %v924, %v3203
        %v3205 = vpop.f32.mrf.mxu0
        %v3206 = vadd.f32 %v924, %v3205
        %v3207 = vpop.f32.mrf.mxu0
        %v3208 = vadd.f32 %v929, %v3207
        %v3209 = vpop.f32.mrf.mxu0
        %v3210 = vadd.f32 %v929, %v3209
        %3211 = vdwg.mxu0
        %3212 = vmatprep.subr.bf16.mxu0 0
        %3213 = vmatpush1.bf16.msra.mxu0 0
        %3214 = vmatprep.subr.bf16.mxu0 0
        %3215 = vmatpush1.bf16.msra.mxu0 0
        %3216 = vmatprep.subr.bf16.mxu0 0
        %3217 = vmatpush1.bf16.msra.mxu0 0
        %3218 = vmatprep.subr.bf16.mxu0 0
        %3219 = vmatpush1.bf16.msra.mxu0 0
        %3220 = vmatprep.subr.bf16.mxu0 %v2284
        %3221 = vmatpush1.bf16.msra.mxu0 %v2281
        %3222 = vmatprep.subr.bf16.mxu0 %v1873
        %3223 = vmatpush1.bf16.msra.mxu0 %v1872
        %3224 = vmatprep.subr.bf16.mxu0 %v1809
        %3225 = vmatpush1.bf16.msra.mxu0 %v1808
        %3226 = vmatprep.subr.bf16.mxu0 %v1745
        %3227 = vmatpush1.bf16.msra.mxu0 %v1744
        %3228 = vmatprep.subr.bf16.mxu0 0
        %3229 = vmatpush2.bf16.msra.mxu0 0
        %3230 = vmatprep.subr.bf16.mxu0 0
        %3231 = vmatpush2.bf16.msra.mxu0 0
        %3232 = vmatprep.subr.bf16.mxu0 0
        %3233 = vmatpush2.bf16.msra.mxu0 0
        %3234 = vmatprep.subr.bf16.mxu0 0
        %3235 = vmatpush2.bf16.msra.mxu0 0
        %3236 = vmatprep.subr.bf16.mxu0 0
        %3237 = vmatpush2.bf16.msra.mxu0 0
        %3238 = vmatprep.subr.bf16.mxu0 0
        %3239 = vmatpush2.bf16.msra.mxu0 0
        %3240 = vmatprep.subr.bf16.mxu0 0
        %3241 = vmatpush2.bf16.msra.mxu0 0
        %3242 = vmatprep.subr.bf16.mxu0 0
        %3243 = vmatpush2.bf16.msra.mxu0 0
        %3244 = vmatprep.mubr.bf16.mxu0 0
        %3245 = vmatmul.mubr.bf16.gmra.mxu0 %v2154
        %v3246 = vpop.f32.mrf.mxu0
        %v3247 = vadd.f32 %v924, %v3246
        %v3248 = vpop.f32.mrf.mxu0
        %v3249 = vadd.f32 %v924, %v3248
        %v3250 = vpop.f32.mrf.mxu0
        %v3251 = vadd.f32 %v929, %v3250
        %v3252 = vpop.f32.mrf.mxu0
        %v3253 = vadd.f32 %v929, %v3252
        %3254 = vdwg.mxu0
        %3255 = vmatprep.subr.bf16.mxu0 0
        %3256 = vmatpush1.bf16.msra.mxu0 0
        %3257 = vmatprep.subr.bf16.mxu0 0
        %3258 = vmatpush1.bf16.msra.mxu0 0
        %3259 = vmatprep.subr.bf16.mxu0 0
        %3260 = vmatpush1.bf16.msra.mxu0 0
        %3261 = vmatprep.subr.bf16.mxu0 0
        %3262 = vmatpush1.bf16.msra.mxu0 0
        %3263 = vmatprep.subr.bf16.mxu0 %v2290
        %3264 = vmatpush1.bf16.msra.mxu0 %v2287
        %3265 = vmatprep.subr.bf16.mxu0 %v1875
        %3266 = vmatpush1.bf16.msra.mxu0 %v1874
        %3267 = vmatprep.subr.bf16.mxu0 %v1811
        %3268 = vmatpush1.bf16.msra.mxu0 %v1810
        %3269 = vmatprep.subr.bf16.mxu0 %v1747
        %3270 = vmatpush1.bf16.msra.mxu0 %v1746
        %3271 = vmatprep.subr.bf16.mxu0 0
        %3272 = vmatpush2.bf16.msra.mxu0 0
        %3273 = vmatprep.subr.bf16.mxu0 0
        %3274 = vmatpush2.bf16.msra.mxu0 0
        %3275 = vmatprep.subr.bf16.mxu0 0
        %3276 = vmatpush2.bf16.msra.mxu0 0
        %3277 = vmatprep.subr.bf16.mxu0 0
        %3278 = vmatpush2.bf16.msra.mxu0 0
        %3279 = vmatprep.subr.bf16.mxu0 0
        %3280 = vmatpush2.bf16.msra.mxu0 0
        %3281 = vmatprep.subr.bf16.mxu0 0
        %3282 = vmatpush2.bf16.msra.mxu0 0
        %3283 = vmatprep.subr.bf16.mxu0 0
        %3284 = vmatpush2.bf16.msra.mxu0 0
        %3285 = vmatprep.subr.bf16.mxu0 0
        %3286 = vmatpush2.bf16.msra.mxu0 0
        %3287 = vmatprep.mubr.bf16.mxu0 0
        %3288 = vmatmul.mubr.bf16.gmra.mxu0 %v2154
        %v3289 = vpop.f32.mrf.mxu0
        %v3290 = vadd.f32 %v924, %v3289
        %v3291 = vpop.f32.mrf.mxu0
        %v3292 = vadd.f32 %v924, %v3291
        %v3293 = vpop.f32.mrf.mxu0
        %v3294 = vadd.f32 %v929, %v3293
        %v3295 = vpop.f32.mrf.mxu0
        %v3296 = vadd.f32 %v929, %v3295
        %3297 = vdwg.mxu0
        %3298 = vmatprep.subr.bf16.mxu0 0
        %3299 = vmatpush1.bf16.msra.mxu0 0
        %3300 = vmatprep.subr.bf16.mxu0 0
        %3301 = vmatpush1.bf16.msra.mxu0 0
        %3302 = vmatprep.subr.bf16.mxu0 0
        %3303 = vmatpush1.bf16.msra.mxu0 0
        %3304 = vmatprep.subr.bf16.mxu0 0
        %3305 = vmatpush1.bf16.msra.mxu0 0
        %3306 = vmatprep.subr.bf16.mxu0 %v2296
        %3307 = vmatpush1.bf16.msra.mxu0 %v2293
        %3308 = vmatprep.subr.bf16.mxu0 %v1877
        %3309 = vmatpush1.bf16.msra.mxu0 %v1876
        %3310 = vmatprep.subr.bf16.mxu0 %v1813
        %3311 = vmatpush1.bf16.msra.mxu0 %v1812
        %3312 = vmatprep.subr.bf16.mxu0 %v1749
        %3313 = vmatpush1.bf16.msra.mxu0 %v1748
        %3314 = vmatprep.subr.bf16.mxu0 0
        %3315 = vmatpush2.bf16.msra.mxu0 0
        %3316 = vmatprep.subr.bf16.mxu0 0
        %3317 = vmatpush2.bf16.msra.mxu0 0
        %3318 = vmatprep.subr.bf16.mxu0 0
        %3319 = vmatpush2.bf16.msra.mxu0 0
        %3320 = vmatprep.subr.bf16.mxu0 0
        %3321 = vmatpush2.bf16.msra.mxu0 0
        %3322 = vmatprep.subr.bf16.mxu0 0
        %3323 = vmatpush2.bf16.msra.mxu0 0
        %3324 = vmatprep.subr.bf16.mxu0 0
        %3325 = vmatpush2.bf16.msra.mxu0 0
        %3326 = vmatprep.subr.bf16.mxu0 0
        %3327 = vmatpush2.bf16.msra.mxu0 0
        %3328 = vmatprep.subr.bf16.mxu0 0
        %3329 = vmatpush2.bf16.msra.mxu0 0
        %3330 = vmatprep.mubr.bf16.mxu0 0
        %3331 = vmatmul.mubr.bf16.gmra.mxu0 %v2154
        %v3332 = vpop.f32.mrf.mxu0
        %v3333 = vadd.f32 %v924, %v3332
        %v3334 = vpop.f32.mrf.mxu0
        %v3335 = vadd.f32 %v924, %v3334
        %v3336 = vpop.f32.mrf.mxu0
        %v3337 = vadd.f32 %v929, %v3336
        %v3338 = vpop.f32.mrf.mxu0
        %v3339 = vadd.f32 %v929, %v3338
        %3340 = vdwg.mxu0
        %3341 = vmatprep.subr.bf16.mxu0 0
        %3342 = vmatpush1.bf16.msra.mxu0 0
        %3343 = vmatprep.subr.bf16.mxu0 0
        %3344 = vmatpush1.bf16.msra.mxu0 0
        %3345 = vmatprep.subr.bf16.mxu0 0
        %3346 = vmatpush1.bf16.msra.mxu0 0
        %3347 = vmatprep.subr.bf16.mxu0 0
        %3348 = vmatpush1.bf16.msra.mxu0 0
        %3349 = vmatprep.subr.bf16.mxu0 %v2302
        %3350 = vmatpush1.bf16.msra.mxu0 %v2299
        %3351 = vmatprep.subr.bf16.mxu0 %v1879
        %3352 = vmatpush1.bf16.msra.mxu0 %v1878
        %3353 = vmatprep.subr.bf16.mxu0 %v1815
        %3354 = vmatpush1.bf16.msra.mxu0 %v1814
        %3355 = vmatprep.subr.bf16.mxu0 %v1751
        %3356 = vmatpush1.bf16.msra.mxu0 %v1750
        %3357 = vmatprep.subr.bf16.mxu0 0
        %3358 = vmatpush2.bf16.msra.mxu0 0
        %3359 = vmatprep.subr.bf16.mxu0 0
        %3360 = vmatpush2.bf16.msra.mxu0 0
        %3361 = vmatprep.subr.bf16.mxu0 0
        %3362 = vmatpush2.bf16.msra.mxu0 0
        %3363 = vmatprep.subr.bf16.mxu0 0
        %3364 = vmatpush2.bf16.msra.mxu0 0
        %3365 = vmatprep.subr.bf16.mxu0 0
        %3366 = vmatpush2.bf16.msra.mxu0 0
        %3367 = vmatprep.subr.bf16.mxu0 0
        %3368 = vmatpush2.bf16.msra.mxu0 0
        %3369 = vmatprep.subr.bf16.mxu0 0
        %3370 = vmatpush2.bf16.msra.mxu0 0
        %3371 = vmatprep.subr.bf16.mxu0 0
        %3372 = vmatpush2.bf16.msra.mxu0 0
        %3373 = vmatprep.mubr.bf16.mxu0 0
        %3374 = vmatmul.mubr.bf16.gmra.mxu0 %v2154
        %v3375 = vpop.f32.mrf.mxu0
        %v3376 = vadd.f32 %v924, %v3375
        %v3377 = vpop.f32.mrf.mxu0
        %v3378 = vadd.f32 %v924, %v3377
        %v3379 = vpop.f32.mrf.mxu0
        %v3380 = vadd.f32 %v929, %v3379
        %v3381 = vpop.f32.mrf.mxu0
        %v3382 = vadd.f32 %v929, %v3381
        %3383 = vdwg.mxu0
        %3384 = vmatprep.subr.bf16.mxu0 0
        %3385 = vmatpush1.bf16.msra.mxu0 0
        %3386 = vmatprep.subr.bf16.mxu0 0
        %3387 = vmatpush1.bf16.msra.mxu0 0
        %3388 = vmatprep.subr.bf16.mxu0 0
        %3389 = vmatpush1.bf16.msra.mxu0 0
        %3390 = vmatprep.subr.bf16.mxu0 0
        %3391 = vmatpush1.bf16.msra.mxu0 0
        %3392 = vmatprep.subr.bf16.mxu0 %v2308
        %3393 = vmatpush1.bf16.msra.mxu0 %v2305
        %3394 = vmatprep.subr.bf16.mxu0 %v1881
        %3395 = vmatpush1.bf16.msra.mxu0 %v1880
        %3396 = vmatprep.subr.bf16.mxu0 %v1817
        %3397 = vmatpush1.bf16.msra.mxu0 %v1816
        %3398 = vmatprep.subr.bf16.mxu0 %v1753
        %3399 = vmatpush1.bf16.msra.mxu0 %v1752
        %3400 = vmatprep.subr.bf16.mxu0 0
        %3401 = vmatpush2.bf16.msra.mxu0 0
        %3402 = vmatprep.subr.bf16.mxu0 0
        %3403 = vmatpush2.bf16.msra.mxu0 0
        %3404 = vmatprep.subr.bf16.mxu0 0
        %3405 = vmatpush2.bf16.msra.mxu0 0
        %3406 = vmatprep.subr.bf16.mxu0 0
        %3407 = vmatpush2.bf16.msra.mxu0 0
        %3408 = vmatprep.subr.bf16.mxu0 0
        %3409 = vmatpush2.bf16.msra.mxu0 0
        %3410 = vmatprep.subr.bf16.mxu0 0
        %3411 = vmatpush2.bf16.msra.mxu0 0
        %3412 = vmatprep.subr.bf16.mxu0 0
        %3413 = vmatpush2.bf16.msra.mxu0 0
        %3414 = vmatprep.subr.bf16.mxu0 0
        %3415 = vmatpush2.bf16.msra.mxu0 0
        %3416 = vmatprep.mubr.bf16.mxu0 0
        %3417 = vmatmul.mubr.bf16.gmra.mxu0 %v2154
        %v3418 = vpop.f32.mrf.mxu0
        %v3419 = vadd.f32 %v924, %v3418
        %v3420 = vpop.f32.mrf.mxu0
        %v3421 = vadd.f32 %v924, %v3420
        %v3422 = vpop.f32.mrf.mxu0
        %v3423 = vadd.f32 %v929, %v3422
        %v3424 = vpop.f32.mrf.mxu0
        %v3425 = vadd.f32 %v929, %v3424
        %3426 = vdwg.mxu0
        %3427 = vmatprep.subr.bf16.mxu0 0
        %3428 = vmatpush1.bf16.msra.mxu0 0
        %3429 = vmatprep.subr.bf16.mxu0 0
        %3430 = vmatpush1.bf16.msra.mxu0 0
        %3431 = vmatprep.subr.bf16.mxu0 0
        %3432 = vmatpush1.bf16.msra.mxu0 0
        %3433 = vmatprep.subr.bf16.mxu0 0
        %3434 = vmatpush1.bf16.msra.mxu0 0
        %3435 = vmatprep.subr.bf16.mxu0 %v2314
        %3436 = vmatpush1.bf16.msra.mxu0 %v2311
        %3437 = vmatprep.subr.bf16.mxu0 %v1883
        %3438 = vmatpush1.bf16.msra.mxu0 %v1882
        %3439 = vmatprep.subr.bf16.mxu0 %v1819
        %3440 = vmatpush1.bf16.msra.mxu0 %v1818
        %3441 = vmatprep.subr.bf16.mxu0 %v1755
        %3442 = vmatpush1.bf16.msra.mxu0 %v1754
        %3443 = vmatprep.subr.bf16.mxu0 0
        %3444 = vmatpush2.bf16.msra.mxu0 0
        %3445 = vmatprep.subr.bf16.mxu0 0
        %3446 = vmatpush2.bf16.msra.mxu0 0
        %3447 = vmatprep.subr.bf16.mxu0 0
        %3448 = vmatpush2.bf16.msra.mxu0 0
        %3449 = vmatprep.subr.bf16.mxu0 0
        %3450 = vmatpush2.bf16.msra.mxu0 0
        %3451 = vmatprep.subr.bf16.mxu0 0
        %3452 = vmatpush2.bf16.msra.mxu0 0
        %3453 = vmatprep.subr.bf16.mxu0 0
        %3454 = vmatpush2.bf16.msra.mxu0 0
        %3455 = vmatprep.subr.bf16.mxu0 0
        %3456 = vmatpush2.bf16.msra.mxu0 0
        %3457 = vmatprep.subr.bf16.mxu0 0
        %3458 = vmatpush2.bf16.msra.mxu0 0
        %3459 = vmatprep.mubr.bf16.mxu0 0
        %3460 = vmatmul.mubr.bf16.gmra.mxu0 %v2154
        %v3461 = vpop.f32.mrf.mxu0
        %v3462 = vadd.f32 %v924, %v3461
        %v3463 = vpop.f32.mrf.mxu0
        %v3464 = vadd.f32 %v924, %v3463
        %v3465 = vpop.f32.mrf.mxu0
        %v3466 = vadd.f32 %v929, %v3465
        %v3467 = vpop.f32.mrf.mxu0
        %v3468 = vadd.f32 %v929, %v3467
        %3469 = vdwg.mxu0
        %3470 = vmatprep.subr.bf16.mxu0 0
        %3471 = vmatpush1.bf16.msra.mxu0 0
        %3472 = vmatprep.subr.bf16.mxu0 0
        %3473 = vmatpush1.bf16.msra.mxu0 0
        %3474 = vmatprep.subr.bf16.mxu0 0
        %3475 = vmatpush1.bf16.msra.mxu0 0
        %3476 = vmatprep.subr.bf16.mxu0 0
        %3477 = vmatpush1.bf16.msra.mxu0 0
        %3478 = vmatprep.subr.bf16.mxu0 %v2320
        %3479 = vmatpush1.bf16.msra.mxu0 %v2317
        %3480 = vmatprep.subr.bf16.mxu0 %v1885
        %3481 = vmatpush1.bf16.msra.mxu0 %v1884
        %3482 = vmatprep.subr.bf16.mxu0 %v1821
        %3483 = vmatpush1.bf16.msra.mxu0 %v1820
        %3484 = vmatprep.subr.bf16.mxu0 %v1757
        %3485 = vmatpush1.bf16.msra.mxu0 %v1756
        %3486 = vmatprep.subr.bf16.mxu0 0
        %3487 = vmatpush2.bf16.msra.mxu0 0
        %3488 = vmatprep.subr.bf16.mxu0 0
        %3489 = vmatpush2.bf16.msra.mxu0 0
        %3490 = vmatprep.subr.bf16.mxu0 0
        %3491 = vmatpush2.bf16.msra.mxu0 0
        %3492 = vmatprep.subr.bf16.mxu0 0
        %3493 = vmatpush2.bf16.msra.mxu0 0
        %3494 = vmatprep.subr.bf16.mxu0 0
        %3495 = vmatpush2.bf16.msra.mxu0 0
        %3496 = vmatprep.subr.bf16.mxu0 0
        %3497 = vmatpush2.bf16.msra.mxu0 0
        %3498 = vmatprep.subr.bf16.mxu0 0
        %3499 = vmatpush2.bf16.msra.mxu0 0
        %3500 = vmatprep.subr.bf16.mxu0 0
        %3501 = vmatpush2.bf16.msra.mxu0 0
        %3502 = vmatprep.mubr.bf16.mxu0 0
        %3503 = vmatmul.mubr.bf16.gmra.mxu0 %v2154
        %v3504 = vpop.f32.mrf.mxu0
        %v3505 = vadd.f32 %v924, %v3504
        %v3506 = vpop.f32.mrf.mxu0
        %v3507 = vadd.f32 %v924, %v3506
        %v3508 = vpop.f32.mrf.mxu0
        %v3509 = vadd.f32 %v929, %v3508
        %v3510 = vpop.f32.mrf.mxu0
        %v3511 = vadd.f32 %v929, %v3510
        %3512 = vdwg.mxu0
        %3513 = vmatprep.subr.bf16.mxu0 0
        %3514 = vmatpush1.bf16.msra.mxu0 0
        %3515 = vmatprep.subr.bf16.mxu0 0
        %3516 = vmatpush1.bf16.msra.mxu0 0
        %3517 = vmatprep.subr.bf16.mxu0 0
        %3518 = vmatpush1.bf16.msra.mxu0 0
        %3519 = vmatprep.subr.bf16.mxu0 0
        %3520 = vmatpush1.bf16.msra.mxu0 0
        %3521 = vmatprep.subr.bf16.mxu0 %v2326
        %3522 = vmatpush1.bf16.msra.mxu0 %v2323
        %3523 = vmatprep.subr.bf16.mxu0 %v1887
        %3524 = vmatpush1.bf16.msra.mxu0 %v1886
        %3525 = vmatprep.subr.bf16.mxu0 %v1823
        %3526 = vmatpush1.bf16.msra.mxu0 %v1822
        %3527 = vmatprep.subr.bf16.mxu0 %v1759
        %3528 = vmatpush1.bf16.msra.mxu0 %v1758
        %3529 = vmatprep.subr.bf16.mxu0 0
        %3530 = vmatpush2.bf16.msra.mxu0 0
        %3531 = vmatprep.subr.bf16.mxu0 0
        %3532 = vmatpush2.bf16.msra.mxu0 0
        %3533 = vmatprep.subr.bf16.mxu0 0
        %3534 = vmatpush2.bf16.msra.mxu0 0
        %3535 = vmatprep.subr.bf16.mxu0 0
        %3536 = vmatpush2.bf16.msra.mxu0 0
        %3537 = vmatprep.subr.bf16.mxu0 0
        %3538 = vmatpush2.bf16.msra.mxu0 0
        %3539 = vmatprep.subr.bf16.mxu0 0
        %3540 = vmatpush2.bf16.msra.mxu0 0
        %3541 = vmatprep.subr.bf16.mxu0 0
        %3542 = vmatpush2.bf16.msra.mxu0 0
        %3543 = vmatprep.subr.bf16.mxu0 0
        %3544 = vmatpush2.bf16.msra.mxu0 0
        %3545 = vmatprep.mubr.bf16.mxu0 0
        %3546 = vmatmul.mubr.bf16.gmra.mxu0 %v2154
        %v3547 = vpop.f32.mrf.mxu0
        %v3548 = vadd.f32 %v924, %v3547
        %v3549 = vpop.f32.mrf.mxu0
        %v3550 = vadd.f32 %v924, %v3549
        %v3551 = vpop.f32.mrf.mxu0
        %v3552 = vadd.f32 %v929, %v3551
        %v3553 = vpop.f32.mrf.mxu0
        %v3554 = vadd.f32 %v929, %v3553
        %3555 = vdwg.mxu0
        %3556 = vmatprep.subr.bf16.mxu0 0
        %3557 = vmatpush1.bf16.msra.mxu0 0
        %3558 = vmatprep.subr.bf16.mxu0 0
        %3559 = vmatpush1.bf16.msra.mxu0 0
        %3560 = vmatprep.subr.bf16.mxu0 0
        %3561 = vmatpush1.bf16.msra.mxu0 0
        %3562 = vmatprep.subr.bf16.mxu0 0
        %3563 = vmatpush1.bf16.msra.mxu0 0
        %3564 = vmatprep.subr.bf16.mxu0 %v2332
        %3565 = vmatpush1.bf16.msra.mxu0 %v2329
        %3566 = vmatprep.subr.bf16.mxu0 %v1889
        %3567 = vmatpush1.bf16.msra.mxu0 %v1888
        %3568 = vmatprep.subr.bf16.mxu0 %v1825
        %3569 = vmatpush1.bf16.msra.mxu0 %v1824
        %3570 = vmatprep.subr.bf16.mxu0 %v1761
        %3571 = vmatpush1.bf16.msra.mxu0 %v1760
        %3572 = vmatprep.subr.bf16.mxu0 0
        %3573 = vmatpush2.bf16.msra.mxu0 0
        %3574 = vmatprep.subr.bf16.mxu0 0
        %3575 = vmatpush2.bf16.msra.mxu0 0
        %3576 = vmatprep.subr.bf16.mxu0 0
        %3577 = vmatpush2.bf16.msra.mxu0 0
        %3578 = vmatprep.subr.bf16.mxu0 0
        %3579 = vmatpush2.bf16.msra.mxu0 0
        %3580 = vmatprep.subr.bf16.mxu0 0
        %3581 = vmatpush2.bf16.msra.mxu0 0
        %3582 = vmatprep.subr.bf16.mxu0 0
        %3583 = vmatpush2.bf16.msra.mxu0 0
        %3584 = vmatprep.subr.bf16.mxu0 0
        %3585 = vmatpush2.bf16.msra.mxu0 0
        %3586 = vmatprep.subr.bf16.mxu0 0
        %3587 = vmatpush2.bf16.msra.mxu0 0
        %3588 = vmatprep.mubr.bf16.mxu0 0
        %3589 = vmatmul.mubr.bf16.gmra.mxu0 %v2154
        %v3590 = vpop.f32.mrf.mxu0
        %v3591 = vadd.f32 %v924, %v3590
        %v3592 = vpop.f32.mrf.mxu0
        %v3593 = vadd.f32 %v924, %v3592
        %v3594 = vpop.f32.mrf.mxu0
        %v3595 = vadd.f32 %v929, %v3594
        %v3596 = vpop.f32.mrf.mxu0
        %v3597 = vadd.f32 %v929, %v3596
        %3598 = vdwg.mxu0
        %3599 = vmatprep.subr.bf16.mxu0 0
        %3600 = vmatpush1.bf16.msra.mxu0 0
        %3601 = vmatprep.subr.bf16.mxu0 0
        %3602 = vmatpush1.bf16.msra.mxu0 0
        %3603 = vmatprep.subr.bf16.mxu0 0
        %3604 = vmatpush1.bf16.msra.mxu0 0
        %3605 = vmatprep.subr.bf16.mxu0 0
        %3606 = vmatpush1.bf16.msra.mxu0 0
        %3607 = vmatprep.subr.bf16.mxu0 %v2338
        %3608 = vmatpush1.bf16.msra.mxu0 %v2335
        %3609 = vmatprep.subr.bf16.mxu0 %v1891
        %3610 = vmatpush1.bf16.msra.mxu0 %v1890
        %3611 = vmatprep.subr.bf16.mxu0 %v1827
        %3612 = vmatpush1.bf16.msra.mxu0 %v1826
        %3613 = vmatprep.subr.bf16.mxu0 %v1763
        %3614 = vmatpush1.bf16.msra.mxu0 %v1762
        %3615 = vmatprep.subr.bf16.mxu0 0
        %3616 = vmatpush2.bf16.msra.mxu0 0
        %3617 = vmatprep.subr.bf16.mxu0 0
        %3618 = vmatpush2.bf16.msra.mxu0 0
        %3619 = vmatprep.subr.bf16.mxu0 0
        %3620 = vmatpush2.bf16.msra.mxu0 0
        %3621 = vmatprep.subr.bf16.mxu0 0
        %3622 = vmatpush2.bf16.msra.mxu0 0
        %3623 = vmatprep.subr.bf16.mxu0 0
        %3624 = vmatpush2.bf16.msra.mxu0 0
        %3625 = vmatprep.subr.bf16.mxu0 0
        %3626 = vmatpush2.bf16.msra.mxu0 0
        %3627 = vmatprep.subr.bf16.mxu0 0
        %3628 = vmatpush2.bf16.msra.mxu0 0
        %3629 = vmatprep.subr.bf16.mxu0 0
        %3630 = vmatpush2.bf16.msra.mxu0 0
        %3631 = vmatprep.mubr.bf16.mxu0 0
        %3632 = vmatmul.mubr.bf16.gmra.mxu0 %v2154
        %v3633 = vpop.f32.mrf.mxu0
        %v3634 = vadd.f32 %v924, %v3633
        %v3635 = vpop.f32.mrf.mxu0
        %v3636 = vadd.f32 %v924, %v3635
        %v3637 = vpop.f32.mrf.mxu0
        %v3638 = vadd.f32 %v929, %v3637
        %v3639 = vpop.f32.mrf.mxu0
        %v3640 = vadd.f32 %v929, %v3639
        %3641 = vdwg.mxu0
        %3642 = vmatprep.subr.bf16.mxu0 0
        %3643 = vmatpush1.bf16.msra.mxu0 0
        %3644 = vmatprep.subr.bf16.mxu0 0
        %3645 = vmatpush1.bf16.msra.mxu0 0
        %3646 = vmatprep.subr.bf16.mxu0 0
        %3647 = vmatpush1.bf16.msra.mxu0 0
        %3648 = vmatprep.subr.bf16.mxu0 0
        %3649 = vmatpush1.bf16.msra.mxu0 0
        %3650 = vmatprep.subr.bf16.mxu0 %v2344
        %3651 = vmatpush1.bf16.msra.mxu0 %v2341
        %3652 = vmatprep.subr.bf16.mxu0 %v1893
        %3653 = vmatpush1.bf16.msra.mxu0 %v1892
        %3654 = vmatprep.subr.bf16.mxu0 %v1829
        %3655 = vmatpush1.bf16.msra.mxu0 %v1828
        %3656 = vmatprep.subr.bf16.mxu0 %v1765
        %3657 = vmatpush1.bf16.msra.mxu0 %v1764
        %3658 = vmatprep.subr.bf16.mxu0 0
        %3659 = vmatpush2.bf16.msra.mxu0 0
        %3660 = vmatprep.subr.bf16.mxu0 0
        %3661 = vmatpush2.bf16.msra.mxu0 0
        %3662 = vmatprep.subr.bf16.mxu0 0
        %3663 = vmatpush2.bf16.msra.mxu0 0
        %3664 = vmatprep.subr.bf16.mxu0 0
        %3665 = vmatpush2.bf16.msra.mxu0 0
        %3666 = vmatprep.subr.bf16.mxu0 0
        %3667 = vmatpush2.bf16.msra.mxu0 0
        %3668 = vmatprep.subr.bf16.mxu0 0
        %3669 = vmatpush2.bf16.msra.mxu0 0
        %3670 = vmatprep.subr.bf16.mxu0 0
        %3671 = vmatpush2.bf16.msra.mxu0 0
        %3672 = vmatprep.subr.bf16.mxu0 0
        %3673 = vmatpush2.bf16.msra.mxu0 0
        %3674 = vmatprep.mubr.bf16.mxu0 0
        %3675 = vmatmul.mubr.bf16.gmra.mxu0 %v2154
        %v3676 = vpop.f32.mrf.mxu0
        %v3677 = vadd.f32 %v924, %v3676
        %v3678 = vpop.f32.mrf.mxu0
        %v3679 = vadd.f32 %v924, %v3678
        %v3680 = vpop.f32.mrf.mxu0
        %v3681 = vadd.f32 %v929, %v3680
        %v3682 = vpop.f32.mrf.mxu0
        %v3683 = vadd.f32 %v929, %v3682
        %3684 = vdwg.mxu0
        %3685 = vmatprep.subr.bf16.mxu0 0
        %3686 = vmatpush1.bf16.msra.mxu0 0
        %3687 = vmatprep.subr.bf16.mxu0 0
        %3688 = vmatpush1.bf16.msra.mxu0 0
        %3689 = vmatprep.subr.bf16.mxu0 0
        %3690 = vmatpush1.bf16.msra.mxu0 0
        %3691 = vmatprep.subr.bf16.mxu0 0
        %3692 = vmatpush1.bf16.msra.mxu0 0
        %3693 = vmatprep.subr.bf16.mxu0 %v2350
        %3694 = vmatpush1.bf16.msra.mxu0 %v2347
        %3695 = vmatprep.subr.bf16.mxu0 %v1895
        %3696 = vmatpush1.bf16.msra.mxu0 %v1894
        %3697 = vmatprep.subr.bf16.mxu0 %v1831
        %3698 = vmatpush1.bf16.msra.mxu0 %v1830
        %3699 = vmatprep.subr.bf16.mxu0 %v1767
        %3700 = vmatpush1.bf16.msra.mxu0 %v1766
        %3701 = vmatprep.subr.bf16.mxu0 0
        %3702 = vmatpush2.bf16.msra.mxu0 0
        %3703 = vmatprep.subr.bf16.mxu0 0
        %3704 = vmatpush2.bf16.msra.mxu0 0
        %3705 = vmatprep.subr.bf16.mxu0 0
        %3706 = vmatpush2.bf16.msra.mxu0 0
        %3707 = vmatprep.subr.bf16.mxu0 0
        %3708 = vmatpush2.bf16.msra.mxu0 0
        %3709 = vmatprep.subr.bf16.mxu0 0
        %3710 = vmatpush2.bf16.msra.mxu0 0
        %3711 = vmatprep.subr.bf16.mxu0 0
        %3712 = vmatpush2.bf16.msra.mxu0 0
        %3713 = vmatprep.subr.bf16.mxu0 0
        %3714 = vmatpush2.bf16.msra.mxu0 0
        %3715 = vmatprep.subr.bf16.mxu0 0
        %3716 = vmatpush2.bf16.msra.mxu0 0
        %3717 = vmatprep.mubr.bf16.mxu0 0
        %3718 = vmatmul.mubr.bf16.gmra.mxu0 %v2154
        %v3719 = vpop.f32.mrf.mxu0
        %v3720 = vadd.f32 %v924, %v3719
        %v3721 = vpop.f32.mrf.mxu0
        %v3722 = vadd.f32 %v924, %v3721
        %v3723 = vpop.f32.mrf.mxu0
        %v3724 = vadd.f32 %v929, %v3723
        %v3725 = vpop.f32.mrf.mxu0
        %v3726 = vadd.f32 %v929, %v3725
        %3727 = vdwg.mxu0
        %v3728 = vmax.f32 %v2387, 0.0
        %v3729 = vmax.f32 %v2389, 0.0
        %v3730 = vmax.f32 %v2430, 0.0
        %v3731 = vmax.f32 %v2432, 0.0
        %v3732 = vmax.f32 %v2473, 0.0
        %v3733 = vmax.f32 %v2475, 0.0
        %v3734 = vmax.f32 %v2516, 0.0
        %v3735 = vmax.f32 %v2518, 0.0
        %v3736 = vmax.f32 %v2559, 0.0
        %v3737 = vmax.f32 %v2561, 0.0
        %v3738 = vmax.f32 %v2602, 0.0
        %v3739 = vmax.f32 %v2604, 0.0
        %v3740 = vmax.f32 %v2645, 0.0
        %v3741 = vmax.f32 %v2647, 0.0
        %v3742 = vmax.f32 %v2688, 0.0
        %v3743 = vmax.f32 %v2690, 0.0
        %v3744 = vmax.f32 %v2731, 0.0
        %v3745 = vmax.f32 %v2733, 0.0
        %v3746 = vmax.f32 %v2774, 0.0
        %v3747 = vmax.f32 %v2776, 0.0
        %v3748 = vmax.f32 %v2817, 0.0
        %v3749 = vmax.f32 %v2819, 0.0
        %v3750 = vmax.f32 %v2860, 0.0
        %v3751 = vmax.f32 %v2862, 0.0
        %v3752 = vmax.f32 %v2903, 0.0
        %v3753 = vmax.f32 %v2905, 0.0
        %v3754 = vmax.f32 %v2946, 0.0
        %v3755 = vmax.f32 %v2948, 0.0
        %v3756 = vmax.f32 %v2989, 0.0
        %v3757 = vmax.f32 %v2991, 0.0
        %v3758 = vmax.f32 %v3032, 0.0
        %v3759 = vmax.f32 %v3034, 0.0
        %v3760 = vmax.f32 %v3075, 0.0
        %v3761 = vmax.f32 %v3077, 0.0
        %v3762 = vmax.f32 %v3118, 0.0
        %v3763 = vmax.f32 %v3120, 0.0
        %v3764 = vmax.f32 %v3161, 0.0
        %v3765 = vmax.f32 %v3163, 0.0
        %v3766 = vmax.f32 %v3204, 0.0
        %v3767 = vmax.f32 %v3206, 0.0
        %v3768 = vmax.f32 %v3247, 0.0
        %v3769 = vmax.f32 %v3249, 0.0
        %v3770 = vmax.f32 %v3290, 0.0
        %v3771 = vmax.f32 %v3292, 0.0
        %v3772 = vmax.f32 %v3333, 0.0
        %v3773 = vmax.f32 %v3335, 0.0
        %v3774 = vmax.f32 %v3376, 0.0
        %v3775 = vmax.f32 %v3378, 0.0
        %v3776 = vmax.f32 %v3419, 0.0
        %v3777 = vmax.f32 %v3421, 0.0
        %v3778 = vmax.f32 %v3462, 0.0
        %v3779 = vmax.f32 %v3464, 0.0
        %v3780 = vmax.f32 %v3505, 0.0
        %v3781 = vmax.f32 %v3507, 0.0
        %v3782 = vmax.f32 %v3548, 0.0
        %v3783 = vmax.f32 %v3550, 0.0
        %v3784 = vmax.f32 %v3591, 0.0
        %v3785 = vmax.f32 %v3593, 0.0
        %v3786 = vmax.f32 %v3634, 0.0
        %v3787 = vmax.f32 %v3636, 0.0
        %v3788 = vmax.f32 %v3677, 0.0
        %v3789 = vmax.f32 %v3679, 0.0
        %v3790 = vmax.f32 %v3720, 0.0
        %v3791 = vmax.f32 %v3722, 0.0
        %v3792 = vmax.f32 %v2391, 0.0
        %v3793 = vmax.f32 %v2393, 0.0
        %v3794 = vmax.f32 %v2434, 0.0
        %v3795 = vmax.f32 %v2436, 0.0
        %v3796 = vmax.f32 %v2477, 0.0
        %v3797 = vmax.f32 %v2479, 0.0
        %v3798 = vmax.f32 %v2520, 0.0
        %v3799 = vmax.f32 %v2522, 0.0
        %v3800 = vmax.f32 %v2563, 0.0
        %v3801 = vmax.f32 %v2565, 0.0
        %v3802 = vmax.f32 %v2606, 0.0
        %v3803 = vmax.f32 %v2608, 0.0
        %v3804 = vmax.f32 %v2649, 0.0
        %v3805 = vmax.f32 %v2651, 0.0
        %v3806 = vmax.f32 %v2692, 0.0
        %v3807 = vmax.f32 %v2694, 0.0
        %v3808 = vmax.f32 %v2735, 0.0
        %v3809 = vmax.f32 %v2737, 0.0
        %v3810 = vmax.f32 %v2778, 0.0
        %v3811 = vmax.f32 %v2780, 0.0
        %v3812 = vmax.f32 %v2821, 0.0
        %v3813 = vmax.f32 %v2823, 0.0
        %v3814 = vmax.f32 %v2864, 0.0
        %v3815 = vmax.f32 %v2866, 0.0
        %v3816 = vmax.f32 %v2907, 0.0
        %v3817 = vmax.f32 %v2909, 0.0
        %v3818 = vmax.f32 %v2950, 0.0
        %v3819 = vmax.f32 %v2952, 0.0
        %v3820 = vmax.f32 %v2993, 0.0
        %v3821 = vmax.f32 %v2995, 0.0
        %v3822 = vmax.f32 %v3036, 0.0
        %v3823 = vmax.f32 %v3038, 0.0
        %v3824 = vmax.f32 %v3079, 0.0
        %v3825 = vmax.f32 %v3081, 0.0
        %v3826 = vmax.f32 %v3122, 0.0
        %v3827 = vmax.f32 %v3124, 0.0
        %v3828 = vmax.f32 %v3165, 0.0
        %v3829 = vmax.f32 %v3167, 0.0
        %v3830 = vmax.f32 %v3208, 0.0
        %v3831 = vmax.f32 %v3210, 0.0
        %v3832 = vmax.f32 %v3251, 0.0
        %v3833 = vmax.f32 %v3253, 0.0
        %v3834 = vmax.f32 %v3294, 0.0
        %v3835 = vmax.f32 %v3296, 0.0
        %v3836 = vmax.f32 %v3337, 0.0
        %v3837 = vmax.f32 %v3339, 0.0
        %v3838 = vmax.f32 %v3380, 0.0
        %v3839 = vmax.f32 %v3382, 0.0
        %v3840 = vmax.f32 %v3423, 0.0
        %v3841 = vmax.f32 %v3425, 0.0
        %v3842 = vmax.f32 %v3466, 0.0
        %v3843 = vmax.f32 %v3468, 0.0
        %v3844 = vmax.f32 %v3509, 0.0
        %v3845 = vmax.f32 %v3511, 0.0
        %v3846 = vmax.f32 %v3552, 0.0
        %v3847 = vmax.f32 %v3554, 0.0
        %v3848 = vmax.f32 %v3595, 0.0
        %v3849 = vmax.f32 %v3597, 0.0
        %v3850 = vmax.f32 %v3638, 0.0
        %v3851 = vmax.f32 %v3640, 0.0
        %v3852 = vmax.f32 %v3681, 0.0
        %v3853 = vmax.f32 %v3683, 0.0
        %v3854 = vmax.f32 %v3724, 0.0
        %v3855 = vmax.f32 %v3726, 0.0
        %v3856 = vpack.c.bf16 %v3792, %v3728
        %v3857 = vpack.c.bf16 %v3793, %v3729
        %v3858 = vpack.c.bf16 %v3794, %v3730
        %v3859 = vpack.c.bf16 %v3795, %v3731
        %v3860 = vpack.c.bf16 %v3796, %v3732
        %v3861 = vpack.c.bf16 %v3797, %v3733
        %v3862 = vpack.c.bf16 %v3798, %v3734
        %v3863 = vpack.c.bf16 %v3799, %v3735
        %v3864 = vpack.c.bf16 %v3800, %v3736
        %v3865 = vpack.c.bf16 %v3801, %v3737
        %v3866 = vpack.c.bf16 %v3802, %v3738
        %v3867 = vpack.c.bf16 %v3803, %v3739
        %v3868 = vpack.c.bf16 %v3804, %v3740
        %v3869 = vpack.c.bf16 %v3805, %v3741
        %v3870 = vpack.c.bf16 %v3806, %v3742
        %v3871 = vpack.c.bf16 %v3807, %v3743
        %v3872 = vpack.c.bf16 %v3808, %v3744
        %v3873 = vpack.c.bf16 %v3809, %v3745
        %v3874 = vpack.c.bf16 %v3810, %v3746
        %v3875 = vpack.c.bf16 %v3811, %v3747
        %v3876 = vpack.c.bf16 %v3812, %v3748
        %v3877 = vpack.c.bf16 %v3813, %v3749
        %v3878 = vpack.c.bf16 %v3814, %v3750
        %v3879 = vpack.c.bf16 %v3815, %v3751
        %v3880 = vpack.c.bf16 %v3816, %v3752
        %v3881 = vpack.c.bf16 %v3817, %v3753
        %v3882 = vpack.c.bf16 %v3818, %v3754
        %v3883 = vpack.c.bf16 %v3819, %v3755
        %v3884 = vpack.c.bf16 %v3820, %v3756
        %v3885 = vpack.c.bf16 %v3821, %v3757
        %v3886 = vpack.c.bf16 %v3822, %v3758
        %v3887 = vpack.c.bf16 %v3823, %v3759
        %v3888 = vpack.c.bf16 %v3824, %v3760
        %v3889 = vpack.c.bf16 %v3825, %v3761
        %v3890 = vpack.c.bf16 %v3826, %v3762
        %v3891 = vpack.c.bf16 %v3827, %v3763
        %v3892 = vpack.c.bf16 %v3828, %v3764
        %v3893 = vpack.c.bf16 %v3829, %v3765
        %v3894 = vpack.c.bf16 %v3830, %v3766
        %v3895 = vpack.c.bf16 %v3831, %v3767
        %v3896 = vpack.c.bf16 %v3832, %v3768
        %v3897 = vpack.c.bf16 %v3833, %v3769
        %v3898 = vpack.c.bf16 %v3834, %v3770
        %v3899 = vpack.c.bf16 %v3835, %v3771
        %v3900 = vpack.c.bf16 %v3836, %v3772
        %v3901 = vpack.c.bf16 %v3837, %v3773
        %v3902 = vpack.c.bf16 %v3838, %v3774
        %v3903 = vpack.c.bf16 %v3839, %v3775
        %v3904 = vpack.c.bf16 %v3840, %v3776
        %v3905 = vpack.c.bf16 %v3841, %v3777
        %v3906 = vpack.c.bf16 %v3842, %v3778
        %v3907 = vpack.c.bf16 %v3843, %v3779
        %v3908 = vpack.c.bf16 %v3844, %v3780
        %v3909 = vpack.c.bf16 %v3845, %v3781
        %v3910 = vpack.c.bf16 %v3846, %v3782
        %v3911 = vpack.c.bf16 %v3847, %v3783
        %v3912 = vpack.c.bf16 %v3848, %v3784
        %v3913 = vpack.c.bf16 %v3849, %v3785
        %v3914 = vpack.c.bf16 %v3850, %v3786
        %v3915 = vpack.c.bf16 %v3851, %v3787
        %v3916 = vpack.c.bf16 %v3852, %v3788
        %v3917 = vpack.c.bf16 %v3853, %v3789
        %v3918 = vpack.c.bf16 %v3854, %v3790
        %v3919 = vpack.c.bf16 %v3855, %v3791
        %v3984 = vunpack.c.l.b16 %v3856
        %v3985 = vunpack.c.l.b16 %v3857
        %v3986 = vunpack.c.l.b16 %v3858
        %v3987 = vunpack.c.l.b16 %v3859
        %v3988 = vunpack.c.l.b16 %v3860
        %v3989 = vunpack.c.l.b16 %v3861
        %v3990 = vunpack.c.l.b16 %v3862
        %v3991 = vunpack.c.l.b16 %v3863
        %v3992 = vunpack.c.l.b16 %v3864
        %v3993 = vunpack.c.l.b16 %v3865
        %v3994 = vunpack.c.l.b16 %v3866
        %v3995 = vunpack.c.l.b16 %v3867
        %v3996 = vunpack.c.l.b16 %v3868
        %v3997 = vunpack.c.l.b16 %v3869
        %v3998 = vunpack.c.l.b16 %v3870
        %v3999 = vunpack.c.l.b16 %v3871
        %v4000 = vunpack.c.l.b16 %v3872
        %v4001 = vunpack.c.l.b16 %v3873
        %v4002 = vunpack.c.l.b16 %v3874
        %v4003 = vunpack.c.l.b16 %v3875
        %v4004 = vunpack.c.l.b16 %v3876
        %v4005 = vunpack.c.l.b16 %v3877
        %v4006 = vunpack.c.l.b16 %v3878
        %v4007 = vunpack.c.l.b16 %v3879
        %v4008 = vunpack.c.l.b16 %v3880
        %v4009 = vunpack.c.l.b16 %v3881
        %v4010 = vunpack.c.l.b16 %v3882
        %v4011 = vunpack.c.l.b16 %v3883
        %v4012 = vunpack.c.l.b16 %v3884
        %v4013 = vunpack.c.l.b16 %v3885
        %v4014 = vunpack.c.l.b16 %v3886
        %v4015 = vunpack.c.l.b16 %v3887
        %v4016 = vunpack.c.l.b16 %v3888
        %v4017 = vunpack.c.l.b16 %v3889
        %v4018 = vunpack.c.l.b16 %v3890
        %v4019 = vunpack.c.l.b16 %v3891
        %v4020 = vunpack.c.l.b16 %v3892
        %v4021 = vunpack.c.l.b16 %v3893
        %v4022 = vunpack.c.l.b16 %v3894
        %v4023 = vunpack.c.l.b16 %v3895
        %v4024 = vunpack.c.l.b16 %v3896
        %v4025 = vunpack.c.l.b16 %v3897
        %v4026 = vunpack.c.l.b16 %v3898
        %v4027 = vunpack.c.l.b16 %v3899
        %v4028 = vunpack.c.l.b16 %v3900
        %v4029 = vunpack.c.l.b16 %v3901
        %v4030 = vunpack.c.l.b16 %v3902
        %v4031 = vunpack.c.l.b16 %v3903
        %v4032 = vunpack.c.l.b16 %v3904
        %v4033 = vunpack.c.l.b16 %v3905
        %v4034 = vunpack.c.l.b16 %v3906
        %v4035 = vunpack.c.l.b16 %v3907
        %v4036 = vunpack.c.l.b16 %v3908
        %v4037 = vunpack.c.l.b16 %v3909
        %v4038 = vunpack.c.l.b16 %v3910
        %v4039 = vunpack.c.l.b16 %v3911
        %v4040 = vunpack.c.l.b16 %v3912
        %v4041 = vunpack.c.l.b16 %v3913
        %v4042 = vunpack.c.l.b16 %v3914
        %v4043 = vunpack.c.l.b16 %v3915
        %v4044 = vunpack.c.l.b16 %v3916
        %v4045 = vunpack.c.l.b16 %v3917
        %v4046 = vunpack.c.l.b16 %v3918
        %v4047 = vunpack.c.l.b16 %v3919
        %v4048 = vunpack.c.h.b16 %v3856
        %v4049 = vunpack.c.h.b16 %v3857
        %v4050 = vunpack.c.h.b16 %v3858
        %v4051 = vunpack.c.h.b16 %v3859
        %v4052 = vunpack.c.h.b16 %v3860
        %v4053 = vunpack.c.h.b16 %v3861
        %v4054 = vunpack.c.h.b16 %v3862
        %v4055 = vunpack.c.h.b16 %v3863
        %v4056 = vunpack.c.h.b16 %v3864
        %v4057 = vunpack.c.h.b16 %v3865
        %v4058 = vunpack.c.h.b16 %v3866
        %v4059 = vunpack.c.h.b16 %v3867
        %v4060 = vunpack.c.h.b16 %v3868
        %v4061 = vunpack.c.h.b16 %v3869
        %v4062 = vunpack.c.h.b16 %v3870
        %v4063 = vunpack.c.h.b16 %v3871
        %v4064 = vunpack.c.h.b16 %v3872
        %v4065 = vunpack.c.h.b16 %v3873
        %v4066 = vunpack.c.h.b16 %v3874
        %v4067 = vunpack.c.h.b16 %v3875
        %v4068 = vunpack.c.h.b16 %v3876
        %v4069 = vunpack.c.h.b16 %v3877
        %v4070 = vunpack.c.h.b16 %v3878
        %v4071 = vunpack.c.h.b16 %v3879
        %v4072 = vunpack.c.h.b16 %v3880
        %v4073 = vunpack.c.h.b16 %v3881
        %v4074 = vunpack.c.h.b16 %v3882
        %v4075 = vunpack.c.h.b16 %v3883
        %v4076 = vunpack.c.h.b16 %v3884
        %v4077 = vunpack.c.h.b16 %v3885
        %v4078 = vunpack.c.h.b16 %v3886
        %v4079 = vunpack.c.h.b16 %v3887
        %v4080 = vunpack.c.h.b16 %v3888
        %v4081 = vunpack.c.h.b16 %v3889
        %v4082 = vunpack.c.h.b16 %v3890
        %v4083 = vunpack.c.h.b16 %v3891
        %v4084 = vunpack.c.h.b16 %v3892
        %v4085 = vunpack.c.h.b16 %v3893
        %v4086 = vunpack.c.h.b16 %v3894
        %v4087 = vunpack.c.h.b16 %v3895
        %v4088 = vunpack.c.h.b16 %v3896
        %v4089 = vunpack.c.h.b16 %v3897
        %v4090 = vunpack.c.h.b16 %v3898
        %v4091 = vunpack.c.h.b16 %v3899
        %v4092 = vunpack.c.h.b16 %v3900
        %v4093 = vunpack.c.h.b16 %v3901
        %v4094 = vunpack.c.h.b16 %v3902
        %v4095 = vunpack.c.h.b16 %v3903
        %v4096 = vunpack.c.h.b16 %v3904
        %v4097 = vunpack.c.h.b16 %v3905
        %v4098 = vunpack.c.h.b16 %v3906
        %v4099 = vunpack.c.h.b16 %v3907
        %v4100 = vunpack.c.h.b16 %v3908
        %v4101 = vunpack.c.h.b16 %v3909
        %v4102 = vunpack.c.h.b16 %v3910
        %v4103 = vunpack.c.h.b16 %v3911
        %v4104 = vunpack.c.h.b16 %v3912
        %v4105 = vunpack.c.h.b16 %v3913
        %v4106 = vunpack.c.h.b16 %v3914
        %v4107 = vunpack.c.h.b16 %v3915
        %v4108 = vunpack.c.h.b16 %v3916
        %v4109 = vunpack.c.h.b16 %v3917
        %v4110 = vunpack.c.h.b16 %v3918
        %v4111 = vunpack.c.h.b16 %v3919
        %v4112 = vpack.c.b16 %v3985, %v3984
        %v4113 = vpack.c.b16 %v3987, %v3986
        %v4114 = vpack.c.b16 %v3989, %v3988
        %v4115 = vpack.c.b16 %v3991, %v3990
        %v4116 = vpack.c.b16 %v3993, %v3992
        %v4117 = vpack.c.b16 %v3995, %v3994
        %v4118 = vpack.c.b16 %v3997, %v3996
        %v4119 = vpack.c.b16 %v3999, %v3998
        %v4120 = vpack.c.b16 %v4001, %v4000
        %v4121 = vpack.c.b16 %v4003, %v4002
        %v4122 = vpack.c.b16 %v4005, %v4004
        %v4123 = vpack.c.b16 %v4007, %v4006
        %v4124 = vpack.c.b16 %v4009, %v4008
        %v4125 = vpack.c.b16 %v4011, %v4010
        %v4126 = vpack.c.b16 %v4013, %v4012
        %v4127 = vpack.c.b16 %v4015, %v4014
        %v4128 = vpack.c.b16 %v4017, %v4016
        %v4129 = vpack.c.b16 %v4019, %v4018
        %v4130 = vpack.c.b16 %v4021, %v4020
        %v4131 = vpack.c.b16 %v4023, %v4022
        %v4132 = vpack.c.b16 %v4025, %v4024
        %v4133 = vpack.c.b16 %v4027, %v4026
        %v4134 = vpack.c.b16 %v4029, %v4028
        %v4135 = vpack.c.b16 %v4031, %v4030
        %v4136 = vpack.c.b16 %v4033, %v4032
        %v4137 = vpack.c.b16 %v4035, %v4034
        %v4138 = vpack.c.b16 %v4037, %v4036
        %v4139 = vpack.c.b16 %v4039, %v4038
        %v4140 = vpack.c.b16 %v4041, %v4040
        %v4141 = vpack.c.b16 %v4043, %v4042
        %v4142 = vpack.c.b16 %v4045, %v4044
        %v4143 = vpack.c.b16 %v4047, %v4046
        %v4144 = vpack.c.b16 %v4049, %v4048
        %v4145 = vpack.c.b16 %v4051, %v4050
        %v4146 = vpack.c.b16 %v4053, %v4052
        %v4147 = vpack.c.b16 %v4055, %v4054
        %v4148 = vpack.c.b16 %v4057, %v4056
        %v4149 = vpack.c.b16 %v4059, %v4058
        %v4150 = vpack.c.b16 %v4061, %v4060
        %v4151 = vpack.c.b16 %v4063, %v4062
        %v4152 = vpack.c.b16 %v4065, %v4064
        %v4153 = vpack.c.b16 %v4067, %v4066
        %v4154 = vpack.c.b16 %v4069, %v4068
        %v4155 = vpack.c.b16 %v4071, %v4070
        %v4156 = vpack.c.b16 %v4073, %v4072
        %v4157 = vpack.c.b16 %v4075, %v4074
        %v4158 = vpack.c.b16 %v4077, %v4076
        %v4159 = vpack.c.b16 %v4079, %v4078
        %v4160 = vpack.c.b16 %v4081, %v4080
        %v4161 = vpack.c.b16 %v4083, %v4082
        %v4162 = vpack.c.b16 %v4085, %v4084
        %v4163 = vpack.c.b16 %v4087, %v4086
        %v4164 = vpack.c.b16 %v4089, %v4088
        %v4165 = vpack.c.b16 %v4091, %v4090
        %v4166 = vpack.c.b16 %v4093, %v4092
        %v4167 = vpack.c.b16 %v4095, %v4094
        %v4168 = vpack.c.b16 %v4097, %v4096
        %v4169 = vpack.c.b16 %v4099, %v4098
        %v4170 = vpack.c.b16 %v4101, %v4100
        %v4171 = vpack.c.b16 %v4103, %v4102
        %v4172 = vpack.c.b16 %v4105, %v4104
        %v4173 = vpack.c.b16 %v4107, %v4106
        %v4174 = vpack.c.b16 %v4109, %v4108
        %v4175 = vpack.c.b16 %v4111, %v4110
        %4240 = vst [vmem:[%s649] sm:$0xff] %v4112
        %4241 = vst [vmem:[%s649 + $0x8] sm:$0xff] %v4113
        %4242 = vst [vmem:[%s649 + $0x10] sm:$0xff] %v4114
        %4243 = vst [vmem:[%s649 + $0x18] sm:$0xff] %v4115
        %4244 = vst [vmem:[%s649 + $0x20] sm:$0xff] %v4116
        %4245 = vst [vmem:[%s649 + $0x28] sm:$0xff] %v4117
        %4246 = vst [vmem:[%s649 + $0x30] sm:$0xff] %v4118
        %4247 = vst [vmem:[%s649 + $0x38] sm:$0xff] %v4119
        %4248 = vst [vmem:[%s649 + $0x40] sm:$0xff] %v4120
        %4249 = vst [vmem:[%s649 + $0x48] sm:$0xff] %v4121
        %4250 = vst [vmem:[%s649 + $0x50] sm:$0xff] %v4122
        %4251 = vst [vmem:[%s649 + $0x58] sm:$0xff] %v4123
        %4252 = vst [vmem:[%s649 + $0x60] sm:$0xff] %v4124
        %4253 = vst [vmem:[%s649 + $0x68] sm:$0xff] %v4125
        %4254 = vst [vmem:[%s649 + $0x70] sm:$0xff] %v4126
        %4255 = vst [vmem:[%s649 + $0x78] sm:$0xff] %v4127
        %4256 = vst [vmem:[%s649 + $0x80] sm:$0xff] %v4128
        %4257 = vst [vmem:[%s649 + $0x88] sm:$0xff] %v4129
        %4258 = vst [vmem:[%s649 + $0x90] sm:$0xff] %v4130
        %4259 = vst [vmem:[%s649 + $0x98] sm:$0xff] %v4131
        %4260 = vst [vmem:[%s649 + $0xa0] sm:$0xff] %v4132
        %4261 = vst [vmem:[%s649 + $0xa8] sm:$0xff] %v4133
        %4262 = vst [vmem:[%s649 + $0xb0] sm:$0xff] %v4134
        %4263 = vst [vmem:[%s649 + $0xb8] sm:$0xff] %v4135
        %4264 = vst [vmem:[%s649 + $0xc0] sm:$0xff] %v4136
        %4265 = vst [vmem:[%s649 + $0xc8] sm:$0xff] %v4137
        %4266 = vst [vmem:[%s649 + $0xd0] sm:$0xff] %v4138
        %4267 = vst [vmem:[%s649 + $0xd8] sm:$0xff] %v4139
        %4268 = vst [vmem:[%s649 + $0xe0] sm:$0xff] %v4140
        %4269 = vst [vmem:[%s649 + $0xe8] sm:$0xff] %v4141
        %4270 = vst [vmem:[%s649 + $0xf0] sm:$0xff] %v4142
        %4271 = vst [vmem:[%s649 + $0xf8] sm:$0xff] %v4143
        %4272 = vst [vmem:[%s649 + $0x100] sm:$0xff] %v4144
        %4273 = vst [vmem:[%s649 + $0x108] sm:$0xff] %v4145
        %4274 = vst [vmem:[%s649 + $0x110] sm:$0xff] %v4146
        %4275 = vst [vmem:[%s649 + $0x118] sm:$0xff] %v4147
        %4276 = vst [vmem:[%s649 + $0x120] sm:$0xff] %v4148
        %4277 = vst [vmem:[%s649 + $0x128] sm:$0xff] %v4149
        %4278 = vst [vmem:[%s649 + $0x130] sm:$0xff] %v4150
        %4279 = vst [vmem:[%s649 + $0x138] sm:$0xff] %v4151
        %4280 = vst [vmem:[%s649 + $0x140] sm:$0xff] %v4152
        %4281 = vst [vmem:[%s649 + $0x148] sm:$0xff] %v4153
        %4282 = vst [vmem:[%s649 + $0x150] sm:$0xff] %v4154
        %4283 = vst [vmem:[%s649 + $0x158] sm:$0xff] %v4155
        %4284 = vst [vmem:[%s649 + $0x160] sm:$0xff] %v4156
        %4285 = vst [vmem:[%s649 + $0x168] sm:$0xff] %v4157
        %4286 = vst [vmem:[%s649 + $0x170] sm:$0xff] %v4158
        %4287 = vst [vmem:[%s649 + $0x178] sm:$0xff] %v4159
        %4288 = vst [vmem:[%s649 + $0x180] sm:$0xff] %v4160
        %4289 = vst [vmem:[%s649 + $0x188] sm:$0xff] %v4161
        %4290 = vst [vmem:[%s649 + $0x190] sm:$0xff] %v4162
        %4291 = vst [vmem:[%s649 + $0x198] sm:$0xff] %v4163
        %4292 = vst [vmem:[%s649 + $0x1a0] sm:$0xff] %v4164
        %4293 = vst [vmem:[%s649 + $0x1a8] sm:$0xff] %v4165
        %4294 = vst [vmem:[%s649 + $0x1b0] sm:$0xff] %v4166
        %4295 = vst [vmem:[%s649 + $0x1b8] sm:$0xff] %v4167
        %4296 = vst [vmem:[%s649 + $0x1c0] sm:$0xff] %v4168
        %4297 = vst [vmem:[%s649 + $0x1c8] sm:$0xff] %v4169
        %4298 = vst [vmem:[%s649 + $0x1d0] sm:$0xff] %v4170
        %4299 = vst [vmem:[%s649 + $0x1d8] sm:$0xff] %v4171
        %4300 = vst [vmem:[%s649 + $0x1e0] sm:$0xff] %v4172
        %4301 = vst [vmem:[%s649 + $0x1e8] sm:$0xff] %v4173
        %4302 = vst [vmem:[%s649 + $0x1f0] sm:$0xff] %v4174
        %4303 = vst [vmem:[%s649 + $0x1f8] sm:$0xff] %v4175
        %s4304 = sand.u32 %s106, 1
        %s4305 = sand.u32 %s106, 1
        %s4306 = smul.addr %s4305, 512
        %s4307 = scalar_lea.vmem [#allocation3], %s4306
        // Predicated region
        $region99: #{rsfnet_maskin_forward.3} parent=93 // pred_check
          %p4308 = pneg %p116
        $region100: #{rsfnet_maskin_forward.3} parent=93 // pred_check_branch
          %4310 = sbr.rel (%p4308) target = $region102
        $region101: #{rsfnet_maskin_forward.3} parent=93 // pred_region
          %s4311 = smul.u32 64, %s19
          %s4312 = ssub.s32 254, %s4311
          %p4313 = scmp.lt.s32.totalorder %s4312, 64
          %s4314 = scalar_select %p4313, %s4312, 64
          %s4315 = smul.u32 128, %s4314
          %p4316 = scmp.ne.s32.totalorder 0, %s4315
          %s4317 = smul.addr %s18, 508
          %s4318 = sadd.s32 %s4311, %s4317
          %s4319 = smul.addr %s4318, 4
          %s4320 = scalar_lea.vmem %s3, %s4319
          %s4321 = smul.u32 %s4314, 4
          // Predicated region
          $region103: #{rsfnet_maskin_forward.3} parent=101 // pred_check
            %p4322 = pneg %p4316
          $region104: #{rsfnet_maskin_forward.3} parent=101 // pred_check_branch
            %4324 = sbr.rel (%p4322) target = $region106
          $region105: #{rsfnet_maskin_forward.3} parent=101 // pred_region
            %p4325 = scmp.lt.u32.totalorder %s4321, 8
            %p4326 = pneg %p4325
            // Predicated region
            $region107: #{rsfnet_maskin_forward.3} parent=105 // pred_check
              _
            $region108: #{rsfnet_maskin_forward.3} parent=105 // pred_check_branch
              %4328 = sbr.rel (%p4325) target = $region110
            $region109: #{rsfnet_maskin_forward.3} parent=105 // pred_region
              %s4346 = sand.u32 %s4321, 7
              %p4347 = scmp.eq.s32.totalorder %s4346, 0
              // Predicated region
              $region122: #{rsfnet_maskin_forward.3} parent=109 // pred_check
                %p4348 = pneg %p4347
              $region123: #{rsfnet_maskin_forward.3} parent=109 // pred_check_branch
                %4350 = sbr.rel (%p4348) target = $region125
              $region124: #{rsfnet_maskin_forward.3} parent=109 // pred_region
                %s4351 = sshrl.u32 %s4321, 3
                %s4352 = sshrl.u32 %s4351, 5
                // While loop
                $region126: #{rsfnet_maskin_forward.3} parent=124 // loop_pre_header
                  _
                $region127: #{rsfnet_maskin_forward.3} parent=124 // loop_header
                  %s4356 = sphi 0, %s4358
                  %p4357 = scmp.ge.s32.totalorder %s4356, %s4352
                  %s4361 = sphi 0, %s4494
                  %s4362 = sphi %s4307, %s4497
                  %s4363 = sphi %s4320, %s4498
                $region128: #{rsfnet_maskin_forward.3} parent=124 // loop_header_branch
                  %4360 = sbr.rel (%p4357) target = $region132
                $region129: #{rsfnet_maskin_forward.3} parent=124 // loop_body
                  %v4364 = vld [vmem:[%s4362] sm:$0xff]
                  %4365 = vst [vmem:[%s4363] sm:$0xff] %v4364
                  %v4366 = vld [vmem:[%s4362 + $0x8] sm:$0xff]
                  %4367 = vst [vmem:[%s4363 + $0x8] sm:$0xff] %v4366
                  %v4368 = vld [vmem:[%s4362 + $0x10] sm:$0xff]
                  %4369 = vst [vmem:[%s4363 + $0x10] sm:$0xff] %v4368
                  %v4370 = vld [vmem:[%s4362 + $0x18] sm:$0xff]
                  %4371 = vst [vmem:[%s4363 + $0x18] sm:$0xff] %v4370
                  %v4372 = vld [vmem:[%s4362 + $0x20] sm:$0xff]
                  %4373 = vst [vmem:[%s4363 + $0x20] sm:$0xff] %v4372
                  %v4374 = vld [vmem:[%s4362 + $0x28] sm:$0xff]
                  %4375 = vst [vmem:[%s4363 + $0x28] sm:$0xff] %v4374
                  %v4376 = vld [vmem:[%s4362 + $0x30] sm:$0xff]
                  %4377 = vst [vmem:[%s4363 + $0x30] sm:$0xff] %v4376
                  %v4378 = vld [vmem:[%s4362 + $0x38] sm:$0xff]
                  %4379 = vst [vmem:[%s4363 + $0x38] sm:$0xff] %v4378
                  %v4380 = vld [vmem:[%s4362 + $0x40] sm:$0xff]
                  %4381 = vst [vmem:[%s4363 + $0x40] sm:$0xff] %v4380
                  %v4382 = vld [vmem:[%s4362 + $0x48] sm:$0xff]
                  %4383 = vst [vmem:[%s4363 + $0x48] sm:$0xff] %v4382
                  %v4384 = vld [vmem:[%s4362 + $0x50] sm:$0xff]
                  %4385 = vst [vmem:[%s4363 + $0x50] sm:$0xff] %v4384
                  %v4386 = vld [vmem:[%s4362 + $0x58] sm:$0xff]
                  %4387 = vst [vmem:[%s4363 + $0x58] sm:$0xff] %v4386
                  %v4388 = vld [vmem:[%s4362 + $0x60] sm:$0xff]
                  %4389 = vst [vmem:[%s4363 + $0x60] sm:$0xff] %v4388
                  %v4390 = vld [vmem:[%s4362 + $0x68] sm:$0xff]
                  %4391 = vst [vmem:[%s4363 + $0x68] sm:$0xff] %v4390
                  %v4392 = vld [vmem:[%s4362 + $0x70] sm:$0xff]
                  %4393 = vst [vmem:[%s4363 + $0x70] sm:$0xff] %v4392
                  %v4394 = vld [vmem:[%s4362 + $0x78] sm:$0xff]
                  %4395 = vst [vmem:[%s4363 + $0x78] sm:$0xff] %v4394
                  %v4396 = vld [vmem:[%s4362 + $0x80] sm:$0xff]
                  %4397 = vst [vmem:[%s4363 + $0x80] sm:$0xff] %v4396
                  %v4398 = vld [vmem:[%s4362 + $0x88] sm:$0xff]
                  %4399 = vst [vmem:[%s4363 + $0x88] sm:$0xff] %v4398
                  %v4400 = vld [vmem:[%s4362 + $0x90] sm:$0xff]
                  %4401 = vst [vmem:[%s4363 + $0x90] sm:$0xff] %v4400
                  %v4402 = vld [vmem:[%s4362 + $0x98] sm:$0xff]
                  %4403 = vst [vmem:[%s4363 + $0x98] sm:$0xff] %v4402
                  %v4404 = vld [vmem:[%s4362 + $0xa0] sm:$0xff]
                  %4405 = vst [vmem:[%s4363 + $0xa0] sm:$0xff] %v4404
                  %v4406 = vld [vmem:[%s4362 + $0xa8] sm:$0xff]
                  %4407 = vst [vmem:[%s4363 + $0xa8] sm:$0xff] %v4406
                  %v4408 = vld [vmem:[%s4362 + $0xb0] sm:$0xff]
                  %4409 = vst [vmem:[%s4363 + $0xb0] sm:$0xff] %v4408
                  %v4410 = vld [vmem:[%s4362 + $0xb8] sm:$0xff]
                  %4411 = vst [vmem:[%s4363 + $0xb8] sm:$0xff] %v4410
                  %v4412 = vld [vmem:[%s4362 + $0xc0] sm:$0xff]
                  %4413 = vst [vmem:[%s4363 + $0xc0] sm:$0xff] %v4412
                  %v4414 = vld [vmem:[%s4362 + $0xc8] sm:$0xff]
                  %4415 = vst [vmem:[%s4363 + $0xc8] sm:$0xff] %v4414
                  %v4416 = vld [vmem:[%s4362 + $0xd0] sm:$0xff]
                  %4417 = vst [vmem:[%s4363 + $0xd0] sm:$0xff] %v4416
                  %v4418 = vld [vmem:[%s4362 + $0xd8] sm:$0xff]
                  %4419 = vst [vmem:[%s4363 + $0xd8] sm:$0xff] %v4418
                  %v4420 = vld [vmem:[%s4362 + $0xe0] sm:$0xff]
                  %4421 = vst [vmem:[%s4363 + $0xe0] sm:$0xff] %v4420
                  %v4422 = vld [vmem:[%s4362 + $0xe8] sm:$0xff]
                  %4423 = vst [vmem:[%s4363 + $0xe8] sm:$0xff] %v4422
                  %v4424 = vld [vmem:[%s4362 + $0xf0] sm:$0xff]
                  %4425 = vst [vmem:[%s4363 + $0xf0] sm:$0xff] %v4424
                  %v4426 = vld [vmem:[%s4362 + $0xf8] sm:$0xff]
                  %4427 = vst [vmem:[%s4363 + $0xf8] sm:$0xff] %v4426
                  %v4428 = vld [vmem:[%s4362 + $0x100] sm:$0xff]
                  %4429 = vst [vmem:[%s4363 + $0x3f8] sm:$0xff] %v4428
                  %v4430 = vld [vmem:[%s4362 + $0x108] sm:$0xff]
                  %4431 = vst [vmem:[%s4363 + $0x400] sm:$0xff] %v4430
                  %v4432 = vld [vmem:[%s4362 + $0x110] sm:$0xff]
                  %4433 = vst [vmem:[%s4363 + $0x408] sm:$0xff] %v4432
                  %v4434 = vld [vmem:[%s4362 + $0x118] sm:$0xff]
                  %4435 = vst [vmem:[%s4363 + $0x410] sm:$0xff] %v4434
                  %v4436 = vld [vmem:[%s4362 + $0x120] sm:$0xff]
                  %4437 = vst [vmem:[%s4363 + $0x418] sm:$0xff] %v4436
                  %v4438 = vld [vmem:[%s4362 + $0x128] sm:$0xff]
                  %4439 = vst [vmem:[%s4363 + $0x420] sm:$0xff] %v4438
                  %v4440 = vld [vmem:[%s4362 + $0x130] sm:$0xff]
                  %4441 = vst [vmem:[%s4363 + $0x428] sm:$0xff] %v4440
                  %v4442 = vld [vmem:[%s4362 + $0x138] sm:$0xff]
                  %4443 = vst [vmem:[%s4363 + $0x430] sm:$0xff] %v4442
                  %v4444 = vld [vmem:[%s4362 + $0x140] sm:$0xff]
                  %4445 = vst [vmem:[%s4363 + $0x438] sm:$0xff] %v4444
                  %v4446 = vld [vmem:[%s4362 + $0x148] sm:$0xff]
                  %4447 = vst [vmem:[%s4363 + $0x440] sm:$0xff] %v4446
                  %v4448 = vld [vmem:[%s4362 + $0x150] sm:$0xff]
                  %4449 = vst [vmem:[%s4363 + $0x448] sm:$0xff] %v4448
                  %v4450 = vld [vmem:[%s4362 + $0x158] sm:$0xff]
                  %4451 = vst [vmem:[%s4363 + $0x450] sm:$0xff] %v4450
                  %v4452 = vld [vmem:[%s4362 + $0x160] sm:$0xff]
                  %4453 = vst [vmem:[%s4363 + $0x458] sm:$0xff] %v4452
                  %v4454 = vld [vmem:[%s4362 + $0x168] sm:$0xff]
                  %4455 = vst [vmem:[%s4363 + $0x460] sm:$0xff] %v4454
                  %v4456 = vld [vmem:[%s4362 + $0x170] sm:$0xff]
                  %4457 = vst [vmem:[%s4363 + $0x468] sm:$0xff] %v4456
                  %v4458 = vld [vmem:[%s4362 + $0x178] sm:$0xff]
                  %4459 = vst [vmem:[%s4363 + $0x470] sm:$0xff] %v4458
                  %v4460 = vld [vmem:[%s4362 + $0x180] sm:$0xff]
                  %4461 = vst [vmem:[%s4363 + $0x478] sm:$0xff] %v4460
                  %v4462 = vld [vmem:[%s4362 + $0x188] sm:$0xff]
                  %4463 = vst [vmem:[%s4363 + $0x480] sm:$0xff] %v4462
                  %v4464 = vld [vmem:[%s4362 + $0x190] sm:$0xff]
                  %4465 = vst [vmem:[%s4363 + $0x488] sm:$0xff] %v4464
                  %v4466 = vld [vmem:[%s4362 + $0x198] sm:$0xff]
                  %4467 = vst [vmem:[%s4363 + $0x490] sm:$0xff] %v4466
                  %v4468 = vld [vmem:[%s4362 + $0x1a0] sm:$0xff]
                  %4469 = vst [vmem:[%s4363 + $0x498] sm:$0xff] %v4468
                  %v4470 = vld [vmem:[%s4362 + $0x1a8] sm:$0xff]
                  %4471 = vst [vmem:[%s4363 + $0x4a0] sm:$0xff] %v4470
                  %v4472 = vld [vmem:[%s4362 + $0x1b0] sm:$0xff]
                  %4473 = vst [vmem:[%s4363 + $0x4a8] sm:$0xff] %v4472
                  %v4474 = vld [vmem:[%s4362 + $0x1b8] sm:$0xff]
                  %4475 = vst [vmem:[%s4363 + $0x4b0] sm:$0xff] %v4474
                  %v4476 = vld [vmem:[%s4362 + $0x1c0] sm:$0xff]
                  %4477 = vst [vmem:[%s4363 + $0x4b8] sm:$0xff] %v4476
                  %v4478 = vld [vmem:[%s4362 + $0x1c8] sm:$0xff]
                  %4479 = vst [vmem:[%s4363 + $0x4c0] sm:$0xff] %v4478
                  %v4480 = vld [vmem:[%s4362 + $0x1d0] sm:$0xff]
                  %4481 = vst [vmem:[%s4363 + $0x4c8] sm:$0xff] %v4480
                  %v4482 = vld [vmem:[%s4362 + $0x1d8] sm:$0xff]
                  %4483 = vst [vmem:[%s4363 + $0x4d0] sm:$0xff] %v4482
                  %v4484 = vld [vmem:[%s4362 + $0x1e0] sm:$0xff]
                  %4485 = vst [vmem:[%s4363 + $0x4d8] sm:$0xff] %v4484
                  %v4486 = vld [vmem:[%s4362 + $0x1e8] sm:$0xff]
                  %4487 = vst [vmem:[%s4363 + $0x4e0] sm:$0xff] %v4486
                  %v4488 = vld [vmem:[%s4362 + $0x1f0] sm:$0xff]
                  %4489 = vst [vmem:[%s4363 + $0x4e8] sm:$0xff] %v4488
                  %v4490 = vld [vmem:[%s4362 + $0x1f8] sm:$0xff]
                  %4491 = vst [vmem:[%s4363 + $0x4f0] sm:$0xff] %v4490
                  %s4492 = sadd.s32 1, %s4361
                  %p4493 = scmp.ge.s32.totalorder %s4492, %s4352
                  %s4494 = scalar_select %p4493, 0, %s4492
                  %s4495 = smul.u32 %s4494, 256
                  %s4496 = smul.u32 %s4494, 256
                  %s4497 = scalar_lea.vmem %s4307, %s4495 [#allocation3]
                  %s4498 = scalar_lea.vmem %s4320, %s4496
                $region130: #{rsfnet_maskin_forward.3} parent=124 // loop_footer
                  %s4358 = sadd.s32 %s4356, 1
                $region131: #{rsfnet_maskin_forward.3} parent=124 // loop_footer_branch
                  %4355 = sbr.rel target = $region127
                $region132: #{rsfnet_maskin_forward.3} parent=124 // loop_exit
                  _
                %s4499 = sshrl.u32 %s4351, 5
                %s4500 = sand.u32 %s4351, 31
                %s4501 = smul.u32 %s4499, 32
                %s4502 = smul.u32 128, %s4501
                %s4503 = sshra.s32 %s4502, 4
                %s4504 = scalar_lea.vmem %s4307, %s4503 [#allocation3]
                %s4505 = smul.u32 128, %s4501
                %s4506 = sshra.s32 %s4505, 4
                %s4507 = scalar_lea.vmem %s4320, %s4506
                // While loop
                $region133: #{rsfnet_maskin_forward.3} parent=124 // loop_pre_header
                  _
                $region134: #{rsfnet_maskin_forward.3} parent=124 // loop_header
                  %s4511 = sphi 0, %s4513
                  %p4512 = scmp.ge.s32.totalorder %s4511, %s4500
                  %s4516 = sphi 0, %s4525
                  %s4517 = sphi %s4504, %s4528
                  %s4518 = sphi %s4507, %s4529
                $region135: #{rsfnet_maskin_forward.3} parent=124 // loop_header_branch
                  %4515 = sbr.rel (%p4512) target = $region139
                $region136: #{rsfnet_maskin_forward.3} parent=124 // loop_body
                  %v4519 = vld [vmem:[%s4517] sm:$0xff]
                  %4520 = vst [vmem:[%s4518] sm:$0xff] %v4519
                  %v4521 = vld [vmem:[%s4517 + $0x100] sm:$0xff]
                  %4522 = vst [vmem:[%s4518 + $0x3f8] sm:$0xff] %v4521
                  %s4523 = sadd.s32 1, %s4516
                  %p4524 = scmp.ge.s32.totalorder %s4523, %s4500
                  %s4525 = scalar_select %p4524, 0, %s4523
                  %s4526 = smul.u32 %s4525, 8
                  %s4527 = smul.u32 %s4525, 8
                  %s4528 = scalar_lea.vmem %s4504, %s4526 [#allocation3]
                  %s4529 = scalar_lea.vmem %s4507, %s4527
                $region137: #{rsfnet_maskin_forward.3} parent=124 // loop_footer
                  %s4513 = sadd.s32 %s4511, 1
                $region138: #{rsfnet_maskin_forward.3} parent=124 // loop_footer_branch
                  %4510 = sbr.rel target = $region134
                $region139: #{rsfnet_maskin_forward.3} parent=124 // loop_exit
                  _
              $region125: #{rsfnet_maskin_forward.3} parent=109 // pred_fallthru
                _
              %p4530 = pneg %p4347
              // Predicated region
              $region140: #{rsfnet_maskin_forward.3} parent=109 // pred_check
                _
              $region141: #{rsfnet_maskin_forward.3} parent=109 // pred_check_branch
                %4532 = sbr.rel (%p4347) target = $region143
              $region142: #{rsfnet_maskin_forward.3} parent=109 // pred_region
                %s4533 = sand.u32 %s4321, 7
                %s4534 = ssub.s32 %s4321, %s4533
                %s4535 = scalar_lea.vmem %s4307, %s4534 [#allocation3]
                %s4536 = ssub.s32 %s4321, %s4533
                %s4537 = scalar_lea.vmem %s4320, %s4536
                %s4538 = sshrl.u32 %s4321, 3
                %s4539 = sshrl.u32 %s4538, 5
                // While loop
                $region144: #{rsfnet_maskin_forward.3} parent=142 // loop_pre_header
                  _
                $region145: #{rsfnet_maskin_forward.3} parent=142 // loop_header
                  %s4543 = sphi 0, %s4545
                  %p4544 = scmp.ge.s32.totalorder %s4543, %s4539
                  %s4548 = sphi 0, %s4681
                  %s4549 = sphi %s4307, %s4684
                  %s4550 = sphi %s4320, %s4685
                $region146: #{rsfnet_maskin_forward.3} parent=142 // loop_header_branch
                  %4547 = sbr.rel (%p4544) target = $region150
                $region147: #{rsfnet_maskin_forward.3} parent=142 // loop_body
                  %v4551 = vld [vmem:[%s4549] sm:$0xff]
                  %4552 = vst [vmem:[%s4550] sm:$0xff] %v4551
                  %v4553 = vld [vmem:[%s4549 + $0x8] sm:$0xff]
                  %4554 = vst [vmem:[%s4550 + $0x8] sm:$0xff] %v4553
                  %v4555 = vld [vmem:[%s4549 + $0x10] sm:$0xff]
                  %4556 = vst [vmem:[%s4550 + $0x10] sm:$0xff] %v4555
                  %v4557 = vld [vmem:[%s4549 + $0x18] sm:$0xff]
                  %4558 = vst [vmem:[%s4550 + $0x18] sm:$0xff] %v4557
                  %v4559 = vld [vmem:[%s4549 + $0x20] sm:$0xff]
                  %4560 = vst [vmem:[%s4550 + $0x20] sm:$0xff] %v4559
                  %v4561 = vld [vmem:[%s4549 + $0x28] sm:$0xff]
                  %4562 = vst [vmem:[%s4550 + $0x28] sm:$0xff] %v4561
                  %v4563 = vld [vmem:[%s4549 + $0x30] sm:$0xff]
                  %4564 = vst [vmem:[%s4550 + $0x30] sm:$0xff] %v4563
                  %v4565 = vld [vmem:[%s4549 + $0x38] sm:$0xff]
                  %4566 = vst [vmem:[%s4550 + $0x38] sm:$0xff] %v4565
                  %v4567 = vld [vmem:[%s4549 + $0x40] sm:$0xff]
                  %4568 = vst [vmem:[%s4550 + $0x40] sm:$0xff] %v4567
                  %v4569 = vld [vmem:[%s4549 + $0x48] sm:$0xff]
                  %4570 = vst [vmem:[%s4550 + $0x48] sm:$0xff] %v4569
                  %v4571 = vld [vmem:[%s4549 + $0x50] sm:$0xff]
                  %4572 = vst [vmem:[%s4550 + $0x50] sm:$0xff] %v4571
                  %v4573 = vld [vmem:[%s4549 + $0x58] sm:$0xff]
                  %4574 = vst [vmem:[%s4550 + $0x58] sm:$0xff] %v4573
                  %v4575 = vld [vmem:[%s4549 + $0x60] sm:$0xff]
                  %4576 = vst [vmem:[%s4550 + $0x60] sm:$0xff] %v4575
                  %v4577 = vld [vmem:[%s4549 + $0x68] sm:$0xff]
                  %4578 = vst [vmem:[%s4550 + $0x68] sm:$0xff] %v4577
                  %v4579 = vld [vmem:[%s4549 + $0x70] sm:$0xff]
                  %4580 = vst [vmem:[%s4550 + $0x70] sm:$0xff] %v4579
                  %v4581 = vld [vmem:[%s4549 + $0x78] sm:$0xff]
                  %4582 = vst [vmem:[%s4550 + $0x78] sm:$0xff] %v4581
                  %v4583 = vld [vmem:[%s4549 + $0x80] sm:$0xff]
                  %4584 = vst [vmem:[%s4550 + $0x80] sm:$0xff] %v4583
                  %v4585 = vld [vmem:[%s4549 + $0x88] sm:$0xff]
                  %4586 = vst [vmem:[%s4550 + $0x88] sm:$0xff] %v4585
                  %v4587 = vld [vmem:[%s4549 + $0x90] sm:$0xff]
                  %4588 = vst [vmem:[%s4550 + $0x90] sm:$0xff] %v4587
                  %v4589 = vld [vmem:[%s4549 + $0x98] sm:$0xff]
                  %4590 = vst [vmem:[%s4550 + $0x98] sm:$0xff] %v4589
                  %v4591 = vld [vmem:[%s4549 + $0xa0] sm:$0xff]
                  %4592 = vst [vmem:[%s4550 + $0xa0] sm:$0xff] %v4591
                  %v4593 = vld [vmem:[%s4549 + $0xa8] sm:$0xff]
                  %4594 = vst [vmem:[%s4550 + $0xa8] sm:$0xff] %v4593
                  %v4595 = vld [vmem:[%s4549 + $0xb0] sm:$0xff]
                  %4596 = vst [vmem:[%s4550 + $0xb0] sm:$0xff] %v4595
                  %v4597 = vld [vmem:[%s4549 + $0xb8] sm:$0xff]
                  %4598 = vst [vmem:[%s4550 + $0xb8] sm:$0xff] %v4597
                  %v4599 = vld [vmem:[%s4549 + $0xc0] sm:$0xff]
                  %4600 = vst [vmem:[%s4550 + $0xc0] sm:$0xff] %v4599
                  %v4601 = vld [vmem:[%s4549 + $0xc8] sm:$0xff]
                  %4602 = vst [vmem:[%s4550 + $0xc8] sm:$0xff] %v4601
                  %v4603 = vld [vmem:[%s4549 + $0xd0] sm:$0xff]
                  %4604 = vst [vmem:[%s4550 + $0xd0] sm:$0xff] %v4603
                  %v4605 = vld [vmem:[%s4549 + $0xd8] sm:$0xff]
                  %4606 = vst [vmem:[%s4550 + $0xd8] sm:$0xff] %v4605
                  %v4607 = vld [vmem:[%s4549 + $0xe0] sm:$0xff]
                  %4608 = vst [vmem:[%s4550 + $0xe0] sm:$0xff] %v4607
                  %v4609 = vld [vmem:[%s4549 + $0xe8] sm:$0xff]
                  %4610 = vst [vmem:[%s4550 + $0xe8] sm:$0xff] %v4609
                  %v4611 = vld [vmem:[%s4549 + $0xf0] sm:$0xff]
                  %4612 = vst [vmem:[%s4550 + $0xf0] sm:$0xff] %v4611
                  %v4613 = vld [vmem:[%s4549 + $0xf8] sm:$0xff]
                  %4614 = vst [vmem:[%s4550 + $0xf8] sm:$0xff] %v4613
                  %v4615 = vld [vmem:[%s4549 + $0x100] sm:$0xff]
                  %4616 = vst [vmem:[%s4550 + $0x3f8] sm:$0xff] %v4615
                  %v4617 = vld [vmem:[%s4549 + $0x108] sm:$0xff]
                  %4618 = vst [vmem:[%s4550 + $0x400] sm:$0xff] %v4617
                  %v4619 = vld [vmem:[%s4549 + $0x110] sm:$0xff]
                  %4620 = vst [vmem:[%s4550 + $0x408] sm:$0xff] %v4619
                  %v4621 = vld [vmem:[%s4549 + $0x118] sm:$0xff]
                  %4622 = vst [vmem:[%s4550 + $0x410] sm:$0xff] %v4621
                  %v4623 = vld [vmem:[%s4549 + $0x120] sm:$0xff]
                  %4624 = vst [vmem:[%s4550 + $0x418] sm:$0xff] %v4623
                  %v4625 = vld [vmem:[%s4549 + $0x128] sm:$0xff]
                  %4626 = vst [vmem:[%s4550 + $0x420] sm:$0xff] %v4625
                  %v4627 = vld [vmem:[%s4549 + $0x130] sm:$0xff]
                  %4628 = vst [vmem:[%s4550 + $0x428] sm:$0xff] %v4627
                  %v4629 = vld [vmem:[%s4549 + $0x138] sm:$0xff]
                  %4630 = vst [vmem:[%s4550 + $0x430] sm:$0xff] %v4629
                  %v4631 = vld [vmem:[%s4549 + $0x140] sm:$0xff]
                  %4632 = vst [vmem:[%s4550 + $0x438] sm:$0xff] %v4631
                  %v4633 = vld [vmem:[%s4549 + $0x148] sm:$0xff]
                  %4634 = vst [vmem:[%s4550 + $0x440] sm:$0xff] %v4633
                  %v4635 = vld [vmem:[%s4549 + $0x150] sm:$0xff]
                  %4636 = vst [vmem:[%s4550 + $0x448] sm:$0xff] %v4635
                  %v4637 = vld [vmem:[%s4549 + $0x158] sm:$0xff]
                  %4638 = vst [vmem:[%s4550 + $0x450] sm:$0xff] %v4637
                  %v4639 = vld [vmem:[%s4549 + $0x160] sm:$0xff]
                  %4640 = vst [vmem:[%s4550 + $0x458] sm:$0xff] %v4639
                  %v4641 = vld [vmem:[%s4549 + $0x168] sm:$0xff]
                  %4642 = vst [vmem:[%s4550 + $0x460] sm:$0xff] %v4641
                  %v4643 = vld [vmem:[%s4549 + $0x170] sm:$0xff]
                  %4644 = vst [vmem:[%s4550 + $0x468] sm:$0xff] %v4643
                  %v4645 = vld [vmem:[%s4549 + $0x178] sm:$0xff]
                  %4646 = vst [vmem:[%s4550 + $0x470] sm:$0xff] %v4645
                  %v4647 = vld [vmem:[%s4549 + $0x180] sm:$0xff]
                  %4648 = vst [vmem:[%s4550 + $0x478] sm:$0xff] %v4647
                  %v4649 = vld [vmem:[%s4549 + $0x188] sm:$0xff]
                  %4650 = vst [vmem:[%s4550 + $0x480] sm:$0xff] %v4649
                  %v4651 = vld [vmem:[%s4549 + $0x190] sm:$0xff]
                  %4652 = vst [vmem:[%s4550 + $0x488] sm:$0xff] %v4651
                  %v4653 = vld [vmem:[%s4549 + $0x198] sm:$0xff]
                  %4654 = vst [vmem:[%s4550 + $0x490] sm:$0xff] %v4653
                  %v4655 = vld [vmem:[%s4549 + $0x1a0] sm:$0xff]
                  %4656 = vst [vmem:[%s4550 + $0x498] sm:$0xff] %v4655
                  %v4657 = vld [vmem:[%s4549 + $0x1a8] sm:$0xff]
                  %4658 = vst [vmem:[%s4550 + $0x4a0] sm:$0xff] %v4657
                  %v4659 = vld [vmem:[%s4549 + $0x1b0] sm:$0xff]
                  %4660 = vst [vmem:[%s4550 + $0x4a8] sm:$0xff] %v4659
                  %v4661 = vld [vmem:[%s4549 + $0x1b8] sm:$0xff]
                  %4662 = vst [vmem:[%s4550 + $0x4b0] sm:$0xff] %v4661
                  %v4663 = vld [vmem:[%s4549 + $0x1c0] sm:$0xff]
                  %4664 = vst [vmem:[%s4550 + $0x4b8] sm:$0xff] %v4663
                  %v4665 = vld [vmem:[%s4549 + $0x1c8] sm:$0xff]
                  %4666 = vst [vmem:[%s4550 + $0x4c0] sm:$0xff] %v4665
                  %v4667 = vld [vmem:[%s4549 + $0x1d0] sm:$0xff]
                  %4668 = vst [vmem:[%s4550 + $0x4c8] sm:$0xff] %v4667
                  %v4669 = vld [vmem:[%s4549 + $0x1d8] sm:$0xff]
                  %4670 = vst [vmem:[%s4550 + $0x4d0] sm:$0xff] %v4669
                  %v4671 = vld [vmem:[%s4549 + $0x1e0] sm:$0xff]
                  %4672 = vst [vmem:[%s4550 + $0x4d8] sm:$0xff] %v4671
                  %v4673 = vld [vmem:[%s4549 + $0x1e8] sm:$0xff]
                  %4674 = vst [vmem:[%s4550 + $0x4e0] sm:$0xff] %v4673
                  %v4675 = vld [vmem:[%s4549 + $0x1f0] sm:$0xff]
                  %4676 = vst [vmem:[%s4550 + $0x4e8] sm:$0xff] %v4675
                  %v4677 = vld [vmem:[%s4549 + $0x1f8] sm:$0xff]
                  %4678 = vst [vmem:[%s4550 + $0x4f0] sm:$0xff] %v4677
                  %s4679 = sadd.s32 1, %s4548
                  %p4680 = scmp.ge.s32.totalorder %s4679, %s4539
                  %s4681 = scalar_select %p4680, 0, %s4679
                  %s4682 = smul.u32 %s4681, 256
                  %s4683 = smul.u32 %s4681, 256
                  %s4684 = scalar_lea.vmem %s4307, %s4682 [#allocation3]
                  %s4685 = scalar_lea.vmem %s4320, %s4683
                $region148: #{rsfnet_maskin_forward.3} parent=142 // loop_footer
                  %s4545 = sadd.s32 %s4543, 1
                $region149: #{rsfnet_maskin_forward.3} parent=142 // loop_footer_branch
                  %4542 = sbr.rel target = $region145
                $region150: #{rsfnet_maskin_forward.3} parent=142 // loop_exit
                  _
                %s4686 = sshrl.u32 %s4538, 5
                %s4687 = sand.u32 %s4538, 31
                %s4688 = smul.u32 %s4686, 32
                %s4689 = smul.u32 128, %s4688
                %s4690 = sshra.s32 %s4689, 4
                %s4691 = scalar_lea.vmem %s4307, %s4690 [#allocation3]
                %s4692 = smul.u32 128, %s4688
                %s4693 = sshra.s32 %s4692, 4
                %s4694 = scalar_lea.vmem %s4320, %s4693
                // While loop
                $region151: #{rsfnet_maskin_forward.3} parent=142 // loop_pre_header
                  _
                $region152: #{rsfnet_maskin_forward.3} parent=142 // loop_header
                  %s4698 = sphi 0, %s4700
                  %p4699 = scmp.ge.s32.totalorder %s4698, %s4687
                  %s4703 = sphi 0, %s4712
                  %s4704 = sphi %s4691, %s4715
                  %s4705 = sphi %s4694, %s4716
                $region153: #{rsfnet_maskin_forward.3} parent=142 // loop_header_branch
                  %4702 = sbr.rel (%p4699) target = $region157
                $region154: #{rsfnet_maskin_forward.3} parent=142 // loop_body
                  %v4706 = vld [vmem:[%s4704] sm:$0xff]
                  %4707 = vst [vmem:[%s4705] sm:$0xff] %v4706
                  %v4708 = vld [vmem:[%s4704 + $0x100] sm:$0xff]
                  %4709 = vst [vmem:[%s4705 + $0x3f8] sm:$0xff] %v4708
                  %s4710 = sadd.s32 1, %s4703
                  %p4711 = scmp.ge.s32.totalorder %s4710, %s4687
                  %s4712 = scalar_select %p4711, 0, %s4710
                  %s4713 = smul.u32 %s4712, 8
                  %s4714 = smul.u32 %s4712, 8
                  %s4715 = scalar_lea.vmem %s4691, %s4713 [#allocation3]
                  %s4716 = scalar_lea.vmem %s4694, %s4714
                $region155: #{rsfnet_maskin_forward.3} parent=142 // loop_footer
                  %s4700 = sadd.s32 %s4698, 1
                $region156: #{rsfnet_maskin_forward.3} parent=142 // loop_footer_branch
                  %4697 = sbr.rel target = $region152
                $region157: #{rsfnet_maskin_forward.3} parent=142 // loop_exit
                  _
                %s4717 = sshll.u32 1, %s4533
                %s4718 = ssub.s32 %s4717, 1
                loop: start=0, step=1, limit=1
                $region158: #{rsfnet_maskin_forward.3} parent=142 // loop_pre_header
                  _
                $region159: #{rsfnet_maskin_forward.3} parent=142 // loop_header
                  %s4720 = sphi 0, %s4724
                  %p4721 = scmp.ge.s32.totalorder %s4720, 1
                  %s4725 = sphi %s4535, %s4535
                  %s4726 = sphi %s4537, %s4537
                $region160: #{rsfnet_maskin_forward.3} parent=142 // loop_header_branch
                  %4723 = sbr.rel (%p4721) target = $region164
                $region161: #{rsfnet_maskin_forward.3} parent=142 // loop_body
                  %v4727 = vld [vmem:[%s4725] sm:%s4718]
                  %4728 = vst [vmem:[%s4726] sm:%s4718] %v4727
                  %v4729 = vld [vmem:[%s4725 + $0x100] sm:%s4718]
                  %4730 = vst [vmem:[%s4726 + $0x3f8] sm:%s4718] %v4729
                $region162: #{rsfnet_maskin_forward.3} parent=142 // loop_footer
                  %s4724 = sadd.s32 1, %s4720
                $region163: #{rsfnet_maskin_forward.3} parent=142 // loop_footer_branch
                  %4719 = sbr.rel target = $region159
                $region164: #{rsfnet_maskin_forward.3} parent=142 // loop_exit
                  _
              $region143: #{rsfnet_maskin_forward.3} parent=109 // pred_fallthru
                _
            $region110: #{rsfnet_maskin_forward.3} parent=105 // pred_fallthru
              _
            // Predicated region
            $region111: #{rsfnet_maskin_forward.3} parent=105 // pred_check
              %p4329 = pneg %p4325
            $region112: #{rsfnet_maskin_forward.3} parent=105 // pred_check_branch
              %4331 = sbr.rel (%p4329) target = $region114
            $region113: #{rsfnet_maskin_forward.3} parent=105 // pred_region
              %s4332 = sshll.u32 1, %s4321
              %s4333 = ssub.s32 %s4332, 1
              loop: start=0, step=1, limit=1
              $region115: #{rsfnet_maskin_forward.3} parent=113 // loop_pre_header
                _
              $region116: #{rsfnet_maskin_forward.3} parent=113 // loop_header
                %s4335 = sphi 0, %s4339
                %p4336 = scmp.ge.s32.totalorder %s4335, 1
                %s4340 = sphi %s4307, %s4307
                %s4341 = sphi %s4320, %s4320
              $region117: #{rsfnet_maskin_forward.3} parent=113 // loop_header_branch
                %4338 = sbr.rel (%p4336) target = $region121
              $region118: #{rsfnet_maskin_forward.3} parent=113 // loop_body
                %v4342 = vld [vmem:[%s4340] sm:%s4333]
                %4343 = vst [vmem:[%s4341] sm:%s4333] %v4342
                %v4344 = vld [vmem:[%s4340 + $0x100] sm:%s4333]
                %4345 = vst [vmem:[%s4341 + $0x3f8] sm:%s4333] %v4344
              $region119: #{rsfnet_maskin_forward.3} parent=113 // loop_footer
                %s4339 = sadd.s32 1, %s4335
              $region120: #{rsfnet_maskin_forward.3} parent=113 // loop_footer_branch
                %4334 = sbr.rel target = $region116
              $region121: #{rsfnet_maskin_forward.3} parent=113 // loop_exit
                _
            $region114: #{rsfnet_maskin_forward.3} parent=105 // pred_fallthru
              _
          $region106: #{rsfnet_maskin_forward.3} parent=101 // pred_fallthru
            _
          %4731 = vnop
        $region102: #{rsfnet_maskin_forward.3} parent=93 // pred_fallthru
          _
      $region94: #{rsfnet_maskin_forward.3} parent=5 // pred_fallthru
        _
      %p4732 = scmp.le.s32.totalorder 2, %s9
      // Predicated region
      $region165: #{rsfnet_maskin_forward.3} parent=5 // pred_check
        %p4733 = pneg %p4732
      $region166: #{rsfnet_maskin_forward.3} parent=5 // pred_check_branch
        %4735 = sbr.rel (%p4733) target = $region168
      $region167: #{rsfnet_maskin_forward.3} parent=5 // pred_region
        %s4736 = ssub.s32 %s9, 2
        // Predicated region
        $region169: #{rsfnet_maskin_forward.3} parent=167 // pred_check
          %p4737 = pneg %p122
        $region170: #{rsfnet_maskin_forward.3} parent=167 // pred_check_branch
          %4739 = sbr.rel (%p4737) target = $region172
        $region171: #{rsfnet_maskin_forward.3} parent=167 // pred_region
          %s4740 = sand.u32 %s107, 1
          %s4741 = sand.u32 %s107, 1
          %s4742 = smul.addr %s4741, 512
          %s4743 = scalar_lea.vmem [#allocation3], %s4742
        $region172: #{rsfnet_maskin_forward.3} parent=167 // pred_fallthru
          _
      $region168: #{rsfnet_maskin_forward.3} parent=5 // pred_fallthru
        _
    $region6: #{rsfnet_maskin_forward.3} parent=1 // loop_footer
      %s13 = sadd.s32 1, %s9
    $region7: #{rsfnet_maskin_forward.3} parent=1 // loop_footer_branch
      %8 = sbr.rel target = $region3
    $region8: #{rsfnet_maskin_forward.3} parent=1 // loop_exit
      _

// kernel: rsfnet_maskin_forward.5
$region0: #{rsfnet_maskin_forward.5}
  #allocation0 [shape = 'u32[]', space=smem, size = 0x4, offset = 0x4, fixed_abs, tag = 'smem constant byte address 0x4 - core index']
  #allocation1 [shape = 'u32[144,128]{1,0:T(1,128)}', space=vmem, size = 0x12000, scoped, tag = 'internal scratch']
  %s0 = inlined_call_operand.vmem [shape: f32[2,12,3], index: 0, kind: input, shape index: {}]
  %s1 = inlined_call_operand.vmem [shape: f32[2,12,1], index: 1, kind: input, shape index: {}]
  %s2 = inlined_call_operand.vmem [shape: f32[2,3,256], index: 2, kind: input, shape index: {}]
  %s3 = inlined_call_operand.vmem [shape: f32[2,4,256], index: 3, kind: input, shape index: {}]
  %s4 = inlined_call_operand.vmem [shape: f32[2,3,256], index: 4, kind: output, shape index: {0}]
  %s5 = inlined_call_operand.vmem [shape: bf16[2,12,256], index: 5, kind: output, shape index: {1}]
  %6 = xla_tuple %s4, %s5
  %s7 = sld [smem:[#allocation0]]
  $region34: #{rsfnet_maskin_forward.5} parent=0
    _
  %s9 = ssub.s32 1, %s7
  %s10 = scalar_select 0, %s9, %s7
  // Predicated region
  $region2: #{rsfnet_maskin_forward.5} parent=0 // pred_check
    _
  $region3: #{rsfnet_maskin_forward.5} parent=0 // pred_check_branch
    %12 = sbr.rel (0) target = $region5
  $region4: #{rsfnet_maskin_forward.5} parent=0 // pred_region
    _
  $region5: #{rsfnet_maskin_forward.5} parent=0 // pred_fallthru
    _
  // Predicated region
  $region6: #{rsfnet_maskin_forward.5} parent=0 // pred_check
    _
  $region7: #{rsfnet_maskin_forward.5} parent=0 // pred_check_branch
    %14 = sbr.rel (0) target = $region9
  $region8: #{rsfnet_maskin_forward.5} parent=0 // pred_region
    _
  $region9: #{rsfnet_maskin_forward.5} parent=0 // pred_fallthru
    _
  // Predicated region
  $region10: #{rsfnet_maskin_forward.5} parent=0 // pred_check
    _
  $region11: #{rsfnet_maskin_forward.5} parent=0 // pred_check_branch
    %16 = sbr.rel (0) target = $region13
  $region12: #{rsfnet_maskin_forward.5} parent=0 // pred_region
    _
  $region13: #{rsfnet_maskin_forward.5} parent=0 // pred_fallthru
    _
  // Predicated region
  $region14: #{rsfnet_maskin_forward.5} parent=0 // pred_check
    _
  $region15: #{rsfnet_maskin_forward.5} parent=0 // pred_check_branch
    %18 = sbr.rel (0) target = $region17
  $region16: #{rsfnet_maskin_forward.5} parent=0 // pred_region
    _
  $region17: #{rsfnet_maskin_forward.5} parent=0 // pred_fallthru
    _
  %v19 = vld [vmem:[%s2] sm:$0x77]
  %v20 = vld [vmem:[%s2 + $0x8] sm:$0x77]
  %v21 = vld [vmem:[%s0] sm:$0xff]
  %v22 = vld [vmem:[%s0 + $0x8] sm:$0xf]
  %v23 = vld [vmem:[%s0 + $0x10] sm:$0xff]
  %v24 = vld [vmem:[%s0 + $0x18] sm:$0xf]
  %v25 = vld [vmem:[%s1] sm:$0xff]
  %v26 = vld [vmem:[%s1 + $0x8] sm:$0xf]
  %v27 = vld [vmem:[%s1 + $0x10] sm:$0xff]
  %v28 = vld [vmem:[%s1 + $0x18] sm:$0xf]
  %v29 = vld [vmem:[%s3] sm:$0xff]
  %v30 = vld [vmem:[%s3 + $0x8] sm:$0xff]
  %32 = vset.pattern.permute.xlu0 0
  %33 = vperm.xlu0 %32, %v21
  %v34 = vpop.permute.xlu0 %33
  %37 = vset.pattern.permute.xlu0 0
  %38 = vperm.xlu0 %37, %v23
  %v39 = vpop.permute.xlu0 %38
  %v43 = vlaneseq
  %v44 = vshrl.u32 %v43, 7
  %v45 = vsub.s32 0, %v44
  %v46 = vrot.slane %v19, %v45
  %v47 = vlaneseq
  %v48 = vshrl.u32 %v47, 7
  %v49 = vsub.s32 4, %v48
  %v50 = vrot.slane %v19, %v49
  %v51 = vlaneseq
  %v52 = vshrl.u32 %v51, 7
  %v53 = vsub.s32 0, %v52
  %v54 = vrot.slane %v20, %v53
  %v55 = vlaneseq
  %v56 = vshrl.u32 %v55, 7
  %v57 = vsub.s32 4, %v56
  %v58 = vrot.slane %v20, %v57
  %v63 = vlaneseq
  %v64 = vshrl.u32 %v63, 7
  %v65 = vsub.s32 0, %v64
  %v66 = vrot.slane %v46, %v65
  %v67 = vlaneseq
  %v68 = vshrl.u32 %v67, 7
  %v69 = vsub.s32 0, %v68
  %v70 = vrot.slane %v50, %v69
  %v71 = vlaneseq
  %v72 = vshrl.u32 %v71, 7
  %v73 = vsub.s32 0, %v72
  %v74 = vrot.slane %v54, %v73
  %v75 = vlaneseq
  %v76 = vshrl.u32 %v75, 7
  %v77 = vsub.s32 0, %v76
  %v78 = vrot.slane %v58, %v77
  %v79 = vmul.f32 %v34, %v66
  %v80 = vmul.f32 %v34, %v70
  %v81 = vmul.f32 %v39, %v74
  %v82 = vmul.f32 %v39, %v78
  %83 = vset.pattern.permute.xlu0 1
  %84 = vperm.xlu0 %83, %v21
  %v85 = vpop.permute.xlu0 %84
  %87 = vset.pattern.permute.xlu0 1
  %88 = vperm.xlu0 %87, %v23
  %v89 = vpop.permute.xlu0 %88
  %v91 = vlaneseq
  %v92 = vshrl.u32 %v91, 7
  %v93 = vsub.s32 1, %v92
  %v94 = vrot.slane %v19, %v93
  %v95 = vlaneseq
  %v96 = vshrl.u32 %v95, 7
  %v97 = vsub.s32 5, %v96
  %v98 = vrot.slane %v19, %v97
  %v99 = vlaneseq
  %v100 = vshrl.u32 %v99, 7
  %v101 = vsub.s32 1, %v100
  %v102 = vrot.slane %v20, %v101
  %v103 = vlaneseq
  %v104 = vshrl.u32 %v103, 7
  %v105 = vsub.s32 5, %v104
  %v106 = vrot.slane %v20, %v105
  %v111 = vlaneseq
  %v112 = vshrl.u32 %v111, 7
  %v113 = vsub.s32 1, %v112
  %v114 = vrot.slane %v94, %v113
  %v115 = vlaneseq
  %v116 = vshrl.u32 %v115, 7
  %v117 = vsub.s32 1, %v116
  %v118 = vrot.slane %v98, %v117
  %v119 = vlaneseq
  %v120 = vshrl.u32 %v119, 7
  %v121 = vsub.s32 1, %v120
  %v122 = vrot.slane %v102, %v121
  %v123 = vlaneseq
  %v124 = vshrl.u32 %v123, 7
  %v125 = vsub.s32 1, %v124
  %v126 = vrot.slane %v106, %v125
  %v127 = vmul.f32 %v85, %v114
  %v128 = vmul.f32 %v85, %v118
  %v129 = vmul.f32 %v89, %v122
  %v130 = vmul.f32 %v89, %v126
  %v131 = vadd.f32 %v79, %v127
  %v132 = vadd.f32 %v80, %v128
  %v133 = vadd.f32 %v81, %v129
  %v134 = vadd.f32 %v82, %v130
  %135 = vset.pattern.permute.xlu0 2
  %136 = vperm.xlu0 %135, %v21
  %v137 = vpop.permute.xlu0 %136
  %139 = vset.pattern.permute.xlu0 2
  %140 = vperm.xlu0 %139, %v23
  %v141 = vpop.permute.xlu0 %140
  %v143 = vlaneseq
  %v144 = vshrl.u32 %v143, 7
  %v145 = vsub.s32 2, %v144
  %v146 = vrot.slane %v19, %v145
  %v147 = vlaneseq
  %v148 = vshrl.u32 %v147, 7
  %v149 = vsub.s32 6, %v148
  %v150 = vrot.slane %v19, %v149
  %v151 = vlaneseq
  %v152 = vshrl.u32 %v151, 7
  %v153 = vsub.s32 2, %v152
  %v154 = vrot.slane %v20, %v153
  %v155 = vlaneseq
  %v156 = vshrl.u32 %v155, 7
  %v157 = vsub.s32 6, %v156
  %v158 = vrot.slane %v20, %v157
  %v163 = vlaneseq
  %v164 = vshrl.u32 %v163, 7
  %v165 = vsub.s32 2, %v164
  %v166 = vrot.slane %v146, %v165
  %v167 = vlaneseq
  %v168 = vshrl.u32 %v167, 7
  %v169 = vsub.s32 2, %v168
  %v170 = vrot.slane %v150, %v169
  %v171 = vlaneseq
  %v172 = vshrl.u32 %v171, 7
  %v173 = vsub.s32 2, %v172
  %v174 = vrot.slane %v154, %v173
  %v175 = vlaneseq
  %v176 = vshrl.u32 %v175, 7
  %v177 = vsub.s32 2, %v176
  %v178 = vrot.slane %v158, %v177
  %v179 = vmul.f32 %v137, %v166
  %v180 = vmul.f32 %v137, %v170
  %v181 = vmul.f32 %v141, %v174
  %v182 = vmul.f32 %v141, %v178
  %v183 = vadd.f32 %v131, %v179
  %v184 = vadd.f32 %v132, %v180
  %v185 = vadd.f32 %v133, %v181
  %v186 = vadd.f32 %v134, %v182
  %188 = vset.pattern.permute.xlu0 0
  %189 = vperm.xlu0 %188, %v25
  %v190 = vpop.permute.xlu0 %189
  %193 = vset.pattern.permute.xlu0 0
  %194 = vperm.xlu0 %193, %v27
  %v195 = vpop.permute.xlu0 %194
  %v197 = vadd.f32 %v183, %v190
  %v198 = vadd.f32 %v184, %v190
  %v199 = vadd.f32 %v185, %v195
  %v200 = vadd.f32 %v186, %v195
  %v201 = vcombine.high %v19, %v19
  %v202 = vcombine.high %v20, %v20
  %v205 = vsub.f32 %v197, %v19
  %v206 = vsub.f32 %v198, %v201
  %v207 = vsub.f32 %v199, %v20
  %v208 = vsub.f32 %v200, %v202
  %v211 = vlaneseq
  %v212 = vshrl.u32 %v211, 7
  %v213 = vsub.s32 0, %v212
  %v214 = vrot.slane %v29, %v213
  %v215 = vlaneseq
  %v216 = vshrl.u32 %v215, 7
  %v217 = vsub.s32 4, %v216
  %v218 = vrot.slane %v29, %v217
  %v219 = vlaneseq
  %v220 = vshrl.u32 %v219, 7
  %v221 = vsub.s32 0, %v220
  %v222 = vrot.slane %v30, %v221
  %v223 = vlaneseq
  %v224 = vshrl.u32 %v223, 7
  %v225 = vsub.s32 4, %v224
  %v226 = vrot.slane %v30, %v225
  %v231 = vlaneseq
  %v232 = vshrl.u32 %v231, 7
  %v233 = vsub.s32 0, %v232
  %v234 = vrot.slane %v214, %v233
  %v235 = vlaneseq
  %v236 = vshrl.u32 %v235, 7
  %v237 = vsub.s32 0, %v236
  %v238 = vrot.slane %v218, %v237
  %v239 = vlaneseq
  %v240 = vshrl.u32 %v239, 7
  %v241 = vsub.s32 0, %v240
  %v242 = vrot.slane %v222, %v241
  %v243 = vlaneseq
  %v244 = vshrl.u32 %v243, 7
  %v245 = vsub.s32 0, %v244
  %v246 = vrot.slane %v226, %v245
  %v247 = vmul.f32 %v234, %v205
  %v248 = vmul.f32 %v238, %v206
  %v249 = vmul.f32 %v242, %v207
  %v250 = vmul.f32 %v246, %v208
  %v255 = vcombine.low %v247, %v248
  %v256 = vcombine.low %v249, %v250
  %v259 = vadd.f32 %v19, %v255
  %v260 = vadd.f32 %v20, %v256
  %v263 = vcombine.high %v259, %v259
  %v264 = vcombine.high %v260, %v260
  %v267 = vpack.c.bf16 %v259, %v259
  %v268 = vpack.c.bf16 %v263, %v263
  %v269 = vpack.c.bf16 %v260, %v260
  %v270 = vpack.c.bf16 %v264, %v264
  %v275 = vunpack.c.l.b16 %v267
  %v276 = vunpack.c.l.b16 %v268
  %v277 = vunpack.c.l.b16 %v269
  %v278 = vunpack.c.l.b16 %v270
  %v279 = vpack.c.b16 %v276, %v275
  %v280 = vpack.c.b16 %v278, %v277
  %vm283 = vcmask 1041408
  %vm284 = vsmask.f32 1280
  %vm285 = vmand %vm283, %vm284
  %vm286 = vcmask 1045508
  %vm287 = vsmask.f32 5376
  %vm288 = vmand %vm286, %vm287
  %vm289 = vmor %vm288, %vm285
  %v290 = vld [vmem:[%s5] sm:$0x33]
  %v291 = vsel %vm289, %v279, %v290
  %292 = vst [vmem:[%s5] sm:$0x33] %v291
  %v293 = vld [vmem:[%s5 + $0x10] sm:$0x33]
  %v294 = vsel %vm289, %v280, %v293
  %295 = vst [vmem:[%s5 + $0x10] sm:$0x33] %v294
  %v296 = vrot.slane %v19, 5
  %v297 = vrot.slane %v201, 5
  %v298 = vrot.slane %v20, 5
  %v299 = vrot.slane %v202, 5
  %v304 = vsub.f32 %v197, %v296
  %v305 = vsub.f32 %v198, %v297
  %v306 = vsub.f32 %v199, %v298
  %v307 = vsub.f32 %v200, %v299
  %v308 = vlaneseq
  %v309 = vshrl.u32 %v308, 7
  %v310 = vsub.s32 1, %v309
  %v311 = vrot.slane %v29, %v310
  %v312 = vlaneseq
  %v313 = vshrl.u32 %v312, 7
  %v314 = vsub.s32 5, %v313
  %v315 = vrot.slane %v29, %v314
  %v316 = vlaneseq
  %v317 = vshrl.u32 %v316, 7
  %v318 = vsub.s32 1, %v317
  %v319 = vrot.slane %v30, %v318
  %v320 = vlaneseq
  %v321 = vshrl.u32 %v320, 7
  %v322 = vsub.s32 5, %v321
  %v323 = vrot.slane %v30, %v322
  %v328 = vlaneseq
  %v329 = vshrl.u32 %v328, 7
  %v330 = vsub.s32 1, %v329
  %v331 = vrot.slane %v311, %v330
  %v332 = vlaneseq
  %v333 = vshrl.u32 %v332, 7
  %v334 = vsub.s32 1, %v333
  %v335 = vrot.slane %v315, %v334
  %v336 = vlaneseq
  %v337 = vshrl.u32 %v336, 7
  %v338 = vsub.s32 1, %v337
  %v339 = vrot.slane %v319, %v338
  %v340 = vlaneseq
  %v341 = vshrl.u32 %v340, 7
  %v342 = vsub.s32 1, %v341
  %v343 = vrot.slane %v323, %v342
  %v344 = vmul.f32 %v331, %v304
  %v345 = vmul.f32 %v335, %v305
  %v346 = vmul.f32 %v339, %v306
  %v347 = vmul.f32 %v343, %v307
  %v352 = vcombine.low %v344, %v345
  %v353 = vcombine.high %v344, %v345
  %v354 = vcombine.low %v346, %v347
  %v355 = vcombine.high %v346, %v347
  %vm356 = vcmask 1040384
  %vm357 = vcmask 1044484
  %vm358 = vmor %vm356, %vm357
  %v359 = vrot.slane %v352, 7
  %v360 = vrot.slane %v359, 4
  %v361 = vrot.slane %v353, 7
  %v362 = vsel %vm358, %v360, %v361
  %v363 = vrot.slane %v354, 7
  %v364 = vrot.slane %v363, 4
  %v365 = vrot.slane %v355, 7
  %v366 = vsel %vm358, %v364, %v365
  %v369 = vadd.f32 %v19, %v362
  %v370 = vadd.f32 %v20, %v366
  %v373 = vcombine.high %v369, %v369
  %v374 = vcombine.high %v370, %v370
  %v377 = vpack.c.bf16 %v369, %v369
  %v378 = vpack.c.bf16 %v373, %v373
  %v379 = vpack.c.bf16 %v370, %v370
  %v380 = vpack.c.bf16 %v374, %v374
  %v385 = vunpack.c.l.b16 %v377
  %v386 = vunpack.c.l.b16 %v378
  %v387 = vunpack.c.l.b16 %v379
  %v388 = vunpack.c.l.b16 %v380
  %v389 = vpack.c.b16 %v386, %v385
  %v390 = vpack.c.b16 %v388, %v387
  %v392 = vshrl.u32 %v389, 16
  %v394 = vrot.slane %v392, 6
  %v395 = vshll.u32 %v389, 16
  %v397 = vrot.slane %v395, 7
  %v398 = vor.u32 %v394, %v397
  %v400 = vshrl.u32 %v390, 16
  %v402 = vrot.slane %v400, 6
  %v403 = vshll.u32 %v390, 16
  %v405 = vrot.slane %v403, 7
  %v406 = vor.u32 %v402, %v405
  %vm409 = vcmask 1042433
  %vm410 = vsmask.f32 7942
  %vm411 = vmand %vm409, %vm410
  %vm412 = vcmask 1046533
  %vm413 = vsmask.f32 7958
  %vm414 = vmand %vm412, %vm413
  %vm415 = vmor %vm414, %vm411
  %v416 = vld [vmem:[%s5] sm:$0x66]
  %v417 = vsel %vm415, %v398, %v416
  %418 = vst [vmem:[%s5] sm:$0x66] %v417
  %v419 = vld [vmem:[%s5 + $0x10] sm:$0x66]
  %v420 = vsel %vm415, %v406, %v419
  %421 = vst [vmem:[%s5 + $0x10] sm:$0x66] %v420
  %v422 = vadd.f32 %v259, %v362
  %v423 = vadd.f32 %v260, %v366
  %425 = vset.pattern.permute.xlu0 0
  %426 = vperm.xlu0 %425, %v22
  %v427 = vpop.permute.xlu0 %426
  %430 = vset.pattern.permute.xlu0 0
  %431 = vperm.xlu0 %430, %v24
  %v432 = vpop.permute.xlu0 %431
  %v434 = vmul.f32 %v427, %v66
  %v435 = vmul.f32 %v427, %v70
  %v436 = vmul.f32 %v432, %v74
  %v437 = vmul.f32 %v432, %v78
  %438 = vset.pattern.permute.xlu0 1
  %439 = vperm.xlu0 %438, %v22
  %v440 = vpop.permute.xlu0 %439
  %442 = vset.pattern.permute.xlu0 1
  %443 = vperm.xlu0 %442, %v24
  %v444 = vpop.permute.xlu0 %443
  %v446 = vmul.f32 %v440, %v114
  %v447 = vmul.f32 %v440, %v118
  %v448 = vmul.f32 %v444, %v122
  %v449 = vmul.f32 %v444, %v126
  %v450 = vadd.f32 %v434, %v446
  %v451 = vadd.f32 %v435, %v447
  %v452 = vadd.f32 %v436, %v448
  %v453 = vadd.f32 %v437, %v449
  %454 = vset.pattern.permute.xlu0 2
  %455 = vperm.xlu0 %454, %v22
  %v456 = vpop.permute.xlu0 %455
  %458 = vset.pattern.permute.xlu0 2
  %459 = vperm.xlu0 %458, %v24
  %v460 = vpop.permute.xlu0 %459
  %v462 = vmul.f32 %v456, %v166
  %v463 = vmul.f32 %v456, %v170
  %v464 = vmul.f32 %v460, %v174
  %v465 = vmul.f32 %v460, %v178
  %v466 = vadd.f32 %v450, %v462
  %v467 = vadd.f32 %v451, %v463
  %v468 = vadd.f32 %v452, %v464
  %v469 = vadd.f32 %v453, %v465
  %471 = vset.pattern.permute.xlu0 0
  %472 = vperm.xlu0 %471, %v26
  %v473 = vpop.permute.xlu0 %472
  %476 = vset.pattern.permute.xlu0 0
  %477 = vperm.xlu0 %476, %v28
  %v478 = vpop.permute.xlu0 %477
  %v480 = vadd.f32 %v466, %v473
  %v481 = vadd.f32 %v467, %v473
  %v482 = vadd.f32 %v468, %v478
  %v483 = vadd.f32 %v469, %v478
  %v484 = vrot.slane %v19, 2
  %v485 = vrot.slane %v201, 2
  %v486 = vrot.slane %v20, 2
  %v487 = vrot.slane %v202, 2
  %v492 = vsub.f32 %v197, %v484
  %v493 = vsub.f32 %v198, %v485
  %v494 = vsub.f32 %v480, %v484
  %v495 = vsub.f32 %v481, %v485
  %v496 = vsub.f32 %v199, %v486
  %v497 = vsub.f32 %v200, %v487
  %v498 = vsub.f32 %v482, %v486
  %v499 = vsub.f32 %v483, %v487
  %v500 = vlaneseq
  %v501 = vshrl.u32 %v500, 7
  %v502 = vsub.s32 2, %v501
  %v503 = vrot.slane %v29, %v502
  %v504 = vlaneseq
  %v505 = vshrl.u32 %v504, 7
  %v506 = vsub.s32 6, %v505
  %v507 = vrot.slane %v29, %v506
  %v508 = vlaneseq
  %v509 = vshrl.u32 %v508, 7
  %v510 = vsub.s32 2, %v509
  %v511 = vrot.slane %v30, %v510
  %v512 = vlaneseq
  %v513 = vshrl.u32 %v512, 7
  %v514 = vsub.s32 6, %v513
  %v515 = vrot.slane %v30, %v514
  %v520 = vlaneseq
  %v521 = vshrl.u32 %v520, 7
  %v522 = vsub.s32 2, %v521
  %v523 = vrot.slane %v503, %v522
  %v524 = vlaneseq
  %v525 = vshrl.u32 %v524, 7
  %v526 = vsub.s32 2, %v525
  %v527 = vrot.slane %v507, %v526
  %v528 = vlaneseq
  %v529 = vshrl.u32 %v528, 7
  %v530 = vsub.s32 2, %v529
  %v531 = vrot.slane %v511, %v530
  %v532 = vlaneseq
  %v533 = vshrl.u32 %v532, 7
  %v534 = vsub.s32 2, %v533
  %v535 = vrot.slane %v515, %v534
  %v536 = vmul.f32 %v523, %v492
  %v537 = vmul.f32 %v527, %v493
  %v538 = vmul.f32 %v523, %v494
  %v539 = vmul.f32 %v527, %v495
  %v540 = vmul.f32 %v531, %v496
  %v541 = vmul.f32 %v535, %v497
  %v542 = vmul.f32 %v531, %v498
  %v543 = vmul.f32 %v535, %v499
  %v552 = vcombine.high %v536, %v537
  %v553 = vcombine.low %v538, %v539
  %v554 = vcombine.high %v540, %v541
  %v555 = vcombine.low %v542, %v543
  %vm556 = vcmask 1041408
  %vm557 = vcmask 1045508
  %vm558 = vmor %vm556, %vm557
  %v559 = vrot.slane %v552, 6
  %v560 = vrot.slane %v559, 4
  %v561 = vrot.slane %v553, 6
  %v562 = vsel %vm558, %v560, %v561
  %v563 = vrot.slane %v554, 6
  %v564 = vrot.slane %v563, 4
  %v565 = vrot.slane %v555, 6
  %v566 = vsel %vm558, %v564, %v565
  %v569 = vadd.f32 %v19, %v562
  %v570 = vadd.f32 %v20, %v566
  %v573 = vcombine.high %v569, %v569
  %v574 = vcombine.high %v570, %v570
  %v577 = vpack.c.bf16 %v569, %v569
  %v578 = vpack.c.bf16 %v573, %v573
  %v579 = vpack.c.bf16 %v570, %v570
  %v580 = vpack.c.bf16 %v574, %v574
  %v585 = vunpack.c.l.b16 %v577
  %v586 = vunpack.c.l.b16 %v578
  %v587 = vunpack.c.l.b16 %v579
  %v588 = vunpack.c.l.b16 %v580
  %v589 = vpack.c.b16 %v586, %v585
  %v590 = vpack.c.b16 %v588, %v587
  %v591 = vrot.slane %v589, 5
  %v592 = vrot.slane %v591, 4
  %v593 = vrot.slane %v590, 5
  %v594 = vrot.slane %v593, 4
  %599 = vst [vmem:[%s5] sm:$0x88] %v591
  %vm600 = vcmask 1040384
  %vm601 = vsmask.f32 256
  %vm602 = vmand %vm600, %vm601
  %vm603 = vcmask 1044484
  %vm604 = vsmask.f32 4352
  %vm605 = vmand %vm603, %vm604
  %vm606 = vmor %vm605, %vm602
  %v607 = vld [vmem:[%s5 + $0x8] sm:$0x11]
  %v608 = vsel %vm606, %v592, %v607
  %609 = vst [vmem:[%s5 + $0x8] sm:$0x11] %v608
  %610 = vst [vmem:[%s5 + $0x10] sm:$0x88] %v593
  %v611 = vld [vmem:[%s5 + $0x18] sm:$0x11]
  %v612 = vsel %vm606, %v594, %v611
  %613 = vst [vmem:[%s5 + $0x18] sm:$0x11] %v612
  %v614 = vadd.f32 %v422, %v562
  %v615 = vadd.f32 %v423, %v566
  %v616 = vrot.slane %v19, 7
  %v617 = vrot.slane %v201, 7
  %v618 = vrot.slane %v20, 7
  %v619 = vrot.slane %v202, 7
  %v624 = vsub.f32 %v480, %v616
  %v625 = vsub.f32 %v481, %v617
  %v626 = vsub.f32 %v482, %v618
  %v627 = vsub.f32 %v483, %v619
  %v628 = vlaneseq
  %v629 = vshrl.u32 %v628, 7
  %v630 = vsub.s32 3, %v629
  %v631 = vrot.slane %v29, %v630
  %v632 = vlaneseq
  %v633 = vshrl.u32 %v632, 7
  %v634 = vsub.s32 7, %v633
  %v635 = vrot.slane %v29, %v634
  %v636 = vlaneseq
  %v637 = vshrl.u32 %v636, 7
  %v638 = vsub.s32 3, %v637
  %v639 = vrot.slane %v30, %v638
  %v640 = vlaneseq
  %v641 = vshrl.u32 %v640, 7
  %v642 = vsub.s32 7, %v641
  %v643 = vrot.slane %v30, %v642
  %v648 = vlaneseq
  %v649 = vshrl.u32 %v648, 7
  %v650 = vsub.s32 3, %v649
  %v651 = vrot.slane %v631, %v650
  %v652 = vlaneseq
  %v653 = vshrl.u32 %v652, 7
  %v654 = vsub.s32 3, %v653
  %v655 = vrot.slane %v635, %v654
  %v656 = vlaneseq
  %v657 = vshrl.u32 %v656, 7
  %v658 = vsub.s32 3, %v657
  %v659 = vrot.slane %v639, %v658
  %v660 = vlaneseq
  %v661 = vshrl.u32 %v660, 7
  %v662 = vsub.s32 3, %v661
  %v663 = vrot.slane %v643, %v662
  %v664 = vmul.f32 %v651, %v624
  %v665 = vmul.f32 %v655, %v625
  %v666 = vmul.f32 %v659, %v626
  %v667 = vmul.f32 %v663, %v627
  %v672 = vcombine.low %v664, %v665
  %v673 = vcombine.low %v666, %v667
  %v674 = vrot.slane %v672, 5
  %v675 = vrot.slane %v674, 4
  %v676 = vrot.slane %v673, 5
  %v677 = vrot.slane %v676, 4
  %v680 = vadd.f32 %v19, %v675
  %v681 = vadd.f32 %v20, %v677
  %v684 = vcombine.high %v680, %v680
  %v685 = vcombine.high %v681, %v681
  %v688 = vpack.c.bf16 %v680, %v680
  %v689 = vpack.c.bf16 %v684, %v684
  %v690 = vpack.c.bf16 %v681, %v681
  %v691 = vpack.c.bf16 %v685, %v685
  %v696 = vunpack.c.l.b16 %v688
  %v697 = vunpack.c.l.b16 %v689
  %v698 = vunpack.c.l.b16 %v690
  %v699 = vunpack.c.l.b16 %v691
  %v700 = vpack.c.b16 %v697, %v696
  %v701 = vpack.c.b16 %v699, %v698
  %v703 = vshrl.u32 %v700, 16
  %v705 = vrot.slane %v703, 7
  %v706 = vshll.u32 %v700, 16
  %v708 = vor.u32 %v705, %v706
  %v710 = vshrl.u32 %v701, 16
  %v712 = vrot.slane %v710, 7
  %v713 = vshll.u32 %v701, 16
  %v715 = vor.u32 %v712, %v713
  %vm718 = vsmask.f32 7938
  %vm719 = vmand %vm283, %vm718
  %vm720 = vsmask.f32 7954
  %vm721 = vmand %vm286, %vm720
  %vm722 = vmor %vm721, %vm719
  %v723 = vld [vmem:[%s5 + $0x8] sm:$0x33]
  %v724 = vsel %vm722, %v708, %v723
  %725 = vst [vmem:[%s5 + $0x8] sm:$0x33] %v724
  %v726 = vld [vmem:[%s5 + $0x18] sm:$0x33]
  %v727 = vsel %vm722, %v715, %v726
  %728 = vst [vmem:[%s5 + $0x18] sm:$0x33] %v727
  %v729 = vadd.f32 %v614, %v675
  %v730 = vadd.f32 %v615, %v677
  %731 = vst [vmem:[%s4] sm:$0x77] %v729
  %732 = vst [vmem:[%s4 + $0x8] sm:$0x77] %v730
  // Predicated region
  $region18: #{rsfnet_maskin_forward.5} parent=0 // pred_check
    _
  $region19: #{rsfnet_maskin_forward.5} parent=0 // pred_check_branch
    %734 = sbr.rel (0) target = $region21
  $region20: #{rsfnet_maskin_forward.5} parent=0 // pred_region
    _
  $region21: #{rsfnet_maskin_forward.5} parent=0 // pred_fallthru
    _
  // Predicated region
  $region22: #{rsfnet_maskin_forward.5} parent=0 // pred_check
    _
  $region23: #{rsfnet_maskin_forward.5} parent=0 // pred_check_branch
    %736 = sbr.rel (0) target = $region25
  $region24: #{rsfnet_maskin_forward.5} parent=0 // pred_region
    _
  $region25: #{rsfnet_maskin_forward.5} parent=0 // pred_fallthru
    _
  // Predicated region
  $region26: #{rsfnet_maskin_forward.5} parent=0 // pred_check
    _
  $region27: #{rsfnet_maskin_forward.5} parent=0 // pred_check_branch
    %738 = sbr.rel (0) target = $region29
  $region28: #{rsfnet_maskin_forward.5} parent=0 // pred_region
    _
  $region29: #{rsfnet_maskin_forward.5} parent=0 // pred_fallthru
    _
  // Predicated region
  $region30: #{rsfnet_maskin_forward.5} parent=0 // pred_check
    _
  $region31: #{rsfnet_maskin_forward.5} parent=0 // pred_check_branch
    %740 = sbr.rel (0) target = $region33
  $region32: #{rsfnet_maskin_forward.5} parent=0 // pred_region
    _
  $region33: #{rsfnet_maskin_forward.5} parent=0 // pred_fallthru
    _

// kernel: rsfnet_maskin_forward.4
$region0: #{rsfnet_maskin_forward.4}
  #allocation0 [shape = 'u32[]', space=smem, size = 0x4, offset = 0x4, fixed_abs, tag = 'smem constant byte address 0x4 - core index']
  #allocation1 [shape = 'u32[144,128]{1,0:T(1,128)}', space=vmem, size = 0x12000, scoped, tag = 'internal scratch']
  %s0 = inlined_call_operand.vmem [shape: bf16[2,144,8100], index: 0, kind: input, shape index: {}]
  %s1 = inlined_call_operand.vmem [shape: bf16[32,144], index: 1, kind: input, shape index: {}]
  %s2 = inlined_call_operand.vmem [shape: f32[32,1], index: 2, kind: input, shape index: {}]
  %s3 = inlined_call_operand.vmem [shape: f32[2,32,8100], index: 3, kind: output, shape index: {}]
  %s4 = sld [smem:[#allocation0]]
  $region45: #{rsfnet_maskin_forward.4} parent=0
    _
  %s6 = ssub.s32 1, %s4
  %s7 = scalar_select 0, %s6, %s4
  loop: start=0, step=1, limit=4
  $region2: #{rsfnet_maskin_forward.4} parent=0 // loop_pre_header
    _
  $region3: #{rsfnet_maskin_forward.4} parent=0 // loop_header
    %s9 = sphi 0, %s13
    %p10 = scmp.ge.s32.totalorder %s9, 4
    %s16 = sphi 0, %s28
    %s17 = sphi 0, %s24
    %s18 = sphi 0, %s16
    %s19 = sphi 0, %s17
    %s20 = sphi 0, %s18
    %s21 = sphi 0, %s19
    %s33 = sphi 0, %s35
    %s36 = sphi 0, %s33
    %s37 = sphi 0, %s36
    %s53 = sphi 0, %s37
    %s57 = sphi 0, %s57
    %s59 = sphi 0, %s57
    %s60 = sphi 0, %s59
    %s74 = sphi 0, %s60
    %s78 = sphi 0, %s78
    %s80 = sphi 0, %s78
    %s81 = sphi 0, %s80
    %s95 = sphi 0, %s81
    %s103 = sphi 0, %s105
    %s106 = sphi 0, %s103
    %s107 = sphi 0, %s106
    %s123 = sphi 0, %s107
  $region4: #{rsfnet_maskin_forward.4} parent=0 // loop_header_branch
    %12 = sbr.rel (%p10) target = $region8
  $region5: #{rsfnet_maskin_forward.4} parent=0 // loop_body
    %s14 = ssub.s32 %s9, 1
    %s15 = ssub.s32 %s9, 2
    %s22 = sadd.s32 1, %s17
    %p23 = scmp.ge.s32.totalorder %s22, 1
    %s24 = scalar_select %p23, 0, %s22
    %s25 = sadd.s32 1, %s16
    %s26 = scalar_select %p23, %s25, %s16
    %p27 = scmp.ge.s32.totalorder %s26, 2
    %s28 = scalar_select %p27, 0, %s26
    %s29 = ssub.s32 %s16, %s28
    %s30 = ssub.s32 %s17, %s24
    %s31 = sor.u32 %s29, %s30
    %p32 = scmp.eq.s32.totalorder %s31, 0
    %s34 = sadd.s32 %s33, 1
    %s35 = scalar_select %p32, %s33, %s34
    %p38 = pneg %p32
    %p39 = scmp.eq.s32.totalorder %s9, 1
    %p40 = por %p38, %p39
    %p41 = scmp.ne.s32.totalorder %s33, %s36
    %p42 = scmp.eq.s32.totalorder %s9, 0
    %p43 = por %p41, %p42
    %p44 = scmp.ne.s32.totalorder %s33, %s36
    %p45 = scmp.eq.s32.totalorder %s14, 1
    %p46 = por %p44, %p45
    %p47 = scmp.ne.s32.totalorder %s36, %s37
    %p48 = scmp.eq.s32.totalorder %s14, 0
    %p49 = por %p47, %p48
    %p50 = scmp.ne.s32.totalorder %s36, %s37
    %p51 = scmp.eq.s32.totalorder %s15, 1
    %p52 = por %p50, %p51
    %p54 = scmp.ne.s32.totalorder %s37, %s53
    %p55 = scmp.eq.s32.totalorder %s15, 0
    %p56 = por %p54, %p55
    %s58 = sadd.s32 %s57, 1
    %p61 = scmp.eq.s32.totalorder %s9, 1
    %p62 = scmp.ne.s32.totalorder %s57, %s59
    %p63 = scmp.eq.s32.totalorder %s9, 0
    %p64 = por %p62, %p63
    %p65 = scmp.ne.s32.totalorder %s57, %s59
    %p66 = scmp.eq.s32.totalorder %s14, 1
    %p67 = por %p65, %p66
    %p68 = scmp.ne.s32.totalorder %s59, %s60
    %p69 = scmp.eq.s32.totalorder %s14, 0
    %p70 = por %p68, %p69
    %p71 = scmp.ne.s32.totalorder %s59, %s60
    %p72 = scmp.eq.s32.totalorder %s15, 1
    %p73 = por %p71, %p72
    %p75 = scmp.ne.s32.totalorder %s60, %s74
    %p76 = scmp.eq.s32.totalorder %s15, 0
    %p77 = por %p75, %p76
    %s79 = sadd.s32 %s78, 1
    %p82 = scmp.eq.s32.totalorder %s9, 1
    %p83 = scmp.ne.s32.totalorder %s78, %s80
    %p84 = scmp.eq.s32.totalorder %s9, 0
    %p85 = por %p83, %p84
    %p86 = scmp.ne.s32.totalorder %s78, %s80
    %p87 = scmp.eq.s32.totalorder %s14, 1
    %p88 = por %p86, %p87
    %p89 = scmp.ne.s32.totalorder %s80, %s81
    %p90 = scmp.eq.s32.totalorder %s14, 0
    %p91 = por %p89, %p90
    %p92 = scmp.ne.s32.totalorder %s80, %s81
    %p93 = scmp.eq.s32.totalorder %s15, 1
    %p94 = por %p92, %p93
    %p96 = scmp.ne.s32.totalorder %s81, %s95
    %p97 = scmp.eq.s32.totalorder %s15, 0
    %p98 = por %p96, %p97
    %s99 = ssub.s32 %s16, %s28
    %s100 = ssub.s32 %s17, %s24
    %s101 = sor.u32 %s99, %s100
    %p102 = scmp.eq.s32.totalorder %s101, 0
    %s104 = sadd.s32 %s103, 1
    %s105 = scalar_select %p102, %s103, %s104
    %p108 = pneg %p102
    %p109 = scmp.eq.s32.totalorder %s9, 1
    %p110 = por %p108, %p109
    %p111 = scmp.ne.s32.totalorder %s103, %s106
    %p112 = scmp.eq.s32.totalorder %s9, 0
    %p113 = por %p111, %p112
    %p114 = scmp.ne.s32.totalorder %s103, %s106
    %p115 = scmp.eq.s32.totalorder %s14, 1
    %p116 = por %p114, %p115
    %p117 = scmp.ne.s32.totalorder %s106, %s107
    %p118 = scmp.eq.s32.totalorder %s14, 0
    %p119 = por %p117, %p118
    %p120 = scmp.ne.s32.totalorder %s106, %s107
    %p121 = scmp.eq.s32.totalorder %s15, 1
    %p122 = por %p120, %p121
    %p124 = scmp.ne.s32.totalorder %s107, %s123
    %p125 = scmp.eq.s32.totalorder %s15, 0
    %p126 = por %p124, %p125
    %p127 = scmp.le.s32.totalorder 1, %s9
    %p128 = scmp.lt.s32.totalorder %s9, 3
    %p129 = pnand %p127, %p128
    %p130 = pneg %p129
    // Predicated region
    $region9: #{rsfnet_maskin_forward.4} parent=5 // pred_check
      _
    $region10: #{rsfnet_maskin_forward.4} parent=5 // pred_check_branch
      %132 = sbr.rel (%p129) target = $region12
    $region11: #{rsfnet_maskin_forward.4} parent=5 // pred_region
      %s133 = ssub.s32 %s9, 1
      // Predicated region
      $region13: #{rsfnet_maskin_forward.4} parent=11 // pred_check
        %p134 = pneg %p70
      $region14: #{rsfnet_maskin_forward.4} parent=11 // pred_check_branch
        %136 = sbr.rel (%p134) target = $region16
      $region15: #{rsfnet_maskin_forward.4} parent=11 // pred_region
        _
      $region16: #{rsfnet_maskin_forward.4} parent=11 // pred_fallthru
        _
      // Predicated region
      $region17: #{rsfnet_maskin_forward.4} parent=11 // pred_check
        %p137 = pneg %p91
      $region18: #{rsfnet_maskin_forward.4} parent=11 // pred_check_branch
        %139 = sbr.rel (%p137) target = $region20
      $region19: #{rsfnet_maskin_forward.4} parent=11 // pred_region
        _
      $region20: #{rsfnet_maskin_forward.4} parent=11 // pred_fallthru
        _
    $region12: #{rsfnet_maskin_forward.4} parent=5 // pred_fallthru
      _
    %p140 = scmp.lt.s32.totalorder %s9, 2
    // Predicated region
    $region21: #{rsfnet_maskin_forward.4} parent=5 // pred_check
      %p141 = pneg %p140
    $region22: #{rsfnet_maskin_forward.4} parent=5 // pred_check_branch
      %143 = sbr.rel (%p141) target = $region24
    $region23: #{rsfnet_maskin_forward.4} parent=5 // pred_region
      // Predicated region
      $region25: #{rsfnet_maskin_forward.4} parent=23 // pred_check
        %p144 = pneg %p43
      $region26: #{rsfnet_maskin_forward.4} parent=23 // pred_check_branch
        %146 = sbr.rel (%p144) target = $region28
      $region27: #{rsfnet_maskin_forward.4} parent=23 // pred_region
        %s147 = smul.u32 64, %s17
        %p148 = scmp.lt.s32.totalorder %s16, 1
        %s149 = scalar_select %p148, %s16, 1
        %p150 = scmp.lt.s32.totalorder %s147, 63
        %s151 = scalar_select %p150, %s147, 63
        %s152 = smul.addr %s149, 1152
        %s153 = sadd.s32 %s151, %s152
        %s154 = smul.addr %s153, 4
        %s155 = scalar_lea.vmem %s0, %s154
        %s156 = smul.u32 64, %s17
      $region28: #{rsfnet_maskin_forward.4} parent=23 // pred_fallthru
        _
    $region24: #{rsfnet_maskin_forward.4} parent=5 // pred_fallthru
      _
    %p157 = scmp.le.s32.totalorder 1, %s9
    %p158 = scmp.lt.s32.totalorder %s9, 3
    %p159 = pnand %p157, %p158
    %p160 = pneg %p159
    // Predicated region
    $region29: #{rsfnet_maskin_forward.4} parent=5 // pred_check
      _
    $region30: #{rsfnet_maskin_forward.4} parent=5 // pred_check_branch
      %162 = sbr.rel (%p159) target = $region32
    $region31: #{rsfnet_maskin_forward.4} parent=5 // pred_region
      %s163 = ssub.s32 %s9, 1
      %s164 = smul.u32 64, %s19
      %p165 = scmp.lt.s32.totalorder %s18, 1
      %s166 = scalar_select %p165, %s18, 1
      %p167 = scmp.lt.s32.totalorder %s164, 63
      %s168 = scalar_select %p167, %s164, 63
      %s169 = smul.addr %s166, 1152
      %s170 = sadd.s32 %s168, %s169
      %s171 = smul.addr %s170, 4
      %s172 = scalar_lea.vmem %s0, %s171
      %p173 = pneg %p49
      %p174 = pneg %p46
      %p175 = pneg %p70
      %p176 = pneg %p67
      %p177 = pneg %p91
      %p178 = pneg %p88
      %p179 = pneg %p119
      %p180 = pneg %p116
      %s181 = smul.u32 64, %s19
      %p182 = scmp.lt.s32.totalorder %s18, 1
      %s183 = scalar_select %p182, %s18, 1
      %p184 = scmp.lt.s32.totalorder %s181, 63
      %s185 = scalar_select %p184, %s181, 63
      %s186 = smul.addr %s183, 256
      %s187 = sadd.s32 %s185, %s186
      %s188 = smul.addr %s187, 8
      %s189 = scalar_lea.vmem %s3, %s188
      %s190 = smul.u32 64, %s19
      %p191 = scmp.lt.s32.totalorder %s18, 1
      %s192 = scalar_select %p191, %s18, 1
      %p193 = scmp.lt.s32.totalorder %s190, 63
      %s194 = scalar_select %p193, %s190, 63
      %s195 = smul.addr %s192, 1152
      %s196 = sadd.s32 %s194, %s195
      %s197 = smul.addr %s196, 4
      %s198 = scalar_lea.vmem %s0, %s197
      %s199 = smul.u32 64, %s19
      %s200 = smul.u32 64, %s19
      %p201 = scmp.lt.s32.totalorder %s18, 1
      %s202 = scalar_select %p201, %s18, 1
      %p203 = scmp.lt.s32.totalorder %s200, 63
      %s204 = scalar_select %p203, %s200, 63
      %s205 = smul.addr %s202, 256
      %s206 = sadd.s32 %s204, %s205
      %s207 = smul.addr %s206, 8
      %s208 = scalar_lea.vmem %s3, %s207
      %s209 = smul.u32 64, %s19
      %v211 = vld [vmem:[%s1] sm:$0xff]
      %v212 = vld [vmem:[%s1 + $0x8] sm:$0xff]
      %v213 = vld [vmem:[%s1 + $0x10] sm:$0xff]
      %v214 = vld [vmem:[%s1 + $0x18] sm:$0xff]
      %v215 = vld [vmem:[%s198] sm:$0xff]
      %v216 = vld [vmem:[%s198 + $0x8] sm:$0xff]
      %v217 = vld [vmem:[%s198 + $0x10] sm:$0xff]
      %v218 = vld [vmem:[%s198 + $0x18] sm:$0xff]
      %v219 = vld [vmem:[%s198 + $0x20] sm:$0xff]
      %v220 = vld [vmem:[%s198 + $0x28] sm:$0xff]
      %v221 = vld [vmem:[%s198 + $0x30] sm:$0xff]
      %v222 = vld [vmem:[%s198 + $0x38] sm:$0xff]
      %v223 = vld [vmem:[%s198 + $0x40] sm:$0xff]
      %v224 = vld [vmem:[%s198 + $0x48] sm:$0xff]
      %v225 = vld [vmem:[%s198 + $0x50] sm:$0xff]
      %v226 = vld [vmem:[%s198 + $0x58] sm:$0xff]
      %v227 = vld [vmem:[%s198 + $0x60] sm:$0xff]
      %v228 = vld [vmem:[%s198 + $0x68] sm:$0xff]
      %v229 = vld [vmem:[%s198 + $0x70] sm:$0xff]
      %v230 = vld [vmem:[%s198 + $0x78] sm:$0xff]
      %v231 = vld [vmem:[%s198 + $0x80] sm:$0xff]
      %v232 = vld [vmem:[%s198 + $0x88] sm:$0xff]
      %v233 = vld [vmem:[%s198 + $0x90] sm:$0xff]
      %v234 = vld [vmem:[%s198 + $0x98] sm:$0xff]
      %v235 = vld [vmem:[%s198 + $0xa0] sm:$0xff]
      %v236 = vld [vmem:[%s198 + $0xa8] sm:$0xff]
      %v237 = vld [vmem:[%s198 + $0xb0] sm:$0xff]
      %v238 = vld [vmem:[%s198 + $0xb8] sm:$0xff]
      %v239 = vld [vmem:[%s198 + $0xc0] sm:$0xff]
      %v240 = vld [vmem:[%s198 + $0xc8] sm:$0xff]
      %v241 = vld [vmem:[%s198 + $0xd0] sm:$0xff]
      %v242 = vld [vmem:[%s198 + $0xd8] sm:$0xff]
      %v243 = vld [vmem:[%s198 + $0xe0] sm:$0xff]
      %v244 = vld [vmem:[%s198 + $0xe8] sm:$0xff]
      %v245 = vld [vmem:[%s198 + $0xf0] sm:$0xff]
      %v246 = vld [vmem:[%s198 + $0xf8] sm:$0xff]
      %v247 = vld [vmem:[%s198 + $0x100] sm:$0xff]
      %v248 = vld [vmem:[%s198 + $0x108] sm:$0xff]
      %v249 = vld [vmem:[%s198 + $0x110] sm:$0xff]
      %v250 = vld [vmem:[%s198 + $0x118] sm:$0xff]
      %v251 = vld [vmem:[%s198 + $0x120] sm:$0xff]
      %v252 = vld [vmem:[%s198 + $0x128] sm:$0xff]
      %v253 = vld [vmem:[%s198 + $0x130] sm:$0xff]
      %v254 = vld [vmem:[%s198 + $0x138] sm:$0xff]
      %v255 = vld [vmem:[%s198 + $0x140] sm:$0xff]
      %v256 = vld [vmem:[%s198 + $0x148] sm:$0xff]
      %v257 = vld [vmem:[%s198 + $0x150] sm:$0xff]
      %v258 = vld [vmem:[%s198 + $0x158] sm:$0xff]
      %v259 = vld [vmem:[%s198 + $0x160] sm:$0xff]
      %v260 = vld [vmem:[%s198 + $0x168] sm:$0xff]
      %v261 = vld [vmem:[%s198 + $0x170] sm:$0xff]
      %v262 = vld [vmem:[%s198 + $0x178] sm:$0xff]
      %v263 = vld [vmem:[%s198 + $0x180] sm:$0xff]
      %v264 = vld [vmem:[%s198 + $0x188] sm:$0xff]
      %v265 = vld [vmem:[%s198 + $0x190] sm:$0xff]
      %v266 = vld [vmem:[%s198 + $0x198] sm:$0xff]
      %v267 = vld [vmem:[%s198 + $0x1a0] sm:$0xff]
      %v268 = vld [vmem:[%s198 + $0x1a8] sm:$0xff]
      %v269 = vld [vmem:[%s198 + $0x1b0] sm:$0xff]
      %v270 = vld [vmem:[%s198 + $0x1b8] sm:$0xff]
      %v271 = vld [vmem:[%s198 + $0x1c0] sm:$0xff]
      %v272 = vld [vmem:[%s198 + $0x1c8] sm:$0xff]
      %v273 = vld [vmem:[%s198 + $0x1d0] sm:$0xff]
      %v274 = vld [vmem:[%s198 + $0x1d8] sm:$0xff]
      %v275 = vld [vmem:[%s198 + $0x1e0] sm:$0xff]
      %v276 = vld [vmem:[%s198 + $0x1e8] sm:$0xff]
      %v277 = vld [vmem:[%s198 + $0x1f0] sm:$0xff]
      %v278 = vld [vmem:[%s198 + $0x1f8] sm:$0xff]
      %v279 = vld [vmem:[%s198 + $0x200] sm:$0xff]
      %v280 = vld [vmem:[%s198 + $0x208] sm:$0xff]
      %v281 = vld [vmem:[%s198 + $0x210] sm:$0xff]
      %v282 = vld [vmem:[%s198 + $0x218] sm:$0xff]
      %v283 = vld [vmem:[%s198 + $0x220] sm:$0xff]
      %v284 = vld [vmem:[%s198 + $0x228] sm:$0xff]
      %v285 = vld [vmem:[%s198 + $0x230] sm:$0xff]
      %v286 = vld [vmem:[%s198 + $0x238] sm:$0xff]
      %v287 = vld [vmem:[%s198 + $0x240] sm:$0xff]
      %v288 = vld [vmem:[%s198 + $0x248] sm:$0xff]
      %v289 = vld [vmem:[%s198 + $0x250] sm:$0xff]
      %v290 = vld [vmem:[%s198 + $0x258] sm:$0xff]
      %v291 = vld [vmem:[%s198 + $0x260] sm:$0xff]
      %v292 = vld [vmem:[%s198 + $0x268] sm:$0xff]
      %v293 = vld [vmem:[%s198 + $0x270] sm:$0xff]
      %v294 = vld [vmem:[%s198 + $0x278] sm:$0xff]
      %v295 = vld [vmem:[%s198 + $0x280] sm:$0xff]
      %v296 = vld [vmem:[%s198 + $0x288] sm:$0xff]
      %v297 = vld [vmem:[%s198 + $0x290] sm:$0xff]
      %v298 = vld [vmem:[%s198 + $0x298] sm:$0xff]
      %v299 = vld [vmem:[%s198 + $0x2a0] sm:$0xff]
      %v300 = vld [vmem:[%s198 + $0x2a8] sm:$0xff]
      %v301 = vld [vmem:[%s198 + $0x2b0] sm:$0xff]
      %v302 = vld [vmem:[%s198 + $0x2b8] sm:$0xff]
      %v303 = vld [vmem:[%s198 + $0x2c0] sm:$0xff]
      %v304 = vld [vmem:[%s198 + $0x2c8] sm:$0xff]
      %v305 = vld [vmem:[%s198 + $0x2d0] sm:$0xff]
      %v306 = vld [vmem:[%s198 + $0x2d8] sm:$0xff]
      %v307 = vld [vmem:[%s198 + $0x2e0] sm:$0xff]
      %v308 = vld [vmem:[%s198 + $0x2e8] sm:$0xff]
      %v309 = vld [vmem:[%s198 + $0x2f0] sm:$0xff]
      %v310 = vld [vmem:[%s198 + $0x2f8] sm:$0xff]
      %v311 = vld [vmem:[%s198 + $0x300] sm:$0xff]
      %v312 = vld [vmem:[%s198 + $0x308] sm:$0xff]
      %v313 = vld [vmem:[%s198 + $0x310] sm:$0xff]
      %v314 = vld [vmem:[%s198 + $0x318] sm:$0xff]
      %v315 = vld [vmem:[%s198 + $0x320] sm:$0xff]
      %v316 = vld [vmem:[%s198 + $0x328] sm:$0xff]
      %v317 = vld [vmem:[%s198 + $0x330] sm:$0xff]
      %v318 = vld [vmem:[%s198 + $0x338] sm:$0xff]
      %v319 = vld [vmem:[%s198 + $0x340] sm:$0xff]
      %v320 = vld [vmem:[%s198 + $0x348] sm:$0xff]
      %v321 = vld [vmem:[%s198 + $0x350] sm:$0xff]
      %v322 = vld [vmem:[%s198 + $0x358] sm:$0xff]
      %v323 = vld [vmem:[%s198 + $0x360] sm:$0xff]
      %v324 = vld [vmem:[%s198 + $0x368] sm:$0xff]
      %v325 = vld [vmem:[%s198 + $0x370] sm:$0xff]
      %v326 = vld [vmem:[%s198 + $0x378] sm:$0xff]
      %v327 = vld [vmem:[%s198 + $0x380] sm:$0xff]
      %v328 = vld [vmem:[%s198 + $0x388] sm:$0xff]
      %v329 = vld [vmem:[%s198 + $0x390] sm:$0xff]
      %v330 = vld [vmem:[%s198 + $0x398] sm:$0xff]
      %v331 = vld [vmem:[%s198 + $0x3a0] sm:$0xff]
      %v332 = vld [vmem:[%s198 + $0x3a8] sm:$0xff]
      %v333 = vld [vmem:[%s198 + $0x3b0] sm:$0xff]
      %v334 = vld [vmem:[%s198 + $0x3b8] sm:$0xff]
      %v335 = vld [vmem:[%s198 + $0x3c0] sm:$0xff]
      %v336 = vld [vmem:[%s198 + $0x3c8] sm:$0xff]
      %v337 = vld [vmem:[%s198 + $0x3d0] sm:$0xff]
      %v338 = vld [vmem:[%s198 + $0x3d8] sm:$0xff]
      %v339 = vld [vmem:[%s198 + $0x3e0] sm:$0xff]
      %v340 = vld [vmem:[%s198 + $0x3e8] sm:$0xff]
      %v341 = vld [vmem:[%s198 + $0x3f0] sm:$0xff]
      %v342 = vld [vmem:[%s198 + $0x3f8] sm:$0xff]
      %v343 = vld [vmem:[%s198 + $0x400] sm:$0xff]
      %v344 = vld [vmem:[%s198 + $0x408] sm:$0xff]
      %v345 = vld [vmem:[%s198 + $0x410] sm:$0xff]
      %v346 = vld [vmem:[%s198 + $0x418] sm:$0xff]
      %v347 = vld [vmem:[%s198 + $0x420] sm:$0xff]
      %v348 = vld [vmem:[%s198 + $0x428] sm:$0xff]
      %v349 = vld [vmem:[%s198 + $0x430] sm:$0xff]
      %v350 = vld [vmem:[%s198 + $0x438] sm:$0xff]
      %v351 = vld [vmem:[%s198 + $0x440] sm:$0xff]
      %v352 = vld [vmem:[%s198 + $0x448] sm:$0xff]
      %v353 = vld [vmem:[%s198 + $0x450] sm:$0xff]
      %v354 = vld [vmem:[%s198 + $0x458] sm:$0xff]
      %v355 = vld [vmem:[%s198 + $0x460] sm:$0xff]
      %v356 = vld [vmem:[%s198 + $0x468] sm:$0xff]
      %v357 = vld [vmem:[%s198 + $0x470] sm:$0xff]
      %v358 = vld [vmem:[%s198 + $0x478] sm:$0xff]
      %v359 = vld [vmem:[%s198 + $0x480] sm:$0xff]
      %v360 = vld [vmem:[%s198 + $0x488] sm:$0xff]
      %v361 = vld [vmem:[%s198 + $0x490] sm:$0xff]
      %v362 = vld [vmem:[%s198 + $0x498] sm:$0xff]
      %v363 = vld [vmem:[%s198 + $0x4a0] sm:$0xff]
      %v364 = vld [vmem:[%s198 + $0x4a8] sm:$0xff]
      %v365 = vld [vmem:[%s198 + $0x4b0] sm:$0xff]
      %v366 = vld [vmem:[%s198 + $0x4b8] sm:$0xff]
      %v367 = vld [vmem:[%s198 + $0x4c0] sm:$0xff]
      %v368 = vld [vmem:[%s198 + $0x4c8] sm:$0xff]
      %v369 = vld [vmem:[%s198 + $0x4d0] sm:$0xff]
      %v370 = vld [vmem:[%s198 + $0x4d8] sm:$0xff]
      %v371 = vld [vmem:[%s198 + $0x4e0] sm:$0xff]
      %v372 = vld [vmem:[%s198 + $0x4e8] sm:$0xff]
      %v373 = vld [vmem:[%s198 + $0x4f0] sm:$0xff]
      %v374 = vld [vmem:[%s198 + $0x4f8] sm:$0xff]
      %v375 = vld [vmem:[%s198 + $0x500] sm:$0xff]
      %v376 = vld [vmem:[%s198 + $0x508] sm:$0xff]
      %v377 = vld [vmem:[%s198 + $0x510] sm:$0xff]
      %v378 = vld [vmem:[%s198 + $0x518] sm:$0xff]
      %v379 = vld [vmem:[%s198 + $0x520] sm:$0xff]
      %v380 = vld [vmem:[%s198 + $0x528] sm:$0xff]
      %v381 = vld [vmem:[%s198 + $0x530] sm:$0xff]
      %v382 = vld [vmem:[%s198 + $0x538] sm:$0xff]
      %v383 = vld [vmem:[%s198 + $0x540] sm:$0xff]
      %v384 = vld [vmem:[%s198 + $0x548] sm:$0xff]
      %v385 = vld [vmem:[%s198 + $0x550] sm:$0xff]
      %v386 = vld [vmem:[%s198 + $0x558] sm:$0xff]
      %v387 = vld [vmem:[%s198 + $0x560] sm:$0xff]
      %v388 = vld [vmem:[%s198 + $0x568] sm:$0xff]
      %v389 = vld [vmem:[%s198 + $0x570] sm:$0xff]
      %v390 = vld [vmem:[%s198 + $0x578] sm:$0xff]
      %v391 = vld [vmem:[%s198 + $0x580] sm:$0xff]
      %v392 = vld [vmem:[%s198 + $0x588] sm:$0xff]
      %v393 = vld [vmem:[%s198 + $0x590] sm:$0xff]
      %v394 = vld [vmem:[%s198 + $0x598] sm:$0xff]
      %v395 = vld [vmem:[%s198 + $0x5a0] sm:$0xff]
      %v396 = vld [vmem:[%s198 + $0x5a8] sm:$0xff]
      %v397 = vld [vmem:[%s198 + $0x5b0] sm:$0xff]
      %v398 = vld [vmem:[%s198 + $0x5b8] sm:$0xff]
      %v399 = vld [vmem:[%s198 + $0x5c0] sm:$0xff]
      %v400 = vld [vmem:[%s198 + $0x5c8] sm:$0xff]
      %v401 = vld [vmem:[%s198 + $0x5d0] sm:$0xff]
      %v402 = vld [vmem:[%s198 + $0x5d8] sm:$0xff]
      %v403 = vld [vmem:[%s198 + $0x5e0] sm:$0xff]
      %v404 = vld [vmem:[%s198 + $0x5e8] sm:$0xff]
      %v405 = vld [vmem:[%s198 + $0x5f0] sm:$0xff]
      %v406 = vld [vmem:[%s198 + $0x5f8] sm:$0xff]
      %v407 = vld [vmem:[%s198 + $0x600] sm:$0xff]
      %v408 = vld [vmem:[%s198 + $0x608] sm:$0xff]
      %v409 = vld [vmem:[%s198 + $0x610] sm:$0xff]
      %v410 = vld [vmem:[%s198 + $0x618] sm:$0xff]
      %v411 = vld [vmem:[%s198 + $0x620] sm:$0xff]
      %v412 = vld [vmem:[%s198 + $0x628] sm:$0xff]
      %v413 = vld [vmem:[%s198 + $0x630] sm:$0xff]
      %v414 = vld [vmem:[%s198 + $0x638] sm:$0xff]
      %v415 = vld [vmem:[%s198 + $0x640] sm:$0xff]
      %v416 = vld [vmem:[%s198 + $0x648] sm:$0xff]
      %v417 = vld [vmem:[%s198 + $0x650] sm:$0xff]
      %v418 = vld [vmem:[%s198 + $0x658] sm:$0xff]
      %v419 = vld [vmem:[%s198 + $0x660] sm:$0xff]
      %v420 = vld [vmem:[%s198 + $0x668] sm:$0xff]
      %v421 = vld [vmem:[%s198 + $0x670] sm:$0xff]
      %v422 = vld [vmem:[%s198 + $0x678] sm:$0xff]
      %v423 = vld [vmem:[%s198 + $0x680] sm:$0xff]
      %v424 = vld [vmem:[%s198 + $0x688] sm:$0xff]
      %v425 = vld [vmem:[%s198 + $0x690] sm:$0xff]
      %v426 = vld [vmem:[%s198 + $0x698] sm:$0xff]
      %v427 = vld [vmem:[%s198 + $0x6a0] sm:$0xff]
      %v428 = vld [vmem:[%s198 + $0x6a8] sm:$0xff]
      %v429 = vld [vmem:[%s198 + $0x6b0] sm:$0xff]
      %v430 = vld [vmem:[%s198 + $0x6b8] sm:$0xff]
      %v431 = vld [vmem:[%s198 + $0x6c0] sm:$0xff]
      %v432 = vld [vmem:[%s198 + $0x6c8] sm:$0xff]
      %v433 = vld [vmem:[%s198 + $0x6d0] sm:$0xff]
      %v434 = vld [vmem:[%s198 + $0x6d8] sm:$0xff]
      %v435 = vld [vmem:[%s198 + $0x6e0] sm:$0xff]
      %v436 = vld [vmem:[%s198 + $0x6e8] sm:$0xff]
      %v437 = vld [vmem:[%s198 + $0x6f0] sm:$0xff]
      %v438 = vld [vmem:[%s198 + $0x6f8] sm:$0xff]
      %v439 = vld [vmem:[%s198 + $0x700] sm:$0xff]
      %v440 = vld [vmem:[%s198 + $0x708] sm:$0xff]
      %v441 = vld [vmem:[%s198 + $0x710] sm:$0xff]
      %v442 = vld [vmem:[%s198 + $0x718] sm:$0xff]
      %v443 = vld [vmem:[%s198 + $0x720] sm:$0xff]
      %v444 = vld [vmem:[%s198 + $0x728] sm:$0xff]
      %v445 = vld [vmem:[%s198 + $0x730] sm:$0xff]
      %v446 = vld [vmem:[%s198 + $0x738] sm:$0xff]
      %v447 = vld [vmem:[%s198 + $0x740] sm:$0xff]
      %v448 = vld [vmem:[%s198 + $0x748] sm:$0xff]
      %v449 = vld [vmem:[%s198 + $0x750] sm:$0xff]
      %v450 = vld [vmem:[%s198 + $0x758] sm:$0xff]
      %v451 = vld [vmem:[%s198 + $0x760] sm:$0xff]
      %v452 = vld [vmem:[%s198 + $0x768] sm:$0xff]
      %v453 = vld [vmem:[%s198 + $0x770] sm:$0xff]
      %v454 = vld [vmem:[%s198 + $0x778] sm:$0xff]
      %v455 = vld [vmem:[%s198 + $0x780] sm:$0xff]
      %v456 = vld [vmem:[%s198 + $0x788] sm:$0xff]
      %v457 = vld [vmem:[%s198 + $0x790] sm:$0xff]
      %v458 = vld [vmem:[%s198 + $0x798] sm:$0xff]
      %v459 = vld [vmem:[%s198 + $0x7a0] sm:$0xff]
      %v460 = vld [vmem:[%s198 + $0x7a8] sm:$0xff]
      %v461 = vld [vmem:[%s198 + $0x7b0] sm:$0xff]
      %v462 = vld [vmem:[%s198 + $0x7b8] sm:$0xff]
      %v463 = vld [vmem:[%s198 + $0x7c0] sm:$0xff]
      %v464 = vld [vmem:[%s198 + $0x7c8] sm:$0xff]
      %v465 = vld [vmem:[%s198 + $0x7d0] sm:$0xff]
      %v466 = vld [vmem:[%s198 + $0x7d8] sm:$0xff]
      %v467 = vld [vmem:[%s198 + $0x7e0] sm:$0xff]
      %v468 = vld [vmem:[%s198 + $0x7e8] sm:$0xff]
      %v469 = vld [vmem:[%s198 + $0x7f0] sm:$0xff]
      %v470 = vld [vmem:[%s198 + $0x7f8] sm:$0xff]
      %v471 = vld [vmem:[%s198 + $0x800] sm:$0xff]
      %v472 = vld [vmem:[%s198 + $0x808] sm:$0xff]
      %v473 = vld [vmem:[%s198 + $0x810] sm:$0xff]
      %v474 = vld [vmem:[%s198 + $0x818] sm:$0xff]
      %v475 = vld [vmem:[%s198 + $0x820] sm:$0xff]
      %v476 = vld [vmem:[%s198 + $0x828] sm:$0xff]
      %v477 = vld [vmem:[%s198 + $0x830] sm:$0xff]
      %v478 = vld [vmem:[%s198 + $0x838] sm:$0xff]
      %v479 = vld [vmem:[%s198 + $0x840] sm:$0xff]
      %v480 = vld [vmem:[%s198 + $0x848] sm:$0xff]
      %v481 = vld [vmem:[%s198 + $0x850] sm:$0xff]
      %v482 = vld [vmem:[%s198 + $0x858] sm:$0xff]
      %v483 = vld [vmem:[%s198 + $0x860] sm:$0xff]
      %v484 = vld [vmem:[%s198 + $0x868] sm:$0xff]
      %v485 = vld [vmem:[%s198 + $0x870] sm:$0xff]
      %v486 = vld [vmem:[%s198 + $0x878] sm:$0xff]
      %v487 = vld [vmem:[%s198 + $0x880] sm:$0xff]
      %v488 = vld [vmem:[%s198 + $0x888] sm:$0xff]
      %v489 = vld [vmem:[%s198 + $0x890] sm:$0xff]
      %v490 = vld [vmem:[%s198 + $0x898] sm:$0xff]
      %v491 = vld [vmem:[%s198 + $0x8a0] sm:$0xff]
      %v492 = vld [vmem:[%s198 + $0x8a8] sm:$0xff]
      %v493 = vld [vmem:[%s198 + $0x8b0] sm:$0xff]
      %v494 = vld [vmem:[%s198 + $0x8b8] sm:$0xff]
      %v495 = vld [vmem:[%s198 + $0x8c0] sm:$0xff]
      %v496 = vld [vmem:[%s198 + $0x8c8] sm:$0xff]
      %v497 = vld [vmem:[%s198 + $0x8d0] sm:$0xff]
      %v498 = vld [vmem:[%s198 + $0x8d8] sm:$0xff]
      %v499 = vld [vmem:[%s198 + $0x8e0] sm:$0xff]
      %v500 = vld [vmem:[%s198 + $0x8e8] sm:$0xff]
      %v501 = vld [vmem:[%s198 + $0x8f0] sm:$0xff]
      %v502 = vld [vmem:[%s198 + $0x8f8] sm:$0xff]
      %v503 = vld [vmem:[%s198 + $0x900] sm:$0xff]
      %v504 = vld [vmem:[%s198 + $0x908] sm:$0xff]
      %v505 = vld [vmem:[%s198 + $0x910] sm:$0xff]
      %v506 = vld [vmem:[%s198 + $0x918] sm:$0xff]
      %v507 = vld [vmem:[%s198 + $0x920] sm:$0xff]
      %v508 = vld [vmem:[%s198 + $0x928] sm:$0xff]
      %v509 = vld [vmem:[%s198 + $0x930] sm:$0xff]
      %v510 = vld [vmem:[%s198 + $0x938] sm:$0xff]
      %v511 = vld [vmem:[%s198 + $0x940] sm:$0xff]
      %v512 = vld [vmem:[%s198 + $0x948] sm:$0xff]
      %v513 = vld [vmem:[%s198 + $0x950] sm:$0xff]
      %v514 = vld [vmem:[%s198 + $0x958] sm:$0xff]
      %v515 = vld [vmem:[%s198 + $0x960] sm:$0xff]
      %v516 = vld [vmem:[%s198 + $0x968] sm:$0xff]
      %v517 = vld [vmem:[%s198 + $0x970] sm:$0xff]
      %v518 = vld [vmem:[%s198 + $0x978] sm:$0xff]
      %v519 = vld [vmem:[%s198 + $0x980] sm:$0xff]
      %v520 = vld [vmem:[%s198 + $0x988] sm:$0xff]
      %v521 = vld [vmem:[%s198 + $0x990] sm:$0xff]
      %v522 = vld [vmem:[%s198 + $0x998] sm:$0xff]
      %v523 = vld [vmem:[%s198 + $0x9a0] sm:$0xff]
      %v524 = vld [vmem:[%s198 + $0x9a8] sm:$0xff]
      %v525 = vld [vmem:[%s198 + $0x9b0] sm:$0xff]
      %v526 = vld [vmem:[%s198 + $0x9b8] sm:$0xff]
      %v527 = vld [vmem:[%s198 + $0x9c0] sm:$0xff]
      %v528 = vld [vmem:[%s198 + $0x9c8] sm:$0xff]
      %v529 = vld [vmem:[%s198 + $0x9d0] sm:$0xff]
      %v530 = vld [vmem:[%s198 + $0x9d8] sm:$0xff]
      %v531 = vld [vmem:[%s198 + $0x9e0] sm:$0xff]
      %v532 = vld [vmem:[%s198 + $0x9e8] sm:$0xff]
      %v533 = vld [vmem:[%s198 + $0x9f0] sm:$0xff]
      %v534 = vld [vmem:[%s198 + $0x9f8] sm:$0xff]
      %v535 = vld [vmem:[%s198 + $0xa00] sm:$0xff]
      %v536 = vld [vmem:[%s198 + $0xa08] sm:$0xff]
      %v537 = vld [vmem:[%s198 + $0xa10] sm:$0xff]
      %v538 = vld [vmem:[%s198 + $0xa18] sm:$0xff]
      %v539 = vld [vmem:[%s198 + $0xa20] sm:$0xff]
      %v540 = vld [vmem:[%s198 + $0xa28] sm:$0xff]
      %v541 = vld [vmem:[%s198 + $0xa30] sm:$0xff]
      %v542 = vld [vmem:[%s198 + $0xa38] sm:$0xff]
      %v543 = vld [vmem:[%s198 + $0xa40] sm:$0xff]
      %v544 = vld [vmem:[%s198 + $0xa48] sm:$0xff]
      %v545 = vld [vmem:[%s198 + $0xa50] sm:$0xff]
      %v546 = vld [vmem:[%s198 + $0xa58] sm:$0xff]
      %v547 = vld [vmem:[%s198 + $0xa60] sm:$0xff]
      %v548 = vld [vmem:[%s198 + $0xa68] sm:$0xff]
      %v549 = vld [vmem:[%s198 + $0xa70] sm:$0xff]
      %v550 = vld [vmem:[%s198 + $0xa78] sm:$0xff]
      %v551 = vld [vmem:[%s198 + $0xa80] sm:$0xff]
      %v552 = vld [vmem:[%s198 + $0xa88] sm:$0xff]
      %v553 = vld [vmem:[%s198 + $0xa90] sm:$0xff]
      %v554 = vld [vmem:[%s198 + $0xa98] sm:$0xff]
      %v555 = vld [vmem:[%s198 + $0xaa0] sm:$0xff]
      %v556 = vld [vmem:[%s198 + $0xaa8] sm:$0xff]
      %v557 = vld [vmem:[%s198 + $0xab0] sm:$0xff]
      %v558 = vld [vmem:[%s198 + $0xab8] sm:$0xff]
      %v559 = vld [vmem:[%s198 + $0xac0] sm:$0xff]
      %v560 = vld [vmem:[%s198 + $0xac8] sm:$0xff]
      %v561 = vld [vmem:[%s198 + $0xad0] sm:$0xff]
      %v562 = vld [vmem:[%s198 + $0xad8] sm:$0xff]
      %v563 = vld [vmem:[%s198 + $0xae0] sm:$0xff]
      %v564 = vld [vmem:[%s198 + $0xae8] sm:$0xff]
      %v565 = vld [vmem:[%s198 + $0xaf0] sm:$0xff]
      %v566 = vld [vmem:[%s198 + $0xaf8] sm:$0xff]
      %v567 = vld [vmem:[%s198 + $0xb00] sm:$0xff]
      %v568 = vld [vmem:[%s198 + $0xb08] sm:$0xff]
      %v569 = vld [vmem:[%s198 + $0xb10] sm:$0xff]
      %v570 = vld [vmem:[%s198 + $0xb18] sm:$0xff]
      %v571 = vld [vmem:[%s198 + $0xb20] sm:$0xff]
      %v572 = vld [vmem:[%s198 + $0xb28] sm:$0xff]
      %v573 = vld [vmem:[%s198 + $0xb30] sm:$0xff]
      %v574 = vld [vmem:[%s198 + $0xb38] sm:$0xff]
      %v575 = vld [vmem:[%s198 + $0xb40] sm:$0xff]
      %v576 = vld [vmem:[%s198 + $0xb48] sm:$0xff]
      %v577 = vld [vmem:[%s198 + $0xb50] sm:$0xff]
      %v578 = vld [vmem:[%s198 + $0xb58] sm:$0xff]
      %v579 = vld [vmem:[%s198 + $0xb60] sm:$0xff]
      %v580 = vld [vmem:[%s198 + $0xb68] sm:$0xff]
      %v581 = vld [vmem:[%s198 + $0xb70] sm:$0xff]
      %v582 = vld [vmem:[%s198 + $0xb78] sm:$0xff]
      %v583 = vld [vmem:[%s198 + $0xb80] sm:$0xff]
      %v584 = vld [vmem:[%s198 + $0xb88] sm:$0xff]
      %v585 = vld [vmem:[%s198 + $0xb90] sm:$0xff]
      %v586 = vld [vmem:[%s198 + $0xb98] sm:$0xff]
      %v587 = vld [vmem:[%s198 + $0xba0] sm:$0xff]
      %v588 = vld [vmem:[%s198 + $0xba8] sm:$0xff]
      %v589 = vld [vmem:[%s198 + $0xbb0] sm:$0xff]
      %v590 = vld [vmem:[%s198 + $0xbb8] sm:$0xff]
      %v591 = vld [vmem:[%s198 + $0xbc0] sm:$0xff]
      %v592 = vld [vmem:[%s198 + $0xbc8] sm:$0xff]
      %v593 = vld [vmem:[%s198 + $0xbd0] sm:$0xff]
      %v594 = vld [vmem:[%s198 + $0xbd8] sm:$0xff]
      %v595 = vld [vmem:[%s198 + $0xbe0] sm:$0xff]
      %v596 = vld [vmem:[%s198 + $0xbe8] sm:$0xff]
      %v597 = vld [vmem:[%s198 + $0xbf0] sm:$0xff]
      %v598 = vld [vmem:[%s198 + $0xbf8] sm:$0xff]
      %v599 = vld [vmem:[%s198 + $0xc00] sm:$0xff]
      %v600 = vld [vmem:[%s198 + $0xc08] sm:$0xff]
      %v601 = vld [vmem:[%s198 + $0xc10] sm:$0xff]
      %v602 = vld [vmem:[%s198 + $0xc18] sm:$0xff]
      %v603 = vld [vmem:[%s198 + $0xc20] sm:$0xff]
      %v604 = vld [vmem:[%s198 + $0xc28] sm:$0xff]
      %v605 = vld [vmem:[%s198 + $0xc30] sm:$0xff]
      %v606 = vld [vmem:[%s198 + $0xc38] sm:$0xff]
      %v607 = vld [vmem:[%s198 + $0xc40] sm:$0xff]
      %v608 = vld [vmem:[%s198 + $0xc48] sm:$0xff]
      %v609 = vld [vmem:[%s198 + $0xc50] sm:$0xff]
      %v610 = vld [vmem:[%s198 + $0xc58] sm:$0xff]
      %v611 = vld [vmem:[%s198 + $0xc60] sm:$0xff]
      %v612 = vld [vmem:[%s198 + $0xc68] sm:$0xff]
      %v613 = vld [vmem:[%s198 + $0xc70] sm:$0xff]
      %v614 = vld [vmem:[%s198 + $0xc78] sm:$0xff]
      %v615 = vld [vmem:[%s198 + $0xc80] sm:$0xff]
      %v616 = vld [vmem:[%s198 + $0xc88] sm:$0xff]
      %v617 = vld [vmem:[%s198 + $0xc90] sm:$0xff]
      %v618 = vld [vmem:[%s198 + $0xc98] sm:$0xff]
      %v619 = vld [vmem:[%s198 + $0xca0] sm:$0xff]
      %v620 = vld [vmem:[%s198 + $0xca8] sm:$0xff]
      %v621 = vld [vmem:[%s198 + $0xcb0] sm:$0xff]
      %v622 = vld [vmem:[%s198 + $0xcb8] sm:$0xff]
      %v623 = vld [vmem:[%s198 + $0xcc0] sm:$0xff]
      %v624 = vld [vmem:[%s198 + $0xcc8] sm:$0xff]
      %v625 = vld [vmem:[%s198 + $0xcd0] sm:$0xff]
      %v626 = vld [vmem:[%s198 + $0xcd8] sm:$0xff]
      %v627 = vld [vmem:[%s198 + $0xce0] sm:$0xff]
      %v628 = vld [vmem:[%s198 + $0xce8] sm:$0xff]
      %v629 = vld [vmem:[%s198 + $0xcf0] sm:$0xff]
      %v630 = vld [vmem:[%s198 + $0xcf8] sm:$0xff]
      %v631 = vld [vmem:[%s198 + $0xd00] sm:$0xff]
      %v632 = vld [vmem:[%s198 + $0xd08] sm:$0xff]
      %v633 = vld [vmem:[%s198 + $0xd10] sm:$0xff]
      %v634 = vld [vmem:[%s198 + $0xd18] sm:$0xff]
      %v635 = vld [vmem:[%s198 + $0xd20] sm:$0xff]
      %v636 = vld [vmem:[%s198 + $0xd28] sm:$0xff]
      %v637 = vld [vmem:[%s198 + $0xd30] sm:$0xff]
      %v638 = vld [vmem:[%s198 + $0xd38] sm:$0xff]
      %v639 = vld [vmem:[%s198 + $0xd40] sm:$0xff]
      %v640 = vld [vmem:[%s198 + $0xd48] sm:$0xff]
      %v641 = vld [vmem:[%s198 + $0xd50] sm:$0xff]
      %v642 = vld [vmem:[%s198 + $0xd58] sm:$0xff]
      %v643 = vld [vmem:[%s198 + $0xd60] sm:$0xff]
      %v644 = vld [vmem:[%s198 + $0xd68] sm:$0xff]
      %v645 = vld [vmem:[%s198 + $0xd70] sm:$0xff]
      %v646 = vld [vmem:[%s198 + $0xd78] sm:$0xff]
      %v647 = vld [vmem:[%s198 + $0xd80] sm:$0xff]
      %v648 = vld [vmem:[%s198 + $0xd88] sm:$0xff]
      %v649 = vld [vmem:[%s198 + $0xd90] sm:$0xff]
      %v650 = vld [vmem:[%s198 + $0xd98] sm:$0xff]
      %v651 = vld [vmem:[%s198 + $0xda0] sm:$0xff]
      %v652 = vld [vmem:[%s198 + $0xda8] sm:$0xff]
      %v653 = vld [vmem:[%s198 + $0xdb0] sm:$0xff]
      %v654 = vld [vmem:[%s198 + $0xdb8] sm:$0xff]
      %v655 = vld [vmem:[%s198 + $0xdc0] sm:$0xff]
      %v656 = vld [vmem:[%s198 + $0xdc8] sm:$0xff]
      %v657 = vld [vmem:[%s198 + $0xdd0] sm:$0xff]
      %v658 = vld [vmem:[%s198 + $0xdd8] sm:$0xff]
      %v659 = vld [vmem:[%s198 + $0xde0] sm:$0xff]
      %v660 = vld [vmem:[%s198 + $0xde8] sm:$0xff]
      %v661 = vld [vmem:[%s198 + $0xdf0] sm:$0xff]
      %v662 = vld [vmem:[%s198 + $0xdf8] sm:$0xff]
      %v663 = vld [vmem:[%s198 + $0xe00] sm:$0xff]
      %v664 = vld [vmem:[%s198 + $0xe08] sm:$0xff]
      %v665 = vld [vmem:[%s198 + $0xe10] sm:$0xff]
      %v666 = vld [vmem:[%s198 + $0xe18] sm:$0xff]
      %v667 = vld [vmem:[%s198 + $0xe20] sm:$0xff]
      %v668 = vld [vmem:[%s198 + $0xe28] sm:$0xff]
      %v669 = vld [vmem:[%s198 + $0xe30] sm:$0xff]
      %v670 = vld [vmem:[%s198 + $0xe38] sm:$0xff]
      %v671 = vld [vmem:[%s198 + $0xe40] sm:$0xff]
      %v672 = vld [vmem:[%s198 + $0xe48] sm:$0xff]
      %v673 = vld [vmem:[%s198 + $0xe50] sm:$0xff]
      %v674 = vld [vmem:[%s198 + $0xe58] sm:$0xff]
      %v675 = vld [vmem:[%s198 + $0xe60] sm:$0xff]
      %v676 = vld [vmem:[%s198 + $0xe68] sm:$0xff]
      %v677 = vld [vmem:[%s198 + $0xe70] sm:$0xff]
      %v678 = vld [vmem:[%s198 + $0xe78] sm:$0xff]
      %v679 = vld [vmem:[%s198 + $0xe80] sm:$0xff]
      %v680 = vld [vmem:[%s198 + $0xe88] sm:$0xff]
      %v681 = vld [vmem:[%s198 + $0xe90] sm:$0xff]
      %v682 = vld [vmem:[%s198 + $0xe98] sm:$0xff]
      %v683 = vld [vmem:[%s198 + $0xea0] sm:$0xff]
      %v684 = vld [vmem:[%s198 + $0xea8] sm:$0xff]
      %v685 = vld [vmem:[%s198 + $0xeb0] sm:$0xff]
      %v686 = vld [vmem:[%s198 + $0xeb8] sm:$0xff]
      %v687 = vld [vmem:[%s198 + $0xec0] sm:$0xff]
      %v688 = vld [vmem:[%s198 + $0xec8] sm:$0xff]
      %v689 = vld [vmem:[%s198 + $0xed0] sm:$0xff]
      %v690 = vld [vmem:[%s198 + $0xed8] sm:$0xff]
      %v691 = vld [vmem:[%s198 + $0xee0] sm:$0xff]
      %v692 = vld [vmem:[%s198 + $0xee8] sm:$0xff]
      %v693 = vld [vmem:[%s198 + $0xef0] sm:$0xff]
      %v694 = vld [vmem:[%s198 + $0xef8] sm:$0xff]
      %v695 = vld [vmem:[%s198 + $0xf00] sm:$0xff]
      %v696 = vld [vmem:[%s198 + $0xf08] sm:$0xff]
      %v697 = vld [vmem:[%s198 + $0xf10] sm:$0xff]
      %v698 = vld [vmem:[%s198 + $0xf18] sm:$0xff]
      %v699 = vld [vmem:[%s198 + $0xf20] sm:$0xff]
      %v700 = vld [vmem:[%s198 + $0xf28] sm:$0xff]
      %v701 = vld [vmem:[%s198 + $0xf30] sm:$0xff]
      %v702 = vld [vmem:[%s198 + $0xf38] sm:$0xff]
      %v703 = vld [vmem:[%s198 + $0xf40] sm:$0xff]
      %v704 = vld [vmem:[%s198 + $0xf48] sm:$0xff]
      %v705 = vld [vmem:[%s198 + $0xf50] sm:$0xff]
      %v706 = vld [vmem:[%s198 + $0xf58] sm:$0xff]
      %v707 = vld [vmem:[%s198 + $0xf60] sm:$0xff]
      %v708 = vld [vmem:[%s198 + $0xf68] sm:$0xff]
      %v709 = vld [vmem:[%s198 + $0xf70] sm:$0xff]
      %v710 = vld [vmem:[%s198 + $0xf78] sm:$0xff]
      %v711 = vld [vmem:[%s198 + $0xf80] sm:$0xff]
      %v712 = vld [vmem:[%s198 + $0xf88] sm:$0xff]
      %v713 = vld [vmem:[%s198 + $0xf90] sm:$0xff]
      %v714 = vld [vmem:[%s198 + $0xf98] sm:$0xff]
      %v715 = vld [vmem:[%s198 + $0xfa0] sm:$0xff]
      %v716 = vld [vmem:[%s198 + $0xfa8] sm:$0xff]
      %v717 = vld [vmem:[%s198 + $0xfb0] sm:$0xff]
      %v718 = vld [vmem:[%s198 + $0xfb8] sm:$0xff]
      %v719 = vld [vmem:[%s198 + $0xfc0] sm:$0xff]
      %v720 = vld [vmem:[%s198 + $0xfc8] sm:$0xff]
      %v721 = vld [vmem:[%s198 + $0xfd0] sm:$0xff]
      %v722 = vld [vmem:[%s198 + $0xfd8] sm:$0xff]
      %v723 = vld [vmem:[%s198 + $0xfe0] sm:$0xff]
      %v724 = vld [vmem:[%s198 + $0xfe8] sm:$0xff]
      %v725 = vld [vmem:[%s198 + $0xff0] sm:$0xff]
      %v726 = vld [vmem:[%s198 + $0xff8] sm:$0xff]
      %v727 = vld [vmem:[%s198 + $0x1000] sm:$0xff]
      %v728 = vld [vmem:[%s198 + $0x1008] sm:$0xff]
      %v729 = vld [vmem:[%s198 + $0x1010] sm:$0xff]
      %v730 = vld [vmem:[%s198 + $0x1018] sm:$0xff]
      %v731 = vld [vmem:[%s198 + $0x1020] sm:$0xff]
      %v732 = vld [vmem:[%s198 + $0x1028] sm:$0xff]
      %v733 = vld [vmem:[%s198 + $0x1030] sm:$0xff]
      %v734 = vld [vmem:[%s198 + $0x1038] sm:$0xff]
      %v735 = vld [vmem:[%s198 + $0x1040] sm:$0xff]
      %v736 = vld [vmem:[%s198 + $0x1048] sm:$0xff]
      %v737 = vld [vmem:[%s198 + $0x1050] sm:$0xff]
      %v738 = vld [vmem:[%s198 + $0x1058] sm:$0xff]
      %v739 = vld [vmem:[%s198 + $0x1060] sm:$0xff]
      %v740 = vld [vmem:[%s198 + $0x1068] sm:$0xff]
      %v741 = vld [vmem:[%s198 + $0x1070] sm:$0xff]
      %v742 = vld [vmem:[%s198 + $0x1078] sm:$0xff]
      %v743 = vld [vmem:[%s198 + $0x1080] sm:$0xff]
      %v744 = vld [vmem:[%s198 + $0x1088] sm:$0xff]
      %v745 = vld [vmem:[%s198 + $0x1090] sm:$0xff]
      %v746 = vld [vmem:[%s198 + $0x1098] sm:$0xff]
      %v747 = vld [vmem:[%s198 + $0x10a0] sm:$0xff]
      %v748 = vld [vmem:[%s198 + $0x10a8] sm:$0xff]
      %v749 = vld [vmem:[%s198 + $0x10b0] sm:$0xff]
      %v750 = vld [vmem:[%s198 + $0x10b8] sm:$0xff]
      %v751 = vld [vmem:[%s198 + $0x10c0] sm:$0xff]
      %v752 = vld [vmem:[%s198 + $0x10c8] sm:$0xff]
      %v753 = vld [vmem:[%s198 + $0x10d0] sm:$0xff]
      %v754 = vld [vmem:[%s198 + $0x10d8] sm:$0xff]
      %v755 = vld [vmem:[%s198 + $0x10e0] sm:$0xff]
      %v756 = vld [vmem:[%s198 + $0x10e8] sm:$0xff]
      %v757 = vld [vmem:[%s198 + $0x10f0] sm:$0xff]
      %v758 = vld [vmem:[%s198 + $0x10f8] sm:$0xff]
      %v759 = vld [vmem:[%s198 + $0x1100] sm:$0xff]
      %v760 = vld [vmem:[%s198 + $0x1108] sm:$0xff]
      %v761 = vld [vmem:[%s198 + $0x1110] sm:$0xff]
      %v762 = vld [vmem:[%s198 + $0x1118] sm:$0xff]
      %v763 = vld [vmem:[%s198 + $0x1120] sm:$0xff]
      %v764 = vld [vmem:[%s198 + $0x1128] sm:$0xff]
      %v765 = vld [vmem:[%s198 + $0x1130] sm:$0xff]
      %v766 = vld [vmem:[%s198 + $0x1138] sm:$0xff]
      %v767 = vld [vmem:[%s198 + $0x1140] sm:$0xff]
      %v768 = vld [vmem:[%s198 + $0x1148] sm:$0xff]
      %v769 = vld [vmem:[%s198 + $0x1150] sm:$0xff]
      %v770 = vld [vmem:[%s198 + $0x1158] sm:$0xff]
      %v771 = vld [vmem:[%s198 + $0x1160] sm:$0xff]
      %v772 = vld [vmem:[%s198 + $0x1168] sm:$0xff]
      %v773 = vld [vmem:[%s198 + $0x1170] sm:$0xff]
      %v774 = vld [vmem:[%s198 + $0x1178] sm:$0xff]
      %v775 = vld [vmem:[%s198 + $0x1180] sm:$0xff]
      %v776 = vld [vmem:[%s198 + $0x1188] sm:$0xff]
      %v777 = vld [vmem:[%s198 + $0x1190] sm:$0xff]
      %v778 = vld [vmem:[%s198 + $0x1198] sm:$0xff]
      %v779 = vld [vmem:[%s198 + $0x11a0] sm:$0xff]
      %v780 = vld [vmem:[%s198 + $0x11a8] sm:$0xff]
      %v781 = vld [vmem:[%s198 + $0x11b0] sm:$0xff]
      %v782 = vld [vmem:[%s198 + $0x11b8] sm:$0xff]
      %v783 = vld [vmem:[%s198 + $0x11c0] sm:$0xff]
      %v784 = vld [vmem:[%s198 + $0x11c8] sm:$0xff]
      %v785 = vld [vmem:[%s198 + $0x11d0] sm:$0xff]
      %v786 = vld [vmem:[%s198 + $0x11d8] sm:$0xff]
      %v787 = vld [vmem:[%s198 + $0x11e0] sm:$0xff]
      %v788 = vld [vmem:[%s198 + $0x11e8] sm:$0xff]
      %v789 = vld [vmem:[%s198 + $0x11f0] sm:$0xff]
      %v790 = vld [vmem:[%s198 + $0x11f8] sm:$0xff]
      %v791 = vld [vmem:[%s2] sm:$0xff]
      %v792 = vld [vmem:[%s2 + $0x8] sm:$0xff]
      %v793 = vld [vmem:[%s2 + $0x10] sm:$0xff]
      %v794 = vld [vmem:[%s2 + $0x18] sm:$0xff]
      %796 = vset.pattern.permute.xlu0 0
      %797 = vperm.xlu0 %796, %v791
      %v798 = vpop.permute.xlu0 %797
      %801 = vset.pattern.permute.xlu0 0
      %802 = vperm.xlu0 %801, %v792
      %v803 = vpop.permute.xlu0 %802
      %806 = vset.pattern.permute.xlu0 0
      %807 = vperm.xlu0 %806, %v793
      %v808 = vpop.permute.xlu0 %807
      %811 = vset.pattern.permute.xlu0 0
      %812 = vperm.xlu0 %811, %v794
      %v813 = vpop.permute.xlu0 %812
      %v819 = vunpack.c.l.b16 %v211
      %v820 = vunpack.c.h.b16 %v211
      %v821 = vunpack.c.l.b16 %v212
      %v822 = vunpack.c.h.b16 %v212
      %v823 = vunpack.c.l.b16 %v213
      %v824 = vunpack.c.h.b16 %v213
      %v825 = vunpack.c.l.b16 %v214
      %v826 = vunpack.c.h.b16 %v214
      %v827 = vpack.c.b16 %v821, %v819
      %v828 = vpack.c.b16 %v822, %v820
      %v829 = vpack.c.b16 %v825, %v823
      %v830 = vpack.c.b16 %v826, %v824
      %v1409 = vunpack.c.l.b16 %v215
      %v1410 = vunpack.c.h.b16 %v215
      %v1411 = vunpack.c.l.b16 %v216
      %v1412 = vunpack.c.h.b16 %v216
      %v1413 = vunpack.c.l.b16 %v217
      %v1414 = vunpack.c.h.b16 %v217
      %v1415 = vunpack.c.l.b16 %v218
      %v1416 = vunpack.c.h.b16 %v218
      %v1417 = vunpack.c.l.b16 %v219
      %v1418 = vunpack.c.h.b16 %v219
      %v1419 = vunpack.c.l.b16 %v220
      %v1420 = vunpack.c.h.b16 %v220
      %v1421 = vunpack.c.l.b16 %v221
      %v1422 = vunpack.c.h.b16 %v221
      %v1423 = vunpack.c.l.b16 %v222
      %v1424 = vunpack.c.h.b16 %v222
      %v1425 = vunpack.c.l.b16 %v223
      %v1426 = vunpack.c.h.b16 %v223
      %v1427 = vunpack.c.l.b16 %v224
      %v1428 = vunpack.c.h.b16 %v224
      %v1429 = vunpack.c.l.b16 %v225
      %v1430 = vunpack.c.h.b16 %v225
      %v1431 = vunpack.c.l.b16 %v226
      %v1432 = vunpack.c.h.b16 %v226
      %v1433 = vunpack.c.l.b16 %v227
      %v1434 = vunpack.c.h.b16 %v227
      %v1435 = vunpack.c.l.b16 %v228
      %v1436 = vunpack.c.h.b16 %v228
      %v1437 = vunpack.c.l.b16 %v229
      %v1438 = vunpack.c.h.b16 %v229
      %v1439 = vunpack.c.l.b16 %v230
      %v1440 = vunpack.c.h.b16 %v230
      %v1441 = vunpack.c.l.b16 %v231
      %v1442 = vunpack.c.h.b16 %v231
      %v1443 = vunpack.c.l.b16 %v232
      %v1444 = vunpack.c.h.b16 %v232
      %v1445 = vunpack.c.l.b16 %v233
      %v1446 = vunpack.c.h.b16 %v233
      %v1447 = vunpack.c.l.b16 %v234
      %v1448 = vunpack.c.h.b16 %v234
      %v1449 = vunpack.c.l.b16 %v235
      %v1450 = vunpack.c.h.b16 %v235
      %v1451 = vunpack.c.l.b16 %v236
      %v1452 = vunpack.c.h.b16 %v236
      %v1453 = vunpack.c.l.b16 %v237
      %v1454 = vunpack.c.h.b16 %v237
      %v1455 = vunpack.c.l.b16 %v238
      %v1456 = vunpack.c.h.b16 %v238
      %v1457 = vunpack.c.l.b16 %v239
      %v1458 = vunpack.c.h.b16 %v239
      %v1459 = vunpack.c.l.b16 %v240
      %v1460 = vunpack.c.h.b16 %v240
      %v1461 = vunpack.c.l.b16 %v241
      %v1462 = vunpack.c.h.b16 %v241
      %v1463 = vunpack.c.l.b16 %v242
      %v1464 = vunpack.c.h.b16 %v242
      %v1465 = vunpack.c.l.b16 %v243
      %v1466 = vunpack.c.h.b16 %v243
      %v1467 = vunpack.c.l.b16 %v244
      %v1468 = vunpack.c.h.b16 %v244
      %v1469 = vunpack.c.l.b16 %v245
      %v1470 = vunpack.c.h.b16 %v245
      %v1471 = vunpack.c.l.b16 %v246
      %v1472 = vunpack.c.h.b16 %v246
      %v1473 = vunpack.c.l.b16 %v247
      %v1474 = vunpack.c.h.b16 %v247
      %v1475 = vunpack.c.l.b16 %v248
      %v1476 = vunpack.c.h.b16 %v248
      %v1477 = vunpack.c.l.b16 %v249
      %v1478 = vunpack.c.h.b16 %v249
      %v1479 = vunpack.c.l.b16 %v250
      %v1480 = vunpack.c.h.b16 %v250
      %v1481 = vunpack.c.l.b16 %v251
      %v1482 = vunpack.c.h.b16 %v251
      %v1483 = vunpack.c.l.b16 %v252
      %v1484 = vunpack.c.h.b16 %v252
      %v1485 = vunpack.c.l.b16 %v253
      %v1486 = vunpack.c.h.b16 %v253
      %v1487 = vunpack.c.l.b16 %v254
      %v1488 = vunpack.c.h.b16 %v254
      %v1489 = vunpack.c.l.b16 %v255
      %v1490 = vunpack.c.h.b16 %v255
      %v1491 = vunpack.c.l.b16 %v256
      %v1492 = vunpack.c.h.b16 %v256
      %v1493 = vunpack.c.l.b16 %v257
      %v1494 = vunpack.c.h.b16 %v257
      %v1495 = vunpack.c.l.b16 %v258
      %v1496 = vunpack.c.h.b16 %v258
      %v1497 = vunpack.c.l.b16 %v259
      %v1498 = vunpack.c.h.b16 %v259
      %v1499 = vunpack.c.l.b16 %v260
      %v1500 = vunpack.c.h.b16 %v260
      %v1501 = vunpack.c.l.b16 %v261
      %v1502 = vunpack.c.h.b16 %v261
      %v1503 = vunpack.c.l.b16 %v262
      %v1504 = vunpack.c.h.b16 %v262
      %v1505 = vunpack.c.l.b16 %v263
      %v1506 = vunpack.c.h.b16 %v263
      %v1507 = vunpack.c.l.b16 %v264
      %v1508 = vunpack.c.h.b16 %v264
      %v1509 = vunpack.c.l.b16 %v265
      %v1510 = vunpack.c.h.b16 %v265
      %v1511 = vunpack.c.l.b16 %v266
      %v1512 = vunpack.c.h.b16 %v266
      %v1513 = vunpack.c.l.b16 %v267
      %v1514 = vunpack.c.h.b16 %v267
      %v1515 = vunpack.c.l.b16 %v268
      %v1516 = vunpack.c.h.b16 %v268
      %v1517 = vunpack.c.l.b16 %v269
      %v1518 = vunpack.c.h.b16 %v269
      %v1519 = vunpack.c.l.b16 %v270
      %v1520 = vunpack.c.h.b16 %v270
      %v1521 = vunpack.c.l.b16 %v271
      %v1522 = vunpack.c.h.b16 %v271
      %v1523 = vunpack.c.l.b16 %v272
      %v1524 = vunpack.c.h.b16 %v272
      %v1525 = vunpack.c.l.b16 %v273
      %v1526 = vunpack.c.h.b16 %v273
      %v1527 = vunpack.c.l.b16 %v274
      %v1528 = vunpack.c.h.b16 %v274
      %v1529 = vunpack.c.l.b16 %v275
      %v1530 = vunpack.c.h.b16 %v275
      %v1531 = vunpack.c.l.b16 %v276
      %v1532 = vunpack.c.h.b16 %v276
      %v1533 = vunpack.c.l.b16 %v277
      %v1534 = vunpack.c.h.b16 %v277
      %v1535 = vunpack.c.l.b16 %v278
      %v1536 = vunpack.c.h.b16 %v278
      %v1537 = vunpack.c.l.b16 %v279
      %v1538 = vunpack.c.h.b16 %v279
      %v1539 = vunpack.c.l.b16 %v280
      %v1540 = vunpack.c.h.b16 %v280
      %v1541 = vunpack.c.l.b16 %v281
      %v1542 = vunpack.c.h.b16 %v281
      %v1543 = vunpack.c.l.b16 %v282
      %v1544 = vunpack.c.h.b16 %v282
      %v1545 = vunpack.c.l.b16 %v283
      %v1546 = vunpack.c.h.b16 %v283
      %v1547 = vunpack.c.l.b16 %v284
      %v1548 = vunpack.c.h.b16 %v284
      %v1549 = vunpack.c.l.b16 %v285
      %v1550 = vunpack.c.h.b16 %v285
      %v1551 = vunpack.c.l.b16 %v286
      %v1552 = vunpack.c.h.b16 %v286
      %v1553 = vunpack.c.l.b16 %v287
      %v1554 = vunpack.c.h.b16 %v287
      %v1555 = vunpack.c.l.b16 %v288
      %v1556 = vunpack.c.h.b16 %v288
      %v1557 = vunpack.c.l.b16 %v289
      %v1558 = vunpack.c.h.b16 %v289
      %v1559 = vunpack.c.l.b16 %v290
      %v1560 = vunpack.c.h.b16 %v290
      %v1561 = vunpack.c.l.b16 %v291
      %v1562 = vunpack.c.h.b16 %v291
      %v1563 = vunpack.c.l.b16 %v292
      %v1564 = vunpack.c.h.b16 %v292
      %v1565 = vunpack.c.l.b16 %v293
      %v1566 = vunpack.c.h.b16 %v293
      %v1567 = vunpack.c.l.b16 %v294
      %v1568 = vunpack.c.h.b16 %v294
      %v1569 = vunpack.c.l.b16 %v295
      %v1570 = vunpack.c.h.b16 %v295
      %v1571 = vunpack.c.l.b16 %v296
      %v1572 = vunpack.c.h.b16 %v296
      %v1573 = vunpack.c.l.b16 %v297
      %v1574 = vunpack.c.h.b16 %v297
      %v1575 = vunpack.c.l.b16 %v298
      %v1576 = vunpack.c.h.b16 %v298
      %v1577 = vunpack.c.l.b16 %v299
      %v1578 = vunpack.c.h.b16 %v299
      %v1579 = vunpack.c.l.b16 %v300
      %v1580 = vunpack.c.h.b16 %v300
      %v1581 = vunpack.c.l.b16 %v301
      %v1582 = vunpack.c.h.b16 %v301
      %v1583 = vunpack.c.l.b16 %v302
      %v1584 = vunpack.c.h.b16 %v302
      %v1585 = vunpack.c.l.b16 %v303
      %v1586 = vunpack.c.h.b16 %v303
      %v1587 = vunpack.c.l.b16 %v304
      %v1588 = vunpack.c.h.b16 %v304
      %v1589 = vunpack.c.l.b16 %v305
      %v1590 = vunpack.c.h.b16 %v305
      %v1591 = vunpack.c.l.b16 %v306
      %v1592 = vunpack.c.h.b16 %v306
      %v1593 = vunpack.c.l.b16 %v307
      %v1594 = vunpack.c.h.b16 %v307
      %v1595 = vunpack.c.l.b16 %v308
      %v1596 = vunpack.c.h.b16 %v308
      %v1597 = vunpack.c.l.b16 %v309
      %v1598 = vunpack.c.h.b16 %v309
      %v1599 = vunpack.c.l.b16 %v310
      %v1600 = vunpack.c.h.b16 %v310
      %v1601 = vunpack.c.l.b16 %v311
      %v1602 = vunpack.c.h.b16 %v311
      %v1603 = vunpack.c.l.b16 %v312
      %v1604 = vunpack.c.h.b16 %v312
      %v1605 = vunpack.c.l.b16 %v313
      %v1606 = vunpack.c.h.b16 %v313
      %v1607 = vunpack.c.l.b16 %v314
      %v1608 = vunpack.c.h.b16 %v314
      %v1609 = vunpack.c.l.b16 %v315
      %v1610 = vunpack.c.h.b16 %v315
      %v1611 = vunpack.c.l.b16 %v316
      %v1612 = vunpack.c.h.b16 %v316
      %v1613 = vunpack.c.l.b16 %v317
      %v1614 = vunpack.c.h.b16 %v317
      %v1615 = vunpack.c.l.b16 %v318
      %v1616 = vunpack.c.h.b16 %v318
      %v1617 = vunpack.c.l.b16 %v319
      %v1618 = vunpack.c.h.b16 %v319
      %v1619 = vunpack.c.l.b16 %v320
      %v1620 = vunpack.c.h.b16 %v320
      %v1621 = vunpack.c.l.b16 %v321
      %v1622 = vunpack.c.h.b16 %v321
      %v1623 = vunpack.c.l.b16 %v322
      %v1624 = vunpack.c.h.b16 %v322
      %v1625 = vunpack.c.l.b16 %v323
      %v1626 = vunpack.c.h.b16 %v323
      %v1627 = vunpack.c.l.b16 %v324
      %v1628 = vunpack.c.h.b16 %v324
      %v1629 = vunpack.c.l.b16 %v325
      %v1630 = vunpack.c.h.b16 %v325
      %v1631 = vunpack.c.l.b16 %v326
      %v1632 = vunpack.c.h.b16 %v326
      %v1633 = vunpack.c.l.b16 %v327
      %v1634 = vunpack.c.h.b16 %v327
      %v1635 = vunpack.c.l.b16 %v328
      %v1636 = vunpack.c.h.b16 %v328
      %v1637 = vunpack.c.l.b16 %v329
      %v1638 = vunpack.c.h.b16 %v329
      %v1639 = vunpack.c.l.b16 %v330
      %v1640 = vunpack.c.h.b16 %v330
      %v1641 = vunpack.c.l.b16 %v331
      %v1642 = vunpack.c.h.b16 %v331
      %v1643 = vunpack.c.l.b16 %v332
      %v1644 = vunpack.c.h.b16 %v332
      %v1645 = vunpack.c.l.b16 %v333
      %v1646 = vunpack.c.h.b16 %v333
      %v1647 = vunpack.c.l.b16 %v334
      %v1648 = vunpack.c.h.b16 %v334
      %v1649 = vunpack.c.l.b16 %v335
      %v1650 = vunpack.c.h.b16 %v335
      %v1651 = vunpack.c.l.b16 %v336
      %v1652 = vunpack.c.h.b16 %v336
      %v1653 = vunpack.c.l.b16 %v337
      %v1654 = vunpack.c.h.b16 %v337
      %v1655 = vunpack.c.l.b16 %v338
      %v1656 = vunpack.c.h.b16 %v338
      %v1657 = vunpack.c.l.b16 %v339
      %v1658 = vunpack.c.h.b16 %v339
      %v1659 = vunpack.c.l.b16 %v340
      %v1660 = vunpack.c.h.b16 %v340
      %v1661 = vunpack.c.l.b16 %v341
      %v1662 = vunpack.c.h.b16 %v341
      %v1663 = vunpack.c.l.b16 %v342
      %v1664 = vunpack.c.h.b16 %v342
      %v1665 = vunpack.c.l.b16 %v343
      %v1666 = vunpack.c.h.b16 %v343
      %v1667 = vunpack.c.l.b16 %v344
      %v1668 = vunpack.c.h.b16 %v344
      %v1669 = vunpack.c.l.b16 %v345
      %v1670 = vunpack.c.h.b16 %v345
      %v1671 = vunpack.c.l.b16 %v346
      %v1672 = vunpack.c.h.b16 %v346
      %v1673 = vunpack.c.l.b16 %v347
      %v1674 = vunpack.c.h.b16 %v347
      %v1675 = vunpack.c.l.b16 %v348
      %v1676 = vunpack.c.h.b16 %v348
      %v1677 = vunpack.c.l.b16 %v349
      %v1678 = vunpack.c.h.b16 %v349
      %v1679 = vunpack.c.l.b16 %v350
      %v1680 = vunpack.c.h.b16 %v350
      %v1681 = vunpack.c.l.b16 %v351
      %v1682 = vunpack.c.h.b16 %v351
      %v1683 = vunpack.c.l.b16 %v352
      %v1684 = vunpack.c.h.b16 %v352
      %v1685 = vunpack.c.l.b16 %v353
      %v1686 = vunpack.c.h.b16 %v353
      %v1687 = vunpack.c.l.b16 %v354
      %v1688 = vunpack.c.h.b16 %v354
      %v1689 = vunpack.c.l.b16 %v355
      %v1690 = vunpack.c.h.b16 %v355
      %v1691 = vunpack.c.l.b16 %v356
      %v1692 = vunpack.c.h.b16 %v356
      %v1693 = vunpack.c.l.b16 %v357
      %v1694 = vunpack.c.h.b16 %v357
      %v1695 = vunpack.c.l.b16 %v358
      %v1696 = vunpack.c.h.b16 %v358
      %v1697 = vunpack.c.l.b16 %v359
      %v1698 = vunpack.c.h.b16 %v359
      %v1699 = vunpack.c.l.b16 %v360
      %v1700 = vunpack.c.h.b16 %v360
      %v1701 = vunpack.c.l.b16 %v361
      %v1702 = vunpack.c.h.b16 %v361
      %v1703 = vunpack.c.l.b16 %v362
      %v1704 = vunpack.c.h.b16 %v362
      %v1705 = vunpack.c.l.b16 %v363
      %v1706 = vunpack.c.h.b16 %v363
      %v1707 = vunpack.c.l.b16 %v364
      %v1708 = vunpack.c.h.b16 %v364
      %v1709 = vunpack.c.l.b16 %v365
      %v1710 = vunpack.c.h.b16 %v365
      %v1711 = vunpack.c.l.b16 %v366
      %v1712 = vunpack.c.h.b16 %v366
      %v1713 = vunpack.c.l.b16 %v367
      %v1714 = vunpack.c.h.b16 %v367
      %v1715 = vunpack.c.l.b16 %v368
      %v1716 = vunpack.c.h.b16 %v368
      %v1717 = vunpack.c.l.b16 %v369
      %v1718 = vunpack.c.h.b16 %v369
      %v1719 = vunpack.c.l.b16 %v370
      %v1720 = vunpack.c.h.b16 %v370
      %v1721 = vunpack.c.l.b16 %v371
      %v1722 = vunpack.c.h.b16 %v371
      %v1723 = vunpack.c.l.b16 %v372
      %v1724 = vunpack.c.h.b16 %v372
      %v1725 = vunpack.c.l.b16 %v373
      %v1726 = vunpack.c.h.b16 %v373
      %v1727 = vunpack.c.l.b16 %v374
      %v1728 = vunpack.c.h.b16 %v374
      %v1729 = vunpack.c.l.b16 %v375
      %v1730 = vunpack.c.h.b16 %v375
      %v1731 = vunpack.c.l.b16 %v376
      %v1732 = vunpack.c.h.b16 %v376
      %v1733 = vunpack.c.l.b16 %v377
      %v1734 = vunpack.c.h.b16 %v377
      %v1735 = vunpack.c.l.b16 %v378
      %v1736 = vunpack.c.h.b16 %v378
      %v1737 = vunpack.c.l.b16 %v379
      %v1738 = vunpack.c.h.b16 %v379
      %v1739 = vunpack.c.l.b16 %v380
      %v1740 = vunpack.c.h.b16 %v380
      %v1741 = vunpack.c.l.b16 %v381
      %v1742 = vunpack.c.h.b16 %v381
      %v1743 = vunpack.c.l.b16 %v382
      %v1744 = vunpack.c.h.b16 %v382
      %v1745 = vunpack.c.l.b16 %v383
      %v1746 = vunpack.c.h.b16 %v383
      %v1747 = vunpack.c.l.b16 %v384
      %v1748 = vunpack.c.h.b16 %v384
      %v1749 = vunpack.c.l.b16 %v385
      %v1750 = vunpack.c.h.b16 %v385
      %v1751 = vunpack.c.l.b16 %v386
      %v1752 = vunpack.c.h.b16 %v386
      %v1753 = vunpack.c.l.b16 %v387
      %v1754 = vunpack.c.h.b16 %v387
      %v1755 = vunpack.c.l.b16 %v388
      %v1756 = vunpack.c.h.b16 %v388
      %v1757 = vunpack.c.l.b16 %v389
      %v1758 = vunpack.c.h.b16 %v389
      %v1759 = vunpack.c.l.b16 %v390
      %v1760 = vunpack.c.h.b16 %v390
      %v1761 = vunpack.c.l.b16 %v391
      %v1762 = vunpack.c.h.b16 %v391
      %v1763 = vunpack.c.l.b16 %v392
      %v1764 = vunpack.c.h.b16 %v392
      %v1765 = vunpack.c.l.b16 %v393
      %v1766 = vunpack.c.h.b16 %v393
      %v1767 = vunpack.c.l.b16 %v394
      %v1768 = vunpack.c.h.b16 %v394
      %v1769 = vunpack.c.l.b16 %v395
      %v1770 = vunpack.c.h.b16 %v395
      %v1771 = vunpack.c.l.b16 %v396
      %v1772 = vunpack.c.h.b16 %v396
      %v1773 = vunpack.c.l.b16 %v397
      %v1774 = vunpack.c.h.b16 %v397
      %v1775 = vunpack.c.l.b16 %v398
      %v1776 = vunpack.c.h.b16 %v398
      %v1777 = vunpack.c.l.b16 %v399
      %v1778 = vunpack.c.h.b16 %v399
      %v1779 = vunpack.c.l.b16 %v400
      %v1780 = vunpack.c.h.b16 %v400
      %v1781 = vunpack.c.l.b16 %v401
      %v1782 = vunpack.c.h.b16 %v401
      %v1783 = vunpack.c.l.b16 %v402
      %v1784 = vunpack.c.h.b16 %v402
      %v1785 = vunpack.c.l.b16 %v403
      %v1786 = vunpack.c.h.b16 %v403
      %v1787 = vunpack.c.l.b16 %v404
      %v1788 = vunpack.c.h.b16 %v404
      %v1789 = vunpack.c.l.b16 %v405
      %v1790 = vunpack.c.h.b16 %v405
      %v1791 = vunpack.c.l.b16 %v406
      %v1792 = vunpack.c.h.b16 %v406
      %v1793 = vunpack.c.l.b16 %v407
      %v1794 = vunpack.c.h.b16 %v407
      %v1795 = vunpack.c.l.b16 %v408
      %v1796 = vunpack.c.h.b16 %v408
      %v1797 = vunpack.c.l.b16 %v409
      %v1798 = vunpack.c.h.b16 %v409
      %v1799 = vunpack.c.l.b16 %v410
      %v1800 = vunpack.c.h.b16 %v410
      %v1801 = vunpack.c.l.b16 %v411
      %v1802 = vunpack.c.h.b16 %v411
      %v1803 = vunpack.c.l.b16 %v412
      %v1804 = vunpack.c.h.b16 %v412
      %v1805 = vunpack.c.l.b16 %v413
      %v1806 = vunpack.c.h.b16 %v413
      %v1807 = vunpack.c.l.b16 %v414
      %v1808 = vunpack.c.h.b16 %v414
      %v1809 = vunpack.c.l.b16 %v415
      %v1810 = vunpack.c.h.b16 %v415
      %v1811 = vunpack.c.l.b16 %v416
      %v1812 = vunpack.c.h.b16 %v416
      %v1813 = vunpack.c.l.b16 %v417
      %v1814 = vunpack.c.h.b16 %v417
      %v1815 = vunpack.c.l.b16 %v418
      %v1816 = vunpack.c.h.b16 %v418
      %v1817 = vunpack.c.l.b16 %v419
      %v1818 = vunpack.c.h.b16 %v419
      %v1819 = vunpack.c.l.b16 %v420
      %v1820 = vunpack.c.h.b16 %v420
      %v1821 = vunpack.c.l.b16 %v421
      %v1822 = vunpack.c.h.b16 %v421
      %v1823 = vunpack.c.l.b16 %v422
      %v1824 = vunpack.c.h.b16 %v422
      %v1825 = vunpack.c.l.b16 %v423
      %v1826 = vunpack.c.h.b16 %v423
      %v1827 = vunpack.c.l.b16 %v424
      %v1828 = vunpack.c.h.b16 %v424
      %v1829 = vunpack.c.l.b16 %v425
      %v1830 = vunpack.c.h.b16 %v425
      %v1831 = vunpack.c.l.b16 %v426
      %v1832 = vunpack.c.h.b16 %v426
      %v1833 = vunpack.c.l.b16 %v427
      %v1834 = vunpack.c.h.b16 %v427
      %v1835 = vunpack.c.l.b16 %v428
      %v1836 = vunpack.c.h.b16 %v428
      %v1837 = vunpack.c.l.b16 %v429
      %v1838 = vunpack.c.h.b16 %v429
      %v1839 = vunpack.c.l.b16 %v430
      %v1840 = vunpack.c.h.b16 %v430
      %v1841 = vunpack.c.l.b16 %v431
      %v1842 = vunpack.c.h.b16 %v431
      %v1843 = vunpack.c.l.b16 %v432
      %v1844 = vunpack.c.h.b16 %v432
      %v1845 = vunpack.c.l.b16 %v433
      %v1846 = vunpack.c.h.b16 %v433
      %v1847 = vunpack.c.l.b16 %v434
      %v1848 = vunpack.c.h.b16 %v434
      %v1849 = vunpack.c.l.b16 %v435
      %v1850 = vunpack.c.h.b16 %v435
      %v1851 = vunpack.c.l.b16 %v436
      %v1852 = vunpack.c.h.b16 %v436
      %v1853 = vunpack.c.l.b16 %v437
      %v1854 = vunpack.c.h.b16 %v437
      %v1855 = vunpack.c.l.b16 %v438
      %v1856 = vunpack.c.h.b16 %v438
      %v1857 = vunpack.c.l.b16 %v439
      %v1858 = vunpack.c.h.b16 %v439
      %v1859 = vunpack.c.l.b16 %v440
      %v1860 = vunpack.c.h.b16 %v440
      %v1861 = vunpack.c.l.b16 %v441
      %v1862 = vunpack.c.h.b16 %v441
      %v1863 = vunpack.c.l.b16 %v442
      %v1864 = vunpack.c.h.b16 %v442
      %v1865 = vunpack.c.l.b16 %v443
      %v1866 = vunpack.c.h.b16 %v443
      %v1867 = vunpack.c.l.b16 %v444
      %v1868 = vunpack.c.h.b16 %v444
      %v1869 = vunpack.c.l.b16 %v445
      %v1870 = vunpack.c.h.b16 %v445
      %v1871 = vunpack.c.l.b16 %v446
      %v1872 = vunpack.c.h.b16 %v446
      %v1873 = vunpack.c.l.b16 %v447
      %v1874 = vunpack.c.h.b16 %v447
      %v1875 = vunpack.c.l.b16 %v448
      %v1876 = vunpack.c.h.b16 %v448
      %v1877 = vunpack.c.l.b16 %v449
      %v1878 = vunpack.c.h.b16 %v449
      %v1879 = vunpack.c.l.b16 %v450
      %v1880 = vunpack.c.h.b16 %v450
      %v1881 = vunpack.c.l.b16 %v451
      %v1882 = vunpack.c.h.b16 %v451
      %v1883 = vunpack.c.l.b16 %v452
      %v1884 = vunpack.c.h.b16 %v452
      %v1885 = vunpack.c.l.b16 %v453
      %v1886 = vunpack.c.h.b16 %v453
      %v1887 = vunpack.c.l.b16 %v454
      %v1888 = vunpack.c.h.b16 %v454
      %v1889 = vunpack.c.l.b16 %v455
      %v1890 = vunpack.c.h.b16 %v455
      %v1891 = vunpack.c.l.b16 %v456
      %v1892 = vunpack.c.h.b16 %v456
      %v1893 = vunpack.c.l.b16 %v457
      %v1894 = vunpack.c.h.b16 %v457
      %v1895 = vunpack.c.l.b16 %v458
      %v1896 = vunpack.c.h.b16 %v458
      %v1897 = vunpack.c.l.b16 %v459
      %v1898 = vunpack.c.h.b16 %v459
      %v1899 = vunpack.c.l.b16 %v460
      %v1900 = vunpack.c.h.b16 %v460
      %v1901 = vunpack.c.l.b16 %v461
      %v1902 = vunpack.c.h.b16 %v461
      %v1903 = vunpack.c.l.b16 %v462
      %v1904 = vunpack.c.h.b16 %v462
      %v1905 = vunpack.c.l.b16 %v463
      %v1906 = vunpack.c.h.b16 %v463
      %v1907 = vunpack.c.l.b16 %v464
      %v1908 = vunpack.c.h.b16 %v464
      %v1909 = vunpack.c.l.b16 %v465
      %v1910 = vunpack.c.h.b16 %v465
      %v1911 = vunpack.c.l.b16 %v466
      %v1912 = vunpack.c.h.b16 %v466
      %v1913 = vunpack.c.l.b16 %v467
      %v1914 = vunpack.c.h.b16 %v467
      %v1915 = vunpack.c.l.b16 %v468
      %v1916 = vunpack.c.h.b16 %v468
      %v1917 = vunpack.c.l.b16 %v469
      %v1918 = vunpack.c.h.b16 %v469
      %v1919 = vunpack.c.l.b16 %v470
      %v1920 = vunpack.c.h.b16 %v470
      %v1921 = vunpack.c.l.b16 %v471
      %v1922 = vunpack.c.h.b16 %v471
      %v1923 = vunpack.c.l.b16 %v472
      %v1924 = vunpack.c.h.b16 %v472
      %v1925 = vunpack.c.l.b16 %v473
      %v1926 = vunpack.c.h.b16 %v473
      %v1927 = vunpack.c.l.b16 %v474
      %v1928 = vunpack.c.h.b16 %v474
      %v1929 = vunpack.c.l.b16 %v475
      %v1930 = vunpack.c.h.b16 %v475
      %v1931 = vunpack.c.l.b16 %v476
      %v1932 = vunpack.c.h.b16 %v476
      %v1933 = vunpack.c.l.b16 %v477
      %v1934 = vunpack.c.h.b16 %v477
      %v1935 = vunpack.c.l.b16 %v478
      %v1936 = vunpack.c.h.b16 %v478
      %v1937 = vunpack.c.l.b16 %v479
      %v1938 = vunpack.c.h.b16 %v479
      %v1939 = vunpack.c.l.b16 %v480
      %v1940 = vunpack.c.h.b16 %v480
      %v1941 = vunpack.c.l.b16 %v481
      %v1942 = vunpack.c.h.b16 %v481
      %v1943 = vunpack.c.l.b16 %v482
      %v1944 = vunpack.c.h.b16 %v482
      %v1945 = vunpack.c.l.b16 %v483
      %v1946 = vunpack.c.h.b16 %v483
      %v1947 = vunpack.c.l.b16 %v484
      %v1948 = vunpack.c.h.b16 %v484
      %v1949 = vunpack.c.l.b16 %v485
      %v1950 = vunpack.c.h.b16 %v485
      %v1951 = vunpack.c.l.b16 %v486
      %v1952 = vunpack.c.h.b16 %v486
      %v1953 = vunpack.c.l.b16 %v487
      %v1954 = vunpack.c.h.b16 %v487
      %v1955 = vunpack.c.l.b16 %v488
      %v1956 = vunpack.c.h.b16 %v488
      %v1957 = vunpack.c.l.b16 %v489
      %v1958 = vunpack.c.h.b16 %v489
      %v1959 = vunpack.c.l.b16 %v490
      %v1960 = vunpack.c.h.b16 %v490
      %v1961 = vunpack.c.l.b16 %v491
      %v1962 = vunpack.c.h.b16 %v491
      %v1963 = vunpack.c.l.b16 %v492
      %v1964 = vunpack.c.h.b16 %v492
      %v1965 = vunpack.c.l.b16 %v493
      %v1966 = vunpack.c.h.b16 %v493
      %v1967 = vunpack.c.l.b16 %v494
      %v1968 = vunpack.c.h.b16 %v494
      %v1969 = vunpack.c.l.b16 %v495
      %v1970 = vunpack.c.h.b16 %v495
      %v1971 = vunpack.c.l.b16 %v496
      %v1972 = vunpack.c.h.b16 %v496
      %v1973 = vunpack.c.l.b16 %v497
      %v1974 = vunpack.c.h.b16 %v497
      %v1975 = vunpack.c.l.b16 %v498
      %v1976 = vunpack.c.h.b16 %v498
      %v1977 = vunpack.c.l.b16 %v499
      %v1978 = vunpack.c.h.b16 %v499
      %v1979 = vunpack.c.l.b16 %v500
      %v1980 = vunpack.c.h.b16 %v500
      %v1981 = vunpack.c.l.b16 %v501
      %v1982 = vunpack.c.h.b16 %v501
      %v1983 = vunpack.c.l.b16 %v502
      %v1984 = vunpack.c.h.b16 %v502
      %v1985 = vunpack.c.l.b16 %v503
      %v1986 = vunpack.c.h.b16 %v503
      %v1987 = vunpack.c.l.b16 %v504
      %v1988 = vunpack.c.h.b16 %v504
      %v1989 = vunpack.c.l.b16 %v505
      %v1990 = vunpack.c.h.b16 %v505
      %v1991 = vunpack.c.l.b16 %v506
      %v1992 = vunpack.c.h.b16 %v506
      %v1993 = vunpack.c.l.b16 %v507
      %v1994 = vunpack.c.h.b16 %v507
      %v1995 = vunpack.c.l.b16 %v508
      %v1996 = vunpack.c.h.b16 %v508
      %v1997 = vunpack.c.l.b16 %v509
      %v1998 = vunpack.c.h.b16 %v509
      %v1999 = vunpack.c.l.b16 %v510
      %v2000 = vunpack.c.h.b16 %v510
      %v2001 = vunpack.c.l.b16 %v511
      %v2002 = vunpack.c.h.b16 %v511
      %v2003 = vunpack.c.l.b16 %v512
      %v2004 = vunpack.c.h.b16 %v512
      %v2005 = vunpack.c.l.b16 %v513
      %v2006 = vunpack.c.h.b16 %v513
      %v2007 = vunpack.c.l.b16 %v514
      %v2008 = vunpack.c.h.b16 %v514
      %v2009 = vunpack.c.l.b16 %v515
      %v2010 = vunpack.c.h.b16 %v515
      %v2011 = vunpack.c.l.b16 %v516
      %v2012 = vunpack.c.h.b16 %v516
      %v2013 = vunpack.c.l.b16 %v517
      %v2014 = vunpack.c.h.b16 %v517
      %v2015 = vunpack.c.l.b16 %v518
      %v2016 = vunpack.c.h.b16 %v518
      %v2017 = vunpack.c.l.b16 %v519
      %v2018 = vunpack.c.h.b16 %v519
      %v2019 = vunpack.c.l.b16 %v520
      %v2020 = vunpack.c.h.b16 %v520
      %v2021 = vunpack.c.l.b16 %v521
      %v2022 = vunpack.c.h.b16 %v521
      %v2023 = vunpack.c.l.b16 %v522
      %v2024 = vunpack.c.h.b16 %v522
      %v2025 = vunpack.c.l.b16 %v523
      %v2026 = vunpack.c.h.b16 %v523
      %v2027 = vunpack.c.l.b16 %v524
      %v2028 = vunpack.c.h.b16 %v524
      %v2029 = vunpack.c.l.b16 %v525
      %v2030 = vunpack.c.h.b16 %v525
      %v2031 = vunpack.c.l.b16 %v526
      %v2032 = vunpack.c.h.b16 %v526
      %v2033 = vunpack.c.l.b16 %v527
      %v2034 = vunpack.c.h.b16 %v527
      %v2035 = vunpack.c.l.b16 %v528
      %v2036 = vunpack.c.h.b16 %v528
      %v2037 = vunpack.c.l.b16 %v529
      %v2038 = vunpack.c.h.b16 %v529
      %v2039 = vunpack.c.l.b16 %v530
      %v2040 = vunpack.c.h.b16 %v530
      %v2041 = vunpack.c.l.b16 %v531
      %v2042 = vunpack.c.h.b16 %v531
      %v2043 = vunpack.c.l.b16 %v532
      %v2044 = vunpack.c.h.b16 %v532
      %v2045 = vunpack.c.l.b16 %v533
      %v2046 = vunpack.c.h.b16 %v533
      %v2047 = vunpack.c.l.b16 %v534
      %v2048 = vunpack.c.h.b16 %v534
      %v2049 = vunpack.c.l.b16 %v535
      %v2050 = vunpack.c.h.b16 %v535
      %v2051 = vunpack.c.l.b16 %v536
      %v2052 = vunpack.c.h.b16 %v536
      %v2053 = vunpack.c.l.b16 %v537
      %v2054 = vunpack.c.h.b16 %v537
      %v2055 = vunpack.c.l.b16 %v538
      %v2056 = vunpack.c.h.b16 %v538
      %v2057 = vunpack.c.l.b16 %v539
      %v2058 = vunpack.c.h.b16 %v539
      %v2059 = vunpack.c.l.b16 %v540
      %v2060 = vunpack.c.h.b16 %v540
      %v2061 = vunpack.c.l.b16 %v541
      %v2062 = vunpack.c.h.b16 %v541
      %v2063 = vunpack.c.l.b16 %v542
      %v2064 = vunpack.c.h.b16 %v542
      %v2065 = vunpack.c.l.b16 %v543
      %v2066 = vunpack.c.h.b16 %v543
      %v2067 = vunpack.c.l.b16 %v544
      %v2068 = vunpack.c.h.b16 %v544
      %v2069 = vunpack.c.l.b16 %v545
      %v2070 = vunpack.c.h.b16 %v545
      %v2071 = vunpack.c.l.b16 %v546
      %v2072 = vunpack.c.h.b16 %v546
      %v2073 = vunpack.c.l.b16 %v547
      %v2074 = vunpack.c.h.b16 %v547
      %v2075 = vunpack.c.l.b16 %v548
      %v2076 = vunpack.c.h.b16 %v548
      %v2077 = vunpack.c.l.b16 %v549
      %v2078 = vunpack.c.h.b16 %v549
      %v2079 = vunpack.c.l.b16 %v550
      %v2080 = vunpack.c.h.b16 %v550
      %v2081 = vunpack.c.l.b16 %v551
      %v2082 = vunpack.c.h.b16 %v551
      %v2083 = vunpack.c.l.b16 %v552
      %v2084 = vunpack.c.h.b16 %v552
      %v2085 = vunpack.c.l.b16 %v553
      %v2086 = vunpack.c.h.b16 %v553
      %v2087 = vunpack.c.l.b16 %v554
      %v2088 = vunpack.c.h.b16 %v554
      %v2089 = vunpack.c.l.b16 %v555
      %v2090 = vunpack.c.h.b16 %v555
      %v2091 = vunpack.c.l.b16 %v556
      %v2092 = vunpack.c.h.b16 %v556
      %v2093 = vunpack.c.l.b16 %v557
      %v2094 = vunpack.c.h.b16 %v557
      %v2095 = vunpack.c.l.b16 %v558
      %v2096 = vunpack.c.h.b16 %v558
      %v2097 = vunpack.c.l.b16 %v559
      %v2098 = vunpack.c.h.b16 %v559
      %v2099 = vunpack.c.l.b16 %v560
      %v2100 = vunpack.c.h.b16 %v560
      %v2101 = vunpack.c.l.b16 %v561
      %v2102 = vunpack.c.h.b16 %v561
      %v2103 = vunpack.c.l.b16 %v562
      %v2104 = vunpack.c.h.b16 %v562
      %v2105 = vunpack.c.l.b16 %v563
      %v2106 = vunpack.c.h.b16 %v563
      %v2107 = vunpack.c.l.b16 %v564
      %v2108 = vunpack.c.h.b16 %v564
      %v2109 = vunpack.c.l.b16 %v565
      %v2110 = vunpack.c.h.b16 %v565
      %v2111 = vunpack.c.l.b16 %v566
      %v2112 = vunpack.c.h.b16 %v566
      %v2113 = vunpack.c.l.b16 %v567
      %v2114 = vunpack.c.h.b16 %v567
      %v2115 = vunpack.c.l.b16 %v568
      %v2116 = vunpack.c.h.b16 %v568
      %v2117 = vunpack.c.l.b16 %v569
      %v2118 = vunpack.c.h.b16 %v569
      %v2119 = vunpack.c.l.b16 %v570
      %v2120 = vunpack.c.h.b16 %v570
      %v2121 = vunpack.c.l.b16 %v571
      %v2122 = vunpack.c.h.b16 %v571
      %v2123 = vunpack.c.l.b16 %v572
      %v2124 = vunpack.c.h.b16 %v572
      %v2125 = vunpack.c.l.b16 %v573
      %v2126 = vunpack.c.h.b16 %v573
      %v2127 = vunpack.c.l.b16 %v574
      %v2128 = vunpack.c.h.b16 %v574
      %v2129 = vunpack.c.l.b16 %v575
      %v2130 = vunpack.c.h.b16 %v575
      %v2131 = vunpack.c.l.b16 %v576
      %v2132 = vunpack.c.h.b16 %v576
      %v2133 = vunpack.c.l.b16 %v577
      %v2134 = vunpack.c.h.b16 %v577
      %v2135 = vunpack.c.l.b16 %v578
      %v2136 = vunpack.c.h.b16 %v578
      %v2137 = vunpack.c.l.b16 %v579
      %v2138 = vunpack.c.h.b16 %v579
      %v2139 = vunpack.c.l.b16 %v580
      %v2140 = vunpack.c.h.b16 %v580
      %v2141 = vunpack.c.l.b16 %v581
      %v2142 = vunpack.c.h.b16 %v581
      %v2143 = vunpack.c.l.b16 %v582
      %v2144 = vunpack.c.h.b16 %v582
      %v2145 = vunpack.c.l.b16 %v583
      %v2146 = vunpack.c.h.b16 %v583
      %v2147 = vunpack.c.l.b16 %v584
      %v2148 = vunpack.c.h.b16 %v584
      %v2149 = vunpack.c.l.b16 %v585
      %v2150 = vunpack.c.h.b16 %v585
      %v2151 = vunpack.c.l.b16 %v586
      %v2152 = vunpack.c.h.b16 %v586
      %v2153 = vunpack.c.l.b16 %v587
      %v2154 = vunpack.c.h.b16 %v587
      %v2155 = vunpack.c.l.b16 %v588
      %v2156 = vunpack.c.h.b16 %v588
      %v2157 = vunpack.c.l.b16 %v589
      %v2158 = vunpack.c.h.b16 %v589
      %v2159 = vunpack.c.l.b16 %v590
      %v2160 = vunpack.c.h.b16 %v590
      %v2161 = vunpack.c.l.b16 %v591
      %v2162 = vunpack.c.h.b16 %v591
      %v2163 = vunpack.c.l.b16 %v592
      %v2164 = vunpack.c.h.b16 %v592
      %v2165 = vunpack.c.l.b16 %v593
      %v2166 = vunpack.c.h.b16 %v593
      %v2167 = vunpack.c.l.b16 %v594
      %v2168 = vunpack.c.h.b16 %v594
      %v2169 = vunpack.c.l.b16 %v595
      %v2170 = vunpack.c.h.b16 %v595
      %v2171 = vunpack.c.l.b16 %v596
      %v2172 = vunpack.c.h.b16 %v596
      %v2173 = vunpack.c.l.b16 %v597
      %v2174 = vunpack.c.h.b16 %v597
      %v2175 = vunpack.c.l.b16 %v598
      %v2176 = vunpack.c.h.b16 %v598
      %v2177 = vunpack.c.l.b16 %v599
      %v2178 = vunpack.c.h.b16 %v599
      %v2179 = vunpack.c.l.b16 %v600
      %v2180 = vunpack.c.h.b16 %v600
      %v2181 = vunpack.c.l.b16 %v601
      %v2182 = vunpack.c.h.b16 %v601
      %v2183 = vunpack.c.l.b16 %v602
      %v2184 = vunpack.c.h.b16 %v602
      %v2185 = vunpack.c.l.b16 %v603
      %v2186 = vunpack.c.h.b16 %v603
      %v2187 = vunpack.c.l.b16 %v604
      %v2188 = vunpack.c.h.b16 %v604
      %v2189 = vunpack.c.l.b16 %v605
      %v2190 = vunpack.c.h.b16 %v605
      %v2191 = vunpack.c.l.b16 %v606
      %v2192 = vunpack.c.h.b16 %v606
      %v2193 = vunpack.c.l.b16 %v607
      %v2194 = vunpack.c.h.b16 %v607
      %v2195 = vunpack.c.l.b16 %v608
      %v2196 = vunpack.c.h.b16 %v608
      %v2197 = vunpack.c.l.b16 %v609
      %v2198 = vunpack.c.h.b16 %v609
      %v2199 = vunpack.c.l.b16 %v610
      %v2200 = vunpack.c.h.b16 %v610
      %v2201 = vunpack.c.l.b16 %v611
      %v2202 = vunpack.c.h.b16 %v611
      %v2203 = vunpack.c.l.b16 %v612
      %v2204 = vunpack.c.h.b16 %v612
      %v2205 = vunpack.c.l.b16 %v613
      %v2206 = vunpack.c.h.b16 %v613
      %v2207 = vunpack.c.l.b16 %v614
      %v2208 = vunpack.c.h.b16 %v614
      %v2209 = vunpack.c.l.b16 %v615
      %v2210 = vunpack.c.h.b16 %v615
      %v2211 = vunpack.c.l.b16 %v616
      %v2212 = vunpack.c.h.b16 %v616
      %v2213 = vunpack.c.l.b16 %v617
      %v2214 = vunpack.c.h.b16 %v617
      %v2215 = vunpack.c.l.b16 %v618
      %v2216 = vunpack.c.h.b16 %v618
      %v2217 = vunpack.c.l.b16 %v619
      %v2218 = vunpack.c.h.b16 %v619
      %v2219 = vunpack.c.l.b16 %v620
      %v2220 = vunpack.c.h.b16 %v620
      %v2221 = vunpack.c.l.b16 %v621
      %v2222 = vunpack.c.h.b16 %v621
      %v2223 = vunpack.c.l.b16 %v622
      %v2224 = vunpack.c.h.b16 %v622
      %v2225 = vunpack.c.l.b16 %v623
      %v2226 = vunpack.c.h.b16 %v623
      %v2227 = vunpack.c.l.b16 %v624
      %v2228 = vunpack.c.h.b16 %v624
      %v2229 = vunpack.c.l.b16 %v625
      %v2230 = vunpack.c.h.b16 %v625
      %v2231 = vunpack.c.l.b16 %v626
      %v2232 = vunpack.c.h.b16 %v626
      %v2233 = vunpack.c.l.b16 %v627
      %v2234 = vunpack.c.h.b16 %v627
      %v2235 = vunpack.c.l.b16 %v628
      %v2236 = vunpack.c.h.b16 %v628
      %v2237 = vunpack.c.l.b16 %v629
      %v2238 = vunpack.c.h.b16 %v629
      %v2239 = vunpack.c.l.b16 %v630
      %v2240 = vunpack.c.h.b16 %v630
      %v2241 = vunpack.c.l.b16 %v631
      %v2242 = vunpack.c.h.b16 %v631
      %v2243 = vunpack.c.l.b16 %v632
      %v2244 = vunpack.c.h.b16 %v632
      %v2245 = vunpack.c.l.b16 %v633
      %v2246 = vunpack.c.h.b16 %v633
      %v2247 = vunpack.c.l.b16 %v634
      %v2248 = vunpack.c.h.b16 %v634
      %v2249 = vunpack.c.l.b16 %v635
      %v2250 = vunpack.c.h.b16 %v635
      %v2251 = vunpack.c.l.b16 %v636
      %v2252 = vunpack.c.h.b16 %v636
      %v2253 = vunpack.c.l.b16 %v637
      %v2254 = vunpack.c.h.b16 %v637
      %v2255 = vunpack.c.l.b16 %v638
      %v2256 = vunpack.c.h.b16 %v638
      %v2257 = vunpack.c.l.b16 %v639
      %v2258 = vunpack.c.h.b16 %v639
      %v2259 = vunpack.c.l.b16 %v640
      %v2260 = vunpack.c.h.b16 %v640
      %v2261 = vunpack.c.l.b16 %v641
      %v2262 = vunpack.c.h.b16 %v641
      %v2263 = vunpack.c.l.b16 %v642
      %v2264 = vunpack.c.h.b16 %v642
      %v2265 = vunpack.c.l.b16 %v643
      %v2266 = vunpack.c.h.b16 %v643
      %v2267 = vunpack.c.l.b16 %v644
      %v2268 = vunpack.c.h.b16 %v644
      %v2269 = vunpack.c.l.b16 %v645
      %v2270 = vunpack.c.h.b16 %v645
      %v2271 = vunpack.c.l.b16 %v646
      %v2272 = vunpack.c.h.b16 %v646
      %v2273 = vunpack.c.l.b16 %v647
      %v2274 = vunpack.c.h.b16 %v647
      %v2275 = vunpack.c.l.b16 %v648
      %v2276 = vunpack.c.h.b16 %v648
      %v2277 = vunpack.c.l.b16 %v649
      %v2278 = vunpack.c.h.b16 %v649
      %v2279 = vunpack.c.l.b16 %v650
      %v2280 = vunpack.c.h.b16 %v650
      %v2281 = vunpack.c.l.b16 %v651
      %v2282 = vunpack.c.h.b16 %v651
      %v2283 = vunpack.c.l.b16 %v652
      %v2284 = vunpack.c.h.b16 %v652
      %v2285 = vunpack.c.l.b16 %v653
      %v2286 = vunpack.c.h.b16 %v653
      %v2287 = vunpack.c.l.b16 %v654
      %v2288 = vunpack.c.h.b16 %v654
      %v2289 = vunpack.c.l.b16 %v655
      %v2290 = vunpack.c.h.b16 %v655
      %v2291 = vunpack.c.l.b16 %v656
      %v2292 = vunpack.c.h.b16 %v656
      %v2293 = vunpack.c.l.b16 %v657
      %v2294 = vunpack.c.h.b16 %v657
      %v2295 = vunpack.c.l.b16 %v658
      %v2296 = vunpack.c.h.b16 %v658
      %v2297 = vunpack.c.l.b16 %v659
      %v2298 = vunpack.c.h.b16 %v659
      %v2299 = vunpack.c.l.b16 %v660
      %v2300 = vunpack.c.h.b16 %v660
      %v2301 = vunpack.c.l.b16 %v661
      %v2302 = vunpack.c.h.b16 %v661
      %v2303 = vunpack.c.l.b16 %v662
      %v2304 = vunpack.c.h.b16 %v662
      %v2305 = vunpack.c.l.b16 %v663
      %v2306 = vunpack.c.h.b16 %v663
      %v2307 = vunpack.c.l.b16 %v664
      %v2308 = vunpack.c.h.b16 %v664
      %v2309 = vunpack.c.l.b16 %v665
      %v2310 = vunpack.c.h.b16 %v665
      %v2311 = vunpack.c.l.b16 %v666
      %v2312 = vunpack.c.h.b16 %v666
      %v2313 = vunpack.c.l.b16 %v667
      %v2314 = vunpack.c.h.b16 %v667
      %v2315 = vunpack.c.l.b16 %v668
      %v2316 = vunpack.c.h.b16 %v668
      %v2317 = vunpack.c.l.b16 %v669
      %v2318 = vunpack.c.h.b16 %v669
      %v2319 = vunpack.c.l.b16 %v670
      %v2320 = vunpack.c.h.b16 %v670
      %v2321 = vunpack.c.l.b16 %v671
      %v2322 = vunpack.c.h.b16 %v671
      %v2323 = vunpack.c.l.b16 %v672
      %v2324 = vunpack.c.h.b16 %v672
      %v2325 = vunpack.c.l.b16 %v673
      %v2326 = vunpack.c.h.b16 %v673
      %v2327 = vunpack.c.l.b16 %v674
      %v2328 = vunpack.c.h.b16 %v674
      %v2329 = vunpack.c.l.b16 %v675
      %v2330 = vunpack.c.h.b16 %v675
      %v2331 = vunpack.c.l.b16 %v676
      %v2332 = vunpack.c.h.b16 %v676
      %v2333 = vunpack.c.l.b16 %v677
      %v2334 = vunpack.c.h.b16 %v677
      %v2335 = vunpack.c.l.b16 %v678
      %v2336 = vunpack.c.h.b16 %v678
      %v2337 = vunpack.c.l.b16 %v679
      %v2338 = vunpack.c.h.b16 %v679
      %v2339 = vunpack.c.l.b16 %v680
      %v2340 = vunpack.c.h.b16 %v680
      %v2341 = vunpack.c.l.b16 %v681
      %v2342 = vunpack.c.h.b16 %v681
      %v2343 = vunpack.c.l.b16 %v682
      %v2344 = vunpack.c.h.b16 %v682
      %v2345 = vunpack.c.l.b16 %v683
      %v2346 = vunpack.c.h.b16 %v683
      %v2347 = vunpack.c.l.b16 %v684
      %v2348 = vunpack.c.h.b16 %v684
      %v2349 = vunpack.c.l.b16 %v685
      %v2350 = vunpack.c.h.b16 %v685
      %v2351 = vunpack.c.l.b16 %v686
      %v2352 = vunpack.c.h.b16 %v686
      %v2353 = vunpack.c.l.b16 %v687
      %v2354 = vunpack.c.h.b16 %v687
      %v2355 = vunpack.c.l.b16 %v688
      %v2356 = vunpack.c.h.b16 %v688
      %v2357 = vunpack.c.l.b16 %v689
      %v2358 = vunpack.c.h.b16 %v689
      %v2359 = vunpack.c.l.b16 %v690
      %v2360 = vunpack.c.h.b16 %v690
      %v2361 = vunpack.c.l.b16 %v691
      %v2362 = vunpack.c.h.b16 %v691
      %v2363 = vunpack.c.l.b16 %v692
      %v2364 = vunpack.c.h.b16 %v692
      %v2365 = vunpack.c.l.b16 %v693
      %v2366 = vunpack.c.h.b16 %v693
      %v2367 = vunpack.c.l.b16 %v694
      %v2368 = vunpack.c.h.b16 %v694
      %v2369 = vunpack.c.l.b16 %v695
      %v2370 = vunpack.c.h.b16 %v695
      %v2371 = vunpack.c.l.b16 %v696
      %v2372 = vunpack.c.h.b16 %v696
      %v2373 = vunpack.c.l.b16 %v697
      %v2374 = vunpack.c.h.b16 %v697
      %v2375 = vunpack.c.l.b16 %v698
      %v2376 = vunpack.c.h.b16 %v698
      %v2377 = vunpack.c.l.b16 %v699
      %v2378 = vunpack.c.h.b16 %v699
      %v2379 = vunpack.c.l.b16 %v700
      %v2380 = vunpack.c.h.b16 %v700
      %v2381 = vunpack.c.l.b16 %v701
      %v2382 = vunpack.c.h.b16 %v701
      %v2383 = vunpack.c.l.b16 %v702
      %v2384 = vunpack.c.h.b16 %v702
      %v2385 = vunpack.c.l.b16 %v703
      %v2386 = vunpack.c.h.b16 %v703
      %v2387 = vunpack.c.l.b16 %v704
      %v2388 = vunpack.c.h.b16 %v704
      %v2389 = vunpack.c.l.b16 %v705
      %v2390 = vunpack.c.h.b16 %v705
      %v2391 = vunpack.c.l.b16 %v706
      %v2392 = vunpack.c.h.b16 %v706
      %v2393 = vunpack.c.l.b16 %v707
      %v2394 = vunpack.c.h.b16 %v707
      %v2395 = vunpack.c.l.b16 %v708
      %v2396 = vunpack.c.h.b16 %v708
      %v2397 = vunpack.c.l.b16 %v709
      %v2398 = vunpack.c.h.b16 %v709
      %v2399 = vunpack.c.l.b16 %v710
      %v2400 = vunpack.c.h.b16 %v710
      %v2401 = vunpack.c.l.b16 %v711
      %v2402 = vunpack.c.h.b16 %v711
      %v2403 = vunpack.c.l.b16 %v712
      %v2404 = vunpack.c.h.b16 %v712
      %v2405 = vunpack.c.l.b16 %v713
      %v2406 = vunpack.c.h.b16 %v713
      %v2407 = vunpack.c.l.b16 %v714
      %v2408 = vunpack.c.h.b16 %v714
      %v2409 = vunpack.c.l.b16 %v715
      %v2410 = vunpack.c.h.b16 %v715
      %v2411 = vunpack.c.l.b16 %v716
      %v2412 = vunpack.c.h.b16 %v716
      %v2413 = vunpack.c.l.b16 %v717
      %v2414 = vunpack.c.h.b16 %v717
      %v2415 = vunpack.c.l.b16 %v718
      %v2416 = vunpack.c.h.b16 %v718
      %v2417 = vunpack.c.l.b16 %v719
      %v2418 = vunpack.c.h.b16 %v719
      %v2419 = vunpack.c.l.b16 %v720
      %v2420 = vunpack.c.h.b16 %v720
      %v2421 = vunpack.c.l.b16 %v721
      %v2422 = vunpack.c.h.b16 %v721
      %v2423 = vunpack.c.l.b16 %v722
      %v2424 = vunpack.c.h.b16 %v722
      %v2425 = vunpack.c.l.b16 %v723
      %v2426 = vunpack.c.h.b16 %v723
      %v2427 = vunpack.c.l.b16 %v724
      %v2428 = vunpack.c.h.b16 %v724
      %v2429 = vunpack.c.l.b16 %v725
      %v2430 = vunpack.c.h.b16 %v725
      %v2431 = vunpack.c.l.b16 %v726
      %v2432 = vunpack.c.h.b16 %v726
      %v2433 = vunpack.c.l.b16 %v727
      %v2434 = vunpack.c.h.b16 %v727
      %v2435 = vunpack.c.l.b16 %v728
      %v2436 = vunpack.c.h.b16 %v728
      %v2437 = vunpack.c.l.b16 %v729
      %v2438 = vunpack.c.h.b16 %v729
      %v2439 = vunpack.c.l.b16 %v730
      %v2440 = vunpack.c.h.b16 %v730
      %v2441 = vunpack.c.l.b16 %v731
      %v2442 = vunpack.c.h.b16 %v731
      %v2443 = vunpack.c.l.b16 %v732
      %v2444 = vunpack.c.h.b16 %v732
      %v2445 = vunpack.c.l.b16 %v733
      %v2446 = vunpack.c.h.b16 %v733
      %v2447 = vunpack.c.l.b16 %v734
      %v2448 = vunpack.c.h.b16 %v734
      %v2449 = vunpack.c.l.b16 %v735
      %v2450 = vunpack.c.h.b16 %v735
      %v2451 = vunpack.c.l.b16 %v736
      %v2452 = vunpack.c.h.b16 %v736
      %v2453 = vunpack.c.l.b16 %v737
      %v2454 = vunpack.c.h.b16 %v737
      %v2455 = vunpack.c.l.b16 %v738
      %v2456 = vunpack.c.h.b16 %v738
      %v2457 = vunpack.c.l.b16 %v739
      %v2458 = vunpack.c.h.b16 %v739
      %v2459 = vunpack.c.l.b16 %v740
      %v2460 = vunpack.c.h.b16 %v740
      %v2461 = vunpack.c.l.b16 %v741
      %v2462 = vunpack.c.h.b16 %v741
      %v2463 = vunpack.c.l.b16 %v742
      %v2464 = vunpack.c.h.b16 %v742
      %v2465 = vunpack.c.l.b16 %v743
      %v2466 = vunpack.c.h.b16 %v743
      %v2467 = vunpack.c.l.b16 %v744
      %v2468 = vunpack.c.h.b16 %v744
      %v2469 = vunpack.c.l.b16 %v745
      %v2470 = vunpack.c.h.b16 %v745
      %v2471 = vunpack.c.l.b16 %v746
      %v2472 = vunpack.c.h.b16 %v746
      %v2473 = vunpack.c.l.b16 %v747
      %v2474 = vunpack.c.h.b16 %v747
      %v2475 = vunpack.c.l.b16 %v748
      %v2476 = vunpack.c.h.b16 %v748
      %v2477 = vunpack.c.l.b16 %v749
      %v2478 = vunpack.c.h.b16 %v749
      %v2479 = vunpack.c.l.b16 %v750
      %v2480 = vunpack.c.h.b16 %v750
      %v2481 = vunpack.c.l.b16 %v751
      %v2482 = vunpack.c.h.b16 %v751
      %v2483 = vunpack.c.l.b16 %v752
      %v2484 = vunpack.c.h.b16 %v752
      %v2485 = vunpack.c.l.b16 %v753
      %v2486 = vunpack.c.h.b16 %v753
      %v2487 = vunpack.c.l.b16 %v754
      %v2488 = vunpack.c.h.b16 %v754
      %v2489 = vunpack.c.l.b16 %v755
      %v2490 = vunpack.c.h.b16 %v755
      %v2491 = vunpack.c.l.b16 %v756
      %v2492 = vunpack.c.h.b16 %v756
      %v2493 = vunpack.c.l.b16 %v757
      %v2494 = vunpack.c.h.b16 %v757
      %v2495 = vunpack.c.l.b16 %v758
      %v2496 = vunpack.c.h.b16 %v758
      %v2497 = vunpack.c.l.b16 %v759
      %v2498 = vunpack.c.h.b16 %v759
      %v2499 = vunpack.c.l.b16 %v760
      %v2500 = vunpack.c.h.b16 %v760
      %v2501 = vunpack.c.l.b16 %v761
      %v2502 = vunpack.c.h.b16 %v761
      %v2503 = vunpack.c.l.b16 %v762
      %v2504 = vunpack.c.h.b16 %v762
      %v2505 = vunpack.c.l.b16 %v763
      %v2506 = vunpack.c.h.b16 %v763
      %v2507 = vunpack.c.l.b16 %v764
      %v2508 = vunpack.c.h.b16 %v764
      %v2509 = vunpack.c.l.b16 %v765
      %v2510 = vunpack.c.h.b16 %v765
      %v2511 = vunpack.c.l.b16 %v766
      %v2512 = vunpack.c.h.b16 %v766
      %v2513 = vunpack.c.l.b16 %v767
      %v2514 = vunpack.c.h.b16 %v767
      %v2515 = vunpack.c.l.b16 %v768
      %v2516 = vunpack.c.h.b16 %v768
      %v2517 = vunpack.c.l.b16 %v769
      %v2518 = vunpack.c.h.b16 %v769
      %v2519 = vunpack.c.l.b16 %v770
      %v2520 = vunpack.c.h.b16 %v770
      %v2521 = vunpack.c.l.b16 %v771
      %v2522 = vunpack.c.h.b16 %v771
      %v2523 = vunpack.c.l.b16 %v772
      %v2524 = vunpack.c.h.b16 %v772
      %v2525 = vunpack.c.l.b16 %v773
      %v2526 = vunpack.c.h.b16 %v773
      %v2527 = vunpack.c.l.b16 %v774
      %v2528 = vunpack.c.h.b16 %v774
      %v2529 = vunpack.c.l.b16 %v775
      %v2530 = vunpack.c.h.b16 %v775
      %v2531 = vunpack.c.l.b16 %v776
      %v2532 = vunpack.c.h.b16 %v776
      %v2533 = vunpack.c.l.b16 %v777
      %v2534 = vunpack.c.h.b16 %v777
      %v2535 = vunpack.c.l.b16 %v778
      %v2536 = vunpack.c.h.b16 %v778
      %v2537 = vunpack.c.l.b16 %v779
      %v2538 = vunpack.c.h.b16 %v779
      %v2539 = vunpack.c.l.b16 %v780
      %v2540 = vunpack.c.h.b16 %v780
      %v2541 = vunpack.c.l.b16 %v781
      %v2542 = vunpack.c.h.b16 %v781
      %v2543 = vunpack.c.l.b16 %v782
      %v2544 = vunpack.c.h.b16 %v782
      %v2545 = vunpack.c.l.b16 %v783
      %v2546 = vunpack.c.h.b16 %v783
      %v2547 = vunpack.c.l.b16 %v784
      %v2548 = vunpack.c.h.b16 %v784
      %v2549 = vunpack.c.l.b16 %v785
      %v2550 = vunpack.c.h.b16 %v785
      %v2551 = vunpack.c.l.b16 %v786
      %v2552 = vunpack.c.h.b16 %v786
      %v2553 = vunpack.c.l.b16 %v787
      %v2554 = vunpack.c.h.b16 %v787
      %v2555 = vunpack.c.l.b16 %v788
      %v2556 = vunpack.c.h.b16 %v788
      %v2557 = vunpack.c.l.b16 %v789
      %v2558 = vunpack.c.h.b16 %v789
      %v2559 = vunpack.c.l.b16 %v790
      %v2560 = vunpack.c.h.b16 %v790
      %v2561 = vpack.c.b16 %v1473, %v1409
      %v2562 = vpack.c.b16 %v1474, %v1410
      %v2563 = vpack.c.b16 %v1475, %v1411
      %v2564 = vpack.c.b16 %v1476, %v1412
      %v2565 = vpack.c.b16 %v1477, %v1413
      %v2566 = vpack.c.b16 %v1478, %v1414
      %v2567 = vpack.c.b16 %v1479, %v1415
      %v2568 = vpack.c.b16 %v1480, %v1416
      %v2569 = vpack.c.b16 %v1481, %v1417
      %v2570 = vpack.c.b16 %v1482, %v1418
      %v2571 = vpack.c.b16 %v1483, %v1419
      %v2572 = vpack.c.b16 %v1484, %v1420
      %v2573 = vpack.c.b16 %v1485, %v1421
      %v2574 = vpack.c.b16 %v1486, %v1422
      %v2575 = vpack.c.b16 %v1487, %v1423
      %v2576 = vpack.c.b16 %v1488, %v1424
      %v2577 = vpack.c.b16 %v1489, %v1425
      %v2578 = vpack.c.b16 %v1490, %v1426
      %v2579 = vpack.c.b16 %v1491, %v1427
      %v2580 = vpack.c.b16 %v1492, %v1428
      %v2581 = vpack.c.b16 %v1493, %v1429
      %v2582 = vpack.c.b16 %v1494, %v1430
      %v2583 = vpack.c.b16 %v1495, %v1431
      %v2584 = vpack.c.b16 %v1496, %v1432
      %v2585 = vpack.c.b16 %v1497, %v1433
      %v2586 = vpack.c.b16 %v1498, %v1434
      %v2587 = vpack.c.b16 %v1499, %v1435
      %v2588 = vpack.c.b16 %v1500, %v1436
      %v2589 = vpack.c.b16 %v1501, %v1437
      %v2590 = vpack.c.b16 %v1502, %v1438
      %v2591 = vpack.c.b16 %v1503, %v1439
      %v2592 = vpack.c.b16 %v1504, %v1440
      %v2593 = vpack.c.b16 %v1505, %v1441
      %v2594 = vpack.c.b16 %v1506, %v1442
      %v2595 = vpack.c.b16 %v1507, %v1443
      %v2596 = vpack.c.b16 %v1508, %v1444
      %v2597 = vpack.c.b16 %v1509, %v1445
      %v2598 = vpack.c.b16 %v1510, %v1446
      %v2599 = vpack.c.b16 %v1511, %v1447
      %v2600 = vpack.c.b16 %v1512, %v1448
      %v2601 = vpack.c.b16 %v1513, %v1449
      %v2602 = vpack.c.b16 %v1514, %v1450
      %v2603 = vpack.c.b16 %v1515, %v1451
      %v2604 = vpack.c.b16 %v1516, %v1452
      %v2605 = vpack.c.b16 %v1517, %v1453
      %v2606 = vpack.c.b16 %v1518, %v1454
      %v2607 = vpack.c.b16 %v1519, %v1455
      %v2608 = vpack.c.b16 %v1520, %v1456
      %v2609 = vpack.c.b16 %v1521, %v1457
      %v2610 = vpack.c.b16 %v1522, %v1458
      %v2611 = vpack.c.b16 %v1523, %v1459
      %v2612 = vpack.c.b16 %v1524, %v1460
      %v2613 = vpack.c.b16 %v1525, %v1461
      %v2614 = vpack.c.b16 %v1526, %v1462
      %v2615 = vpack.c.b16 %v1527, %v1463
      %v2616 = vpack.c.b16 %v1528, %v1464
      %v2617 = vpack.c.b16 %v1529, %v1465
      %v2618 = vpack.c.b16 %v1530, %v1466
      %v2619 = vpack.c.b16 %v1531, %v1467
      %v2620 = vpack.c.b16 %v1532, %v1468
      %v2621 = vpack.c.b16 %v1533, %v1469
      %v2622 = vpack.c.b16 %v1534, %v1470
      %v2623 = vpack.c.b16 %v1535, %v1471
      %v2624 = vpack.c.b16 %v1536, %v1472
      %v2625 = vpack.c.b16 %v1601, %v1537
      %v2626 = vpack.c.b16 %v1602, %v1538
      %v2627 = vpack.c.b16 %v1603, %v1539
      %v2628 = vpack.c.b16 %v1604, %v1540
      %v2629 = vpack.c.b16 %v1605, %v1541
      %v2630 = vpack.c.b16 %v1606, %v1542
      %v2631 = vpack.c.b16 %v1607, %v1543
      %v2632 = vpack.c.b16 %v1608, %v1544
      %v2633 = vpack.c.b16 %v1609, %v1545
      %v2634 = vpack.c.b16 %v1610, %v1546
      %v2635 = vpack.c.b16 %v1611, %v1547
      %v2636 = vpack.c.b16 %v1612, %v1548
      %v2637 = vpack.c.b16 %v1613, %v1549
      %v2638 = vpack.c.b16 %v1614, %v1550
      %v2639 = vpack.c.b16 %v1615, %v1551
      %v2640 = vpack.c.b16 %v1616, %v1552
      %v2641 = vpack.c.b16 %v1617, %v1553
      %v2642 = vpack.c.b16 %v1618, %v1554
      %v2643 = vpack.c.b16 %v1619, %v1555
      %v2644 = vpack.c.b16 %v1620, %v1556
      %v2645 = vpack.c.b16 %v1621, %v1557
      %v2646 = vpack.c.b16 %v1622, %v1558
      %v2647 = vpack.c.b16 %v1623, %v1559
      %v2648 = vpack.c.b16 %v1624, %v1560
      %v2649 = vpack.c.b16 %v1625, %v1561
      %v2650 = vpack.c.b16 %v1626, %v1562
      %v2651 = vpack.c.b16 %v1627, %v1563
      %v2652 = vpack.c.b16 %v1628, %v1564
      %v2653 = vpack.c.b16 %v1629, %v1565
      %v2654 = vpack.c.b16 %v1630, %v1566
      %v2655 = vpack.c.b16 %v1631, %v1567
      %v2656 = vpack.c.b16 %v1632, %v1568
      %v2657 = vpack.c.b16 %v1633, %v1569
      %v2658 = vpack.c.b16 %v1634, %v1570
      %v2659 = vpack.c.b16 %v1635, %v1571
      %v2660 = vpack.c.b16 %v1636, %v1572
      %v2661 = vpack.c.b16 %v1637, %v1573
      %v2662 = vpack.c.b16 %v1638, %v1574
      %v2663 = vpack.c.b16 %v1639, %v1575
      %v2664 = vpack.c.b16 %v1640, %v1576
      %v2665 = vpack.c.b16 %v1641, %v1577
      %v2666 = vpack.c.b16 %v1642, %v1578
      %v2667 = vpack.c.b16 %v1643, %v1579
      %v2668 = vpack.c.b16 %v1644, %v1580
      %v2669 = vpack.c.b16 %v1645, %v1581
      %v2670 = vpack.c.b16 %v1646, %v1582
      %v2671 = vpack.c.b16 %v1647, %v1583
      %v2672 = vpack.c.b16 %v1648, %v1584
      %v2673 = vpack.c.b16 %v1649, %v1585
      %v2674 = vpack.c.b16 %v1650, %v1586
      %v2675 = vpack.c.b16 %v1651, %v1587
      %v2676 = vpack.c.b16 %v1652, %v1588
      %v2677 = vpack.c.b16 %v1653, %v1589
      %v2678 = vpack.c.b16 %v1654, %v1590
      %v2679 = vpack.c.b16 %v1655, %v1591
      %v2680 = vpack.c.b16 %v1656, %v1592
      %v2681 = vpack.c.b16 %v1657, %v1593
      %v2682 = vpack.c.b16 %v1658, %v1594
      %v2683 = vpack.c.b16 %v1659, %v1595
      %v2684 = vpack.c.b16 %v1660, %v1596
      %v2685 = vpack.c.b16 %v1661, %v1597
      %v2686 = vpack.c.b16 %v1662, %v1598
      %v2687 = vpack.c.b16 %v1663, %v1599
      %v2688 = vpack.c.b16 %v1664, %v1600
      %v2689 = vpack.c.b16 %v1729, %v1665
      %v2690 = vpack.c.b16 %v1730, %v1666
      %v2691 = vpack.c.b16 %v1731, %v1667
      %v2692 = vpack.c.b16 %v1732, %v1668
      %v2693 = vpack.c.b16 %v1733, %v1669
      %v2694 = vpack.c.b16 %v1734, %v1670
      %v2695 = vpack.c.b16 %v1735, %v1671
      %v2696 = vpack.c.b16 %v1736, %v1672
      %v2697 = vpack.c.b16 %v1737, %v1673
      %v2698 = vpack.c.b16 %v1738, %v1674
      %v2699 = vpack.c.b16 %v1739, %v1675
      %v2700 = vpack.c.b16 %v1740, %v1676
      %v2701 = vpack.c.b16 %v1741, %v1677
      %v2702 = vpack.c.b16 %v1742, %v1678
      %v2703 = vpack.c.b16 %v1743, %v1679
      %v2704 = vpack.c.b16 %v1744, %v1680
      %v2705 = vpack.c.b16 %v1745, %v1681
      %v2706 = vpack.c.b16 %v1746, %v1682
      %v2707 = vpack.c.b16 %v1747, %v1683
      %v2708 = vpack.c.b16 %v1748, %v1684
      %v2709 = vpack.c.b16 %v1749, %v1685
      %v2710 = vpack.c.b16 %v1750, %v1686
      %v2711 = vpack.c.b16 %v1751, %v1687
      %v2712 = vpack.c.b16 %v1752, %v1688
      %v2713 = vpack.c.b16 %v1753, %v1689
      %v2714 = vpack.c.b16 %v1754, %v1690
      %v2715 = vpack.c.b16 %v1755, %v1691
      %v2716 = vpack.c.b16 %v1756, %v1692
      %v2717 = vpack.c.b16 %v1757, %v1693
      %v2718 = vpack.c.b16 %v1758, %v1694
      %v2719 = vpack.c.b16 %v1759, %v1695
      %v2720 = vpack.c.b16 %v1760, %v1696
      %v2721 = vpack.c.b16 %v1761, %v1697
      %v2722 = vpack.c.b16 %v1762, %v1698
      %v2723 = vpack.c.b16 %v1763, %v1699
      %v2724 = vpack.c.b16 %v1764, %v1700
      %v2725 = vpack.c.b16 %v1765, %v1701
      %v2726 = vpack.c.b16 %v1766, %v1702
      %v2727 = vpack.c.b16 %v1767, %v1703
      %v2728 = vpack.c.b16 %v1768, %v1704
      %v2729 = vpack.c.b16 %v1769, %v1705
      %v2730 = vpack.c.b16 %v1770, %v1706
      %v2731 = vpack.c.b16 %v1771, %v1707
      %v2732 = vpack.c.b16 %v1772, %v1708
      %v2733 = vpack.c.b16 %v1773, %v1709
      %v2734 = vpack.c.b16 %v1774, %v1710
      %v2735 = vpack.c.b16 %v1775, %v1711
      %v2736 = vpack.c.b16 %v1776, %v1712
      %v2737 = vpack.c.b16 %v1777, %v1713
      %v2738 = vpack.c.b16 %v1778, %v1714
      %v2739 = vpack.c.b16 %v1779, %v1715
      %v2740 = vpack.c.b16 %v1780, %v1716
      %v2741 = vpack.c.b16 %v1781, %v1717
      %v2742 = vpack.c.b16 %v1782, %v1718
      %v2743 = vpack.c.b16 %v1783, %v1719
      %v2744 = vpack.c.b16 %v1784, %v1720
      %v2745 = vpack.c.b16 %v1785, %v1721
      %v2746 = vpack.c.b16 %v1786, %v1722
      %v2747 = vpack.c.b16 %v1787, %v1723
      %v2748 = vpack.c.b16 %v1788, %v1724
      %v2749 = vpack.c.b16 %v1789, %v1725
      %v2750 = vpack.c.b16 %v1790, %v1726
      %v2751 = vpack.c.b16 %v1791, %v1727
      %v2752 = vpack.c.b16 %v1792, %v1728
      %v2753 = vpack.c.b16 %v1857, %v1793
      %v2754 = vpack.c.b16 %v1858, %v1794
      %v2755 = vpack.c.b16 %v1859, %v1795
      %v2756 = vpack.c.b16 %v1860, %v1796
      %v2757 = vpack.c.b16 %v1861, %v1797
      %v2758 = vpack.c.b16 %v1862, %v1798
      %v2759 = vpack.c.b16 %v1863, %v1799
      %v2760 = vpack.c.b16 %v1864, %v1800
      %v2761 = vpack.c.b16 %v1865, %v1801
      %v2762 = vpack.c.b16 %v1866, %v1802
      %v2763 = vpack.c.b16 %v1867, %v1803
      %v2764 = vpack.c.b16 %v1868, %v1804
      %v2765 = vpack.c.b16 %v1869, %v1805
      %v2766 = vpack.c.b16 %v1870, %v1806
      %v2767 = vpack.c.b16 %v1871, %v1807
      %v2768 = vpack.c.b16 %v1872, %v1808
      %v2769 = vpack.c.b16 %v1873, %v1809
      %v2770 = vpack.c.b16 %v1874, %v1810
      %v2771 = vpack.c.b16 %v1875, %v1811
      %v2772 = vpack.c.b16 %v1876, %v1812
      %v2773 = vpack.c.b16 %v1877, %v1813
      %v2774 = vpack.c.b16 %v1878, %v1814
      %v2775 = vpack.c.b16 %v1879, %v1815
      %v2776 = vpack.c.b16 %v1880, %v1816
      %v2777 = vpack.c.b16 %v1881, %v1817
      %v2778 = vpack.c.b16 %v1882, %v1818
      %v2779 = vpack.c.b16 %v1883, %v1819
      %v2780 = vpack.c.b16 %v1884, %v1820
      %v2781 = vpack.c.b16 %v1885, %v1821
      %v2782 = vpack.c.b16 %v1886, %v1822
      %v2783 = vpack.c.b16 %v1887, %v1823
      %v2784 = vpack.c.b16 %v1888, %v1824
      %v2785 = vpack.c.b16 %v1889, %v1825
      %v2786 = vpack.c.b16 %v1890, %v1826
      %v2787 = vpack.c.b16 %v1891, %v1827
      %v2788 = vpack.c.b16 %v1892, %v1828
      %v2789 = vpack.c.b16 %v1893, %v1829
      %v2790 = vpack.c.b16 %v1894, %v1830
      %v2791 = vpack.c.b16 %v1895, %v1831
      %v2792 = vpack.c.b16 %v1896, %v1832
      %v2793 = vpack.c.b16 %v1897, %v1833
      %v2794 = vpack.c.b16 %v1898, %v1834
      %v2795 = vpack.c.b16 %v1899, %v1835
      %v2796 = vpack.c.b16 %v1900, %v1836
      %v2797 = vpack.c.b16 %v1901, %v1837
      %v2798 = vpack.c.b16 %v1902, %v1838
      %v2799 = vpack.c.b16 %v1903, %v1839
      %v2800 = vpack.c.b16 %v1904, %v1840
      %v2801 = vpack.c.b16 %v1905, %v1841
      %v2802 = vpack.c.b16 %v1906, %v1842
      %v2803 = vpack.c.b16 %v1907, %v1843
      %v2804 = vpack.c.b16 %v1908, %v1844
      %v2805 = vpack.c.b16 %v1909, %v1845
      %v2806 = vpack.c.b16 %v1910, %v1846
      %v2807 = vpack.c.b16 %v1911, %v1847
      %v2808 = vpack.c.b16 %v1912, %v1848
      %v2809 = vpack.c.b16 %v1913, %v1849
      %v2810 = vpack.c.b16 %v1914, %v1850
      %v2811 = vpack.c.b16 %v1915, %v1851
      %v2812 = vpack.c.b16 %v1916, %v1852
      %v2813 = vpack.c.b16 %v1917, %v1853
      %v2814 = vpack.c.b16 %v1918, %v1854
      %v2815 = vpack.c.b16 %v1919, %v1855
      %v2816 = vpack.c.b16 %v1920, %v1856
      %v2817 = vpack.c.b16 %v1985, %v1921
      %v2818 = vpack.c.b16 %v1986, %v1922
      %v2819 = vpack.c.b16 %v1987, %v1923
      %v2820 = vpack.c.b16 %v1988, %v1924
      %v2821 = vpack.c.b16 %v1989, %v1925
      %v2822 = vpack.c.b16 %v1990, %v1926
      %v2823 = vpack.c.b16 %v1991, %v1927
      %v2824 = vpack.c.b16 %v1992, %v1928
      %v2825 = vpack.c.b16 %v1993, %v1929
      %v2826 = vpack.c.b16 %v1994, %v1930
      %v2827 = vpack.c.b16 %v1995, %v1931
      %v2828 = vpack.c.b16 %v1996, %v1932
      %v2829 = vpack.c.b16 %v1997, %v1933
      %v2830 = vpack.c.b16 %v1998, %v1934
      %v2831 = vpack.c.b16 %v1999, %v1935
      %v2832 = vpack.c.b16 %v2000, %v1936
      %v2833 = vpack.c.b16 %v2001, %v1937
      %v2834 = vpack.c.b16 %v2002, %v1938
      %v2835 = vpack.c.b16 %v2003, %v1939
      %v2836 = vpack.c.b16 %v2004, %v1940
      %v2837 = vpack.c.b16 %v2005, %v1941
      %v2838 = vpack.c.b16 %v2006, %v1942
      %v2839 = vpack.c.b16 %v2007, %v1943
      %v2840 = vpack.c.b16 %v2008, %v1944
      %v2841 = vpack.c.b16 %v2009, %v1945
      %v2842 = vpack.c.b16 %v2010, %v1946
      %v2843 = vpack.c.b16 %v2011, %v1947
      %v2844 = vpack.c.b16 %v2012, %v1948
      %v2845 = vpack.c.b16 %v2013, %v1949
      %v2846 = vpack.c.b16 %v2014, %v1950
      %v2847 = vpack.c.b16 %v2015, %v1951
      %v2848 = vpack.c.b16 %v2016, %v1952
      %v2849 = vpack.c.b16 %v2017, %v1953
      %v2850 = vpack.c.b16 %v2018, %v1954
      %v2851 = vpack.c.b16 %v2019, %v1955
      %v2852 = vpack.c.b16 %v2020, %v1956
      %v2853 = vpack.c.b16 %v2021, %v1957
      %v2854 = vpack.c.b16 %v2022, %v1958
      %v2855 = vpack.c.b16 %v2023, %v1959
      %v2856 = vpack.c.b16 %v2024, %v1960
      %v2857 = vpack.c.b16 %v2025, %v1961
      %v2858 = vpack.c.b16 %v2026, %v1962
      %v2859 = vpack.c.b16 %v2027, %v1963
      %v2860 = vpack.c.b16 %v2028, %v1964
      %v2861 = vpack.c.b16 %v2029, %v1965
      %v2862 = vpack.c.b16 %v2030, %v1966
      %v2863 = vpack.c.b16 %v2031, %v1967
      %v2864 = vpack.c.b16 %v2032, %v1968
      %v2865 = vpack.c.b16 %v2033, %v1969
      %v2866 = vpack.c.b16 %v2034, %v1970
      %v2867 = vpack.c.b16 %v2035, %v1971
      %v2868 = vpack.c.b16 %v2036, %v1972
      %v2869 = vpack.c.b16 %v2037, %v1973
      %v2870 = vpack.c.b16 %v2038, %v1974
      %v2871 = vpack.c.b16 %v2039, %v1975
      %v2872 = vpack.c.b16 %v2040, %v1976
      %v2873 = vpack.c.b16 %v2041, %v1977
      %v2874 = vpack.c.b16 %v2042, %v1978
      %v2875 = vpack.c.b16 %v2043, %v1979
      %v2876 = vpack.c.b16 %v2044, %v1980
      %v2877 = vpack.c.b16 %v2045, %v1981
      %v2878 = vpack.c.b16 %v2046, %v1982
      %v2879 = vpack.c.b16 %v2047, %v1983
      %v2880 = vpack.c.b16 %v2048, %v1984
      %v2881 = vpack.c.b16 %v2113, %v2049
      %v2882 = vpack.c.b16 %v2114, %v2050
      %v2883 = vpack.c.b16 %v2115, %v2051
      %v2884 = vpack.c.b16 %v2116, %v2052
      %v2885 = vpack.c.b16 %v2117, %v2053
      %v2886 = vpack.c.b16 %v2118, %v2054
      %v2887 = vpack.c.b16 %v2119, %v2055
      %v2888 = vpack.c.b16 %v2120, %v2056
      %v2889 = vpack.c.b16 %v2121, %v2057
      %v2890 = vpack.c.b16 %v2122, %v2058
      %v2891 = vpack.c.b16 %v2123, %v2059
      %v2892 = vpack.c.b16 %v2124, %v2060
      %v2893 = vpack.c.b16 %v2125, %v2061
      %v2894 = vpack.c.b16 %v2126, %v2062
      %v2895 = vpack.c.b16 %v2127, %v2063
      %v2896 = vpack.c.b16 %v2128, %v2064
      %v2897 = vpack.c.b16 %v2129, %v2065
      %v2898 = vpack.c.b16 %v2130, %v2066
      %v2899 = vpack.c.b16 %v2131, %v2067
      %v2900 = vpack.c.b16 %v2132, %v2068
      %v2901 = vpack.c.b16 %v2133, %v2069
      %v2902 = vpack.c.b16 %v2134, %v2070
      %v2903 = vpack.c.b16 %v2135, %v2071
      %v2904 = vpack.c.b16 %v2136, %v2072
      %v2905 = vpack.c.b16 %v2137, %v2073
      %v2906 = vpack.c.b16 %v2138, %v2074
      %v2907 = vpack.c.b16 %v2139, %v2075
      %v2908 = vpack.c.b16 %v2140, %v2076
      %v2909 = vpack.c.b16 %v2141, %v2077
      %v2910 = vpack.c.b16 %v2142, %v2078
      %v2911 = vpack.c.b16 %v2143, %v2079
      %v2912 = vpack.c.b16 %v2144, %v2080
      %v2913 = vpack.c.b16 %v2145, %v2081
      %v2914 = vpack.c.b16 %v2146, %v2082
      %v2915 = vpack.c.b16 %v2147, %v2083
      %v2916 = vpack.c.b16 %v2148, %v2084
      %v2917 = vpack.c.b16 %v2149, %v2085
      %v2918 = vpack.c.b16 %v2150, %v2086
      %v2919 = vpack.c.b16 %v2151, %v2087
      %v2920 = vpack.c.b16 %v2152, %v2088
      %v2921 = vpack.c.b16 %v2153, %v2089
      %v2922 = vpack.c.b16 %v2154, %v2090
      %v2923 = vpack.c.b16 %v2155, %v2091
      %v2924 = vpack.c.b16 %v2156, %v2092
      %v2925 = vpack.c.b16 %v2157, %v2093
      %v2926 = vpack.c.b16 %v2158, %v2094
      %v2927 = vpack.c.b16 %v2159, %v2095
      %v2928 = vpack.c.b16 %v2160, %v2096
      %v2929 = vpack.c.b16 %v2161, %v2097
      %v2930 = vpack.c.b16 %v2162, %v2098
      %v2931 = vpack.c.b16 %v2163, %v2099
      %v2932 = vpack.c.b16 %v2164, %v2100
      %v2933 = vpack.c.b16 %v2165, %v2101
      %v2934 = vpack.c.b16 %v2166, %v2102
      %v2935 = vpack.c.b16 %v2167, %v2103
      %v2936 = vpack.c.b16 %v2168, %v2104
      %v2937 = vpack.c.b16 %v2169, %v2105
      %v2938 = vpack.c.b16 %v2170, %v2106
      %v2939 = vpack.c.b16 %v2171, %v2107
      %v2940 = vpack.c.b16 %v2172, %v2108
      %v2941 = vpack.c.b16 %v2173, %v2109
      %v2942 = vpack.c.b16 %v2174, %v2110
      %v2943 = vpack.c.b16 %v2175, %v2111
      %v2944 = vpack.c.b16 %v2176, %v2112
      %v2945 = vpack.c.b16 %v2241, %v2177
      %v2946 = vpack.c.b16 %v2242, %v2178
      %v2947 = vpack.c.b16 %v2243, %v2179
      %v2948 = vpack.c.b16 %v2244, %v2180
      %v2949 = vpack.c.b16 %v2245, %v2181
      %v2950 = vpack.c.b16 %v2246, %v2182
      %v2951 = vpack.c.b16 %v2247, %v2183
      %v2952 = vpack.c.b16 %v2248, %v2184
      %v2953 = vpack.c.b16 %v2249, %v2185
      %v2954 = vpack.c.b16 %v2250, %v2186
      %v2955 = vpack.c.b16 %v2251, %v2187
      %v2956 = vpack.c.b16 %v2252, %v2188
      %v2957 = vpack.c.b16 %v2253, %v2189
      %v2958 = vpack.c.b16 %v2254, %v2190
      %v2959 = vpack.c.b16 %v2255, %v2191
      %v2960 = vpack.c.b16 %v2256, %v2192
      %v2961 = vpack.c.b16 %v2257, %v2193
      %v2962 = vpack.c.b16 %v2258, %v2194
      %v2963 = vpack.c.b16 %v2259, %v2195
      %v2964 = vpack.c.b16 %v2260, %v2196
      %v2965 = vpack.c.b16 %v2261, %v2197
      %v2966 = vpack.c.b16 %v2262, %v2198
      %v2967 = vpack.c.b16 %v2263, %v2199
      %v2968 = vpack.c.b16 %v2264, %v2200
      %v2969 = vpack.c.b16 %v2265, %v2201
      %v2970 = vpack.c.b16 %v2266, %v2202
      %v2971 = vpack.c.b16 %v2267, %v2203
      %v2972 = vpack.c.b16 %v2268, %v2204
      %v2973 = vpack.c.b16 %v2269, %v2205
      %v2974 = vpack.c.b16 %v2270, %v2206
      %v2975 = vpack.c.b16 %v2271, %v2207
      %v2976 = vpack.c.b16 %v2272, %v2208
      %v2977 = vpack.c.b16 %v2273, %v2209
      %v2978 = vpack.c.b16 %v2274, %v2210
      %v2979 = vpack.c.b16 %v2275, %v2211
      %v2980 = vpack.c.b16 %v2276, %v2212
      %v2981 = vpack.c.b16 %v2277, %v2213
      %v2982 = vpack.c.b16 %v2278, %v2214
      %v2983 = vpack.c.b16 %v2279, %v2215
      %v2984 = vpack.c.b16 %v2280, %v2216
      %v2985 = vpack.c.b16 %v2281, %v2217
      %v2986 = vpack.c.b16 %v2282, %v2218
      %v2987 = vpack.c.b16 %v2283, %v2219
      %v2988 = vpack.c.b16 %v2284, %v2220
      %v2989 = vpack.c.b16 %v2285, %v2221
      %v2990 = vpack.c.b16 %v2286, %v2222
      %v2991 = vpack.c.b16 %v2287, %v2223
      %v2992 = vpack.c.b16 %v2288, %v2224
      %v2993 = vpack.c.b16 %v2289, %v2225
      %v2994 = vpack.c.b16 %v2290, %v2226
      %v2995 = vpack.c.b16 %v2291, %v2227
      %v2996 = vpack.c.b16 %v2292, %v2228
      %v2997 = vpack.c.b16 %v2293, %v2229
      %v2998 = vpack.c.b16 %v2294, %v2230
      %v2999 = vpack.c.b16 %v2295, %v2231
      %v3000 = vpack.c.b16 %v2296, %v2232
      %v3001 = vpack.c.b16 %v2297, %v2233
      %v3002 = vpack.c.b16 %v2298, %v2234
      %v3003 = vpack.c.b16 %v2299, %v2235
      %v3004 = vpack.c.b16 %v2300, %v2236
      %v3005 = vpack.c.b16 %v2301, %v2237
      %v3006 = vpack.c.b16 %v2302, %v2238
      %v3007 = vpack.c.b16 %v2303, %v2239
      %v3008 = vpack.c.b16 %v2304, %v2240
      %v3009 = vpack.c.b16 %v2369, %v2305
      %v3010 = vpack.c.b16 %v2370, %v2306
      %v3011 = vpack.c.b16 %v2371, %v2307
      %v3012 = vpack.c.b16 %v2372, %v2308
      %v3013 = vpack.c.b16 %v2373, %v2309
      %v3014 = vpack.c.b16 %v2374, %v2310
      %v3015 = vpack.c.b16 %v2375, %v2311
      %v3016 = vpack.c.b16 %v2376, %v2312
      %v3017 = vpack.c.b16 %v2377, %v2313
      %v3018 = vpack.c.b16 %v2378, %v2314
      %v3019 = vpack.c.b16 %v2379, %v2315
      %v3020 = vpack.c.b16 %v2380, %v2316
      %v3021 = vpack.c.b16 %v2381, %v2317
      %v3022 = vpack.c.b16 %v2382, %v2318
      %v3023 = vpack.c.b16 %v2383, %v2319
      %v3024 = vpack.c.b16 %v2384, %v2320
      %v3025 = vpack.c.b16 %v2385, %v2321
      %v3026 = vpack.c.b16 %v2386, %v2322
      %v3027 = vpack.c.b16 %v2387, %v2323
      %v3028 = vpack.c.b16 %v2388, %v2324
      %v3029 = vpack.c.b16 %v2389, %v2325
      %v3030 = vpack.c.b16 %v2390, %v2326
      %v3031 = vpack.c.b16 %v2391, %v2327
      %v3032 = vpack.c.b16 %v2392, %v2328
      %v3033 = vpack.c.b16 %v2393, %v2329
      %v3034 = vpack.c.b16 %v2394, %v2330
      %v3035 = vpack.c.b16 %v2395, %v2331
      %v3036 = vpack.c.b16 %v2396, %v2332
      %v3037 = vpack.c.b16 %v2397, %v2333
      %v3038 = vpack.c.b16 %v2398, %v2334
      %v3039 = vpack.c.b16 %v2399, %v2335
      %v3040 = vpack.c.b16 %v2400, %v2336
      %v3041 = vpack.c.b16 %v2401, %v2337
      %v3042 = vpack.c.b16 %v2402, %v2338
      %v3043 = vpack.c.b16 %v2403, %v2339
      %v3044 = vpack.c.b16 %v2404, %v2340
      %v3045 = vpack.c.b16 %v2405, %v2341
      %v3046 = vpack.c.b16 %v2406, %v2342
      %v3047 = vpack.c.b16 %v2407, %v2343
      %v3048 = vpack.c.b16 %v2408, %v2344
      %v3049 = vpack.c.b16 %v2409, %v2345
      %v3050 = vpack.c.b16 %v2410, %v2346
      %v3051 = vpack.c.b16 %v2411, %v2347
      %v3052 = vpack.c.b16 %v2412, %v2348
      %v3053 = vpack.c.b16 %v2413, %v2349
      %v3054 = vpack.c.b16 %v2414, %v2350
      %v3055 = vpack.c.b16 %v2415, %v2351
      %v3056 = vpack.c.b16 %v2416, %v2352
      %v3057 = vpack.c.b16 %v2417, %v2353
      %v3058 = vpack.c.b16 %v2418, %v2354
      %v3059 = vpack.c.b16 %v2419, %v2355
      %v3060 = vpack.c.b16 %v2420, %v2356
      %v3061 = vpack.c.b16 %v2421, %v2357
      %v3062 = vpack.c.b16 %v2422, %v2358
      %v3063 = vpack.c.b16 %v2423, %v2359
      %v3064 = vpack.c.b16 %v2424, %v2360
      %v3065 = vpack.c.b16 %v2425, %v2361
      %v3066 = vpack.c.b16 %v2426, %v2362
      %v3067 = vpack.c.b16 %v2427, %v2363
      %v3068 = vpack.c.b16 %v2428, %v2364
      %v3069 = vpack.c.b16 %v2429, %v2365
      %v3070 = vpack.c.b16 %v2430, %v2366
      %v3071 = vpack.c.b16 %v2431, %v2367
      %v3072 = vpack.c.b16 %v2432, %v2368
      %v3073 = vpack.c.b16 %v2497, %v2433
      %v3074 = vpack.c.b16 %v2498, %v2434
      %v3075 = vpack.c.b16 %v2499, %v2435
      %v3076 = vpack.c.b16 %v2500, %v2436
      %v3077 = vpack.c.b16 %v2501, %v2437
      %v3078 = vpack.c.b16 %v2502, %v2438
      %v3079 = vpack.c.b16 %v2503, %v2439
      %v3080 = vpack.c.b16 %v2504, %v2440
      %v3081 = vpack.c.b16 %v2505, %v2441
      %v3082 = vpack.c.b16 %v2506, %v2442
      %v3083 = vpack.c.b16 %v2507, %v2443
      %v3084 = vpack.c.b16 %v2508, %v2444
      %v3085 = vpack.c.b16 %v2509, %v2445
      %v3086 = vpack.c.b16 %v2510, %v2446
      %v3087 = vpack.c.b16 %v2511, %v2447
      %v3088 = vpack.c.b16 %v2512, %v2448
      %v3089 = vpack.c.b16 %v2513, %v2449
      %v3090 = vpack.c.b16 %v2514, %v2450
      %v3091 = vpack.c.b16 %v2515, %v2451
      %v3092 = vpack.c.b16 %v2516, %v2452
      %v3093 = vpack.c.b16 %v2517, %v2453
      %v3094 = vpack.c.b16 %v2518, %v2454
      %v3095 = vpack.c.b16 %v2519, %v2455
      %v3096 = vpack.c.b16 %v2520, %v2456
      %v3097 = vpack.c.b16 %v2521, %v2457
      %v3098 = vpack.c.b16 %v2522, %v2458
      %v3099 = vpack.c.b16 %v2523, %v2459
      %v3100 = vpack.c.b16 %v2524, %v2460
      %v3101 = vpack.c.b16 %v2525, %v2461
      %v3102 = vpack.c.b16 %v2526, %v2462
      %v3103 = vpack.c.b16 %v2527, %v2463
      %v3104 = vpack.c.b16 %v2528, %v2464
      %v3105 = vpack.c.b16 %v2529, %v2465
      %v3106 = vpack.c.b16 %v2530, %v2466
      %v3107 = vpack.c.b16 %v2531, %v2467
      %v3108 = vpack.c.b16 %v2532, %v2468
      %v3109 = vpack.c.b16 %v2533, %v2469
      %v3110 = vpack.c.b16 %v2534, %v2470
      %v3111 = vpack.c.b16 %v2535, %v2471
      %v3112 = vpack.c.b16 %v2536, %v2472
      %v3113 = vpack.c.b16 %v2537, %v2473
      %v3114 = vpack.c.b16 %v2538, %v2474
      %v3115 = vpack.c.b16 %v2539, %v2475
      %v3116 = vpack.c.b16 %v2540, %v2476
      %v3117 = vpack.c.b16 %v2541, %v2477
      %v3118 = vpack.c.b16 %v2542, %v2478
      %v3119 = vpack.c.b16 %v2543, %v2479
      %v3120 = vpack.c.b16 %v2544, %v2480
      %v3121 = vpack.c.b16 %v2545, %v2481
      %v3122 = vpack.c.b16 %v2546, %v2482
      %v3123 = vpack.c.b16 %v2547, %v2483
      %v3124 = vpack.c.b16 %v2548, %v2484
      %v3125 = vpack.c.b16 %v2549, %v2485
      %v3126 = vpack.c.b16 %v2550, %v2486
      %v3127 = vpack.c.b16 %v2551, %v2487
      %v3128 = vpack.c.b16 %v2552, %v2488
      %v3129 = vpack.c.b16 %v2553, %v2489
      %v3130 = vpack.c.b16 %v2554, %v2490
      %v3131 = vpack.c.b16 %v2555, %v2491
      %v3132 = vpack.c.b16 %v2556, %v2492
      %v3133 = vpack.c.b16 %v2557, %v2493
      %v3134 = vpack.c.b16 %v2558, %v2494
      %v3135 = vpack.c.b16 %v2559, %v2495
      %v3136 = vpack.c.b16 %v2560, %v2496
      %vm3713 = vcmask 130048
      %v3715 = vsel %vm3713, %v828, 0
      %v3718 = vsel %vm3713, %v830, 0
      %3720 = vmatprep.subr.bf16.mxu0 %v3010
      %3721 = vmatpush1.bf16.msra.mxu0 %v3009
      %3722 = vmatprep.subr.bf16.mxu0 %v2946
      %3723 = vmatpush1.bf16.msra.mxu0 %v2945
      %3724 = vmatprep.subr.bf16.mxu0 %v2882
      %3725 = vmatpush1.bf16.msra.mxu0 %v2881
      %3726 = vmatprep.subr.bf16.mxu0 %v2818
      %3727 = vmatpush1.bf16.msra.mxu0 %v2817
      %3728 = vmatprep.subr.bf16.mxu0 %v2754
      %3729 = vmatpush1.bf16.msra.mxu0 %v2753
      %3730 = vmatprep.subr.bf16.mxu0 %v2690
      %3731 = vmatpush1.bf16.msra.mxu0 %v2689
      %3732 = vmatprep.subr.bf16.mxu0 %v2626
      %3733 = vmatpush1.bf16.msra.mxu0 %v2625
      %3734 = vmatprep.subr.bf16.mxu0 %v2562
      %3735 = vmatpush1.bf16.msra.mxu0 %v2561
      %3736 = vmatprep.subr.bf16.mxu0 0
      %3737 = vmatpush2.bf16.msra.mxu0 0
      %3738 = vmatprep.subr.bf16.mxu0 0
      %3739 = vmatpush2.bf16.msra.mxu0 0
      %3740 = vmatprep.subr.bf16.mxu0 0
      %3741 = vmatpush2.bf16.msra.mxu0 0
      %3742 = vmatprep.subr.bf16.mxu0 0
      %3743 = vmatpush2.bf16.msra.mxu0 0
      %3744 = vmatprep.subr.bf16.mxu0 0
      %3745 = vmatpush2.bf16.msra.mxu0 0
      %3746 = vmatprep.subr.bf16.mxu0 0
      %3747 = vmatpush2.bf16.msra.mxu0 0
      %3748 = vmatprep.subr.bf16.mxu0 0
      %3749 = vmatpush2.bf16.msra.mxu0 0
      %3750 = vmatprep.subr.bf16.mxu0 %v3074
      %3751 = vmatpush2.bf16.msra.mxu0 %v3073
      %3752 = vmatprep.mubr.bf16.mxu0 %v3715
      %3753 = vmatmul.mubr.bf16.gmra.mxu0 %v827
      %v3754 = vpop.f32.mrf.mxu0
      %v3755 = vadd.f32 %v798, %v3754
      %v3756 = vpop.f32.mrf.mxu0
      %v3757 = vadd.f32 %v798, %v3756
      %v3758 = vpop.f32.mrf.mxu0
      %v3759 = vadd.f32 %v803, %v3758
      %v3760 = vpop.f32.mrf.mxu0
      %v3761 = vadd.f32 %v803, %v3760
      %3762 = vmatprep.mubr.bf16.mxu0 %v3718
      %3763 = vmatmul.mubr.bf16.gmra.mxu0 %v829
      %v3764 = vpop.f32.mrf.mxu0
      %v3765 = vadd.f32 %v808, %v3764
      %v3766 = vpop.f32.mrf.mxu0
      %v3767 = vadd.f32 %v808, %v3766
      %v3768 = vpop.f32.mrf.mxu0
      %v3769 = vadd.f32 %v813, %v3768
      %v3770 = vpop.f32.mrf.mxu0
      %v3771 = vadd.f32 %v813, %v3770
      %3772 = vdwg.mxu0
      %3773 = vmatprep.subr.bf16.mxu0 %v3012
      %3774 = vmatpush1.bf16.msra.mxu0 %v3011
      %3775 = vmatprep.subr.bf16.mxu0 %v2948
      %3776 = vmatpush1.bf16.msra.mxu0 %v2947
      %3777 = vmatprep.subr.bf16.mxu0 %v2884
      %3778 = vmatpush1.bf16.msra.mxu0 %v2883
      %3779 = vmatprep.subr.bf16.mxu0 %v2820
      %3780 = vmatpush1.bf16.msra.mxu0 %v2819
      %3781 = vmatprep.subr.bf16.mxu0 %v2756
      %3782 = vmatpush1.bf16.msra.mxu0 %v2755
      %3783 = vmatprep.subr.bf16.mxu0 %v2692
      %3784 = vmatpush1.bf16.msra.mxu0 %v2691
      %3785 = vmatprep.subr.bf16.mxu0 %v2628
      %3786 = vmatpush1.bf16.msra.mxu0 %v2627
      %3787 = vmatprep.subr.bf16.mxu0 %v2564
      %3788 = vmatpush1.bf16.msra.mxu0 %v2563
      %3789 = vmatprep.subr.bf16.mxu0 0
      %3790 = vmatpush2.bf16.msra.mxu0 0
      %3791 = vmatprep.subr.bf16.mxu0 0
      %3792 = vmatpush2.bf16.msra.mxu0 0
      %3793 = vmatprep.subr.bf16.mxu0 0
      %3794 = vmatpush2.bf16.msra.mxu0 0
      %3795 = vmatprep.subr.bf16.mxu0 0
      %3796 = vmatpush2.bf16.msra.mxu0 0
      %3797 = vmatprep.subr.bf16.mxu0 0
      %3798 = vmatpush2.bf16.msra.mxu0 0
      %3799 = vmatprep.subr.bf16.mxu0 0
      %3800 = vmatpush2.bf16.msra.mxu0 0
      %3801 = vmatprep.subr.bf16.mxu0 0
      %3802 = vmatpush2.bf16.msra.mxu0 0
      %3803 = vmatprep.subr.bf16.mxu0 %v3076
      %3804 = vmatpush2.bf16.msra.mxu0 %v3075
      %3805 = vmatprep.mubr.bf16.mxu0 %v3715
      %3806 = vmatmul.mubr.bf16.gmra.mxu0 %v827
      %v3807 = vpop.f32.mrf.mxu0
      %v3808 = vadd.f32 %v798, %v3807
      %v3809 = vpop.f32.mrf.mxu0
      %v3810 = vadd.f32 %v798, %v3809
      %v3811 = vpop.f32.mrf.mxu0
      %v3812 = vadd.f32 %v803, %v3811
      %v3813 = vpop.f32.mrf.mxu0
      %v3814 = vadd.f32 %v803, %v3813
      %3815 = vmatprep.mubr.bf16.mxu0 %v3718
      %3816 = vmatmul.mubr.bf16.gmra.mxu0 %v829
      %v3817 = vpop.f32.mrf.mxu0
      %v3818 = vadd.f32 %v808, %v3817
      %v3819 = vpop.f32.mrf.mxu0
      %v3820 = vadd.f32 %v808, %v3819
      %v3821 = vpop.f32.mrf.mxu0
      %v3822 = vadd.f32 %v813, %v3821
      %v3823 = vpop.f32.mrf.mxu0
      %v3824 = vadd.f32 %v813, %v3823
      %3825 = vdwg.mxu0
      %3826 = vmatprep.subr.bf16.mxu0 %v3014
      %3827 = vmatpush1.bf16.msra.mxu0 %v3013
      %3828 = vmatprep.subr.bf16.mxu0 %v2950
      %3829 = vmatpush1.bf16.msra.mxu0 %v2949
      %3830 = vmatprep.subr.bf16.mxu0 %v2886
      %3831 = vmatpush1.bf16.msra.mxu0 %v2885
      %3832 = vmatprep.subr.bf16.mxu0 %v2822
      %3833 = vmatpush1.bf16.msra.mxu0 %v2821
      %3834 = vmatprep.subr.bf16.mxu0 %v2758
      %3835 = vmatpush1.bf16.msra.mxu0 %v2757
      %3836 = vmatprep.subr.bf16.mxu0 %v2694
      %3837 = vmatpush1.bf16.msra.mxu0 %v2693
      %3838 = vmatprep.subr.bf16.mxu0 %v2630
      %3839 = vmatpush1.bf16.msra.mxu0 %v2629
      %3840 = vmatprep.subr.bf16.mxu0 %v2566
      %3841 = vmatpush1.bf16.msra.mxu0 %v2565
      %3842 = vmatprep.subr.bf16.mxu0 0
      %3843 = vmatpush2.bf16.msra.mxu0 0
      %3844 = vmatprep.subr.bf16.mxu0 0
      %3845 = vmatpush2.bf16.msra.mxu0 0
      %3846 = vmatprep.subr.bf16.mxu0 0
      %3847 = vmatpush2.bf16.msra.mxu0 0
      %3848 = vmatprep.subr.bf16.mxu0 0
      %3849 = vmatpush2.bf16.msra.mxu0 0
      %3850 = vmatprep.subr.bf16.mxu0 0
      %3851 = vmatpush2.bf16.msra.mxu0 0
      %3852 = vmatprep.subr.bf16.mxu0 0
      %3853 = vmatpush2.bf16.msra.mxu0 0
      %3854 = vmatprep.subr.bf16.mxu0 0
      %3855 = vmatpush2.bf16.msra.mxu0 0
      %3856 = vmatprep.subr.bf16.mxu0 %v3078
      %3857 = vmatpush2.bf16.msra.mxu0 %v3077
      %3858 = vmatprep.mubr.bf16.mxu0 %v3715
      %3859 = vmatmul.mubr.bf16.gmra.mxu0 %v827
      %v3860 = vpop.f32.mrf.mxu0
      %v3861 = vadd.f32 %v798, %v3860
      %v3862 = vpop.f32.mrf.mxu0
      %v3863 = vadd.f32 %v798, %v3862
      %v3864 = vpop.f32.mrf.mxu0
      %v3865 = vadd.f32 %v803, %v3864
      %v3866 = vpop.f32.mrf.mxu0
      %v3867 = vadd.f32 %v803, %v3866
      %3868 = vmatprep.mubr.bf16.mxu0 %v3718
      %3869 = vmatmul.mubr.bf16.gmra.mxu0 %v829
      %v3870 = vpop.f32.mrf.mxu0
      %v3871 = vadd.f32 %v808, %v3870
      %v3872 = vpop.f32.mrf.mxu0
      %v3873 = vadd.f32 %v808, %v3872
      %v3874 = vpop.f32.mrf.mxu0
      %v3875 = vadd.f32 %v813, %v3874
      %v3876 = vpop.f32.mrf.mxu0
      %v3877 = vadd.f32 %v813, %v3876
      %3878 = vdwg.mxu0
      %3879 = vmatprep.subr.bf16.mxu0 %v3016
      %3880 = vmatpush1.bf16.msra.mxu0 %v3015
      %3881 = vmatprep.subr.bf16.mxu0 %v2952
      %3882 = vmatpush1.bf16.msra.mxu0 %v2951
      %3883 = vmatprep.subr.bf16.mxu0 %v2888
      %3884 = vmatpush1.bf16.msra.mxu0 %v2887
      %3885 = vmatprep.subr.bf16.mxu0 %v2824
      %3886 = vmatpush1.bf16.msra.mxu0 %v2823
      %3887 = vmatprep.subr.bf16.mxu0 %v2760
      %3888 = vmatpush1.bf16.msra.mxu0 %v2759
      %3889 = vmatprep.subr.bf16.mxu0 %v2696
      %3890 = vmatpush1.bf16.msra.mxu0 %v2695
      %3891 = vmatprep.subr.bf16.mxu0 %v2632
      %3892 = vmatpush1.bf16.msra.mxu0 %v2631
      %3893 = vmatprep.subr.bf16.mxu0 %v2568
      %3894 = vmatpush1.bf16.msra.mxu0 %v2567
      %3895 = vmatprep.subr.bf16.mxu0 0
      %3896 = vmatpush2.bf16.msra.mxu0 0
      %3897 = vmatprep.subr.bf16.mxu0 0
      %3898 = vmatpush2.bf16.msra.mxu0 0
      %3899 = vmatprep.subr.bf16.mxu0 0
      %3900 = vmatpush2.bf16.msra.mxu0 0
      %3901 = vmatprep.subr.bf16.mxu0 0
      %3902 = vmatpush2.bf16.msra.mxu0 0
      %3903 = vmatprep.subr.bf16.mxu0 0
      %3904 = vmatpush2.bf16.msra.mxu0 0
      %3905 = vmatprep.subr.bf16.mxu0 0
      %3906 = vmatpush2.bf16.msra.mxu0 0
      %3907 = vmatprep.subr.bf16.mxu0 0
      %3908 = vmatpush2.bf16.msra.mxu0 0
      %3909 = vmatprep.subr.bf16.mxu0 %v3080
      %3910 = vmatpush2.bf16.msra.mxu0 %v3079
      %3911 = vmatprep.mubr.bf16.mxu0 %v3715
      %3912 = vmatmul.mubr.bf16.gmra.mxu0 %v827
      %v3913 = vpop.f32.mrf.mxu0
      %v3914 = vadd.f32 %v798, %v3913
      %v3915 = vpop.f32.mrf.mxu0
      %v3916 = vadd.f32 %v798, %v3915
      %v3917 = vpop.f32.mrf.mxu0
      %v3918 = vadd.f32 %v803, %v3917
      %v3919 = vpop.f32.mrf.mxu0
      %v3920 = vadd.f32 %v803, %v3919
      %3921 = vmatprep.mubr.bf16.mxu0 %v3718
      %3922 = vmatmul.mubr.bf16.gmra.mxu0 %v829
      %v3923 = vpop.f32.mrf.mxu0
      %v3924 = vadd.f32 %v808, %v3923
      %v3925 = vpop.f32.mrf.mxu0
      %v3926 = vadd.f32 %v808, %v3925
      %v3927 = vpop.f32.mrf.mxu0
      %v3928 = vadd.f32 %v813, %v3927
      %v3929 = vpop.f32.mrf.mxu0
      %v3930 = vadd.f32 %v813, %v3929
      %3931 = vdwg.mxu0
      %3932 = vmatprep.subr.bf16.mxu0 %v3018
      %3933 = vmatpush1.bf16.msra.mxu0 %v3017
      %3934 = vmatprep.subr.bf16.mxu0 %v2954
      %3935 = vmatpush1.bf16.msra.mxu0 %v2953
      %3936 = vmatprep.subr.bf16.mxu0 %v2890
      %3937 = vmatpush1.bf16.msra.mxu0 %v2889
      %3938 = vmatprep.subr.bf16.mxu0 %v2826
      %3939 = vmatpush1.bf16.msra.mxu0 %v2825
      %3940 = vmatprep.subr.bf16.mxu0 %v2762
      %3941 = vmatpush1.bf16.msra.mxu0 %v2761
      %3942 = vmatprep.subr.bf16.mxu0 %v2698
      %3943 = vmatpush1.bf16.msra.mxu0 %v2697
      %3944 = vmatprep.subr.bf16.mxu0 %v2634
      %3945 = vmatpush1.bf16.msra.mxu0 %v2633
      %3946 = vmatprep.subr.bf16.mxu0 %v2570
      %3947 = vmatpush1.bf16.msra.mxu0 %v2569
      %3948 = vmatprep.subr.bf16.mxu0 0
      %3949 = vmatpush2.bf16.msra.mxu0 0
      %3950 = vmatprep.subr.bf16.mxu0 0
      %3951 = vmatpush2.bf16.msra.mxu0 0
      %3952 = vmatprep.subr.bf16.mxu0 0
      %3953 = vmatpush2.bf16.msra.mxu0 0
      %3954 = vmatprep.subr.bf16.mxu0 0
      %3955 = vmatpush2.bf16.msra.mxu0 0
      %3956 = vmatprep.subr.bf16.mxu0 0
      %3957 = vmatpush2.bf16.msra.mxu0 0
      %3958 = vmatprep.subr.bf16.mxu0 0
      %3959 = vmatpush2.bf16.msra.mxu0 0
      %3960 = vmatprep.subr.bf16.mxu0 0
      %3961 = vmatpush2.bf16.msra.mxu0 0
      %3962 = vmatprep.subr.bf16.mxu0 %v3082
      %3963 = vmatpush2.bf16.msra.mxu0 %v3081
      %3964 = vmatprep.mubr.bf16.mxu0 %v3715
      %3965 = vmatmul.mubr.bf16.gmra.mxu0 %v827
      %v3966 = vpop.f32.mrf.mxu0
      %v3967 = vadd.f32 %v798, %v3966
      %v3968 = vpop.f32.mrf.mxu0
      %v3969 = vadd.f32 %v798, %v3968
      %v3970 = vpop.f32.mrf.mxu0
      %v3971 = vadd.f32 %v803, %v3970
      %v3972 = vpop.f32.mrf.mxu0
      %v3973 = vadd.f32 %v803, %v3972
      %3974 = vmatprep.mubr.bf16.mxu0 %v3718
      %3975 = vmatmul.mubr.bf16.gmra.mxu0 %v829
      %v3976 = vpop.f32.mrf.mxu0
      %v3977 = vadd.f32 %v808, %v3976
      %v3978 = vpop.f32.mrf.mxu0
      %v3979 = vadd.f32 %v808, %v3978
      %v3980 = vpop.f32.mrf.mxu0
      %v3981 = vadd.f32 %v813, %v3980
      %v3982 = vpop.f32.mrf.mxu0
      %v3983 = vadd.f32 %v813, %v3982
      %3984 = vdwg.mxu0
      %3985 = vmatprep.subr.bf16.mxu0 %v3020
      %3986 = vmatpush1.bf16.msra.mxu0 %v3019
      %3987 = vmatprep.subr.bf16.mxu0 %v2956
      %3988 = vmatpush1.bf16.msra.mxu0 %v2955
      %3989 = vmatprep.subr.bf16.mxu0 %v2892
      %3990 = vmatpush1.bf16.msra.mxu0 %v2891
      %3991 = vmatprep.subr.bf16.mxu0 %v2828
      %3992 = vmatpush1.bf16.msra.mxu0 %v2827
      %3993 = vmatprep.subr.bf16.mxu0 %v2764
      %3994 = vmatpush1.bf16.msra.mxu0 %v2763
      %3995 = vmatprep.subr.bf16.mxu0 %v2700
      %3996 = vmatpush1.bf16.msra.mxu0 %v2699
      %3997 = vmatprep.subr.bf16.mxu0 %v2636
      %3998 = vmatpush1.bf16.msra.mxu0 %v2635
      %3999 = vmatprep.subr.bf16.mxu0 %v2572
      %4000 = vmatpush1.bf16.msra.mxu0 %v2571
      %4001 = vmatprep.subr.bf16.mxu0 0
      %4002 = vmatpush2.bf16.msra.mxu0 0
      %4003 = vmatprep.subr.bf16.mxu0 0
      %4004 = vmatpush2.bf16.msra.mxu0 0
      %4005 = vmatprep.subr.bf16.mxu0 0
      %4006 = vmatpush2.bf16.msra.mxu0 0
      %4007 = vmatprep.subr.bf16.mxu0 0
      %4008 = vmatpush2.bf16.msra.mxu0 0
      %4009 = vmatprep.subr.bf16.mxu0 0
      %4010 = vmatpush2.bf16.msra.mxu0 0
      %4011 = vmatprep.subr.bf16.mxu0 0
      %4012 = vmatpush2.bf16.msra.mxu0 0
      %4013 = vmatprep.subr.bf16.mxu0 0
      %4014 = vmatpush2.bf16.msra.mxu0 0
      %4015 = vmatprep.subr.bf16.mxu0 %v3084
      %4016 = vmatpush2.bf16.msra.mxu0 %v3083
      %4017 = vmatprep.mubr.bf16.mxu0 %v3715
      %4018 = vmatmul.mubr.bf16.gmra.mxu0 %v827
      %v4019 = vpop.f32.mrf.mxu0
      %v4020 = vadd.f32 %v798, %v4019
      %v4021 = vpop.f32.mrf.mxu0
      %v4022 = vadd.f32 %v798, %v4021
      %v4023 = vpop.f32.mrf.mxu0
      %v4024 = vadd.f32 %v803, %v4023
      %v4025 = vpop.f32.mrf.mxu0
      %v4026 = vadd.f32 %v803, %v4025
      %4027 = vmatprep.mubr.bf16.mxu0 %v3718
      %4028 = vmatmul.mubr.bf16.gmra.mxu0 %v829
      %v4029 = vpop.f32.mrf.mxu0
      %v4030 = vadd.f32 %v808, %v4029
      %v4031 = vpop.f32.mrf.mxu0
      %v4032 = vadd.f32 %v808, %v4031
      %v4033 = vpop.f32.mrf.mxu0
      %v4034 = vadd.f32 %v813, %v4033
      %v4035 = vpop.f32.mrf.mxu0
      %v4036 = vadd.f32 %v813, %v4035
      %4037 = vdwg.mxu0
      %4038 = vmatprep.subr.bf16.mxu0 %v3022
      %4039 = vmatpush1.bf16.msra.mxu0 %v3021
      %4040 = vmatprep.subr.bf16.mxu0 %v2958
      %4041 = vmatpush1.bf16.msra.mxu0 %v2957
      %4042 = vmatprep.subr.bf16.mxu0 %v2894
      %4043 = vmatpush1.bf16.msra.mxu0 %v2893
      %4044 = vmatprep.subr.bf16.mxu0 %v2830
      %4045 = vmatpush1.bf16.msra.mxu0 %v2829
      %4046 = vmatprep.subr.bf16.mxu0 %v2766
      %4047 = vmatpush1.bf16.msra.mxu0 %v2765
      %4048 = vmatprep.subr.bf16.mxu0 %v2702
      %4049 = vmatpush1.bf16.msra.mxu0 %v2701
      %4050 = vmatprep.subr.bf16.mxu0 %v2638
      %4051 = vmatpush1.bf16.msra.mxu0 %v2637
      %4052 = vmatprep.subr.bf16.mxu0 %v2574
      %4053 = vmatpush1.bf16.msra.mxu0 %v2573
      %4054 = vmatprep.subr.bf16.mxu0 0
      %4055 = vmatpush2.bf16.msra.mxu0 0
      %4056 = vmatprep.subr.bf16.mxu0 0
      %4057 = vmatpush2.bf16.msra.mxu0 0
      %4058 = vmatprep.subr.bf16.mxu0 0
      %4059 = vmatpush2.bf16.msra.mxu0 0
      %4060 = vmatprep.subr.bf16.mxu0 0
      %4061 = vmatpush2.bf16.msra.mxu0 0
      %4062 = vmatprep.subr.bf16.mxu0 0
      %4063 = vmatpush2.bf16.msra.mxu0 0
      %4064 = vmatprep.subr.bf16.mxu0 0
      %4065 = vmatpush2.bf16.msra.mxu0 0
      %4066 = vmatprep.subr.bf16.mxu0 0
      %4067 = vmatpush2.bf16.msra.mxu0 0
      %4068 = vmatprep.subr.bf16.mxu0 %v3086
      %4069 = vmatpush2.bf16.msra.mxu0 %v3085
      %4070 = vmatprep.mubr.bf16.mxu0 %v3715
      %4071 = vmatmul.mubr.bf16.gmra.mxu0 %v827
      %v4072 = vpop.f32.mrf.mxu0
      %v4073 = vadd.f32 %v798, %v4072
      %v4074 = vpop.f32.mrf.mxu0
      %v4075 = vadd.f32 %v798, %v4074
      %v4076 = vpop.f32.mrf.mxu0
      %v4077 = vadd.f32 %v803, %v4076
      %v4078 = vpop.f32.mrf.mxu0
      %v4079 = vadd.f32 %v803, %v4078
      %4080 = vmatprep.mubr.bf16.mxu0 %v3718
      %4081 = vmatmul.mubr.bf16.gmra.mxu0 %v829
      %v4082 = vpop.f32.mrf.mxu0
      %v4083 = vadd.f32 %v808, %v4082
      %v4084 = vpop.f32.mrf.mxu0
      %v4085 = vadd.f32 %v808, %v4084
      %v4086 = vpop.f32.mrf.mxu0
      %v4087 = vadd.f32 %v813, %v4086
      %v4088 = vpop.f32.mrf.mxu0
      %v4089 = vadd.f32 %v813, %v4088
      %4090 = vdwg.mxu0
      %4091 = vmatprep.subr.bf16.mxu0 %v3024
      %4092 = vmatpush1.bf16.msra.mxu0 %v3023
      %4093 = vmatprep.subr.bf16.mxu0 %v2960
      %4094 = vmatpush1.bf16.msra.mxu0 %v2959
      %4095 = vmatprep.subr.bf16.mxu0 %v2896
      %4096 = vmatpush1.bf16.msra.mxu0 %v2895
      %4097 = vmatprep.subr.bf16.mxu0 %v2832
      %4098 = vmatpush1.bf16.msra.mxu0 %v2831
      %4099 = vmatprep.subr.bf16.mxu0 %v2768
      %4100 = vmatpush1.bf16.msra.mxu0 %v2767
      %4101 = vmatprep.subr.bf16.mxu0 %v2704
      %4102 = vmatpush1.bf16.msra.mxu0 %v2703
      %4103 = vmatprep.subr.bf16.mxu0 %v2640
      %4104 = vmatpush1.bf16.msra.mxu0 %v2639
      %4105 = vmatprep.subr.bf16.mxu0 %v2576
      %4106 = vmatpush1.bf16.msra.mxu0 %v2575
      %4107 = vmatprep.subr.bf16.mxu0 0
      %4108 = vmatpush2.bf16.msra.mxu0 0
      %4109 = vmatprep.subr.bf16.mxu0 0
      %4110 = vmatpush2.bf16.msra.mxu0 0
      %4111 = vmatprep.subr.bf16.mxu0 0
      %4112 = vmatpush2.bf16.msra.mxu0 0
      %4113 = vmatprep.subr.bf16.mxu0 0
      %4114 = vmatpush2.bf16.msra.mxu0 0
      %4115 = vmatprep.subr.bf16.mxu0 0
      %4116 = vmatpush2.bf16.msra.mxu0 0
      %4117 = vmatprep.subr.bf16.mxu0 0
      %4118 = vmatpush2.bf16.msra.mxu0 0
      %4119 = vmatprep.subr.bf16.mxu0 0
      %4120 = vmatpush2.bf16.msra.mxu0 0
      %4121 = vmatprep.subr.bf16.mxu0 %v3088
      %4122 = vmatpush2.bf16.msra.mxu0 %v3087
      %4123 = vmatprep.mubr.bf16.mxu0 %v3715
      %4124 = vmatmul.mubr.bf16.gmra.mxu0 %v827
      %v4125 = vpop.f32.mrf.mxu0
      %v4126 = vadd.f32 %v798, %v4125
      %v4127 = vpop.f32.mrf.mxu0
      %v4128 = vadd.f32 %v798, %v4127
      %v4129 = vpop.f32.mrf.mxu0
      %v4130 = vadd.f32 %v803, %v4129
      %v4131 = vpop.f32.mrf.mxu0
      %v4132 = vadd.f32 %v803, %v4131
      %4133 = vmatprep.mubr.bf16.mxu0 %v3718
      %4134 = vmatmul.mubr.bf16.gmra.mxu0 %v829
      %v4135 = vpop.f32.mrf.mxu0
      %v4136 = vadd.f32 %v808, %v4135
      %v4137 = vpop.f32.mrf.mxu0
      %v4138 = vadd.f32 %v808, %v4137
      %v4139 = vpop.f32.mrf.mxu0
      %v4140 = vadd.f32 %v813, %v4139
      %v4141 = vpop.f32.mrf.mxu0
      %v4142 = vadd.f32 %v813, %v4141
      %4143 = vdwg.mxu0
      %4144 = vmatprep.subr.bf16.mxu0 %v3026
      %4145 = vmatpush1.bf16.msra.mxu0 %v3025
      %4146 = vmatprep.subr.bf16.mxu0 %v2962
      %4147 = vmatpush1.bf16.msra.mxu0 %v2961
      %4148 = vmatprep.subr.bf16.mxu0 %v2898
      %4149 = vmatpush1.bf16.msra.mxu0 %v2897
      %4150 = vmatprep.subr.bf16.mxu0 %v2834
      %4151 = vmatpush1.bf16.msra.mxu0 %v2833
      %4152 = vmatprep.subr.bf16.mxu0 %v2770
      %4153 = vmatpush1.bf16.msra.mxu0 %v2769
      %4154 = vmatprep.subr.bf16.mxu0 %v2706
      %4155 = vmatpush1.bf16.msra.mxu0 %v2705
      %4156 = vmatprep.subr.bf16.mxu0 %v2642
      %4157 = vmatpush1.bf16.msra.mxu0 %v2641
      %4158 = vmatprep.subr.bf16.mxu0 %v2578
      %4159 = vmatpush1.bf16.msra.mxu0 %v2577
      %4160 = vmatprep.subr.bf16.mxu0 0
      %4161 = vmatpush2.bf16.msra.mxu0 0
      %4162 = vmatprep.subr.bf16.mxu0 0
      %4163 = vmatpush2.bf16.msra.mxu0 0
      %4164 = vmatprep.subr.bf16.mxu0 0
      %4165 = vmatpush2.bf16.msra.mxu0 0
      %4166 = vmatprep.subr.bf16.mxu0 0
      %4167 = vmatpush2.bf16.msra.mxu0 0
      %4168 = vmatprep.subr.bf16.mxu0 0
      %4169 = vmatpush2.bf16.msra.mxu0 0
      %4170 = vmatprep.subr.bf16.mxu0 0
      %4171 = vmatpush2.bf16.msra.mxu0 0
      %4172 = vmatprep.subr.bf16.mxu0 0
      %4173 = vmatpush2.bf16.msra.mxu0 0
      %4174 = vmatprep.subr.bf16.mxu0 %v3090
      %4175 = vmatpush2.bf16.msra.mxu0 %v3089
      %4176 = vmatprep.mubr.bf16.mxu0 %v3715
      %4177 = vmatmul.mubr.bf16.gmra.mxu0 %v827
      %v4178 = vpop.f32.mrf.mxu0
      %v4179 = vadd.f32 %v798, %v4178
      %v4180 = vpop.f32.mrf.mxu0
      %v4181 = vadd.f32 %v798, %v4180
      %v4182 = vpop.f32.mrf.mxu0
      %v4183 = vadd.f32 %v803, %v4182
      %v4184 = vpop.f32.mrf.mxu0
      %v4185 = vadd.f32 %v803, %v4184
      %4186 = vmatprep.mubr.bf16.mxu0 %v3718
      %4187 = vmatmul.mubr.bf16.gmra.mxu0 %v829
      %v4188 = vpop.f32.mrf.mxu0
      %v4189 = vadd.f32 %v808, %v4188
      %v4190 = vpop.f32.mrf.mxu0
      %v4191 = vadd.f32 %v808, %v4190
      %v4192 = vpop.f32.mrf.mxu0
      %v4193 = vadd.f32 %v813, %v4192
      %v4194 = vpop.f32.mrf.mxu0
      %v4195 = vadd.f32 %v813, %v4194
      %4196 = vdwg.mxu0
      %4197 = vmatprep.subr.bf16.mxu0 %v3028
      %4198 = vmatpush1.bf16.msra.mxu0 %v3027
      %4199 = vmatprep.subr.bf16.mxu0 %v2964
      %4200 = vmatpush1.bf16.msra.mxu0 %v2963
      %4201 = vmatprep.subr.bf16.mxu0 %v2900
      %4202 = vmatpush1.bf16.msra.mxu0 %v2899
      %4203 = vmatprep.subr.bf16.mxu0 %v2836
      %4204 = vmatpush1.bf16.msra.mxu0 %v2835
      %4205 = vmatprep.subr.bf16.mxu0 %v2772
      %4206 = vmatpush1.bf16.msra.mxu0 %v2771
      %4207 = vmatprep.subr.bf16.mxu0 %v2708
      %4208 = vmatpush1.bf16.msra.mxu0 %v2707
      %4209 = vmatprep.subr.bf16.mxu0 %v2644
      %4210 = vmatpush1.bf16.msra.mxu0 %v2643
      %4211 = vmatprep.subr.bf16.mxu0 %v2580
      %4212 = vmatpush1.bf16.msra.mxu0 %v2579
      %4213 = vmatprep.subr.bf16.mxu0 0
      %4214 = vmatpush2.bf16.msra.mxu0 0
      %4215 = vmatprep.subr.bf16.mxu0 0
      %4216 = vmatpush2.bf16.msra.mxu0 0
      %4217 = vmatprep.subr.bf16.mxu0 0
      %4218 = vmatpush2.bf16.msra.mxu0 0
      %4219 = vmatprep.subr.bf16.mxu0 0
      %4220 = vmatpush2.bf16.msra.mxu0 0
      %4221 = vmatprep.subr.bf16.mxu0 0
      %4222 = vmatpush2.bf16.msra.mxu0 0
      %4223 = vmatprep.subr.bf16.mxu0 0
      %4224 = vmatpush2.bf16.msra.mxu0 0
      %4225 = vmatprep.subr.bf16.mxu0 0
      %4226 = vmatpush2.bf16.msra.mxu0 0
      %4227 = vmatprep.subr.bf16.mxu0 %v3092
      %4228 = vmatpush2.bf16.msra.mxu0 %v3091
      %4229 = vmatprep.mubr.bf16.mxu0 %v3715
      %4230 = vmatmul.mubr.bf16.gmra.mxu0 %v827
      %v4231 = vpop.f32.mrf.mxu0
      %v4232 = vadd.f32 %v798, %v4231
      %v4233 = vpop.f32.mrf.mxu0
      %v4234 = vadd.f32 %v798, %v4233
      %v4235 = vpop.f32.mrf.mxu0
      %v4236 = vadd.f32 %v803, %v4235
      %v4237 = vpop.f32.mrf.mxu0
      %v4238 = vadd.f32 %v803, %v4237
      %4239 = vmatprep.mubr.bf16.mxu0 %v3718
      %4240 = vmatmul.mubr.bf16.gmra.mxu0 %v829
      %v4241 = vpop.f32.mrf.mxu0
      %v4242 = vadd.f32 %v808, %v4241
      %v4243 = vpop.f32.mrf.mxu0
      %v4244 = vadd.f32 %v808, %v4243
      %v4245 = vpop.f32.mrf.mxu0
      %v4246 = vadd.f32 %v813, %v4245
      %v4247 = vpop.f32.mrf.mxu0
      %v4248 = vadd.f32 %v813, %v4247
      %4249 = vdwg.mxu0
      %4250 = vmatprep.subr.bf16.mxu0 %v3030
      %4251 = vmatpush1.bf16.msra.mxu0 %v3029
      %4252 = vmatprep.subr.bf16.mxu0 %v2966
      %4253 = vmatpush1.bf16.msra.mxu0 %v2965
      %4254 = vmatprep.subr.bf16.mxu0 %v2902
      %4255 = vmatpush1.bf16.msra.mxu0 %v2901
      %4256 = vmatprep.subr.bf16.mxu0 %v2838
      %4257 = vmatpush1.bf16.msra.mxu0 %v2837
      %4258 = vmatprep.subr.bf16.mxu0 %v2774
      %4259 = vmatpush1.bf16.msra.mxu0 %v2773
      %4260 = vmatprep.subr.bf16.mxu0 %v2710
      %4261 = vmatpush1.bf16.msra.mxu0 %v2709
      %4262 = vmatprep.subr.bf16.mxu0 %v2646
      %4263 = vmatpush1.bf16.msra.mxu0 %v2645
      %4264 = vmatprep.subr.bf16.mxu0 %v2582
      %4265 = vmatpush1.bf16.msra.mxu0 %v2581
      %4266 = vmatprep.subr.bf16.mxu0 0
      %4267 = vmatpush2.bf16.msra.mxu0 0
      %4268 = vmatprep.subr.bf16.mxu0 0
      %4269 = vmatpush2.bf16.msra.mxu0 0
      %4270 = vmatprep.subr.bf16.mxu0 0
      %4271 = vmatpush2.bf16.msra.mxu0 0
      %4272 = vmatprep.subr.bf16.mxu0 0
      %4273 = vmatpush2.bf16.msra.mxu0 0
      %4274 = vmatprep.subr.bf16.mxu0 0
      %4275 = vmatpush2.bf16.msra.mxu0 0
      %4276 = vmatprep.subr.bf16.mxu0 0
      %4277 = vmatpush2.bf16.msra.mxu0 0
      %4278 = vmatprep.subr.bf16.mxu0 0
      %4279 = vmatpush2.bf16.msra.mxu0 0
      %4280 = vmatprep.subr.bf16.mxu0 %v3094
      %4281 = vmatpush2.bf16.msra.mxu0 %v3093
      %4282 = vmatprep.mubr.bf16.mxu0 %v3715
      %4283 = vmatmul.mubr.bf16.gmra.mxu0 %v827
      %v4284 = vpop.f32.mrf.mxu0
      %v4285 = vadd.f32 %v798, %v4284
      %v4286 = vpop.f32.mrf.mxu0
      %v4287 = vadd.f32 %v798, %v4286
      %v4288 = vpop.f32.mrf.mxu0
      %v4289 = vadd.f32 %v803, %v4288
      %v4290 = vpop.f32.mrf.mxu0
      %v4291 = vadd.f32 %v803, %v4290
      %4292 = vmatprep.mubr.bf16.mxu0 %v3718
      %4293 = vmatmul.mubr.bf16.gmra.mxu0 %v829
      %v4294 = vpop.f32.mrf.mxu0
      %v4295 = vadd.f32 %v808, %v4294
      %v4296 = vpop.f32.mrf.mxu0
      %v4297 = vadd.f32 %v808, %v4296
      %v4298 = vpop.f32.mrf.mxu0
      %v4299 = vadd.f32 %v813, %v4298
      %v4300 = vpop.f32.mrf.mxu0
      %v4301 = vadd.f32 %v813, %v4300
      %4302 = vdwg.mxu0
      %4303 = vmatprep.subr.bf16.mxu0 %v3032
      %4304 = vmatpush1.bf16.msra.mxu0 %v3031
      %4305 = vmatprep.subr.bf16.mxu0 %v2968
      %4306 = vmatpush1.bf16.msra.mxu0 %v2967
      %4307 = vmatprep.subr.bf16.mxu0 %v2904
      %4308 = vmatpush1.bf16.msra.mxu0 %v2903
      %4309 = vmatprep.subr.bf16.mxu0 %v2840
      %4310 = vmatpush1.bf16.msra.mxu0 %v2839
      %4311 = vmatprep.subr.bf16.mxu0 %v2776
      %4312 = vmatpush1.bf16.msra.mxu0 %v2775
      %4313 = vmatprep.subr.bf16.mxu0 %v2712
      %4314 = vmatpush1.bf16.msra.mxu0 %v2711
      %4315 = vmatprep.subr.bf16.mxu0 %v2648
      %4316 = vmatpush1.bf16.msra.mxu0 %v2647
      %4317 = vmatprep.subr.bf16.mxu0 %v2584
      %4318 = vmatpush1.bf16.msra.mxu0 %v2583
      %4319 = vmatprep.subr.bf16.mxu0 0
      %4320 = vmatpush2.bf16.msra.mxu0 0
      %4321 = vmatprep.subr.bf16.mxu0 0
      %4322 = vmatpush2.bf16.msra.mxu0 0
      %4323 = vmatprep.subr.bf16.mxu0 0
      %4324 = vmatpush2.bf16.msra.mxu0 0
      %4325 = vmatprep.subr.bf16.mxu0 0
      %4326 = vmatpush2.bf16.msra.mxu0 0
      %4327 = vmatprep.subr.bf16.mxu0 0
      %4328 = vmatpush2.bf16.msra.mxu0 0
      %4329 = vmatprep.subr.bf16.mxu0 0
      %4330 = vmatpush2.bf16.msra.mxu0 0
      %4331 = vmatprep.subr.bf16.mxu0 0
      %4332 = vmatpush2.bf16.msra.mxu0 0
      %4333 = vmatprep.subr.bf16.mxu0 %v3096
      %4334 = vmatpush2.bf16.msra.mxu0 %v3095
      %4335 = vmatprep.mubr.bf16.mxu0 %v3715
      %4336 = vmatmul.mubr.bf16.gmra.mxu0 %v827
      %v4337 = vpop.f32.mrf.mxu0
      %v4338 = vadd.f32 %v798, %v4337
      %v4339 = vpop.f32.mrf.mxu0
      %v4340 = vadd.f32 %v798, %v4339
      %v4341 = vpop.f32.mrf.mxu0
      %v4342 = vadd.f32 %v803, %v4341
      %v4343 = vpop.f32.mrf.mxu0
      %v4344 = vadd.f32 %v803, %v4343
      %4345 = vmatprep.mubr.bf16.mxu0 %v3718
      %4346 = vmatmul.mubr.bf16.gmra.mxu0 %v829
      %v4347 = vpop.f32.mrf.mxu0
      %v4348 = vadd.f32 %v808, %v4347
      %v4349 = vpop.f32.mrf.mxu0
      %v4350 = vadd.f32 %v808, %v4349
      %v4351 = vpop.f32.mrf.mxu0
      %v4352 = vadd.f32 %v813, %v4351
      %v4353 = vpop.f32.mrf.mxu0
      %v4354 = vadd.f32 %v813, %v4353
      %4355 = vdwg.mxu0
      %4356 = vmatprep.subr.bf16.mxu0 %v3034
      %4357 = vmatpush1.bf16.msra.mxu0 %v3033
      %4358 = vmatprep.subr.bf16.mxu0 %v2970
      %4359 = vmatpush1.bf16.msra.mxu0 %v2969
      %4360 = vmatprep.subr.bf16.mxu0 %v2906
      %4361 = vmatpush1.bf16.msra.mxu0 %v2905
      %4362 = vmatprep.subr.bf16.mxu0 %v2842
      %4363 = vmatpush1.bf16.msra.mxu0 %v2841
      %4364 = vmatprep.subr.bf16.mxu0 %v2778
      %4365 = vmatpush1.bf16.msra.mxu0 %v2777
      %4366 = vmatprep.subr.bf16.mxu0 %v2714
      %4367 = vmatpush1.bf16.msra.mxu0 %v2713
      %4368 = vmatprep.subr.bf16.mxu0 %v2650
      %4369 = vmatpush1.bf16.msra.mxu0 %v2649
      %4370 = vmatprep.subr.bf16.mxu0 %v2586
      %4371 = vmatpush1.bf16.msra.mxu0 %v2585
      %4372 = vmatprep.subr.bf16.mxu0 0
      %4373 = vmatpush2.bf16.msra.mxu0 0
      %4374 = vmatprep.subr.bf16.mxu0 0
      %4375 = vmatpush2.bf16.msra.mxu0 0
      %4376 = vmatprep.subr.bf16.mxu0 0
      %4377 = vmatpush2.bf16.msra.mxu0 0
      %4378 = vmatprep.subr.bf16.mxu0 0
      %4379 = vmatpush2.bf16.msra.mxu0 0
      %4380 = vmatprep.subr.bf16.mxu0 0
      %4381 = vmatpush2.bf16.msra.mxu0 0
      %4382 = vmatprep.subr.bf16.mxu0 0
      %4383 = vmatpush2.bf16.msra.mxu0 0
      %4384 = vmatprep.subr.bf16.mxu0 0
      %4385 = vmatpush2.bf16.msra.mxu0 0
      %4386 = vmatprep.subr.bf16.mxu0 %v3098
      %4387 = vmatpush2.bf16.msra.mxu0 %v3097
      %4388 = vmatprep.mubr.bf16.mxu0 %v3715
      %4389 = vmatmul.mubr.bf16.gmra.mxu0 %v827
      %v4390 = vpop.f32.mrf.mxu0
      %v4391 = vadd.f32 %v798, %v4390
      %v4392 = vpop.f32.mrf.mxu0
      %v4393 = vadd.f32 %v798, %v4392
      %v4394 = vpop.f32.mrf.mxu0
      %v4395 = vadd.f32 %v803, %v4394
      %v4396 = vpop.f32.mrf.mxu0
      %v4397 = vadd.f32 %v803, %v4396
      %4398 = vmatprep.mubr.bf16.mxu0 %v3718
      %4399 = vmatmul.mubr.bf16.gmra.mxu0 %v829
      %v4400 = vpop.f32.mrf.mxu0
      %v4401 = vadd.f32 %v808, %v4400
      %v4402 = vpop.f32.mrf.mxu0
      %v4403 = vadd.f32 %v808, %v4402
      %v4404 = vpop.f32.mrf.mxu0
      %v4405 = vadd.f32 %v813, %v4404
      %v4406 = vpop.f32.mrf.mxu0
      %v4407 = vadd.f32 %v813, %v4406
      %4408 = vdwg.mxu0
      %4409 = vmatprep.subr.bf16.mxu0 %v3036
      %4410 = vmatpush1.bf16.msra.mxu0 %v3035
      %4411 = vmatprep.subr.bf16.mxu0 %v2972
      %4412 = vmatpush1.bf16.msra.mxu0 %v2971
      %4413 = vmatprep.subr.bf16.mxu0 %v2908
      %4414 = vmatpush1.bf16.msra.mxu0 %v2907
      %4415 = vmatprep.subr.bf16.mxu0 %v2844
      %4416 = vmatpush1.bf16.msra.mxu0 %v2843
      %4417 = vmatprep.subr.bf16.mxu0 %v2780
      %4418 = vmatpush1.bf16.msra.mxu0 %v2779
      %4419 = vmatprep.subr.bf16.mxu0 %v2716
      %4420 = vmatpush1.bf16.msra.mxu0 %v2715
      %4421 = vmatprep.subr.bf16.mxu0 %v2652
      %4422 = vmatpush1.bf16.msra.mxu0 %v2651
      %4423 = vmatprep.subr.bf16.mxu0 %v2588
      %4424 = vmatpush1.bf16.msra.mxu0 %v2587
      %4425 = vmatprep.subr.bf16.mxu0 0
      %4426 = vmatpush2.bf16.msra.mxu0 0
      %4427 = vmatprep.subr.bf16.mxu0 0
      %4428 = vmatpush2.bf16.msra.mxu0 0
      %4429 = vmatprep.subr.bf16.mxu0 0
      %4430 = vmatpush2.bf16.msra.mxu0 0
      %4431 = vmatprep.subr.bf16.mxu0 0
      %4432 = vmatpush2.bf16.msra.mxu0 0
      %4433 = vmatprep.subr.bf16.mxu0 0
      %4434 = vmatpush2.bf16.msra.mxu0 0
      %4435 = vmatprep.subr.bf16.mxu0 0
      %4436 = vmatpush2.bf16.msra.mxu0 0
      %4437 = vmatprep.subr.bf16.mxu0 0
      %4438 = vmatpush2.bf16.msra.mxu0 0
      %4439 = vmatprep.subr.bf16.mxu0 %v3100
      %4440 = vmatpush2.bf16.msra.mxu0 %v3099
      %4441 = vmatprep.mubr.bf16.mxu0 %v3715
      %4442 = vmatmul.mubr.bf16.gmra.mxu0 %v827
      %v4443 = vpop.f32.mrf.mxu0
      %v4444 = vadd.f32 %v798, %v4443
      %v4445 = vpop.f32.mrf.mxu0
      %v4446 = vadd.f32 %v798, %v4445
      %v4447 = vpop.f32.mrf.mxu0
      %v4448 = vadd.f32 %v803, %v4447
      %v4449 = vpop.f32.mrf.mxu0
      %v4450 = vadd.f32 %v803, %v4449
      %4451 = vmatprep.mubr.bf16.mxu0 %v3718
      %4452 = vmatmul.mubr.bf16.gmra.mxu0 %v829
      %v4453 = vpop.f32.mrf.mxu0
      %v4454 = vadd.f32 %v808, %v4453
      %v4455 = vpop.f32.mrf.mxu0
      %v4456 = vadd.f32 %v808, %v4455
      %v4457 = vpop.f32.mrf.mxu0
      %v4458 = vadd.f32 %v813, %v4457
      %v4459 = vpop.f32.mrf.mxu0
      %v4460 = vadd.f32 %v813, %v4459
      %4461 = vdwg.mxu0
      %4462 = vmatprep.subr.bf16.mxu0 %v3038
      %4463 = vmatpush1.bf16.msra.mxu0 %v3037
      %4464 = vmatprep.subr.bf16.mxu0 %v2974
      %4465 = vmatpush1.bf16.msra.mxu0 %v2973
      %4466 = vmatprep.subr.bf16.mxu0 %v2910
      %4467 = vmatpush1.bf16.msra.mxu0 %v2909
      %4468 = vmatprep.subr.bf16.mxu0 %v2846
      %4469 = vmatpush1.bf16.msra.mxu0 %v2845
      %4470 = vmatprep.subr.bf16.mxu0 %v2782
      %4471 = vmatpush1.bf16.msra.mxu0 %v2781
      %4472 = vmatprep.subr.bf16.mxu0 %v2718
      %4473 = vmatpush1.bf16.msra.mxu0 %v2717
      %4474 = vmatprep.subr.bf16.mxu0 %v2654
      %4475 = vmatpush1.bf16.msra.mxu0 %v2653
      %4476 = vmatprep.subr.bf16.mxu0 %v2590
      %4477 = vmatpush1.bf16.msra.mxu0 %v2589
      %4478 = vmatprep.subr.bf16.mxu0 0
      %4479 = vmatpush2.bf16.msra.mxu0 0
      %4480 = vmatprep.subr.bf16.mxu0 0
      %4481 = vmatpush2.bf16.msra.mxu0 0
      %4482 = vmatprep.subr.bf16.mxu0 0
      %4483 = vmatpush2.bf16.msra.mxu0 0
      %4484 = vmatprep.subr.bf16.mxu0 0
      %4485 = vmatpush2.bf16.msra.mxu0 0
      %4486 = vmatprep.subr.bf16.mxu0 0
      %4487 = vmatpush2.bf16.msra.mxu0 0
      %4488 = vmatprep.subr.bf16.mxu0 0
      %4489 = vmatpush2.bf16.msra.mxu0 0
      %4490 = vmatprep.subr.bf16.mxu0 0
      %4491 = vmatpush2.bf16.msra.mxu0 0
      %4492 = vmatprep.subr.bf16.mxu0 %v3102
      %4493 = vmatpush2.bf16.msra.mxu0 %v3101
      %4494 = vmatprep.mubr.bf16.mxu0 %v3715
      %4495 = vmatmul.mubr.bf16.gmra.mxu0 %v827
      %v4496 = vpop.f32.mrf.mxu0
      %v4497 = vadd.f32 %v798, %v4496
      %v4498 = vpop.f32.mrf.mxu0
      %v4499 = vadd.f32 %v798, %v4498
      %v4500 = vpop.f32.mrf.mxu0
      %v4501 = vadd.f32 %v803, %v4500
      %v4502 = vpop.f32.mrf.mxu0
      %v4503 = vadd.f32 %v803, %v4502
      %4504 = vmatprep.mubr.bf16.mxu0 %v3718
      %4505 = vmatmul.mubr.bf16.gmra.mxu0 %v829
      %v4506 = vpop.f32.mrf.mxu0
      %v4507 = vadd.f32 %v808, %v4506
      %v4508 = vpop.f32.mrf.mxu0
      %v4509 = vadd.f32 %v808, %v4508
      %v4510 = vpop.f32.mrf.mxu0
      %v4511 = vadd.f32 %v813, %v4510
      %v4512 = vpop.f32.mrf.mxu0
      %v4513 = vadd.f32 %v813, %v4512
      %4514 = vdwg.mxu0
      %4515 = vmatprep.subr.bf16.mxu0 %v3040
      %4516 = vmatpush1.bf16.msra.mxu0 %v3039
      %4517 = vmatprep.subr.bf16.mxu0 %v2976
      %4518 = vmatpush1.bf16.msra.mxu0 %v2975
      %4519 = vmatprep.subr.bf16.mxu0 %v2912
      %4520 = vmatpush1.bf16.msra.mxu0 %v2911
      %4521 = vmatprep.subr.bf16.mxu0 %v2848
      %4522 = vmatpush1.bf16.msra.mxu0 %v2847
      %4523 = vmatprep.subr.bf16.mxu0 %v2784
      %4524 = vmatpush1.bf16.msra.mxu0 %v2783
      %4525 = vmatprep.subr.bf16.mxu0 %v2720
      %4526 = vmatpush1.bf16.msra.mxu0 %v2719
      %4527 = vmatprep.subr.bf16.mxu0 %v2656
      %4528 = vmatpush1.bf16.msra.mxu0 %v2655
      %4529 = vmatprep.subr.bf16.mxu0 %v2592
      %4530 = vmatpush1.bf16.msra.mxu0 %v2591
      %4531 = vmatprep.subr.bf16.mxu0 0
      %4532 = vmatpush2.bf16.msra.mxu0 0
      %4533 = vmatprep.subr.bf16.mxu0 0
      %4534 = vmatpush2.bf16.msra.mxu0 0
      %4535 = vmatprep.subr.bf16.mxu0 0
      %4536 = vmatpush2.bf16.msra.mxu0 0
      %4537 = vmatprep.subr.bf16.mxu0 0
      %4538 = vmatpush2.bf16.msra.mxu0 0
      %4539 = vmatprep.subr.bf16.mxu0 0
      %4540 = vmatpush2.bf16.msra.mxu0 0
      %4541 = vmatprep.subr.bf16.mxu0 0
      %4542 = vmatpush2.bf16.msra.mxu0 0
      %4543 = vmatprep.subr.bf16.mxu0 0
      %4544 = vmatpush2.bf16.msra.mxu0 0
      %4545 = vmatprep.subr.bf16.mxu0 %v3104
      %4546 = vmatpush2.bf16.msra.mxu0 %v3103
      %4547 = vmatprep.mubr.bf16.mxu0 %v3715
      %4548 = vmatmul.mubr.bf16.gmra.mxu0 %v827
      %v4549 = vpop.f32.mrf.mxu0
      %v4550 = vadd.f32 %v798, %v4549
      %v4551 = vpop.f32.mrf.mxu0
      %v4552 = vadd.f32 %v798, %v4551
      %v4553 = vpop.f32.mrf.mxu0
      %v4554 = vadd.f32 %v803, %v4553
      %v4555 = vpop.f32.mrf.mxu0
      %v4556 = vadd.f32 %v803, %v4555
      %4557 = vmatprep.mubr.bf16.mxu0 %v3718
      %4558 = vmatmul.mubr.bf16.gmra.mxu0 %v829
      %v4559 = vpop.f32.mrf.mxu0
      %v4560 = vadd.f32 %v808, %v4559
      %v4561 = vpop.f32.mrf.mxu0
      %v4562 = vadd.f32 %v808, %v4561
      %v4563 = vpop.f32.mrf.mxu0
      %v4564 = vadd.f32 %v813, %v4563
      %v4565 = vpop.f32.mrf.mxu0
      %v4566 = vadd.f32 %v813, %v4565
      %4567 = vdwg.mxu0
      %4568 = vmatprep.subr.bf16.mxu0 %v3042
      %4569 = vmatpush1.bf16.msra.mxu0 %v3041
      %4570 = vmatprep.subr.bf16.mxu0 %v2978
      %4571 = vmatpush1.bf16.msra.mxu0 %v2977
      %4572 = vmatprep.subr.bf16.mxu0 %v2914
      %4573 = vmatpush1.bf16.msra.mxu0 %v2913
      %4574 = vmatprep.subr.bf16.mxu0 %v2850
      %4575 = vmatpush1.bf16.msra.mxu0 %v2849
      %4576 = vmatprep.subr.bf16.mxu0 %v2786
      %4577 = vmatpush1.bf16.msra.mxu0 %v2785
      %4578 = vmatprep.subr.bf16.mxu0 %v2722
      %4579 = vmatpush1.bf16.msra.mxu0 %v2721
      %4580 = vmatprep.subr.bf16.mxu0 %v2658
      %4581 = vmatpush1.bf16.msra.mxu0 %v2657
      %4582 = vmatprep.subr.bf16.mxu0 %v2594
      %4583 = vmatpush1.bf16.msra.mxu0 %v2593
      %4584 = vmatprep.subr.bf16.mxu0 0
      %4585 = vmatpush2.bf16.msra.mxu0 0
      %4586 = vmatprep.subr.bf16.mxu0 0
      %4587 = vmatpush2.bf16.msra.mxu0 0
      %4588 = vmatprep.subr.bf16.mxu0 0
      %4589 = vmatpush2.bf16.msra.mxu0 0
      %4590 = vmatprep.subr.bf16.mxu0 0
      %4591 = vmatpush2.bf16.msra.mxu0 0
      %4592 = vmatprep.subr.bf16.mxu0 0
      %4593 = vmatpush2.bf16.msra.mxu0 0
      %4594 = vmatprep.subr.bf16.mxu0 0
      %4595 = vmatpush2.bf16.msra.mxu0 0
      %4596 = vmatprep.subr.bf16.mxu0 0
      %4597 = vmatpush2.bf16.msra.mxu0 0
      %4598 = vmatprep.subr.bf16.mxu0 %v3106
      %4599 = vmatpush2.bf16.msra.mxu0 %v3105
      %4600 = vmatprep.mubr.bf16.mxu0 %v3715
      %4601 = vmatmul.mubr.bf16.gmra.mxu0 %v827
      %v4602 = vpop.f32.mrf.mxu0
      %v4603 = vadd.f32 %v798, %v4602
      %v4604 = vpop.f32.mrf.mxu0
      %v4605 = vadd.f32 %v798, %v4604
      %v4606 = vpop.f32.mrf.mxu0
      %v4607 = vadd.f32 %v803, %v4606
      %v4608 = vpop.f32.mrf.mxu0
      %v4609 = vadd.f32 %v803, %v4608
      %4610 = vmatprep.mubr.bf16.mxu0 %v3718
      %4611 = vmatmul.mubr.bf16.gmra.mxu0 %v829
      %v4612 = vpop.f32.mrf.mxu0
      %v4613 = vadd.f32 %v808, %v4612
      %v4614 = vpop.f32.mrf.mxu0
      %v4615 = vadd.f32 %v808, %v4614
      %v4616 = vpop.f32.mrf.mxu0
      %v4617 = vadd.f32 %v813, %v4616
      %v4618 = vpop.f32.mrf.mxu0
      %v4619 = vadd.f32 %v813, %v4618
      %4620 = vdwg.mxu0
      %4621 = vmatprep.subr.bf16.mxu0 %v3044
      %4622 = vmatpush1.bf16.msra.mxu0 %v3043
      %4623 = vmatprep.subr.bf16.mxu0 %v2980
      %4624 = vmatpush1.bf16.msra.mxu0 %v2979
      %4625 = vmatprep.subr.bf16.mxu0 %v2916
      %4626 = vmatpush1.bf16.msra.mxu0 %v2915
      %4627 = vmatprep.subr.bf16.mxu0 %v2852
      %4628 = vmatpush1.bf16.msra.mxu0 %v2851
      %4629 = vmatprep.subr.bf16.mxu0 %v2788
      %4630 = vmatpush1.bf16.msra.mxu0 %v2787
      %4631 = vmatprep.subr.bf16.mxu0 %v2724
      %4632 = vmatpush1.bf16.msra.mxu0 %v2723
      %4633 = vmatprep.subr.bf16.mxu0 %v2660
      %4634 = vmatpush1.bf16.msra.mxu0 %v2659
      %4635 = vmatprep.subr.bf16.mxu0 %v2596
      %4636 = vmatpush1.bf16.msra.mxu0 %v2595
      %4637 = vmatprep.subr.bf16.mxu0 0
      %4638 = vmatpush2.bf16.msra.mxu0 0
      %4639 = vmatprep.subr.bf16.mxu0 0
      %4640 = vmatpush2.bf16.msra.mxu0 0
      %4641 = vmatprep.subr.bf16.mxu0 0
      %4642 = vmatpush2.bf16.msra.mxu0 0
      %4643 = vmatprep.subr.bf16.mxu0 0
      %4644 = vmatpush2.bf16.msra.mxu0 0
      %4645 = vmatprep.subr.bf16.mxu0 0
      %4646 = vmatpush2.bf16.msra.mxu0 0
      %4647 = vmatprep.subr.bf16.mxu0 0
      %4648 = vmatpush2.bf16.msra.mxu0 0
      %4649 = vmatprep.subr.bf16.mxu0 0
      %4650 = vmatpush2.bf16.msra.mxu0 0
      %4651 = vmatprep.subr.bf16.mxu0 %v3108
      %4652 = vmatpush2.bf16.msra.mxu0 %v3107
      %4653 = vmatprep.mubr.bf16.mxu0 %v3715
      %4654 = vmatmul.mubr.bf16.gmra.mxu0 %v827
      %v4655 = vpop.f32.mrf.mxu0
      %v4656 = vadd.f32 %v798, %v4655
      %v4657 = vpop.f32.mrf.mxu0
      %v4658 = vadd.f32 %v798, %v4657
      %v4659 = vpop.f32.mrf.mxu0
      %v4660 = vadd.f32 %v803, %v4659
      %v4661 = vpop.f32.mrf.mxu0
      %v4662 = vadd.f32 %v803, %v4661
      %4663 = vmatprep.mubr.bf16.mxu0 %v3718
      %4664 = vmatmul.mubr.bf16.gmra.mxu0 %v829
      %v4665 = vpop.f32.mrf.mxu0
      %v4666 = vadd.f32 %v808, %v4665
      %v4667 = vpop.f32.mrf.mxu0
      %v4668 = vadd.f32 %v808, %v4667
      %v4669 = vpop.f32.mrf.mxu0
      %v4670 = vadd.f32 %v813, %v4669
      %v4671 = vpop.f32.mrf.mxu0
      %v4672 = vadd.f32 %v813, %v4671
      %4673 = vdwg.mxu0
      %4674 = vmatprep.subr.bf16.mxu0 %v3046
      %4675 = vmatpush1.bf16.msra.mxu0 %v3045
      %4676 = vmatprep.subr.bf16.mxu0 %v2982
      %4677 = vmatpush1.bf16.msra.mxu0 %v2981
      %4678 = vmatprep.subr.bf16.mxu0 %v2918
      %4679 = vmatpush1.bf16.msra.mxu0 %v2917
      %4680 = vmatprep.subr.bf16.mxu0 %v2854
      %4681 = vmatpush1.bf16.msra.mxu0 %v2853
      %4682 = vmatprep.subr.bf16.mxu0 %v2790
      %4683 = vmatpush1.bf16.msra.mxu0 %v2789
      %4684 = vmatprep.subr.bf16.mxu0 %v2726
      %4685 = vmatpush1.bf16.msra.mxu0 %v2725
      %4686 = vmatprep.subr.bf16.mxu0 %v2662
      %4687 = vmatpush1.bf16.msra.mxu0 %v2661
      %4688 = vmatprep.subr.bf16.mxu0 %v2598
      %4689 = vmatpush1.bf16.msra.mxu0 %v2597
      %4690 = vmatprep.subr.bf16.mxu0 0
      %4691 = vmatpush2.bf16.msra.mxu0 0
      %4692 = vmatprep.subr.bf16.mxu0 0
      %4693 = vmatpush2.bf16.msra.mxu0 0
      %4694 = vmatprep.subr.bf16.mxu0 0
      %4695 = vmatpush2.bf16.msra.mxu0 0
      %4696 = vmatprep.subr.bf16.mxu0 0
      %4697 = vmatpush2.bf16.msra.mxu0 0
      %4698 = vmatprep.subr.bf16.mxu0 0
      %4699 = vmatpush2.bf16.msra.mxu0 0
      %4700 = vmatprep.subr.bf16.mxu0 0
      %4701 = vmatpush2.bf16.msra.mxu0 0
      %4702 = vmatprep.subr.bf16.mxu0 0
      %4703 = vmatpush2.bf16.msra.mxu0 0
      %4704 = vmatprep.subr.bf16.mxu0 %v3110
      %4705 = vmatpush2.bf16.msra.mxu0 %v3109
      %4706 = vmatprep.mubr.bf16.mxu0 %v3715
      %4707 = vmatmul.mubr.bf16.gmra.mxu0 %v827
      %v4708 = vpop.f32.mrf.mxu0
      %v4709 = vadd.f32 %v798, %v4708
      %v4710 = vpop.f32.mrf.mxu0
      %v4711 = vadd.f32 %v798, %v4710
      %v4712 = vpop.f32.mrf.mxu0
      %v4713 = vadd.f32 %v803, %v4712
      %v4714 = vpop.f32.mrf.mxu0
      %v4715 = vadd.f32 %v803, %v4714
      %4716 = vmatprep.mubr.bf16.mxu0 %v3718
      %4717 = vmatmul.mubr.bf16.gmra.mxu0 %v829
      %v4718 = vpop.f32.mrf.mxu0
      %v4719 = vadd.f32 %v808, %v4718
      %v4720 = vpop.f32.mrf.mxu0
      %v4721 = vadd.f32 %v808, %v4720
      %v4722 = vpop.f32.mrf.mxu0
      %v4723 = vadd.f32 %v813, %v4722
      %v4724 = vpop.f32.mrf.mxu0
      %v4725 = vadd.f32 %v813, %v4724
      %4726 = vdwg.mxu0
      %4727 = vmatprep.subr.bf16.mxu0 %v3048
      %4728 = vmatpush1.bf16.msra.mxu0 %v3047
      %4729 = vmatprep.subr.bf16.mxu0 %v2984
      %4730 = vmatpush1.bf16.msra.mxu0 %v2983
      %4731 = vmatprep.subr.bf16.mxu0 %v2920
      %4732 = vmatpush1.bf16.msra.mxu0 %v2919
      %4733 = vmatprep.subr.bf16.mxu0 %v2856
      %4734 = vmatpush1.bf16.msra.mxu0 %v2855
      %4735 = vmatprep.subr.bf16.mxu0 %v2792
      %4736 = vmatpush1.bf16.msra.mxu0 %v2791
      %4737 = vmatprep.subr.bf16.mxu0 %v2728
      %4738 = vmatpush1.bf16.msra.mxu0 %v2727
      %4739 = vmatprep.subr.bf16.mxu0 %v2664
      %4740 = vmatpush1.bf16.msra.mxu0 %v2663
      %4741 = vmatprep.subr.bf16.mxu0 %v2600
      %4742 = vmatpush1.bf16.msra.mxu0 %v2599
      %4743 = vmatprep.subr.bf16.mxu0 0
      %4744 = vmatpush2.bf16.msra.mxu0 0
      %4745 = vmatprep.subr.bf16.mxu0 0
      %4746 = vmatpush2.bf16.msra.mxu0 0
      %4747 = vmatprep.subr.bf16.mxu0 0
      %4748 = vmatpush2.bf16.msra.mxu0 0
      %4749 = vmatprep.subr.bf16.mxu0 0
      %4750 = vmatpush2.bf16.msra.mxu0 0
      %4751 = vmatprep.subr.bf16.mxu0 0
      %4752 = vmatpush2.bf16.msra.mxu0 0
      %4753 = vmatprep.subr.bf16.mxu0 0
      %4754 = vmatpush2.bf16.msra.mxu0 0
      %4755 = vmatprep.subr.bf16.mxu0 0
      %4756 = vmatpush2.bf16.msra.mxu0 0
      %4757 = vmatprep.subr.bf16.mxu0 %v3112
      %4758 = vmatpush2.bf16.msra.mxu0 %v3111
      %4759 = vmatprep.mubr.bf16.mxu0 %v3715
      %4760 = vmatmul.mubr.bf16.gmra.mxu0 %v827
      %v4761 = vpop.f32.mrf.mxu0
      %v4762 = vadd.f32 %v798, %v4761
      %v4763 = vpop.f32.mrf.mxu0
      %v4764 = vadd.f32 %v798, %v4763
      %v4765 = vpop.f32.mrf.mxu0
      %v4766 = vadd.f32 %v803, %v4765
      %v4767 = vpop.f32.mrf.mxu0
      %v4768 = vadd.f32 %v803, %v4767
      %4769 = vmatprep.mubr.bf16.mxu0 %v3718
      %4770 = vmatmul.mubr.bf16.gmra.mxu0 %v829
      %v4771 = vpop.f32.mrf.mxu0
      %v4772 = vadd.f32 %v808, %v4771
      %v4773 = vpop.f32.mrf.mxu0
      %v4774 = vadd.f32 %v808, %v4773
      %v4775 = vpop.f32.mrf.mxu0
      %v4776 = vadd.f32 %v813, %v4775
      %v4777 = vpop.f32.mrf.mxu0
      %v4778 = vadd.f32 %v813, %v4777
      %4779 = vdwg.mxu0
      %4780 = vmatprep.subr.bf16.mxu0 %v3050
      %4781 = vmatpush1.bf16.msra.mxu0 %v3049
      %4782 = vmatprep.subr.bf16.mxu0 %v2986
      %4783 = vmatpush1.bf16.msra.mxu0 %v2985
      %4784 = vmatprep.subr.bf16.mxu0 %v2922
      %4785 = vmatpush1.bf16.msra.mxu0 %v2921
      %4786 = vmatprep.subr.bf16.mxu0 %v2858
      %4787 = vmatpush1.bf16.msra.mxu0 %v2857
      %4788 = vmatprep.subr.bf16.mxu0 %v2794
      %4789 = vmatpush1.bf16.msra.mxu0 %v2793
      %4790 = vmatprep.subr.bf16.mxu0 %v2730
      %4791 = vmatpush1.bf16.msra.mxu0 %v2729
      %4792 = vmatprep.subr.bf16.mxu0 %v2666
      %4793 = vmatpush1.bf16.msra.mxu0 %v2665
      %4794 = vmatprep.subr.bf16.mxu0 %v2602
      %4795 = vmatpush1.bf16.msra.mxu0 %v2601
      %4796 = vmatprep.subr.bf16.mxu0 0
      %4797 = vmatpush2.bf16.msra.mxu0 0
      %4798 = vmatprep.subr.bf16.mxu0 0
      %4799 = vmatpush2.bf16.msra.mxu0 0
      %4800 = vmatprep.subr.bf16.mxu0 0
      %4801 = vmatpush2.bf16.msra.mxu0 0
      %4802 = vmatprep.subr.bf16.mxu0 0
      %4803 = vmatpush2.bf16.msra.mxu0 0
      %4804 = vmatprep.subr.bf16.mxu0 0
      %4805 = vmatpush2.bf16.msra.mxu0 0
      %4806 = vmatprep.subr.bf16.mxu0 0
      %4807 = vmatpush2.bf16.msra.mxu0 0
      %4808 = vmatprep.subr.bf16.mxu0 0
      %4809 = vmatpush2.bf16.msra.mxu0 0
      %4810 = vmatprep.subr.bf16.mxu0 %v3114
      %4811 = vmatpush2.bf16.msra.mxu0 %v3113
      %4812 = vmatprep.mubr.bf16.mxu0 %v3715
      %4813 = vmatmul.mubr.bf16.gmra.mxu0 %v827
      %v4814 = vpop.f32.mrf.mxu0
      %v4815 = vadd.f32 %v798, %v4814
      %v4816 = vpop.f32.mrf.mxu0
      %v4817 = vadd.f32 %v798, %v4816
      %v4818 = vpop.f32.mrf.mxu0
      %v4819 = vadd.f32 %v803, %v4818
      %v4820 = vpop.f32.mrf.mxu0
      %v4821 = vadd.f32 %v803, %v4820
      %4822 = vmatprep.mubr.bf16.mxu0 %v3718
      %4823 = vmatmul.mubr.bf16.gmra.mxu0 %v829
      %v4824 = vpop.f32.mrf.mxu0
      %v4825 = vadd.f32 %v808, %v4824
      %v4826 = vpop.f32.mrf.mxu0
      %v4827 = vadd.f32 %v808, %v4826
      %v4828 = vpop.f32.mrf.mxu0
      %v4829 = vadd.f32 %v813, %v4828
      %v4830 = vpop.f32.mrf.mxu0
      %v4831 = vadd.f32 %v813, %v4830
      %4832 = vdwg.mxu0
      %4833 = vmatprep.subr.bf16.mxu0 %v3052
      %4834 = vmatpush1.bf16.msra.mxu0 %v3051
      %4835 = vmatprep.subr.bf16.mxu0 %v2988
      %4836 = vmatpush1.bf16.msra.mxu0 %v2987
      %4837 = vmatprep.subr.bf16.mxu0 %v2924
      %4838 = vmatpush1.bf16.msra.mxu0 %v2923
      %4839 = vmatprep.subr.bf16.mxu0 %v2860
      %4840 = vmatpush1.bf16.msra.mxu0 %v2859
      %4841 = vmatprep.subr.bf16.mxu0 %v2796
      %4842 = vmatpush1.bf16.msra.mxu0 %v2795
      %4843 = vmatprep.subr.bf16.mxu0 %v2732
      %4844 = vmatpush1.bf16.msra.mxu0 %v2731
      %4845 = vmatprep.subr.bf16.mxu0 %v2668
      %4846 = vmatpush1.bf16.msra.mxu0 %v2667
      %4847 = vmatprep.subr.bf16.mxu0 %v2604
      %4848 = vmatpush1.bf16.msra.mxu0 %v2603
      %4849 = vmatprep.subr.bf16.mxu0 0
      %4850 = vmatpush2.bf16.msra.mxu0 0
      %4851 = vmatprep.subr.bf16.mxu0 0
      %4852 = vmatpush2.bf16.msra.mxu0 0
      %4853 = vmatprep.subr.bf16.mxu0 0
      %4854 = vmatpush2.bf16.msra.mxu0 0
      %4855 = vmatprep.subr.bf16.mxu0 0
      %4856 = vmatpush2.bf16.msra.mxu0 0
      %4857 = vmatprep.subr.bf16.mxu0 0
      %4858 = vmatpush2.bf16.msra.mxu0 0
      %4859 = vmatprep.subr.bf16.mxu0 0
      %4860 = vmatpush2.bf16.msra.mxu0 0
      %4861 = vmatprep.subr.bf16.mxu0 0
      %4862 = vmatpush2.bf16.msra.mxu0 0
      %4863 = vmatprep.subr.bf16.mxu0 %v3116
      %4864 = vmatpush2.bf16.msra.mxu0 %v3115
      %4865 = vmatprep.mubr.bf16.mxu0 %v3715
      %4866 = vmatmul.mubr.bf16.gmra.mxu0 %v827
      %v4867 = vpop.f32.mrf.mxu0
      %v4868 = vadd.f32 %v798, %v4867
      %v4869 = vpop.f32.mrf.mxu0
      %v4870 = vadd.f32 %v798, %v4869
      %v4871 = vpop.f32.mrf.mxu0
      %v4872 = vadd.f32 %v803, %v4871
      %v4873 = vpop.f32.mrf.mxu0
      %v4874 = vadd.f32 %v803, %v4873
      %4875 = vmatprep.mubr.bf16.mxu0 %v3718
      %4876 = vmatmul.mubr.bf16.gmra.mxu0 %v829
      %v4877 = vpop.f32.mrf.mxu0
      %v4878 = vadd.f32 %v808, %v4877
      %v4879 = vpop.f32.mrf.mxu0
      %v4880 = vadd.f32 %v808, %v4879
      %v4881 = vpop.f32.mrf.mxu0
      %v4882 = vadd.f32 %v813, %v4881
      %v4883 = vpop.f32.mrf.mxu0
      %v4884 = vadd.f32 %v813, %v4883
      %4885 = vdwg.mxu0
      %4886 = vmatprep.subr.bf16.mxu0 %v3054
      %4887 = vmatpush1.bf16.msra.mxu0 %v3053
      %4888 = vmatprep.subr.bf16.mxu0 %v2990
      %4889 = vmatpush1.bf16.msra.mxu0 %v2989
      %4890 = vmatprep.subr.bf16.mxu0 %v2926
      %4891 = vmatpush1.bf16.msra.mxu0 %v2925
      %4892 = vmatprep.subr.bf16.mxu0 %v2862
      %4893 = vmatpush1.bf16.msra.mxu0 %v2861
      %4894 = vmatprep.subr.bf16.mxu0 %v2798
      %4895 = vmatpush1.bf16.msra.mxu0 %v2797
      %4896 = vmatprep.subr.bf16.mxu0 %v2734
      %4897 = vmatpush1.bf16.msra.mxu0 %v2733
      %4898 = vmatprep.subr.bf16.mxu0 %v2670
      %4899 = vmatpush1.bf16.msra.mxu0 %v2669
      %4900 = vmatprep.subr.bf16.mxu0 %v2606
      %4901 = vmatpush1.bf16.msra.mxu0 %v2605
      %4902 = vmatprep.subr.bf16.mxu0 0
      %4903 = vmatpush2.bf16.msra.mxu0 0
      %4904 = vmatprep.subr.bf16.mxu0 0
      %4905 = vmatpush2.bf16.msra.mxu0 0
      %4906 = vmatprep.subr.bf16.mxu0 0
      %4907 = vmatpush2.bf16.msra.mxu0 0
      %4908 = vmatprep.subr.bf16.mxu0 0
      %4909 = vmatpush2.bf16.msra.mxu0 0
      %4910 = vmatprep.subr.bf16.mxu0 0
      %4911 = vmatpush2.bf16.msra.mxu0 0
      %4912 = vmatprep.subr.bf16.mxu0 0
      %4913 = vmatpush2.bf16.msra.mxu0 0
      %4914 = vmatprep.subr.bf16.mxu0 0
      %4915 = vmatpush2.bf16.msra.mxu0 0
      %4916 = vmatprep.subr.bf16.mxu0 %v3118
      %4917 = vmatpush2.bf16.msra.mxu0 %v3117
      %4918 = vmatprep.mubr.bf16.mxu0 %v3715
      %4919 = vmatmul.mubr.bf16.gmra.mxu0 %v827
      %v4920 = vpop.f32.mrf.mxu0
      %v4921 = vadd.f32 %v798, %v4920
      %v4922 = vpop.f32.mrf.mxu0
      %v4923 = vadd.f32 %v798, %v4922
      %v4924 = vpop.f32.mrf.mxu0
      %v4925 = vadd.f32 %v803, %v4924
      %v4926 = vpop.f32.mrf.mxu0
      %v4927 = vadd.f32 %v803, %v4926
      %4928 = vmatprep.mubr.bf16.mxu0 %v3718
      %4929 = vmatmul.mubr.bf16.gmra.mxu0 %v829
      %v4930 = vpop.f32.mrf.mxu0
      %v4931 = vadd.f32 %v808, %v4930
      %v4932 = vpop.f32.mrf.mxu0
      %v4933 = vadd.f32 %v808, %v4932
      %v4934 = vpop.f32.mrf.mxu0
      %v4935 = vadd.f32 %v813, %v4934
      %v4936 = vpop.f32.mrf.mxu0
      %v4937 = vadd.f32 %v813, %v4936
      %4938 = vdwg.mxu0
      %4939 = vmatprep.subr.bf16.mxu0 %v3056
      %4940 = vmatpush1.bf16.msra.mxu0 %v3055
      %4941 = vmatprep.subr.bf16.mxu0 %v2992
      %4942 = vmatpush1.bf16.msra.mxu0 %v2991
      %4943 = vmatprep.subr.bf16.mxu0 %v2928
      %4944 = vmatpush1.bf16.msra.mxu0 %v2927
      %4945 = vmatprep.subr.bf16.mxu0 %v2864
      %4946 = vmatpush1.bf16.msra.mxu0 %v2863
      %4947 = vmatprep.subr.bf16.mxu0 %v2800
      %4948 = vmatpush1.bf16.msra.mxu0 %v2799
      %4949 = vmatprep.subr.bf16.mxu0 %v2736
      %4950 = vmatpush1.bf16.msra.mxu0 %v2735
      %4951 = vmatprep.subr.bf16.mxu0 %v2672
      %4952 = vmatpush1.bf16.msra.mxu0 %v2671
      %4953 = vmatprep.subr.bf16.mxu0 %v2608
      %4954 = vmatpush1.bf16.msra.mxu0 %v2607
      %4955 = vmatprep.subr.bf16.mxu0 0
      %4956 = vmatpush2.bf16.msra.mxu0 0
      %4957 = vmatprep.subr.bf16.mxu0 0
      %4958 = vmatpush2.bf16.msra.mxu0 0
      %4959 = vmatprep.subr.bf16.mxu0 0
      %4960 = vmatpush2.bf16.msra.mxu0 0
      %4961 = vmatprep.subr.bf16.mxu0 0
      %4962 = vmatpush2.bf16.msra.mxu0 0
      %4963 = vmatprep.subr.bf16.mxu0 0
      %4964 = vmatpush2.bf16.msra.mxu0 0
      %4965 = vmatprep.subr.bf16.mxu0 0
      %4966 = vmatpush2.bf16.msra.mxu0 0
      %4967 = vmatprep.subr.bf16.mxu0 0
      %4968 = vmatpush2.bf16.msra.mxu0 0
      %4969 = vmatprep.subr.bf16.mxu0 %v3120
      %4970 = vmatpush2.bf16.msra.mxu0 %v3119
      %4971 = vmatprep.mubr.bf16.mxu0 %v3715
      %4972 = vmatmul.mubr.bf16.gmra.mxu0 %v827
      %v4973 = vpop.f32.mrf.mxu0
      %v4974 = vadd.f32 %v798, %v4973
      %v4975 = vpop.f32.mrf.mxu0
      %v4976 = vadd.f32 %v798, %v4975
      %v4977 = vpop.f32.mrf.mxu0
      %v4978 = vadd.f32 %v803, %v4977
      %v4979 = vpop.f32.mrf.mxu0
      %v4980 = vadd.f32 %v803, %v4979
      %4981 = vmatprep.mubr.bf16.mxu0 %v3718
      %4982 = vmatmul.mubr.bf16.gmra.mxu0 %v829
      %v4983 = vpop.f32.mrf.mxu0
      %v4984 = vadd.f32 %v808, %v4983
      %v4985 = vpop.f32.mrf.mxu0
      %v4986 = vadd.f32 %v808, %v4985
      %v4987 = vpop.f32.mrf.mxu0
      %v4988 = vadd.f32 %v813, %v4987
      %v4989 = vpop.f32.mrf.mxu0
      %v4990 = vadd.f32 %v813, %v4989
      %4991 = vdwg.mxu0
      %4992 = vmatprep.subr.bf16.mxu0 %v3058
      %4993 = vmatpush1.bf16.msra.mxu0 %v3057
      %4994 = vmatprep.subr.bf16.mxu0 %v2994
      %4995 = vmatpush1.bf16.msra.mxu0 %v2993
      %4996 = vmatprep.subr.bf16.mxu0 %v2930
      %4997 = vmatpush1.bf16.msra.mxu0 %v2929
      %4998 = vmatprep.subr.bf16.mxu0 %v2866
      %4999 = vmatpush1.bf16.msra.mxu0 %v2865
      %5000 = vmatprep.subr.bf16.mxu0 %v2802
      %5001 = vmatpush1.bf16.msra.mxu0 %v2801
      %5002 = vmatprep.subr.bf16.mxu0 %v2738
      %5003 = vmatpush1.bf16.msra.mxu0 %v2737
      %5004 = vmatprep.subr.bf16.mxu0 %v2674
      %5005 = vmatpush1.bf16.msra.mxu0 %v2673
      %5006 = vmatprep.subr.bf16.mxu0 %v2610
      %5007 = vmatpush1.bf16.msra.mxu0 %v2609
      %5008 = vmatprep.subr.bf16.mxu0 0
      %5009 = vmatpush2.bf16.msra.mxu0 0
      %5010 = vmatprep.subr.bf16.mxu0 0
      %5011 = vmatpush2.bf16.msra.mxu0 0
      %5012 = vmatprep.subr.bf16.mxu0 0
      %5013 = vmatpush2.bf16.msra.mxu0 0
      %5014 = vmatprep.subr.bf16.mxu0 0
      %5015 = vmatpush2.bf16.msra.mxu0 0
      %5016 = vmatprep.subr.bf16.mxu0 0
      %5017 = vmatpush2.bf16.msra.mxu0 0
      %5018 = vmatprep.subr.bf16.mxu0 0
      %5019 = vmatpush2.bf16.msra.mxu0 0
      %5020 = vmatprep.subr.bf16.mxu0 0
      %5021 = vmatpush2.bf16.msra.mxu0 0
      %5022 = vmatprep.subr.bf16.mxu0 %v3122
      %5023 = vmatpush2.bf16.msra.mxu0 %v3121
      %5024 = vmatprep.mubr.bf16.mxu0 %v3715
      %5025 = vmatmul.mubr.bf16.gmra.mxu0 %v827
      %v5026 = vpop.f32.mrf.mxu0
      %v5027 = vadd.f32 %v798, %v5026
      %v5028 = vpop.f32.mrf.mxu0
      %v5029 = vadd.f32 %v798, %v5028
      %v5030 = vpop.f32.mrf.mxu0
      %v5031 = vadd.f32 %v803, %v5030
      %v5032 = vpop.f32.mrf.mxu0
      %v5033 = vadd.f32 %v803, %v5032
      %5034 = vmatprep.mubr.bf16.mxu0 %v3718
      %5035 = vmatmul.mubr.bf16.gmra.mxu0 %v829
      %v5036 = vpop.f32.mrf.mxu0
      %v5037 = vadd.f32 %v808, %v5036
      %v5038 = vpop.f32.mrf.mxu0
      %v5039 = vadd.f32 %v808, %v5038
      %v5040 = vpop.f32.mrf.mxu0
      %v5041 = vadd.f32 %v813, %v5040
      %v5042 = vpop.f32.mrf.mxu0
      %v5043 = vadd.f32 %v813, %v5042
      %5044 = vdwg.mxu0
      %5045 = vmatprep.subr.bf16.mxu0 %v3060
      %5046 = vmatpush1.bf16.msra.mxu0 %v3059
      %5047 = vmatprep.subr.bf16.mxu0 %v2996
      %5048 = vmatpush1.bf16.msra.mxu0 %v2995
      %5049 = vmatprep.subr.bf16.mxu0 %v2932
      %5050 = vmatpush1.bf16.msra.mxu0 %v2931
      %5051 = vmatprep.subr.bf16.mxu0 %v2868
      %5052 = vmatpush1.bf16.msra.mxu0 %v2867
      %5053 = vmatprep.subr.bf16.mxu0 %v2804
      %5054 = vmatpush1.bf16.msra.mxu0 %v2803
      %5055 = vmatprep.subr.bf16.mxu0 %v2740
      %5056 = vmatpush1.bf16.msra.mxu0 %v2739
      %5057 = vmatprep.subr.bf16.mxu0 %v2676
      %5058 = vmatpush1.bf16.msra.mxu0 %v2675
      %5059 = vmatprep.subr.bf16.mxu0 %v2612
      %5060 = vmatpush1.bf16.msra.mxu0 %v2611
      %5061 = vmatprep.subr.bf16.mxu0 0
      %5062 = vmatpush2.bf16.msra.mxu0 0
      %5063 = vmatprep.subr.bf16.mxu0 0
      %5064 = vmatpush2.bf16.msra.mxu0 0
      %5065 = vmatprep.subr.bf16.mxu0 0
      %5066 = vmatpush2.bf16.msra.mxu0 0
      %5067 = vmatprep.subr.bf16.mxu0 0
      %5068 = vmatpush2.bf16.msra.mxu0 0
      %5069 = vmatprep.subr.bf16.mxu0 0
      %5070 = vmatpush2.bf16.msra.mxu0 0
      %5071 = vmatprep.subr.bf16.mxu0 0
      %5072 = vmatpush2.bf16.msra.mxu0 0
      %5073 = vmatprep.subr.bf16.mxu0 0
      %5074 = vmatpush2.bf16.msra.mxu0 0
      %5075 = vmatprep.subr.bf16.mxu0 %v3124
      %5076 = vmatpush2.bf16.msra.mxu0 %v3123
      %5077 = vmatprep.mubr.bf16.mxu0 %v3715
      %5078 = vmatmul.mubr.bf16.gmra.mxu0 %v827
      %v5079 = vpop.f32.mrf.mxu0
      %v5080 = vadd.f32 %v798, %v5079
      %v5081 = vpop.f32.mrf.mxu0
      %v5082 = vadd.f32 %v798, %v5081
      %v5083 = vpop.f32.mrf.mxu0
      %v5084 = vadd.f32 %v803, %v5083
      %v5085 = vpop.f32.mrf.mxu0
      %v5086 = vadd.f32 %v803, %v5085
      %5087 = vmatprep.mubr.bf16.mxu0 %v3718
      %5088 = vmatmul.mubr.bf16.gmra.mxu0 %v829
      %v5089 = vpop.f32.mrf.mxu0
      %v5090 = vadd.f32 %v808, %v5089
      %v5091 = vpop.f32.mrf.mxu0
      %v5092 = vadd.f32 %v808, %v5091
      %v5093 = vpop.f32.mrf.mxu0
      %v5094 = vadd.f32 %v813, %v5093
      %v5095 = vpop.f32.mrf.mxu0
      %v5096 = vadd.f32 %v813, %v5095
      %5097 = vdwg.mxu0
      %5098 = vmatprep.subr.bf16.mxu0 %v3062
      %5099 = vmatpush1.bf16.msra.mxu0 %v3061
      %5100 = vmatprep.subr.bf16.mxu0 %v2998
      %5101 = vmatpush1.bf16.msra.mxu0 %v2997
      %5102 = vmatprep.subr.bf16.mxu0 %v2934
      %5103 = vmatpush1.bf16.msra.mxu0 %v2933
      %5104 = vmatprep.subr.bf16.mxu0 %v2870
      %5105 = vmatpush1.bf16.msra.mxu0 %v2869
      %5106 = vmatprep.subr.bf16.mxu0 %v2806
      %5107 = vmatpush1.bf16.msra.mxu0 %v2805
      %5108 = vmatprep.subr.bf16.mxu0 %v2742
      %5109 = vmatpush1.bf16.msra.mxu0 %v2741
      %5110 = vmatprep.subr.bf16.mxu0 %v2678
      %5111 = vmatpush1.bf16.msra.mxu0 %v2677
      %5112 = vmatprep.subr.bf16.mxu0 %v2614
      %5113 = vmatpush1.bf16.msra.mxu0 %v2613
      %5114 = vmatprep.subr.bf16.mxu0 0
      %5115 = vmatpush2.bf16.msra.mxu0 0
      %5116 = vmatprep.subr.bf16.mxu0 0
      %5117 = vmatpush2.bf16.msra.mxu0 0
      %5118 = vmatprep.subr.bf16.mxu0 0
      %5119 = vmatpush2.bf16.msra.mxu0 0
      %5120 = vmatprep.subr.bf16.mxu0 0
      %5121 = vmatpush2.bf16.msra.mxu0 0
      %5122 = vmatprep.subr.bf16.mxu0 0
      %5123 = vmatpush2.bf16.msra.mxu0 0
      %5124 = vmatprep.subr.bf16.mxu0 0
      %5125 = vmatpush2.bf16.msra.mxu0 0
      %5126 = vmatprep.subr.bf16.mxu0 0
      %5127 = vmatpush2.bf16.msra.mxu0 0
      %5128 = vmatprep.subr.bf16.mxu0 %v3126
      %5129 = vmatpush2.bf16.msra.mxu0 %v3125
      %5130 = vmatprep.mubr.bf16.mxu0 %v3715
      %5131 = vmatmul.mubr.bf16.gmra.mxu0 %v827
      %v5132 = vpop.f32.mrf.mxu0
      %v5133 = vadd.f32 %v798, %v5132
      %v5134 = vpop.f32.mrf.mxu0
      %v5135 = vadd.f32 %v798, %v5134
      %v5136 = vpop.f32.mrf.mxu0
      %v5137 = vadd.f32 %v803, %v5136
      %v5138 = vpop.f32.mrf.mxu0
      %v5139 = vadd.f32 %v803, %v5138
      %5140 = vmatprep.mubr.bf16.mxu0 %v3718
      %5141 = vmatmul.mubr.bf16.gmra.mxu0 %v829
      %v5142 = vpop.f32.mrf.mxu0
      %v5143 = vadd.f32 %v808, %v5142
      %v5144 = vpop.f32.mrf.mxu0
      %v5145 = vadd.f32 %v808, %v5144
      %v5146 = vpop.f32.mrf.mxu0
      %v5147 = vadd.f32 %v813, %v5146
      %v5148 = vpop.f32.mrf.mxu0
      %v5149 = vadd.f32 %v813, %v5148
      %5150 = vdwg.mxu0
      %5151 = vmatprep.subr.bf16.mxu0 %v3064
      %5152 = vmatpush1.bf16.msra.mxu0 %v3063
      %5153 = vmatprep.subr.bf16.mxu0 %v3000
      %5154 = vmatpush1.bf16.msra.mxu0 %v2999
      %5155 = vmatprep.subr.bf16.mxu0 %v2936
      %5156 = vmatpush1.bf16.msra.mxu0 %v2935
      %5157 = vmatprep.subr.bf16.mxu0 %v2872
      %5158 = vmatpush1.bf16.msra.mxu0 %v2871
      %5159 = vmatprep.subr.bf16.mxu0 %v2808
      %5160 = vmatpush1.bf16.msra.mxu0 %v2807
      %5161 = vmatprep.subr.bf16.mxu0 %v2744
      %5162 = vmatpush1.bf16.msra.mxu0 %v2743
      %5163 = vmatprep.subr.bf16.mxu0 %v2680
      %5164 = vmatpush1.bf16.msra.mxu0 %v2679
      %5165 = vmatprep.subr.bf16.mxu0 %v2616
      %5166 = vmatpush1.bf16.msra.mxu0 %v2615
      %5167 = vmatprep.subr.bf16.mxu0 0
      %5168 = vmatpush2.bf16.msra.mxu0 0
      %5169 = vmatprep.subr.bf16.mxu0 0
      %5170 = vmatpush2.bf16.msra.mxu0 0
      %5171 = vmatprep.subr.bf16.mxu0 0
      %5172 = vmatpush2.bf16.msra.mxu0 0
      %5173 = vmatprep.subr.bf16.mxu0 0
      %5174 = vmatpush2.bf16.msra.mxu0 0
      %5175 = vmatprep.subr.bf16.mxu0 0
      %5176 = vmatpush2.bf16.msra.mxu0 0
      %5177 = vmatprep.subr.bf16.mxu0 0
      %5178 = vmatpush2.bf16.msra.mxu0 0
      %5179 = vmatprep.subr.bf16.mxu0 0
      %5180 = vmatpush2.bf16.msra.mxu0 0
      %5181 = vmatprep.subr.bf16.mxu0 %v3128
      %5182 = vmatpush2.bf16.msra.mxu0 %v3127
      %5183 = vmatprep.mubr.bf16.mxu0 %v3715
      %5184 = vmatmul.mubr.bf16.gmra.mxu0 %v827
      %v5185 = vpop.f32.mrf.mxu0
      %v5186 = vadd.f32 %v798, %v5185
      %v5187 = vpop.f32.mrf.mxu0
      %v5188 = vadd.f32 %v798, %v5187
      %v5189 = vpop.f32.mrf.mxu0
      %v5190 = vadd.f32 %v803, %v5189
      %v5191 = vpop.f32.mrf.mxu0
      %v5192 = vadd.f32 %v803, %v5191
      %5193 = vmatprep.mubr.bf16.mxu0 %v3718
      %5194 = vmatmul.mubr.bf16.gmra.mxu0 %v829
      %v5195 = vpop.f32.mrf.mxu0
      %v5196 = vadd.f32 %v808, %v5195
      %v5197 = vpop.f32.mrf.mxu0
      %v5198 = vadd.f32 %v808, %v5197
      %v5199 = vpop.f32.mrf.mxu0
      %v5200 = vadd.f32 %v813, %v5199
      %v5201 = vpop.f32.mrf.mxu0
      %v5202 = vadd.f32 %v813, %v5201
      %5203 = vdwg.mxu0
      %5204 = vmatprep.subr.bf16.mxu0 %v3066
      %5205 = vmatpush1.bf16.msra.mxu0 %v3065
      %5206 = vmatprep.subr.bf16.mxu0 %v3002
      %5207 = vmatpush1.bf16.msra.mxu0 %v3001
      %5208 = vmatprep.subr.bf16.mxu0 %v2938
      %5209 = vmatpush1.bf16.msra.mxu0 %v2937
      %5210 = vmatprep.subr.bf16.mxu0 %v2874
      %5211 = vmatpush1.bf16.msra.mxu0 %v2873
      %5212 = vmatprep.subr.bf16.mxu0 %v2810
      %5213 = vmatpush1.bf16.msra.mxu0 %v2809
      %5214 = vmatprep.subr.bf16.mxu0 %v2746
      %5215 = vmatpush1.bf16.msra.mxu0 %v2745
      %5216 = vmatprep.subr.bf16.mxu0 %v2682
      %5217 = vmatpush1.bf16.msra.mxu0 %v2681
      %5218 = vmatprep.subr.bf16.mxu0 %v2618
      %5219 = vmatpush1.bf16.msra.mxu0 %v2617
      %5220 = vmatprep.subr.bf16.mxu0 0
      %5221 = vmatpush2.bf16.msra.mxu0 0
      %5222 = vmatprep.subr.bf16.mxu0 0
      %5223 = vmatpush2.bf16.msra.mxu0 0
      %5224 = vmatprep.subr.bf16.mxu0 0
      %5225 = vmatpush2.bf16.msra.mxu0 0
      %5226 = vmatprep.subr.bf16.mxu0 0
      %5227 = vmatpush2.bf16.msra.mxu0 0
      %5228 = vmatprep.subr.bf16.mxu0 0
      %5229 = vmatpush2.bf16.msra.mxu0 0
      %5230 = vmatprep.subr.bf16.mxu0 0
      %5231 = vmatpush2.bf16.msra.mxu0 0
      %5232 = vmatprep.subr.bf16.mxu0 0
      %5233 = vmatpush2.bf16.msra.mxu0 0
      %5234 = vmatprep.subr.bf16.mxu0 %v3130
      %5235 = vmatpush2.bf16.msra.mxu0 %v3129
      %5236 = vmatprep.mubr.bf16.mxu0 %v3715
      %5237 = vmatmul.mubr.bf16.gmra.mxu0 %v827
      %v5238 = vpop.f32.mrf.mxu0
      %v5239 = vadd.f32 %v798, %v5238
      %v5240 = vpop.f32.mrf.mxu0
      %v5241 = vadd.f32 %v798, %v5240
      %v5242 = vpop.f32.mrf.mxu0
      %v5243 = vadd.f32 %v803, %v5242
      %v5244 = vpop.f32.mrf.mxu0
      %v5245 = vadd.f32 %v803, %v5244
      %5246 = vmatprep.mubr.bf16.mxu0 %v3718
      %5247 = vmatmul.mubr.bf16.gmra.mxu0 %v829
      %v5248 = vpop.f32.mrf.mxu0
      %v5249 = vadd.f32 %v808, %v5248
      %v5250 = vpop.f32.mrf.mxu0
      %v5251 = vadd.f32 %v808, %v5250
      %v5252 = vpop.f32.mrf.mxu0
      %v5253 = vadd.f32 %v813, %v5252
      %v5254 = vpop.f32.mrf.mxu0
      %v5255 = vadd.f32 %v813, %v5254
      %5256 = vdwg.mxu0
      %5257 = vmatprep.subr.bf16.mxu0 %v3068
      %5258 = vmatpush1.bf16.msra.mxu0 %v3067
      %5259 = vmatprep.subr.bf16.mxu0 %v3004
      %5260 = vmatpush1.bf16.msra.mxu0 %v3003
      %5261 = vmatprep.subr.bf16.mxu0 %v2940
      %5262 = vmatpush1.bf16.msra.mxu0 %v2939
      %5263 = vmatprep.subr.bf16.mxu0 %v2876
      %5264 = vmatpush1.bf16.msra.mxu0 %v2875
      %5265 = vmatprep.subr.bf16.mxu0 %v2812
      %5266 = vmatpush1.bf16.msra.mxu0 %v2811
      %5267 = vmatprep.subr.bf16.mxu0 %v2748
      %5268 = vmatpush1.bf16.msra.mxu0 %v2747
      %5269 = vmatprep.subr.bf16.mxu0 %v2684
      %5270 = vmatpush1.bf16.msra.mxu0 %v2683
      %5271 = vmatprep.subr.bf16.mxu0 %v2620
      %5272 = vmatpush1.bf16.msra.mxu0 %v2619
      %5273 = vmatprep.subr.bf16.mxu0 0
      %5274 = vmatpush2.bf16.msra.mxu0 0
      %5275 = vmatprep.subr.bf16.mxu0 0
      %5276 = vmatpush2.bf16.msra.mxu0 0
      %5277 = vmatprep.subr.bf16.mxu0 0
      %5278 = vmatpush2.bf16.msra.mxu0 0
      %5279 = vmatprep.subr.bf16.mxu0 0
      %5280 = vmatpush2.bf16.msra.mxu0 0
      %5281 = vmatprep.subr.bf16.mxu0 0
      %5282 = vmatpush2.bf16.msra.mxu0 0
      %5283 = vmatprep.subr.bf16.mxu0 0
      %5284 = vmatpush2.bf16.msra.mxu0 0
      %5285 = vmatprep.subr.bf16.mxu0 0
      %5286 = vmatpush2.bf16.msra.mxu0 0
      %5287 = vmatprep.subr.bf16.mxu0 %v3132
      %5288 = vmatpush2.bf16.msra.mxu0 %v3131
      %5289 = vmatprep.mubr.bf16.mxu0 %v3715
      %5290 = vmatmul.mubr.bf16.gmra.mxu0 %v827
      %v5291 = vpop.f32.mrf.mxu0
      %v5292 = vadd.f32 %v798, %v5291
      %v5293 = vpop.f32.mrf.mxu0
      %v5294 = vadd.f32 %v798, %v5293
      %v5295 = vpop.f32.mrf.mxu0
      %v5296 = vadd.f32 %v803, %v5295
      %v5297 = vpop.f32.mrf.mxu0
      %v5298 = vadd.f32 %v803, %v5297
      %5299 = vmatprep.mubr.bf16.mxu0 %v3718
      %5300 = vmatmul.mubr.bf16.gmra.mxu0 %v829
      %v5301 = vpop.f32.mrf.mxu0
      %v5302 = vadd.f32 %v808, %v5301
      %v5303 = vpop.f32.mrf.mxu0
      %v5304 = vadd.f32 %v808, %v5303
      %v5305 = vpop.f32.mrf.mxu0
      %v5306 = vadd.f32 %v813, %v5305
      %v5307 = vpop.f32.mrf.mxu0
      %v5308 = vadd.f32 %v813, %v5307
      %5309 = vdwg.mxu0
      %5310 = vmatprep.subr.bf16.mxu0 %v3070
      %5311 = vmatpush1.bf16.msra.mxu0 %v3069
      %5312 = vmatprep.subr.bf16.mxu0 %v3006
      %5313 = vmatpush1.bf16.msra.mxu0 %v3005
      %5314 = vmatprep.subr.bf16.mxu0 %v2942
      %5315 = vmatpush1.bf16.msra.mxu0 %v2941
      %5316 = vmatprep.subr.bf16.mxu0 %v2878
      %5317 = vmatpush1.bf16.msra.mxu0 %v2877
      %5318 = vmatprep.subr.bf16.mxu0 %v2814
      %5319 = vmatpush1.bf16.msra.mxu0 %v2813
      %5320 = vmatprep.subr.bf16.mxu0 %v2750
      %5321 = vmatpush1.bf16.msra.mxu0 %v2749
      %5322 = vmatprep.subr.bf16.mxu0 %v2686
      %5323 = vmatpush1.bf16.msra.mxu0 %v2685
      %5324 = vmatprep.subr.bf16.mxu0 %v2622
      %5325 = vmatpush1.bf16.msra.mxu0 %v2621
      %5326 = vmatprep.subr.bf16.mxu0 0
      %5327 = vmatpush2.bf16.msra.mxu0 0
      %5328 = vmatprep.subr.bf16.mxu0 0
      %5329 = vmatpush2.bf16.msra.mxu0 0
      %5330 = vmatprep.subr.bf16.mxu0 0
      %5331 = vmatpush2.bf16.msra.mxu0 0
      %5332 = vmatprep.subr.bf16.mxu0 0
      %5333 = vmatpush2.bf16.msra.mxu0 0
      %5334 = vmatprep.subr.bf16.mxu0 0
      %5335 = vmatpush2.bf16.msra.mxu0 0
      %5336 = vmatprep.subr.bf16.mxu0 0
      %5337 = vmatpush2.bf16.msra.mxu0 0
      %5338 = vmatprep.subr.bf16.mxu0 0
      %5339 = vmatpush2.bf16.msra.mxu0 0
      %5340 = vmatprep.subr.bf16.mxu0 %v3134
      %5341 = vmatpush2.bf16.msra.mxu0 %v3133
      %5342 = vmatprep.mubr.bf16.mxu0 %v3715
      %5343 = vmatmul.mubr.bf16.gmra.mxu0 %v827
      %v5344 = vpop.f32.mrf.mxu0
      %v5345 = vadd.f32 %v798, %v5344
      %v5346 = vpop.f32.mrf.mxu0
      %v5347 = vadd.f32 %v798, %v5346
      %v5348 = vpop.f32.mrf.mxu0
      %v5349 = vadd.f32 %v803, %v5348
      %v5350 = vpop.f32.mrf.mxu0
      %v5351 = vadd.f32 %v803, %v5350
      %5352 = vmatprep.mubr.bf16.mxu0 %v3718
      %5353 = vmatmul.mubr.bf16.gmra.mxu0 %v829
      %v5354 = vpop.f32.mrf.mxu0
      %v5355 = vadd.f32 %v808, %v5354
      %v5356 = vpop.f32.mrf.mxu0
      %v5357 = vadd.f32 %v808, %v5356
      %v5358 = vpop.f32.mrf.mxu0
      %v5359 = vadd.f32 %v813, %v5358
      %v5360 = vpop.f32.mrf.mxu0
      %v5361 = vadd.f32 %v813, %v5360
      %5362 = vdwg.mxu0
      %5363 = vmatprep.subr.bf16.mxu0 %v3072
      %5364 = vmatpush1.bf16.msra.mxu0 %v3071
      %5365 = vmatprep.subr.bf16.mxu0 %v3008
      %5366 = vmatpush1.bf16.msra.mxu0 %v3007
      %5367 = vmatprep.subr.bf16.mxu0 %v2944
      %5368 = vmatpush1.bf16.msra.mxu0 %v2943
      %5369 = vmatprep.subr.bf16.mxu0 %v2880
      %5370 = vmatpush1.bf16.msra.mxu0 %v2879
      %5371 = vmatprep.subr.bf16.mxu0 %v2816
      %5372 = vmatpush1.bf16.msra.mxu0 %v2815
      %5373 = vmatprep.subr.bf16.mxu0 %v2752
      %5374 = vmatpush1.bf16.msra.mxu0 %v2751
      %5375 = vmatprep.subr.bf16.mxu0 %v2688
      %5376 = vmatpush1.bf16.msra.mxu0 %v2687
      %5377 = vmatprep.subr.bf16.mxu0 %v2624
      %5378 = vmatpush1.bf16.msra.mxu0 %v2623
      %5379 = vmatprep.subr.bf16.mxu0 0
      %5380 = vmatpush2.bf16.msra.mxu0 0
      %5381 = vmatprep.subr.bf16.mxu0 0
      %5382 = vmatpush2.bf16.msra.mxu0 0
      %5383 = vmatprep.subr.bf16.mxu0 0
      %5384 = vmatpush2.bf16.msra.mxu0 0
      %5385 = vmatprep.subr.bf16.mxu0 0
      %5386 = vmatpush2.bf16.msra.mxu0 0
      %5387 = vmatprep.subr.bf16.mxu0 0
      %5388 = vmatpush2.bf16.msra.mxu0 0
      %5389 = vmatprep.subr.bf16.mxu0 0
      %5390 = vmatpush2.bf16.msra.mxu0 0
      %5391 = vmatprep.subr.bf16.mxu0 0
      %5392 = vmatpush2.bf16.msra.mxu0 0
      %5393 = vmatprep.subr.bf16.mxu0 %v3136
      %5394 = vmatpush2.bf16.msra.mxu0 %v3135
      %5395 = vmatprep.mubr.bf16.mxu0 %v3715
      %5396 = vmatmul.mubr.bf16.gmra.mxu0 %v827
      %v5397 = vpop.f32.mrf.mxu0
      %v5398 = vadd.f32 %v798, %v5397
      %v5399 = vpop.f32.mrf.mxu0
      %v5400 = vadd.f32 %v798, %v5399
      %v5401 = vpop.f32.mrf.mxu0
      %v5402 = vadd.f32 %v803, %v5401
      %v5403 = vpop.f32.mrf.mxu0
      %v5404 = vadd.f32 %v803, %v5403
      %5405 = vmatprep.mubr.bf16.mxu0 %v3718
      %5406 = vmatmul.mubr.bf16.gmra.mxu0 %v829
      %v5407 = vpop.f32.mrf.mxu0
      %v5408 = vadd.f32 %v808, %v5407
      %v5409 = vpop.f32.mrf.mxu0
      %v5410 = vadd.f32 %v808, %v5409
      %v5411 = vpop.f32.mrf.mxu0
      %v5412 = vadd.f32 %v813, %v5411
      %v5413 = vpop.f32.mrf.mxu0
      %v5414 = vadd.f32 %v813, %v5413
      %5415 = vdwg.mxu0
      %v5416 = vmax.f32 %v3755, 0.0
      %v5417 = vmax.f32 %v3757, 0.0
      %v5418 = vmax.f32 %v3808, 0.0
      %v5419 = vmax.f32 %v3810, 0.0
      %v5420 = vmax.f32 %v3861, 0.0
      %v5421 = vmax.f32 %v3863, 0.0
      %v5422 = vmax.f32 %v3914, 0.0
      %v5423 = vmax.f32 %v3916, 0.0
      %v5424 = vmax.f32 %v3967, 0.0
      %v5425 = vmax.f32 %v3969, 0.0
      %v5426 = vmax.f32 %v4020, 0.0
      %v5427 = vmax.f32 %v4022, 0.0
      %v5428 = vmax.f32 %v4073, 0.0
      %v5429 = vmax.f32 %v4075, 0.0
      %v5430 = vmax.f32 %v4126, 0.0
      %v5431 = vmax.f32 %v4128, 0.0
      %v5432 = vmax.f32 %v4179, 0.0
      %v5433 = vmax.f32 %v4181, 0.0
      %v5434 = vmax.f32 %v4232, 0.0
      %v5435 = vmax.f32 %v4234, 0.0
      %v5436 = vmax.f32 %v4285, 0.0
      %v5437 = vmax.f32 %v4287, 0.0
      %v5438 = vmax.f32 %v4338, 0.0
      %v5439 = vmax.f32 %v4340, 0.0
      %v5440 = vmax.f32 %v4391, 0.0
      %v5441 = vmax.f32 %v4393, 0.0
      %v5442 = vmax.f32 %v4444, 0.0
      %v5443 = vmax.f32 %v4446, 0.0
      %v5444 = vmax.f32 %v4497, 0.0
      %v5445 = vmax.f32 %v4499, 0.0
      %v5446 = vmax.f32 %v4550, 0.0
      %v5447 = vmax.f32 %v4552, 0.0
      %v5448 = vmax.f32 %v4603, 0.0
      %v5449 = vmax.f32 %v4605, 0.0
      %v5450 = vmax.f32 %v4656, 0.0
      %v5451 = vmax.f32 %v4658, 0.0
      %v5452 = vmax.f32 %v4709, 0.0
      %v5453 = vmax.f32 %v4711, 0.0
      %v5454 = vmax.f32 %v4762, 0.0
      %v5455 = vmax.f32 %v4764, 0.0
      %v5456 = vmax.f32 %v4815, 0.0
      %v5457 = vmax.f32 %v4817, 0.0
      %v5458 = vmax.f32 %v4868, 0.0
      %v5459 = vmax.f32 %v4870, 0.0
      %v5460 = vmax.f32 %v4921, 0.0
      %v5461 = vmax.f32 %v4923, 0.0
      %v5462 = vmax.f32 %v4974, 0.0
      %v5463 = vmax.f32 %v4976, 0.0
      %v5464 = vmax.f32 %v5027, 0.0
      %v5465 = vmax.f32 %v5029, 0.0
      %v5466 = vmax.f32 %v5080, 0.0
      %v5467 = vmax.f32 %v5082, 0.0
      %v5468 = vmax.f32 %v5133, 0.0
      %v5469 = vmax.f32 %v5135, 0.0
      %v5470 = vmax.f32 %v5186, 0.0
      %v5471 = vmax.f32 %v5188, 0.0
      %v5472 = vmax.f32 %v5239, 0.0
      %v5473 = vmax.f32 %v5241, 0.0
      %v5474 = vmax.f32 %v5292, 0.0
      %v5475 = vmax.f32 %v5294, 0.0
      %v5476 = vmax.f32 %v5345, 0.0
      %v5477 = vmax.f32 %v5347, 0.0
      %v5478 = vmax.f32 %v5398, 0.0
      %v5479 = vmax.f32 %v5400, 0.0
      %v5480 = vmax.f32 %v3759, 0.0
      %v5481 = vmax.f32 %v3761, 0.0
      %v5482 = vmax.f32 %v3812, 0.0
      %v5483 = vmax.f32 %v3814, 0.0
      %v5484 = vmax.f32 %v3865, 0.0
      %v5485 = vmax.f32 %v3867, 0.0
      %v5486 = vmax.f32 %v3918, 0.0
      %v5487 = vmax.f32 %v3920, 0.0
      %v5488 = vmax.f32 %v3971, 0.0
      %v5489 = vmax.f32 %v3973, 0.0
      %v5490 = vmax.f32 %v4024, 0.0
      %v5491 = vmax.f32 %v4026, 0.0
      %v5492 = vmax.f32 %v4077, 0.0
      %v5493 = vmax.f32 %v4079, 0.0
      %v5494 = vmax.f32 %v4130, 0.0
      %v5495 = vmax.f32 %v4132, 0.0
      %v5496 = vmax.f32 %v4183, 0.0
      %v5497 = vmax.f32 %v4185, 0.0
      %v5498 = vmax.f32 %v4236, 0.0
      %v5499 = vmax.f32 %v4238, 0.0
      %v5500 = vmax.f32 %v4289, 0.0
      %v5501 = vmax.f32 %v4291, 0.0
      %v5502 = vmax.f32 %v4342, 0.0
      %v5503 = vmax.f32 %v4344, 0.0
      %v5504 = vmax.f32 %v4395, 0.0
      %v5505 = vmax.f32 %v4397, 0.0
      %v5506 = vmax.f32 %v4448, 0.0
      %v5507 = vmax.f32 %v4450, 0.0
      %v5508 = vmax.f32 %v4501, 0.0
      %v5509 = vmax.f32 %v4503, 0.0
      %v5510 = vmax.f32 %v4554, 0.0
      %v5511 = vmax.f32 %v4556, 0.0
      %v5512 = vmax.f32 %v4607, 0.0
      %v5513 = vmax.f32 %v4609, 0.0
      %v5514 = vmax.f32 %v4660, 0.0
      %v5515 = vmax.f32 %v4662, 0.0
      %v5516 = vmax.f32 %v4713, 0.0
      %v5517 = vmax.f32 %v4715, 0.0
      %v5518 = vmax.f32 %v4766, 0.0
      %v5519 = vmax.f32 %v4768, 0.0
      %v5520 = vmax.f32 %v4819, 0.0
      %v5521 = vmax.f32 %v4821, 0.0
      %v5522 = vmax.f32 %v4872, 0.0
      %v5523 = vmax.f32 %v4874, 0.0
      %v5524 = vmax.f32 %v4925, 0.0
      %v5525 = vmax.f32 %v4927, 0.0
      %v5526 = vmax.f32 %v4978, 0.0
      %v5527 = vmax.f32 %v4980, 0.0
      %v5528 = vmax.f32 %v5031, 0.0
      %v5529 = vmax.f32 %v5033, 0.0
      %v5530 = vmax.f32 %v5084, 0.0
      %v5531 = vmax.f32 %v5086, 0.0
      %v5532 = vmax.f32 %v5137, 0.0
      %v5533 = vmax.f32 %v5139, 0.0
      %v5534 = vmax.f32 %v5190, 0.0
      %v5535 = vmax.f32 %v5192, 0.0
      %v5536 = vmax.f32 %v5243, 0.0
      %v5537 = vmax.f32 %v5245, 0.0
      %v5538 = vmax.f32 %v5296, 0.0
      %v5539 = vmax.f32 %v5298, 0.0
      %v5540 = vmax.f32 %v5349, 0.0
      %v5541 = vmax.f32 %v5351, 0.0
      %v5542 = vmax.f32 %v5402, 0.0
      %v5543 = vmax.f32 %v5404, 0.0
      %v5544 = vmax.f32 %v3765, 0.0
      %v5545 = vmax.f32 %v3767, 0.0
      %v5546 = vmax.f32 %v3818, 0.0
      %v5547 = vmax.f32 %v3820, 0.0
      %v5548 = vmax.f32 %v3871, 0.0
      %v5549 = vmax.f32 %v3873, 0.0
      %v5550 = vmax.f32 %v3924, 0.0
      %v5551 = vmax.f32 %v3926, 0.0
      %v5552 = vmax.f32 %v3977, 0.0
      %v5553 = vmax.f32 %v3979, 0.0
      %v5554 = vmax.f32 %v4030, 0.0
      %v5555 = vmax.f32 %v4032, 0.0
      %v5556 = vmax.f32 %v4083, 0.0
      %v5557 = vmax.f32 %v4085, 0.0
      %v5558 = vmax.f32 %v4136, 0.0
      %v5559 = vmax.f32 %v4138, 0.0
      %v5560 = vmax.f32 %v4189, 0.0
      %v5561 = vmax.f32 %v4191, 0.0
      %v5562 = vmax.f32 %v4242, 0.0
      %v5563 = vmax.f32 %v4244, 0.0
      %v5564 = vmax.f32 %v4295, 0.0
      %v5565 = vmax.f32 %v4297, 0.0
      %v5566 = vmax.f32 %v4348, 0.0
      %v5567 = vmax.f32 %v4350, 0.0
      %v5568 = vmax.f32 %v4401, 0.0
      %v5569 = vmax.f32 %v4403, 0.0
      %v5570 = vmax.f32 %v4454, 0.0
      %v5571 = vmax.f32 %v4456, 0.0
      %v5572 = vmax.f32 %v4507, 0.0
      %v5573 = vmax.f32 %v4509, 0.0
      %v5574 = vmax.f32 %v4560, 0.0
      %v5575 = vmax.f32 %v4562, 0.0
      %v5576 = vmax.f32 %v4613, 0.0
      %v5577 = vmax.f32 %v4615, 0.0
      %v5578 = vmax.f32 %v4666, 0.0
      %v5579 = vmax.f32 %v4668, 0.0
      %v5580 = vmax.f32 %v4719, 0.0
      %v5581 = vmax.f32 %v4721, 0.0
      %v5582 = vmax.f32 %v4772, 0.0
      %v5583 = vmax.f32 %v4774, 0.0
      %v5584 = vmax.f32 %v4825, 0.0
      %v5585 = vmax.f32 %v4827, 0.0
      %v5586 = vmax.f32 %v4878, 0.0
      %v5587 = vmax.f32 %v4880, 0.0
      %v5588 = vmax.f32 %v4931, 0.0
      %v5589 = vmax.f32 %v4933, 0.0
      %v5590 = vmax.f32 %v4984, 0.0
      %v5591 = vmax.f32 %v4986, 0.0
      %v5592 = vmax.f32 %v5037, 0.0
      %v5593 = vmax.f32 %v5039, 0.0
      %v5594 = vmax.f32 %v5090, 0.0
      %v5595 = vmax.f32 %v5092, 0.0
      %v5596 = vmax.f32 %v5143, 0.0
      %v5597 = vmax.f32 %v5145, 0.0
      %v5598 = vmax.f32 %v5196, 0.0
      %v5599 = vmax.f32 %v5198, 0.0
      %v5600 = vmax.f32 %v5249, 0.0
      %v5601 = vmax.f32 %v5251, 0.0
      %v5602 = vmax.f32 %v5302, 0.0
      %v5603 = vmax.f32 %v5304, 0.0
      %v5604 = vmax.f32 %v5355, 0.0
      %v5605 = vmax.f32 %v5357, 0.0
      %v5606 = vmax.f32 %v5408, 0.0
      %v5607 = vmax.f32 %v5410, 0.0
      %v5608 = vmax.f32 %v3769, 0.0
      %v5609 = vmax.f32 %v3771, 0.0
      %v5610 = vmax.f32 %v3822, 0.0
      %v5611 = vmax.f32 %v3824, 0.0
      %v5612 = vmax.f32 %v3875, 0.0
      %v5613 = vmax.f32 %v3877, 0.0
      %v5614 = vmax.f32 %v3928, 0.0
      %v5615 = vmax.f32 %v3930, 0.0
      %v5616 = vmax.f32 %v3981, 0.0
      %v5617 = vmax.f32 %v3983, 0.0
      %v5618 = vmax.f32 %v4034, 0.0
      %v5619 = vmax.f32 %v4036, 0.0
      %v5620 = vmax.f32 %v4087, 0.0
      %v5621 = vmax.f32 %v4089, 0.0
      %v5622 = vmax.f32 %v4140, 0.0
      %v5623 = vmax.f32 %v4142, 0.0
      %v5624 = vmax.f32 %v4193, 0.0
      %v5625 = vmax.f32 %v4195, 0.0
      %v5626 = vmax.f32 %v4246, 0.0
      %v5627 = vmax.f32 %v4248, 0.0
      %v5628 = vmax.f32 %v4299, 0.0
      %v5629 = vmax.f32 %v4301, 0.0
      %v5630 = vmax.f32 %v4352, 0.0
      %v5631 = vmax.f32 %v4354, 0.0
      %v5632 = vmax.f32 %v4405, 0.0
      %v5633 = vmax.f32 %v4407, 0.0
      %v5634 = vmax.f32 %v4458, 0.0
      %v5635 = vmax.f32 %v4460, 0.0
      %v5636 = vmax.f32 %v4511, 0.0
      %v5637 = vmax.f32 %v4513, 0.0
      %v5638 = vmax.f32 %v4564, 0.0
      %v5639 = vmax.f32 %v4566, 0.0
      %v5640 = vmax.f32 %v4617, 0.0
      %v5641 = vmax.f32 %v4619, 0.0
      %v5642 = vmax.f32 %v4670, 0.0
      %v5643 = vmax.f32 %v4672, 0.0
      %v5644 = vmax.f32 %v4723, 0.0
      %v5645 = vmax.f32 %v4725, 0.0
      %v5646 = vmax.f32 %v4776, 0.0
      %v5647 = vmax.f32 %v4778, 0.0
      %v5648 = vmax.f32 %v4829, 0.0
      %v5649 = vmax.f32 %v4831, 0.0
      %v5650 = vmax.f32 %v4882, 0.0
      %v5651 = vmax.f32 %v4884, 0.0
      %v5652 = vmax.f32 %v4935, 0.0
      %v5653 = vmax.f32 %v4937, 0.0
      %v5654 = vmax.f32 %v4988, 0.0
      %v5655 = vmax.f32 %v4990, 0.0
      %v5656 = vmax.f32 %v5041, 0.0
      %v5657 = vmax.f32 %v5043, 0.0
      %v5658 = vmax.f32 %v5094, 0.0
      %v5659 = vmax.f32 %v5096, 0.0
      %v5660 = vmax.f32 %v5147, 0.0
      %v5661 = vmax.f32 %v5149, 0.0
      %v5662 = vmax.f32 %v5200, 0.0
      %v5663 = vmax.f32 %v5202, 0.0
      %v5664 = vmax.f32 %v5253, 0.0
      %v5665 = vmax.f32 %v5255, 0.0
      %v5666 = vmax.f32 %v5306, 0.0
      %v5667 = vmax.f32 %v5308, 0.0
      %v5668 = vmax.f32 %v5359, 0.0
      %v5669 = vmax.f32 %v5361, 0.0
      %v5670 = vmax.f32 %v5412, 0.0
      %v5671 = vmax.f32 %v5414, 0.0
      %5672 = vst [vmem:[%s208] sm:$0xff] %v5416
      %5673 = vst [vmem:[%s208 + $0x8] sm:$0xff] %v5417
      %5674 = vst [vmem:[%s208 + $0x10] sm:$0xff] %v5418
      %5675 = vst [vmem:[%s208 + $0x18] sm:$0xff] %v5419
      %5676 = vst [vmem:[%s208 + $0x20] sm:$0xff] %v5420
      %5677 = vst [vmem:[%s208 + $0x28] sm:$0xff] %v5421
      %5678 = vst [vmem:[%s208 + $0x30] sm:$0xff] %v5422
      %5679 = vst [vmem:[%s208 + $0x38] sm:$0xff] %v5423
      %5680 = vst [vmem:[%s208 + $0x40] sm:$0xff] %v5424
      %5681 = vst [vmem:[%s208 + $0x48] sm:$0xff] %v5425
      %5682 = vst [vmem:[%s208 + $0x50] sm:$0xff] %v5426
      %5683 = vst [vmem:[%s208 + $0x58] sm:$0xff] %v5427
      %5684 = vst [vmem:[%s208 + $0x60] sm:$0xff] %v5428
      %5685 = vst [vmem:[%s208 + $0x68] sm:$0xff] %v5429
      %5686 = vst [vmem:[%s208 + $0x70] sm:$0xff] %v5430
      %5687 = vst [vmem:[%s208 + $0x78] sm:$0xff] %v5431
      %5688 = vst [vmem:[%s208 + $0x80] sm:$0xff] %v5432
      %5689 = vst [vmem:[%s208 + $0x88] sm:$0xff] %v5433
      %5690 = vst [vmem:[%s208 + $0x90] sm:$0xff] %v5434
      %5691 = vst [vmem:[%s208 + $0x98] sm:$0xff] %v5435
      %5692 = vst [vmem:[%s208 + $0xa0] sm:$0xff] %v5436
      %5693 = vst [vmem:[%s208 + $0xa8] sm:$0xff] %v5437
      %5694 = vst [vmem:[%s208 + $0xb0] sm:$0xff] %v5438
      %5695 = vst [vmem:[%s208 + $0xb8] sm:$0xff] %v5439
      %5696 = vst [vmem:[%s208 + $0xc0] sm:$0xff] %v5440
      %5697 = vst [vmem:[%s208 + $0xc8] sm:$0xff] %v5441
      %5698 = vst [vmem:[%s208 + $0xd0] sm:$0xff] %v5442
      %5699 = vst [vmem:[%s208 + $0xd8] sm:$0xff] %v5443
      %5700 = vst [vmem:[%s208 + $0xe0] sm:$0xff] %v5444
      %5701 = vst [vmem:[%s208 + $0xe8] sm:$0xff] %v5445
      %5702 = vst [vmem:[%s208 + $0xf0] sm:$0xff] %v5446
      %5703 = vst [vmem:[%s208 + $0xf8] sm:$0xff] %v5447
      %5704 = vst [vmem:[%s208 + $0x100] sm:$0xff] %v5448
      %5705 = vst [vmem:[%s208 + $0x108] sm:$0xff] %v5449
      %5706 = vst [vmem:[%s208 + $0x110] sm:$0xff] %v5450
      %5707 = vst [vmem:[%s208 + $0x118] sm:$0xff] %v5451
      %5708 = vst [vmem:[%s208 + $0x120] sm:$0xff] %v5452
      %5709 = vst [vmem:[%s208 + $0x128] sm:$0xff] %v5453
      %5710 = vst [vmem:[%s208 + $0x130] sm:$0xff] %v5454
      %5711 = vst [vmem:[%s208 + $0x138] sm:$0xff] %v5455
      %5712 = vst [vmem:[%s208 + $0x140] sm:$0xff] %v5456
      %5713 = vst [vmem:[%s208 + $0x148] sm:$0xff] %v5457
      %5714 = vst [vmem:[%s208 + $0x150] sm:$0xff] %v5458
      %5715 = vst [vmem:[%s208 + $0x158] sm:$0xff] %v5459
      %5716 = vst [vmem:[%s208 + $0x160] sm:$0xff] %v5460
      %5717 = vst [vmem:[%s208 + $0x168] sm:$0xff] %v5461
      %5718 = vst [vmem:[%s208 + $0x170] sm:$0xff] %v5462
      %5719 = vst [vmem:[%s208 + $0x178] sm:$0xff] %v5463
      %5720 = vst [vmem:[%s208 + $0x180] sm:$0xff] %v5464
      %5721 = vst [vmem:[%s208 + $0x188] sm:$0xff] %v5465
      %5722 = vst [vmem:[%s208 + $0x190] sm:$0xff] %v5466
      %5723 = vst [vmem:[%s208 + $0x198] sm:$0xff] %v5467
      %5724 = vst [vmem:[%s208 + $0x1a0] sm:$0xff] %v5468
      %5725 = vst [vmem:[%s208 + $0x1a8] sm:$0xff] %v5469
      %5726 = vst [vmem:[%s208 + $0x1b0] sm:$0xff] %v5470
      %5727 = vst [vmem:[%s208 + $0x1b8] sm:$0xff] %v5471
      %5728 = vst [vmem:[%s208 + $0x1c0] sm:$0xff] %v5472
      %5729 = vst [vmem:[%s208 + $0x1c8] sm:$0xff] %v5473
      %5730 = vst [vmem:[%s208 + $0x1d0] sm:$0xff] %v5474
      %5731 = vst [vmem:[%s208 + $0x1d8] sm:$0xff] %v5475
      %5732 = vst [vmem:[%s208 + $0x1e0] sm:$0xff] %v5476
      %5733 = vst [vmem:[%s208 + $0x1e8] sm:$0xff] %v5477
      %5734 = vst [vmem:[%s208 + $0x1f0] sm:$0xff] %v5478
      %vm5735 = vcmask 293888
      %5736 = vst.msk [vmem:[%s208 + $0x1f8] sm:$0xff] %vm5735, %v5479
      %5737 = vst [vmem:[%s208 + $0x200] sm:$0xff] %v5480
      %5738 = vst [vmem:[%s208 + $0x208] sm:$0xff] %v5481
      %5739 = vst [vmem:[%s208 + $0x210] sm:$0xff] %v5482
      %5740 = vst [vmem:[%s208 + $0x218] sm:$0xff] %v5483
      %5741 = vst [vmem:[%s208 + $0x220] sm:$0xff] %v5484
      %5742 = vst [vmem:[%s208 + $0x228] sm:$0xff] %v5485
      %5743 = vst [vmem:[%s208 + $0x230] sm:$0xff] %v5486
      %5744 = vst [vmem:[%s208 + $0x238] sm:$0xff] %v5487
      %5745 = vst [vmem:[%s208 + $0x240] sm:$0xff] %v5488
      %5746 = vst [vmem:[%s208 + $0x248] sm:$0xff] %v5489
      %5747 = vst [vmem:[%s208 + $0x250] sm:$0xff] %v5490
      %5748 = vst [vmem:[%s208 + $0x258] sm:$0xff] %v5491
      %5749 = vst [vmem:[%s208 + $0x260] sm:$0xff] %v5492
      %5750 = vst [vmem:[%s208 + $0x268] sm:$0xff] %v5493
      %5751 = vst [vmem:[%s208 + $0x270] sm:$0xff] %v5494
      %5752 = vst [vmem:[%s208 + $0x278] sm:$0xff] %v5495
      %5753 = vst [vmem:[%s208 + $0x280] sm:$0xff] %v5496
      %5754 = vst [vmem:[%s208 + $0x288] sm:$0xff] %v5497
      %5755 = vst [vmem:[%s208 + $0x290] sm:$0xff] %v5498
      %5756 = vst [vmem:[%s208 + $0x298] sm:$0xff] %v5499
      %5757 = vst [vmem:[%s208 + $0x2a0] sm:$0xff] %v5500
      %5758 = vst [vmem:[%s208 + $0x2a8] sm:$0xff] %v5501
      %5759 = vst [vmem:[%s208 + $0x2b0] sm:$0xff] %v5502
      %5760 = vst [vmem:[%s208 + $0x2b8] sm:$0xff] %v5503
      %5761 = vst [vmem:[%s208 + $0x2c0] sm:$0xff] %v5504
      %5762 = vst [vmem:[%s208 + $0x2c8] sm:$0xff] %v5505
      %5763 = vst [vmem:[%s208 + $0x2d0] sm:$0xff] %v5506
      %5764 = vst [vmem:[%s208 + $0x2d8] sm:$0xff] %v5507
      %5765 = vst [vmem:[%s208 + $0x2e0] sm:$0xff] %v5508
      %5766 = vst [vmem:[%s208 + $0x2e8] sm:$0xff] %v5509
      %5767 = vst [vmem:[%s208 + $0x2f0] sm:$0xff] %v5510
      %5768 = vst [vmem:[%s208 + $0x2f8] sm:$0xff] %v5511
      %5769 = vst [vmem:[%s208 + $0x300] sm:$0xff] %v5512
      %5770 = vst [vmem:[%s208 + $0x308] sm:$0xff] %v5513
      %5771 = vst [vmem:[%s208 + $0x310] sm:$0xff] %v5514
      %5772 = vst [vmem:[%s208 + $0x318] sm:$0xff] %v5515
      %5773 = vst [vmem:[%s208 + $0x320] sm:$0xff] %v5516
      %5774 = vst [vmem:[%s208 + $0x328] sm:$0xff] %v5517
      %5775 = vst [vmem:[%s208 + $0x330] sm:$0xff] %v5518
      %5776 = vst [vmem:[%s208 + $0x338] sm:$0xff] %v5519
      %5777 = vst [vmem:[%s208 + $0x340] sm:$0xff] %v5520
      %5778 = vst [vmem:[%s208 + $0x348] sm:$0xff] %v5521
      %5779 = vst [vmem:[%s208 + $0x350] sm:$0xff] %v5522
      %5780 = vst [vmem:[%s208 + $0x358] sm:$0xff] %v5523
      %5781 = vst [vmem:[%s208 + $0x360] sm:$0xff] %v5524
      %5782 = vst [vmem:[%s208 + $0x368] sm:$0xff] %v5525
      %5783 = vst [vmem:[%s208 + $0x370] sm:$0xff] %v5526
      %5784 = vst [vmem:[%s208 + $0x378] sm:$0xff] %v5527
      %5785 = vst [vmem:[%s208 + $0x380] sm:$0xff] %v5528
      %5786 = vst [vmem:[%s208 + $0x388] sm:$0xff] %v5529
      %5787 = vst [vmem:[%s208 + $0x390] sm:$0xff] %v5530
      %5788 = vst [vmem:[%s208 + $0x398] sm:$0xff] %v5531
      %5789 = vst [vmem:[%s208 + $0x3a0] sm:$0xff] %v5532
      %5790 = vst [vmem:[%s208 + $0x3a8] sm:$0xff] %v5533
      %5791 = vst [vmem:[%s208 + $0x3b0] sm:$0xff] %v5534
      %5792 = vst [vmem:[%s208 + $0x3b8] sm:$0xff] %v5535
      %5793 = vst [vmem:[%s208 + $0x3c0] sm:$0xff] %v5536
      %5794 = vst [vmem:[%s208 + $0x3c8] sm:$0xff] %v5537
      %5795 = vst [vmem:[%s208 + $0x3d0] sm:$0xff] %v5538
      %5796 = vst [vmem:[%s208 + $0x3d8] sm:$0xff] %v5539
      %5797 = vst [vmem:[%s208 + $0x3e0] sm:$0xff] %v5540
      %5798 = vst [vmem:[%s208 + $0x3e8] sm:$0xff] %v5541
      %5799 = vst [vmem:[%s208 + $0x3f0] sm:$0xff] %v5542
      %5800 = vst.msk [vmem:[%s208 + $0x3f8] sm:$0xff] %vm5735, %v5543
      %5801 = vst [vmem:[%s208 + $0x400] sm:$0xff] %v5544
      %5802 = vst [vmem:[%s208 + $0x408] sm:$0xff] %v5545
      %5803 = vst [vmem:[%s208 + $0x410] sm:$0xff] %v5546
      %5804 = vst [vmem:[%s208 + $0x418] sm:$0xff] %v5547
      %5805 = vst [vmem:[%s208 + $0x420] sm:$0xff] %v5548
      %5806 = vst [vmem:[%s208 + $0x428] sm:$0xff] %v5549
      %5807 = vst [vmem:[%s208 + $0x430] sm:$0xff] %v5550
      %5808 = vst [vmem:[%s208 + $0x438] sm:$0xff] %v5551
      %5809 = vst [vmem:[%s208 + $0x440] sm:$0xff] %v5552
      %5810 = vst [vmem:[%s208 + $0x448] sm:$0xff] %v5553
      %5811 = vst [vmem:[%s208 + $0x450] sm:$0xff] %v5554
      %5812 = vst [vmem:[%s208 + $0x458] sm:$0xff] %v5555
      %5813 = vst [vmem:[%s208 + $0x460] sm:$0xff] %v5556
      %5814 = vst [vmem:[%s208 + $0x468] sm:$0xff] %v5557
      %5815 = vst [vmem:[%s208 + $0x470] sm:$0xff] %v5558
      %5816 = vst [vmem:[%s208 + $0x478] sm:$0xff] %v5559
      %5817 = vst [vmem:[%s208 + $0x480] sm:$0xff] %v5560
      %5818 = vst [vmem:[%s208 + $0x488] sm:$0xff] %v5561
      %5819 = vst [vmem:[%s208 + $0x490] sm:$0xff] %v5562
      %5820 = vst [vmem:[%s208 + $0x498] sm:$0xff] %v5563
      %5821 = vst [vmem:[%s208 + $0x4a0] sm:$0xff] %v5564
      %5822 = vst [vmem:[%s208 + $0x4a8] sm:$0xff] %v5565
      %5823 = vst [vmem:[%s208 + $0x4b0] sm:$0xff] %v5566
      %5824 = vst [vmem:[%s208 + $0x4b8] sm:$0xff] %v5567
      %5825 = vst [vmem:[%s208 + $0x4c0] sm:$0xff] %v5568
      %5826 = vst [vmem:[%s208 + $0x4c8] sm:$0xff] %v5569
      %5827 = vst [vmem:[%s208 + $0x4d0] sm:$0xff] %v5570
      %5828 = vst [vmem:[%s208 + $0x4d8] sm:$0xff] %v5571
      %5829 = vst [vmem:[%s208 + $0x4e0] sm:$0xff] %v5572
      %5830 = vst [vmem:[%s208 + $0x4e8] sm:$0xff] %v5573
      %5831 = vst [vmem:[%s208 + $0x4f0] sm:$0xff] %v5574
      %5832 = vst [vmem:[%s208 + $0x4f8] sm:$0xff] %v5575
      %5833 = vst [vmem:[%s208 + $0x500] sm:$0xff] %v5576
      %5834 = vst [vmem:[%s208 + $0x508] sm:$0xff] %v5577
      %5835 = vst [vmem:[%s208 + $0x510] sm:$0xff] %v5578
      %5836 = vst [vmem:[%s208 + $0x518] sm:$0xff] %v5579
      %5837 = vst [vmem:[%s208 + $0x520] sm:$0xff] %v5580
      %5838 = vst [vmem:[%s208 + $0x528] sm:$0xff] %v5581
      %5839 = vst [vmem:[%s208 + $0x530] sm:$0xff] %v5582
      %5840 = vst [vmem:[%s208 + $0x538] sm:$0xff] %v5583
      %5841 = vst [vmem:[%s208 + $0x540] sm:$0xff] %v5584
      %5842 = vst [vmem:[%s208 + $0x548] sm:$0xff] %v5585
      %5843 = vst [vmem:[%s208 + $0x550] sm:$0xff] %v5586
      %5844 = vst [vmem:[%s208 + $0x558] sm:$0xff] %v5587
      %5845 = vst [vmem:[%s208 + $0x560] sm:$0xff] %v5588
      %5846 = vst [vmem:[%s208 + $0x568] sm:$0xff] %v5589
      %5847 = vst [vmem:[%s208 + $0x570] sm:$0xff] %v5590
      %5848 = vst [vmem:[%s208 + $0x578] sm:$0xff] %v5591
      %5849 = vst [vmem:[%s208 + $0x580] sm:$0xff] %v5592
      %5850 = vst [vmem:[%s208 + $0x588] sm:$0xff] %v5593
      %5851 = vst [vmem:[%s208 + $0x590] sm:$0xff] %v5594
      %5852 = vst [vmem:[%s208 + $0x598] sm:$0xff] %v5595
      %5853 = vst [vmem:[%s208 + $0x5a0] sm:$0xff] %v5596
      %5854 = vst [vmem:[%s208 + $0x5a8] sm:$0xff] %v5597
      %5855 = vst [vmem:[%s208 + $0x5b0] sm:$0xff] %v5598
      %5856 = vst [vmem:[%s208 + $0x5b8] sm:$0xff] %v5599
      %5857 = vst [vmem:[%s208 + $0x5c0] sm:$0xff] %v5600
      %5858 = vst [vmem:[%s208 + $0x5c8] sm:$0xff] %v5601
      %5859 = vst [vmem:[%s208 + $0x5d0] sm:$0xff] %v5602
      %5860 = vst [vmem:[%s208 + $0x5d8] sm:$0xff] %v5603
      %5861 = vst [vmem:[%s208 + $0x5e0] sm:$0xff] %v5604
      %5862 = vst [vmem:[%s208 + $0x5e8] sm:$0xff] %v5605
      %5863 = vst [vmem:[%s208 + $0x5f0] sm:$0xff] %v5606
      %5864 = vst.msk [vmem:[%s208 + $0x5f8] sm:$0xff] %vm5735, %v5607
      %5865 = vst [vmem:[%s208 + $0x600] sm:$0xff] %v5608
      %5866 = vst [vmem:[%s208 + $0x608] sm:$0xff] %v5609
      %5867 = vst [vmem:[%s208 + $0x610] sm:$0xff] %v5610
      %5868 = vst [vmem:[%s208 + $0x618] sm:$0xff] %v5611
      %5869 = vst [vmem:[%s208 + $0x620] sm:$0xff] %v5612
      %5870 = vst [vmem:[%s208 + $0x628] sm:$0xff] %v5613
      %5871 = vst [vmem:[%s208 + $0x630] sm:$0xff] %v5614
      %5872 = vst [vmem:[%s208 + $0x638] sm:$0xff] %v5615
      %5873 = vst [vmem:[%s208 + $0x640] sm:$0xff] %v5616
      %5874 = vst [vmem:[%s208 + $0x648] sm:$0xff] %v5617
      %5875 = vst [vmem:[%s208 + $0x650] sm:$0xff] %v5618
      %5876 = vst [vmem:[%s208 + $0x658] sm:$0xff] %v5619
      %5877 = vst [vmem:[%s208 + $0x660] sm:$0xff] %v5620
      %5878 = vst [vmem:[%s208 + $0x668] sm:$0xff] %v5621
      %5879 = vst [vmem:[%s208 + $0x670] sm:$0xff] %v5622
      %5880 = vst [vmem:[%s208 + $0x678] sm:$0xff] %v5623
      %5881 = vst [vmem:[%s208 + $0x680] sm:$0xff] %v5624
      %5882 = vst [vmem:[%s208 + $0x688] sm:$0xff] %v5625
      %5883 = vst [vmem:[%s208 + $0x690] sm:$0xff] %v5626
      %5884 = vst [vmem:[%s208 + $0x698] sm:$0xff] %v5627
      %5885 = vst [vmem:[%s208 + $0x6a0] sm:$0xff] %v5628
      %5886 = vst [vmem:[%s208 + $0x6a8] sm:$0xff] %v5629
      %5887 = vst [vmem:[%s208 + $0x6b0] sm:$0xff] %v5630
      %5888 = vst [vmem:[%s208 + $0x6b8] sm:$0xff] %v5631
      %5889 = vst [vmem:[%s208 + $0x6c0] sm:$0xff] %v5632
      %5890 = vst [vmem:[%s208 + $0x6c8] sm:$0xff] %v5633
      %5891 = vst [vmem:[%s208 + $0x6d0] sm:$0xff] %v5634
      %5892 = vst [vmem:[%s208 + $0x6d8] sm:$0xff] %v5635
      %5893 = vst [vmem:[%s208 + $0x6e0] sm:$0xff] %v5636
      %5894 = vst [vmem:[%s208 + $0x6e8] sm:$0xff] %v5637
      %5895 = vst [vmem:[%s208 + $0x6f0] sm:$0xff] %v5638
      %5896 = vst [vmem:[%s208 + $0x6f8] sm:$0xff] %v5639
      %5897 = vst [vmem:[%s208 + $0x700] sm:$0xff] %v5640
      %5898 = vst [vmem:[%s208 + $0x708] sm:$0xff] %v5641
      %5899 = vst [vmem:[%s208 + $0x710] sm:$0xff] %v5642
      %5900 = vst [vmem:[%s208 + $0x718] sm:$0xff] %v5643
      %5901 = vst [vmem:[%s208 + $0x720] sm:$0xff] %v5644
      %5902 = vst [vmem:[%s208 + $0x728] sm:$0xff] %v5645
      %5903 = vst [vmem:[%s208 + $0x730] sm:$0xff] %v5646
      %5904 = vst [vmem:[%s208 + $0x738] sm:$0xff] %v5647
      %5905 = vst [vmem:[%s208 + $0x740] sm:$0xff] %v5648
      %5906 = vst [vmem:[%s208 + $0x748] sm:$0xff] %v5649
      %5907 = vst [vmem:[%s208 + $0x750] sm:$0xff] %v5650
      %5908 = vst [vmem:[%s208 + $0x758] sm:$0xff] %v5651
      %5909 = vst [vmem:[%s208 + $0x760] sm:$0xff] %v5652
      %5910 = vst [vmem:[%s208 + $0x768] sm:$0xff] %v5653
      %5911 = vst [vmem:[%s208 + $0x770] sm:$0xff] %v5654
      %5912 = vst [vmem:[%s208 + $0x778] sm:$0xff] %v5655
      %5913 = vst [vmem:[%s208 + $0x780] sm:$0xff] %v5656
      %5914 = vst [vmem:[%s208 + $0x788] sm:$0xff] %v5657
      %5915 = vst [vmem:[%s208 + $0x790] sm:$0xff] %v5658
      %5916 = vst [vmem:[%s208 + $0x798] sm:$0xff] %v5659
      %5917 = vst [vmem:[%s208 + $0x7a0] sm:$0xff] %v5660
      %5918 = vst [vmem:[%s208 + $0x7a8] sm:$0xff] %v5661
      %5919 = vst [vmem:[%s208 + $0x7b0] sm:$0xff] %v5662
      %5920 = vst [vmem:[%s208 + $0x7b8] sm:$0xff] %v5663
      %5921 = vst [vmem:[%s208 + $0x7c0] sm:$0xff] %v5664
      %5922 = vst [vmem:[%s208 + $0x7c8] sm:$0xff] %v5665
      %5923 = vst [vmem:[%s208 + $0x7d0] sm:$0xff] %v5666
      %5924 = vst [vmem:[%s208 + $0x7d8] sm:$0xff] %v5667
      %5925 = vst [vmem:[%s208 + $0x7e0] sm:$0xff] %v5668
      %5926 = vst [vmem:[%s208 + $0x7e8] sm:$0xff] %v5669
      %5927 = vst [vmem:[%s208 + $0x7f0] sm:$0xff] %v5670
      %5928 = vst.msk [vmem:[%s208 + $0x7f8] sm:$0xff] %vm5735, %v5671
      %s5929 = smul.u32 64, %s19
      %p5930 = scmp.lt.s32.totalorder %s18, 1
      %s5931 = scalar_select %p5930, %s18, 1
      %p5932 = scmp.lt.s32.totalorder %s5929, 63
      %s5933 = scalar_select %p5932, %s5929, 63
      %s5934 = smul.addr %s5931, 256
      %s5935 = sadd.s32 %s5933, %s5934
      %s5936 = smul.addr %s5935, 8
      %s5937 = scalar_lea.vmem %s3, %s5936
      // Predicated region
      $region33: #{rsfnet_maskin_forward.4} parent=31 // pred_check
        %p5938 = pneg %p116
      $region34: #{rsfnet_maskin_forward.4} parent=31 // pred_check_branch
        %5940 = sbr.rel (%p5938) target = $region36
      $region35: #{rsfnet_maskin_forward.4} parent=31 // pred_region
        %s5941 = smul.u32 64, %s19
      $region36: #{rsfnet_maskin_forward.4} parent=31 // pred_fallthru
        _
    $region32: #{rsfnet_maskin_forward.4} parent=5 // pred_fallthru
      _
    %p5942 = scmp.le.s32.totalorder 2, %s9
    // Predicated region
    $region37: #{rsfnet_maskin_forward.4} parent=5 // pred_check
      %p5943 = pneg %p5942
    $region38: #{rsfnet_maskin_forward.4} parent=5 // pred_check_branch
      %5945 = sbr.rel (%p5943) target = $region40
    $region39: #{rsfnet_maskin_forward.4} parent=5 // pred_region
      %s5946 = ssub.s32 %s9, 2
      // Predicated region
      $region41: #{rsfnet_maskin_forward.4} parent=39 // pred_check
        %p5947 = pneg %p122
      $region42: #{rsfnet_maskin_forward.4} parent=39 // pred_check_branch
        %5949 = sbr.rel (%p5947) target = $region44
      $region43: #{rsfnet_maskin_forward.4} parent=39 // pred_region
        %s5950 = smul.u32 64, %s21
        %p5951 = scmp.lt.s32.totalorder %s20, 1
        %s5952 = scalar_select %p5951, %s20, 1
        %p5953 = scmp.lt.s32.totalorder %s5950, 63
        %s5954 = scalar_select %p5953, %s5950, 63
        %s5955 = smul.addr %s5952, 256
        %s5956 = sadd.s32 %s5954, %s5955
        %s5957 = smul.addr %s5956, 8
        %s5958 = scalar_lea.vmem %s3, %s5957
      $region44: #{rsfnet_maskin_forward.4} parent=39 // pred_fallthru
        _
    $region40: #{rsfnet_maskin_forward.4} parent=5 // pred_fallthru
      _
  $region6: #{rsfnet_maskin_forward.4} parent=0 // loop_footer
    %s13 = sadd.s32 1, %s9
  $region7: #{rsfnet_maskin_forward.4} parent=0 // loop_footer_branch
    %8 = sbr.rel target = $region3
  $region8: #{rsfnet_maskin_forward.4} parent=0 // loop_exit
    _

</llo_original>
